<compile_context>
chip_gen: v6e
topology: v6e:2x2x1
jax: 0.10.0
libtpu: 0.0.40
codegen_flags: <defaults>
</compile_context>

<pallas_src>
import jax
import jax.numpy as jnp
from jax.experimental import pallas as pl
from jax.experimental.pallas import tpu as pltpu

# Static shapes implied by the module (MNIST: self.fc expects 320 = 20*4*4).
_H = _W = 28
_K = 5
_T = _K * _K                          # 25 taps
_C1, _C2 = 10, 20
_OH1 = _OW1 = _H - _K + 1             # 24
_PH1 = _PW1 = _OH1 // 2               # 12
_OH2 = _OW2 = _PH1 - _K + 1           # 8
_PH2 = _PW2 = _OH2 // 2               # 4
_RC = 8                               # conv1 rows per chunk (3 chunks; keeps vreg pressure low)


def _fused_net_kernel(p_ref, w1_ref, b1_ref, w2_ref, b2_ref, o_ref, x1_s):
    """One image per grid step; all intermediates stay in VMEM / vregs."""
    # ---------------- stage 1: conv1 on the MXU + pool + ReLU ----------------
    w1 = w1_ref[...]                                        # (25, C1)
    b1 = b1_ref[...]                                        # (1,  C1)
    for r in range(_OH1 // _RC):                            # 3 chunks of 8 conv rows
        # (8, 24, 25) -> (192, 25): leading-dim merge, sublane dim stays a
        # multiple of 8 -> layout-free reshape.
        pm = p_ref[0, r * _RC:(r + 1) * _RC].reshape(_RC * _OW1, _T)
        c1 = jnp.dot(pm, w1, preferred_element_type=jnp.float32) + b1   # (192, C1)
        # 2x2 maxpool + ReLU (relu/max commute). H-pool via untiled-axis split.
        c1 = c1.reshape(_RC // 2, 2, _OW1, _C1)             # (4, 2, 24, C1)
        hm = jnp.maximum(c1[:, 0], c1[:, 1])                # (4, 24, C1)
        r0 = r * (_RC // 2)                                 # pooled-row offset
        for j in range(_PW1):                               # W-pool, per column
            q = jnp.maximum(hm[:, 2 * j:2 * j + 1, :],
                            hm[:, 2 * j + 1:2 * j + 2, :])  # (4, 1, C1)
            x1_s[r0:r0 + _RC // 2, j:j + 1, :] = jnp.maximum(q, 0.0)

    # ---------------- stage 2: conv2 (IC=10, OC=20) on the MXU ---------------
    acc2 = jnp.broadcast_to(b2_ref[...], (_OH2 * _OW2, _C2))            # (64, C2)
    for dy in range(_K):
        for dx in range(_K):
            t = dy * _K + dx
            xs = x1_s[dy:dy + _OH2, dx:dx + _OW2, :]        # (8, 8, C1)
            xs = xs.reshape(_OH2 * _OW2, _C1)               # (64, C1) layout-free
            acc2 = acc2 + jnp.dot(xs, w2_ref[t],
                                  preferred_element_type=jnp.float32)

    # ------- stage 3: pool + ReLU + log_softmax over channels (lanes) --------
    c2 = acc2.reshape(_PH2, 2, _OW2, _C2)                   # (4, 2, 8, C2)
    hm2 = jnp.maximum(c2[:, 0], c2[:, 1])                   # (4, 8, C2)
    for j in range(_PW2):
        q = jnp.maximum(hm2[:, 2 * j:2 * j + 1, :],
                        hm2[:, 2 * j + 1:2 * j + 2, :])     # (4, 1, C2)
        v = jnp.maximum(q, 0.0)
        m = jnp.max(v, axis=-1, keepdims=True)
        lse = jnp.log(jnp.sum(jnp.exp(v - m), axis=-1, keepdims=True))
        o_ref[0, :, j:j + 1, :] = v - m - lse


@jax.jit
def net_forward(x, params):
    """x: (N, 1, 28, 28) float32 NCHW -> (N, 20, 4, 4) log-probs (NCHW)."""
    N = x.shape[0]
    x2d = x.reshape(N, _H, _W)                              # C=1: free relabel
    # im2col for conv1 (layout plumbing only, zero FLOPs): tap t = dy*5+dx on
    # the last axis, matching w1m row order below.
    patches = jnp.stack(
        [x2d[:, dy:dy + _OH1, dx:dx + _OW1]
         for dy in range(_K) for dx in range(_K)], axis=-1)  # (N, 24, 24, 25)
    # conv1 weight as (25, 10): row t = (kh, kw), matches PyTorch reshape order.
    w1m = params["w1"].reshape(_C1, _T).T
    b1 = params["b1"].reshape(1, _C1)
    # conv2 weight as (25, 10, 20): [tap, ic, oc].
    w2t = params["w2"].transpose(2, 3, 1, 0).reshape(_T, _C1, _C2)
    b2 = params["b2"].reshape(1, _C2)

    flops = N * (2 * _OH1 * _OW1 * _T * _C1
                 + 2 * _OH2 * _OW2 * _T * _C1 * _C2 + 20_000)
    bytes_accessed = (N * (_OH1 * _OW1 * _T + _PH2 * _PW2 * _C2) * 4
                      + (w1m.size + b1.size + w2t.size + b2.size) * 4)

    out_nhwc = pl.pallas_call(
        _fused_net_kernel,
        out_shape=jax.ShapeDtypeStruct((N, _PH2, _PW2, _C2), jnp.float32),
        grid_spec=pltpu.PrefetchScalarGridSpec(
            num_scalar_prefetch=0,
            grid=(N,),
            in_specs=[
                pl.BlockSpec((1, _OH1, _OW1, _T), lambda n: (n, 0, 0, 0)),
                pl.BlockSpec((_T, _C1), lambda n: (0, 0)),
                pl.BlockSpec((1, _C1), lambda n: (0, 0)),
                pl.BlockSpec((_T, _C1, _C2), lambda n: (0, 0, 0)),
                pl.BlockSpec((1, _C2), lambda n: (0, 0)),
            ],
            out_specs=pl.BlockSpec((1, _PH2, _PW2, _C2),
                                   lambda n: (n, 0, 0, 0)),
            scratch_shapes=[pltpu.VMEM((_PH1, _PW1, _C1), jnp.float32)],
        ),
        compiler_params=pltpu.CompilerParams(
            dimension_semantics=("parallel",)),
        cost_estimate=pl.CostEstimate(
            flops=flops, transcendentals=N * 336,
            bytes_accessed=bytes_accessed),
    )(patches, w1m, b1, w2t, b2)

    # Tiny (N*1.25 KB) layout fixup back to PyTorch's NCHW output.
    return out_nhwc.transpose(0, 3, 1, 2)


# ---------------------------------------------------------------------------
# Parameter init (mirrors the module's __init__) and a pure-JAX reference.
# ---------------------------------------------------------------------------
def init_params(key):
    k1, k2, k3, k4, k5, k6 = jax.random.split(key, 6)
    return {
        # conv1: Conv2d(1, 10, kernel_size=5)
        "w1": 0.1 * jax.random.normal(k1, (_C1, 1, _K, _K), jnp.float32),
        "b1": 0.1 * jax.random.normal(k2, (_C1,), jnp.float32),
        # conv2: Conv2d(10, 20, kernel_size=5)
        "w2": 0.1 * jax.random.normal(k3, (_C2, _C1, _K, _K), jnp.float32),
        "b2": 0.1 * jax.random.normal(k4, (_C2,), jnp.float32),
        # self.fc = Linear(320, 10): defined in __init__ but NEVER used in
        # forward(); kept only for parity with the module definition.
        # TODO(synk): fc is dead code in the reference forward, so it is not
        # part of the Pallas kernel.
        "w_fc": 0.1 * jax.random.normal(k5, (10, 320), jnp.float32),
        "b_fc": 0.1 * jax.random.normal(k6, (10,), jnp.float32),
    }


def _reference_forward(x, params):
    dn = ("NCHW", "OIHW", "NCHW")

    def conv(y, w, b):
        out = jax.lax.conv_general_dilated(
            y, w, window_strides=(1, 1), padding="VALID",
            dimension_numbers=dn, precision=jax.lax.Precision.HIGHEST)
        return out + b[None, :, None, None]

    def mp(y):
        return jax.lax.reduce_window(y, -jnp.inf, jax.lax.max,
                                     (1, 1, 2, 2), (1, 1, 2, 2), "VALID")

    y = jax.nn.relu(mp(conv(x, params["w1"], params["b1"])))
    y = jax.nn.relu(mp(conv(y, params["w2"], params["b2"])))
    # F.log_softmax on a 4-D tensor defaults to dim=1 (channels).
    return jax.nn.log_softmax(y, axis=1)


if __name__ == "__main__":
    key = jax.random.PRNGKey(0)
    k_params, k_x = jax.random.split(key)
    params = init_params(k_params)
    x = jax.random.normal(k_x, (2, 1, _H, _W), jnp.float32)

    out = jax.block_until_ready(net_forward(x, params))
    assert out.shape == (2, _C2, _PH2, _PW2)
    assert out.dtype == jnp.float32

    ref = jax.block_until_ready(_reference_forward(x, params))
    max_err = float(jnp.max(jnp.abs(out - ref)))
    assert max_err < 3e-2, f"mismatch vs reference: max abs err = {max_err}"

    print("KERNEL_OK")
</pallas_src>

<mosaic_0001>
module attributes {stable_mosaic.version = 11 : i64} {
  func.func @_fused_net_kernel(%arg0: i32, %arg1: memref<1x24x24x25xf32, #tpu.memory_space<vmem>>, %arg2: memref<25x10xf32, #tpu.memory_space<vmem>>, %arg3: memref<1x10xf32, #tpu.memory_space<vmem>>, %arg4: memref<25x10x20xf32, #tpu.memory_space<vmem>>, %arg5: memref<1x20xf32, #tpu.memory_space<vmem>>, %arg6: memref<1x4x4x20xf32, #tpu.memory_space<vmem>>, %arg7: memref<12x12x10xf32, #tpu.memory_space<vmem>>) attributes {dimension_semantics = [#tpu.dimension_semantics<parallel>], iteration_bounds = array<i64: 2>, scalar_prefetch = 0 : i64, scratch_operands = 1 : i64, tpu.core_type = #tpu.core_type<tc>, window_params = [{transform_indices = @transform_0, window_bounds = array<i64: 1, 24, 24, 25>}, {pipeline_mode = #tpu.pipeline_mode<synchronous>, transform_indices = @transform_1, window_bounds = array<i64: 25, 10>}, {pipeline_mode = #tpu.pipeline_mode<synchronous>, transform_indices = @transform_2, window_bounds = array<i64: 1, 10>}, {pipeline_mode = #tpu.pipeline_mode<synchronous>, transform_indices = @transform_3, window_bounds = array<i64: 25, 10, 20>}, {pipeline_mode = #tpu.pipeline_mode<synchronous>, transform_indices = @transform_4, window_bounds = array<i64: 1, 20>}, {transform_indices = @transform_5, window_bounds = array<i64: 1, 4, 4, 20>}]} {
    %c0 = arith.constant 0 : index
    %c0_0 = arith.constant 0 : index
    %0 = vector.load %arg2[%c0, %c0_0] : memref<25x10xf32, #tpu.memory_space<vmem>>, vector<25x10xf32>
    %c0_1 = arith.constant 0 : index
    %c0_2 = arith.constant 0 : index
    %1 = vector.load %arg3[%c0_1, %c0_2] : memref<1x10xf32, #tpu.memory_space<vmem>>, vector<1x10xf32>
    %c0_3 = arith.constant 0 : index
    %c0_4 = arith.constant 0 : index
    %c0_5 = arith.constant 0 : index
    %c0_6 = arith.constant 0 : index
    %2 = vector.load %arg1[%c0_3, %c0_4, %c0_5, %c0_6] : memref<1x24x24x25xf32, #tpu.memory_space<vmem>>, vector<1x8x24x25xf32>
    %3 = vector.shape_cast %2 : vector<1x8x24x25xf32> to vector<8x24x25xf32>
    %4 = vector.shape_cast %3 : vector<8x24x25xf32> to vector<192x25xf32>
    %cst = arith.constant dense<0.000000e+00> : vector<192x10xf32>
    %5 = tpu.matmul %4, %0, %cst {dimension_numbers = #tpu.dot_dimension_numbers<[1], [0], [0], [1], [0, 0, 1, 1], [], []>} : vector<192x25xf32>, vector<25x10xf32>, vector<192x10xf32> -> vector<192x10xf32>
    %6 = vector.broadcast %1 : vector<1x10xf32> to vector<192x10xf32>
    %7 = arith.addf %5, %6 : vector<192x10xf32>
    %8 = vector.shape_cast %7 : vector<192x10xf32> to vector<4x2x24x10xf32>
    %9 = vector.extract_strided_slice %8 {offsets = [0, 0, 0, 0], sizes = [4, 1, 24, 10], strides = [1, 1, 1, 1]} : vector<4x2x24x10xf32> to vector<4x1x24x10xf32>
    %10 = vector.shape_cast %9 : vector<4x1x24x10xf32> to vector<4x24x10xf32>
    %11 = vector.extract_strided_slice %8 {offsets = [0, 1, 0, 0], sizes = [4, 1, 24, 10], strides = [1, 1, 1, 1]} : vector<4x2x24x10xf32> to vector<4x1x24x10xf32>
    %12 = vector.shape_cast %11 : vector<4x1x24x10xf32> to vector<4x24x10xf32>
    %13 = arith.maximumf %10, %12 : vector<4x24x10xf32>
    %14 = vector.extract_strided_slice %13 {offsets = [0, 0, 0], sizes = [4, 1, 10], strides = [1, 1, 1]} : vector<4x24x10xf32> to vector<4x1x10xf32>
    %15 = vector.extract_strided_slice %13 {offsets = [0, 1, 0], sizes = [4, 1, 10], strides = [1, 1, 1]} : vector<4x24x10xf32> to vector<4x1x10xf32>
    %16 = arith.maximumf %14, %15 : vector<4x1x10xf32>
    %cst_7 = arith.constant 0.000000e+00 : f32
    %17 = vector.broadcast %cst_7 : f32 to vector<4x1x10xf32>
    %18 = arith.maximumf %16, %17 : vector<4x1x10xf32>
    %c0_8 = arith.constant 0 : index
    %c0_9 = arith.constant 0 : index
    %c0_10 = arith.constant 0 : index
    %19 = vector.load %arg7[%c0_8, %c0_9, %c0_10] : memref<12x12x10xf32, #tpu.memory_space<vmem>>, vector<4x1x10xf32>
    tpu.vector_store %arg7[%c0_8, %c0_9, %c0_10], %18 {strides = array<i32>} : memref<12x12x10xf32, #tpu.memory_space<vmem>>, vector<4x1x10xf32>,
    %20 = vector.extract_strided_slice %13 {offsets = [0, 2, 0], sizes = [4, 1, 10], strides = [1, 1, 1]} : vector<4x24x10xf32> to vector<4x1x10xf32>
    %21 = vector.extract_strided_slice %13 {offsets = [0, 3, 0], sizes = [4, 1, 10], strides = [1, 1, 1]} : vector<4x24x10xf32> to vector<4x1x10xf32>
    %22 = arith.maximumf %20, %21 : vector<4x1x10xf32>
    %cst_11 = arith.constant 0.000000e+00 : f32
    %23 = vector.broadcast %cst_11 : f32 to vector<4x1x10xf32>
    %24 = arith.maximumf %22, %23 : vector<4x1x10xf32>
    %c0_12 = arith.constant 0 : index
    %c1 = arith.constant 1 : index
    %c0_13 = arith.constant 0 : index
    %25 = vector.load %arg7[%c0_12, %c1, %c0_13] : memref<12x12x10xf32, #tpu.memory_space<vmem>>, vector<4x1x10xf32>
    tpu.vector_store %arg7[%c0_12, %c1, %c0_13], %24 {strides = array<i32>} : memref<12x12x10xf32, #tpu.memory_space<vmem>>, vector<4x1x10xf32>,
    %26 = vector.extract_strided_slice %13 {offsets = [0, 4, 0], sizes = [4, 1, 10], strides = [1, 1, 1]} : vector<4x24x10xf32> to vector<4x1x10xf32>
    %27 = vector.extract_strided_slice %13 {offsets = [0, 5, 0], sizes = [4, 1, 10], strides = [1, 1, 1]} : vector<4x24x10xf32> to vector<4x1x10xf32>
    %28 = arith.maximumf %26, %27 : vector<4x1x10xf32>
    %cst_14 = arith.constant 0.000000e+00 : f32
    %29 = vector.broadcast %cst_14 : f32 to vector<4x1x10xf32>
    %30 = arith.maximumf %28, %29 : vector<4x1x10xf32>
    %c0_15 = arith.constant 0 : index
    %c2 = arith.constant 2 : index
    %c0_16 = arith.constant 0 : index
    %31 = vector.load %arg7[%c0_15, %c2, %c0_16] : memref<12x12x10xf32, #tpu.memory_space<vmem>>, vector<4x1x10xf32>
    tpu.vector_store %arg7[%c0_15, %c2, %c0_16], %30 {strides = array<i32>} : memref<12x12x10xf32, #tpu.memory_space<vmem>>, vector<4x1x10xf32>,
    %32 = vector.extract_strided_slice %13 {offsets = [0, 6, 0], sizes = [4, 1, 10], strides = [1, 1, 1]} : vector<4x24x10xf32> to vector<4x1x10xf32>
    %33 = vector.extract_strided_slice %13 {offsets = [0, 7, 0], sizes = [4, 1, 10], strides = [1, 1, 1]} : vector<4x24x10xf32> to vector<4x1x10xf32>
    %34 = arith.maximumf %32, %33 : vector<4x1x10xf32>
    %cst_17 = arith.constant 0.000000e+00 : f32
    %35 = vector.broadcast %cst_17 : f32 to vector<4x1x10xf32>
    %36 = arith.maximumf %34, %35 : vector<4x1x10xf32>
    %c0_18 = arith.constant 0 : index
    %c3 = arith.constant 3 : index
    %c0_19 = arith.constant 0 : index
    %37 = vector.load %arg7[%c0_18, %c3, %c0_19] : memref<12x12x10xf32, #tpu.memory_space<vmem>>, vector<4x1x10xf32>
    tpu.vector_store %arg7[%c0_18, %c3, %c0_19], %36 {strides = array<i32>} : memref<12x12x10xf32, #tpu.memory_space<vmem>>, vector<4x1x10xf32>,
    %38 = vector.extract_strided_slice %13 {offsets = [0, 8, 0], sizes = [4, 1, 10], strides = [1, 1, 1]} : vector<4x24x10xf32> to vector<4x1x10xf32>
    %39 = vector.extract_strided_slice %13 {offsets = [0, 9, 0], sizes = [4, 1, 10], strides = [1, 1, 1]} : vector<4x24x10xf32> to vector<4x1x10xf32>
    %40 = arith.maximumf %38, %39 : vector<4x1x10xf32>
    %cst_20 = arith.constant 0.000000e+00 : f32
    %41 = vector.broadcast %cst_20 : f32 to vector<4x1x10xf32>
    %42 = arith.maximumf %40, %41 : vector<4x1x10xf32>
    %c0_21 = arith.constant 0 : index
    %c4 = arith.constant 4 : index
    %c0_22 = arith.constant 0 : index
    %43 = vector.load %arg7[%c0_21, %c4, %c0_22] : memref<12x12x10xf32, #tpu.memory_space<vmem>>, vector<4x1x10xf32>
    tpu.vector_store %arg7[%c0_21, %c4, %c0_22], %42 {strides = array<i32>} : memref<12x12x10xf32, #tpu.memory_space<vmem>>, vector<4x1x10xf32>,
    %44 = vector.extract_strided_slice %13 {offsets = [0, 10, 0], sizes = [4, 1, 10], strides = [1, 1, 1]} : vector<4x24x10xf32> to vector<4x1x10xf32>
    %45 = vector.extract_strided_slice %13 {offsets = [0, 11, 0], sizes = [4, 1, 10], strides = [1, 1, 1]} : vector<4x24x10xf32> to vector<4x1x10xf32>
    %46 = arith.maximumf %44, %45 : vector<4x1x10xf32>
    %cst_23 = arith.constant 0.000000e+00 : f32
    %47 = vector.broadcast %cst_23 : f32 to vector<4x1x10xf32>
    %48 = arith.maximumf %46, %47 : vector<4x1x10xf32>
    %c0_24 = arith.constant 0 : index
    %c5 = arith.constant 5 : index
    %c0_25 = arith.constant 0 : index
    %49 = vector.load %arg7[%c0_24, %c5, %c0_25] : memref<12x12x10xf32, #tpu.memory_space<vmem>>, vector<4x1x10xf32>
    tpu.vector_store %arg7[%c0_24, %c5, %c0_25], %48 {strides = array<i32>} : memref<12x12x10xf32, #tpu.memory_space<vmem>>, vector<4x1x10xf32>,
    %50 = vector.extract_strided_slice %13 {offsets = [0, 12, 0], sizes = [4, 1, 10], strides = [1, 1, 1]} : vector<4x24x10xf32> to vector<4x1x10xf32>
    %51 = vector.extract_strided_slice %13 {offsets = [0, 13, 0], sizes = [4, 1, 10], strides = [1, 1, 1]} : vector<4x24x10xf32> to vector<4x1x10xf32>
    %52 = arith.maximumf %50, %51 : vector<4x1x10xf32>
    %cst_26 = arith.constant 0.000000e+00 : f32
    %53 = vector.broadcast %cst_26 : f32 to vector<4x1x10xf32>
    %54 = arith.maximumf %52, %53 : vector<4x1x10xf32>
    %c0_27 = arith.constant 0 : index
    %c6 = arith.constant 6 : index
    %c0_28 = arith.constant 0 : index
    %55 = vector.load %arg7[%c0_27, %c6, %c0_28] : memref<12x12x10xf32, #tpu.memory_space<vmem>>, vector<4x1x10xf32>
    tpu.vector_store %arg7[%c0_27, %c6, %c0_28], %54 {strides = array<i32>} : memref<12x12x10xf32, #tpu.memory_space<vmem>>, vector<4x1x10xf32>,
    %56 = vector.extract_strided_slice %13 {offsets = [0, 14, 0], sizes = [4, 1, 10], strides = [1, 1, 1]} : vector<4x24x10xf32> to vector<4x1x10xf32>
    %57 = vector.extract_strided_slice %13 {offsets = [0, 15, 0], sizes = [4, 1, 10], strides = [1, 1, 1]} : vector<4x24x10xf32> to vector<4x1x10xf32>
    %58 = arith.maximumf %56, %57 : vector<4x1x10xf32>
    %cst_29 = arith.constant 0.000000e+00 : f32
    %59 = vector.broadcast %cst_29 : f32 to vector<4x1x10xf32>
    %60 = arith.maximumf %58, %59 : vector<4x1x10xf32>
    %c0_30 = arith.constant 0 : index
    %c7 = arith.constant 7 : index
    %c0_31 = arith.constant 0 : index
    %61 = vector.load %arg7[%c0_30, %c7, %c0_31] : memref<12x12x10xf32, #tpu.memory_space<vmem>>, vector<4x1x10xf32>
    tpu.vector_store %arg7[%c0_30, %c7, %c0_31], %60 {strides = array<i32>} : memref<12x12x10xf32, #tpu.memory_space<vmem>>, vector<4x1x10xf32>,
    %62 = vector.extract_strided_slice %13 {offsets = [0, 16, 0], sizes = [4, 1, 10], strides = [1, 1, 1]} : vector<4x24x10xf32> to vector<4x1x10xf32>
    %63 = vector.extract_strided_slice %13 {offsets = [0, 17, 0], sizes = [4, 1, 10], strides = [1, 1, 1]} : vector<4x24x10xf32> to vector<4x1x10xf32>
    %64 = arith.maximumf %62, %63 : vector<4x1x10xf32>
    %cst_32 = arith.constant 0.000000e+00 : f32
    %65 = vector.broadcast %cst_32 : f32 to vector<4x1x10xf32>
    %66 = arith.maximumf %64, %65 : vector<4x1x10xf32>
    %c0_33 = arith.constant 0 : index
    %c8 = arith.constant 8 : index
    %c0_34 = arith.constant 0 : index
    %67 = vector.load %arg7[%c0_33, %c8, %c0_34] : memref<12x12x10xf32, #tpu.memory_space<vmem>>, vector<4x1x10xf32>
    tpu.vector_store %arg7[%c0_33, %c8, %c0_34], %66 {strides = array<i32>} : memref<12x12x10xf32, #tpu.memory_space<vmem>>, vector<4x1x10xf32>,
    %68 = vector.extract_strided_slice %13 {offsets = [0, 18, 0], sizes = [4, 1, 10], strides = [1, 1, 1]} : vector<4x24x10xf32> to vector<4x1x10xf32>
    %69 = vector.extract_strided_slice %13 {offsets = [0, 19, 0], sizes = [4, 1, 10], strides = [1, 1, 1]} : vector<4x24x10xf32> to vector<4x1x10xf32>
    %70 = arith.maximumf %68, %69 : vector<4x1x10xf32>
    %cst_35 = arith.constant 0.000000e+00 : f32
    %71 = vector.broadcast %cst_35 : f32 to vector<4x1x10xf32>
    %72 = arith.maximumf %70, %71 : vector<4x1x10xf32>
    %c0_36 = arith.constant 0 : index
    %c9 = arith.constant 9 : index
    %c0_37 = arith.constant 0 : index
    %73 = vector.load %arg7[%c0_36, %c9, %c0_37] : memref<12x12x10xf32, #tpu.memory_space<vmem>>, vector<4x1x10xf32>
    tpu.vector_store %arg7[%c0_36, %c9, %c0_37], %72 {strides = array<i32>} : memref<12x12x10xf32, #tpu.memory_space<vmem>>, vector<4x1x10xf32>,
    %74 = vector.extract_strided_slice %13 {offsets = [0, 20, 0], sizes = [4, 1, 10], strides = [1, 1, 1]} : vector<4x24x10xf32> to vector<4x1x10xf32>
    %75 = vector.extract_strided_slice %13 {offsets = [0, 21, 0], sizes = [4, 1, 10], strides = [1, 1, 1]} : vector<4x24x10xf32> to vector<4x1x10xf32>
    %76 = arith.maximumf %74, %75 : vector<4x1x10xf32>
    %cst_38 = arith.constant 0.000000e+00 : f32
    %77 = vector.broadcast %cst_38 : f32 to vector<4x1x10xf32>
    %78 = arith.maximumf %76, %77 : vector<4x1x10xf32>
    %c0_39 = arith.constant 0 : index
    %c10 = arith.constant 10 : index
    %c0_40 = arith.constant 0 : index
    %79 = vector.load %arg7[%c0_39, %c10, %c0_40] : memref<12x12x10xf32, #tpu.memory_space<vmem>>, vector<4x1x10xf32>
    tpu.vector_store %arg7[%c0_39, %c10, %c0_40], %78 {strides = array<i32>} : memref<12x12x10xf32, #tpu.memory_space<vmem>>, vector<4x1x10xf32>,
    %80 = vector.extract_strided_slice %13 {offsets = [0, 22, 0], sizes = [4, 1, 10], strides = [1, 1, 1]} : vector<4x24x10xf32> to vector<4x1x10xf32>
    %81 = vector.extract_strided_slice %13 {offsets = [0, 23, 0], sizes = [4, 1, 10], strides = [1, 1, 1]} : vector<4x24x10xf32> to vector<4x1x10xf32>
    %82 = arith.maximumf %80, %81 : vector<4x1x10xf32>
    %cst_41 = arith.constant 0.000000e+00 : f32
    %83 = vector.broadcast %cst_41 : f32 to vector<4x1x10xf32>
    %84 = arith.maximumf %82, %83 : vector<4x1x10xf32>
    %c0_42 = arith.constant 0 : index
    %c11 = arith.constant 11 : index
    %c0_43 = arith.constant 0 : index
    %85 = vector.load %arg7[%c0_42, %c11, %c0_43] : memref<12x12x10xf32, #tpu.memory_space<vmem>>, vector<4x1x10xf32>
    tpu.vector_store %arg7[%c0_42, %c11, %c0_43], %84 {strides = array<i32>} : memref<12x12x10xf32, #tpu.memory_space<vmem>>, vector<4x1x10xf32>,
    %c0_44 = arith.constant 0 : index
    %c8_45 = arith.constant 8 : index
    %c0_46 = arith.constant 0 : index
    %c0_47 = arith.constant 0 : index
    %86 = vector.load %arg1[%c0_44, %c8_45, %c0_46, %c0_47] : memref<1x24x24x25xf32, #tpu.memory_space<vmem>>, vector<1x8x24x25xf32>
    %87 = vector.shape_cast %86 : vector<1x8x24x25xf32> to vector<8x24x25xf32>
    %88 = vector.shape_cast %87 : vector<8x24x25xf32> to vector<192x25xf32>
    %cst_48 = arith.constant dense<0.000000e+00> : vector<192x10xf32>
    %89 = tpu.matmul %88, %0, %cst_48 {dimension_numbers = #tpu.dot_dimension_numbers<[1], [0], [0], [1], [0, 0, 1, 1], [], []>} : vector<192x25xf32>, vector<25x10xf32>, vector<192x10xf32> -> vector<192x10xf32>
    %90 = vector.broadcast %1 : vector<1x10xf32> to vector<192x10xf32>
    %91 = arith.addf %89, %90 : vector<192x10xf32>
    %92 = vector.shape_cast %91 : vector<192x10xf32> to vector<4x2x24x10xf32>
    %93 = vector.extract_strided_slice %92 {offsets = [0, 0, 0, 0], sizes = [4, 1, 24, 10], strides = [1, 1, 1, 1]} : vector<4x2x24x10xf32> to vector<4x1x24x10xf32>
    %94 = vector.shape_cast %93 : vector<4x1x24x10xf32> to vector<4x24x10xf32>
    %95 = vector.extract_strided_slice %92 {offsets = [0, 1, 0, 0], sizes = [4, 1, 24, 10], strides = [1, 1, 1, 1]} : vector<4x2x24x10xf32> to vector<4x1x24x10xf32>
    %96 = vector.shape_cast %95 : vector<4x1x24x10xf32> to vector<4x24x10xf32>
    %97 = arith.maximumf %94, %96 : vector<4x24x10xf32>
    %98 = vector.extract_strided_slice %97 {offsets = [0, 0, 0], sizes = [4, 1, 10], strides = [1, 1, 1]} : vector<4x24x10xf32> to vector<4x1x10xf32>
    %99 = vector.extract_strided_slice %97 {offsets = [0, 1, 0], sizes = [4, 1, 10], strides = [1, 1, 1]} : vector<4x24x10xf32> to vector<4x1x10xf32>
    %100 = arith.maximumf %98, %99 : vector<4x1x10xf32>
    %cst_49 = arith.constant 0.000000e+00 : f32
    %101 = vector.broadcast %cst_49 : f32 to vector<4x1x10xf32>
    %102 = arith.maximumf %100, %101 : vector<4x1x10xf32>
    %c4_50 = arith.constant 4 : index
    %c0_51 = arith.constant 0 : index
    %c0_52 = arith.constant 0 : index
    %103 = vector.load %arg7[%c4_50, %c0_51, %c0_52] : memref<12x12x10xf32, #tpu.memory_space<vmem>>, vector<4x1x10xf32>
    tpu.vector_store %arg7[%c4_50, %c0_51, %c0_52], %102 {strides = array<i32>} : memref<12x12x10xf32, #tpu.memory_space<vmem>>, vector<4x1x10xf32>,
    %104 = vector.extract_strided_slice %97 {offsets = [0, 2, 0], sizes = [4, 1, 10], strides = [1, 1, 1]} : vector<4x24x10xf32> to vector<4x1x10xf32>
    %105 = vector.extract_strided_slice %97 {offsets = [0, 3, 0], sizes = [4, 1, 10], strides = [1, 1, 1]} : vector<4x24x10xf32> to vector<4x1x10xf32>
    %106 = arith.maximumf %104, %105 : vector<4x1x10xf32>
    %cst_53 = arith.constant 0.000000e+00 : f32
    %107 = vector.broadcast %cst_53 : f32 to vector<4x1x10xf32>
    %108 = arith.maximumf %106, %107 : vector<4x1x10xf32>
    %c4_54 = arith.constant 4 : index
    %c1_55 = arith.constant 1 : index
    %c0_56 = arith.constant 0 : index
    %109 = vector.load %arg7[%c4_54, %c1_55, %c0_56] : memref<12x12x10xf32, #tpu.memory_space<vmem>>, vector<4x1x10xf32>
    tpu.vector_store %arg7[%c4_54, %c1_55, %c0_56], %108 {strides = array<i32>} : memref<12x12x10xf32, #tpu.memory_space<vmem>>, vector<4x1x10xf32>,
    %110 = vector.extract_strided_slice %97 {offsets = [0, 4, 0], sizes = [4, 1, 10], strides = [1, 1, 1]} : vector<4x24x10xf32> to vector<4x1x10xf32>
    %111 = vector.extract_strided_slice %97 {offsets = [0, 5, 0], sizes = [4, 1, 10], strides = [1, 1, 1]} : vector<4x24x10xf32> to vector<4x1x10xf32>
    %112 = arith.maximumf %110, %111 : vector<4x1x10xf32>
    %cst_57 = arith.constant 0.000000e+00 : f32
    %113 = vector.broadcast %cst_57 : f32 to vector<4x1x10xf32>
    %114 = arith.maximumf %112, %113 : vector<4x1x10xf32>
    %c4_58 = arith.constant 4 : index
    %c2_59 = arith.constant 2 : index
    %c0_60 = arith.constant 0 : index
    %115 = vector.load %arg7[%c4_58, %c2_59, %c0_60] : memref<12x12x10xf32, #tpu.memory_space<vmem>>, vector<4x1x10xf32>
    tpu.vector_store %arg7[%c4_58, %c2_59, %c0_60], %114 {strides = array<i32>} : memref<12x12x10xf32, #tpu.memory_space<vmem>>, vector<4x1x10xf32>,
    %116 = vector.extract_strided_slice %97 {offsets = [0, 6, 0], sizes = [4, 1, 10], strides = [1, 1, 1]} : vector<4x24x10xf32> to vector<4x1x10xf32>
    %117 = vector.extract_strided_slice %97 {offsets = [0, 7, 0], sizes = [4, 1, 10], strides = [1, 1, 1]} : vector<4x24x10xf32> to vector<4x1x10xf32>
    %118 = arith.maximumf %116, %117 : vector<4x1x10xf32>
    %cst_61 = arith.constant 0.000000e+00 : f32
    %119 = vector.broadcast %cst_61 : f32 to vector<4x1x10xf32>
    %120 = arith.maximumf %118, %119 : vector<4x1x10xf32>
    %c4_62 = arith.constant 4 : index
    %c3_63 = arith.constant 3 : index
    %c0_64 = arith.constant 0 : index
    %121 = vector.load %arg7[%c4_62, %c3_63, %c0_64] : memref<12x12x10xf32, #tpu.memory_space<vmem>>, vector<4x1x10xf32>
    tpu.vector_store %arg7[%c4_62, %c3_63, %c0_64], %120 {strides = array<i32>} : memref<12x12x10xf32, #tpu.memory_space<vmem>>, vector<4x1x10xf32>,
    %122 = vector.extract_strided_slice %97 {offsets = [0, 8, 0], sizes = [4, 1, 10], strides = [1, 1, 1]} : vector<4x24x10xf32> to vector<4x1x10xf32>
    %123 = vector.extract_strided_slice %97 {offsets = [0, 9, 0], sizes = [4, 1, 10], strides = [1, 1, 1]} : vector<4x24x10xf32> to vector<4x1x10xf32>
    %124 = arith.maximumf %122, %123 : vector<4x1x10xf32>
    %cst_65 = arith.constant 0.000000e+00 : f32
    %125 = vector.broadcast %cst_65 : f32 to vector<4x1x10xf32>
    %126 = arith.maximumf %124, %125 : vector<4x1x10xf32>
    %c4_66 = arith.constant 4 : index
    %c4_67 = arith.constant 4 : index
    %c0_68 = arith.constant 0 : index
    %127 = vector.load %arg7[%c4_66, %c4_67, %c0_68] : memref<12x12x10xf32, #tpu.memory_space<vmem>>, vector<4x1x10xf32>
    tpu.vector_store %arg7[%c4_66, %c4_67, %c0_68], %126 {strides = array<i32>} : memref<12x12x10xf32, #tpu.memory_space<vmem>>, vector<4x1x10xf32>,
    %128 = vector.extract_strided_slice %97 {offsets = [0, 10, 0], sizes = [4, 1, 10], strides = [1, 1, 1]} : vector<4x24x10xf32> to vector<4x1x10xf32>
    %129 = vector.extract_strided_slice %97 {offsets = [0, 11, 0], sizes = [4, 1, 10], strides = [1, 1, 1]} : vector<4x24x10xf32> to vector<4x1x10xf32>
    %130 = arith.maximumf %128, %129 : vector<4x1x10xf32>
    %cst_69 = arith.constant 0.000000e+00 : f32
    %131 = vector.broadcast %cst_69 : f32 to vector<4x1x10xf32>
    %132 = arith.maximumf %130, %131 : vector<4x1x10xf32>
    %c4_70 = arith.constant 4 : index
    %c5_71 = arith.constant 5 : index
    %c0_72 = arith.constant 0 : index
    %133 = vector.load %arg7[%c4_70, %c5_71, %c0_72] : memref<12x12x10xf32, #tpu.memory_space<vmem>>, vector<4x1x10xf32>
    tpu.vector_store %arg7[%c4_70, %c5_71, %c0_72], %132 {strides = array<i32>} : memref<12x12x10xf32, #tpu.memory_space<vmem>>, vector<4x1x10xf32>,
    %134 = vector.extract_strided_slice %97 {offsets = [0, 12, 0], sizes = [4, 1, 10], strides = [1, 1, 1]} : vector<4x24x10xf32> to vector<4x1x10xf32>
    %135 = vector.extract_strided_slice %97 {offsets = [0, 13, 0], sizes = [4, 1, 10], strides = [1, 1, 1]} : vector<4x24x10xf32> to vector<4x1x10xf32>
    %136 = arith.maximumf %134, %135 : vector<4x1x10xf32>
    %cst_73 = arith.constant 0.000000e+00 : f32
    %137 = vector.broadcast %cst_73 : f32 to vector<4x1x10xf32>
    %138 = arith.maximumf %136, %137 : vector<4x1x10xf32>
    %c4_74 = arith.constant 4 : index
    %c6_75 = arith.constant 6 : index
    %c0_76 = arith.constant 0 : index
    %139 = vector.load %arg7[%c4_74, %c6_75, %c0_76] : memref<12x12x10xf32, #tpu.memory_space<vmem>>, vector<4x1x10xf32>
    tpu.vector_store %arg7[%c4_74, %c6_75, %c0_76], %138 {strides = array<i32>} : memref<12x12x10xf32, #tpu.memory_space<vmem>>, vector<4x1x10xf32>,
    %140 = vector.extract_strided_slice %97 {offsets = [0, 14, 0], sizes = [4, 1, 10], strides = [1, 1, 1]} : vector<4x24x10xf32> to vector<4x1x10xf32>
    %141 = vector.extract_strided_slice %97 {offsets = [0, 15, 0], sizes = [4, 1, 10], strides = [1, 1, 1]} : vector<4x24x10xf32> to vector<4x1x10xf32>
    %142 = arith.maximumf %140, %141 : vector<4x1x10xf32>
    %cst_77 = arith.constant 0.000000e+00 : f32
    %143 = vector.broadcast %cst_77 : f32 to vector<4x1x10xf32>
    %144 = arith.maximumf %142, %143 : vector<4x1x10xf32>
    %c4_78 = arith.constant 4 : index
    %c7_79 = arith.constant 7 : index
    %c0_80 = arith.constant 0 : index
    %145 = vector.load %arg7[%c4_78, %c7_79, %c0_80] : memref<12x12x10xf32, #tpu.memory_space<vmem>>, vector<4x1x10xf32>
    tpu.vector_store %arg7[%c4_78, %c7_79, %c0_80], %144 {strides = array<i32>} : memref<12x12x10xf32, #tpu.memory_space<vmem>>, vector<4x1x10xf32>,
    %146 = vector.extract_strided_slice %97 {offsets = [0, 16, 0], sizes = [4, 1, 10], strides = [1, 1, 1]} : vector<4x24x10xf32> to vector<4x1x10xf32>
    %147 = vector.extract_strided_slice %97 {offsets = [0, 17, 0], sizes = [4, 1, 10], strides = [1, 1, 1]} : vector<4x24x10xf32> to vector<4x1x10xf32>
    %148 = arith.maximumf %146, %147 : vector<4x1x10xf32>
    %cst_81 = arith.constant 0.000000e+00 : f32
    %149 = vector.broadcast %cst_81 : f32 to vector<4x1x10xf32>
    %150 = arith.maximumf %148, %149 : vector<4x1x10xf32>
    %c4_82 = arith.constant 4 : index
    %c8_83 = arith.constant 8 : index
    %c0_84 = arith.constant 0 : index
    %151 = vector.load %arg7[%c4_82, %c8_83, %c0_84] : memref<12x12x10xf32, #tpu.memory_space<vmem>>, vector<4x1x10xf32>
    tpu.vector_store %arg7[%c4_82, %c8_83, %c0_84], %150 {strides = array<i32>} : memref<12x12x10xf32, #tpu.memory_space<vmem>>, vector<4x1x10xf32>,
    %152 = vector.extract_strided_slice %97 {offsets = [0, 18, 0], sizes = [4, 1, 10], strides = [1, 1, 1]} : vector<4x24x10xf32> to vector<4x1x10xf32>
    %153 = vector.extract_strided_slice %97 {offsets = [0, 19, 0], sizes = [4, 1, 10], strides = [1, 1, 1]} : vector<4x24x10xf32> to vector<4x1x10xf32>
    %154 = arith.maximumf %152, %153 : vector<4x1x10xf32>
    %cst_85 = arith.constant 0.000000e+00 : f32
    %155 = vector.broadcast %cst_85 : f32 to vector<4x1x10xf32>
    %156 = arith.maximumf %154, %155 : vector<4x1x10xf32>
    %c4_86 = arith.constant 4 : index
    %c9_87 = arith.constant 9 : index
    %c0_88 = arith.constant 0 : index
    %157 = vector.load %arg7[%c4_86, %c9_87, %c0_88] : memref<12x12x10xf32, #tpu.memory_space<vmem>>, vector<4x1x10xf32>
    tpu.vector_store %arg7[%c4_86, %c9_87, %c0_88], %156 {strides = array<i32>} : memref<12x12x10xf32, #tpu.memory_space<vmem>>, vector<4x1x10xf32>,
    %158 = vector.extract_strided_slice %97 {offsets = [0, 20, 0], sizes = [4, 1, 10], strides = [1, 1, 1]} : vector<4x24x10xf32> to vector<4x1x10xf32>
    %159 = vector.extract_strided_slice %97 {offsets = [0, 21, 0], sizes = [4, 1, 10], strides = [1, 1, 1]} : vector<4x24x10xf32> to vector<4x1x10xf32>
    %160 = arith.maximumf %158, %159 : vector<4x1x10xf32>
    %cst_89 = arith.constant 0.000000e+00 : f32
    %161 = vector.broadcast %cst_89 : f32 to vector<4x1x10xf32>
    %162 = arith.maximumf %160, %161 : vector<4x1x10xf32>
    %c4_90 = arith.constant 4 : index
    %c10_91 = arith.constant 10 : index
    %c0_92 = arith.constant 0 : index
    %163 = vector.load %arg7[%c4_90, %c10_91, %c0_92] : memref<12x12x10xf32, #tpu.memory_space<vmem>>, vector<4x1x10xf32>
    tpu.vector_store %arg7[%c4_90, %c10_91, %c0_92], %162 {strides = array<i32>} : memref<12x12x10xf32, #tpu.memory_space<vmem>>, vector<4x1x10xf32>,
    %164 = vector.extract_strided_slice %97 {offsets = [0, 22, 0], sizes = [4, 1, 10], strides = [1, 1, 1]} : vector<4x24x10xf32> to vector<4x1x10xf32>
    %165 = vector.extract_strided_slice %97 {offsets = [0, 23, 0], sizes = [4, 1, 10], strides = [1, 1, 1]} : vector<4x24x10xf32> to vector<4x1x10xf32>
    %166 = arith.maximumf %164, %165 : vector<4x1x10xf32>
    %cst_93 = arith.constant 0.000000e+00 : f32
    %167 = vector.broadcast %cst_93 : f32 to vector<4x1x10xf32>
    %168 = arith.maximumf %166, %167 : vector<4x1x10xf32>
    %c4_94 = arith.constant 4 : index
    %c11_95 = arith.constant 11 : index
    %c0_96 = arith.constant 0 : index
    %169 = vector.load %arg7[%c4_94, %c11_95, %c0_96] : memref<12x12x10xf32, #tpu.memory_space<vmem>>, vector<4x1x10xf32>
    tpu.vector_store %arg7[%c4_94, %c11_95, %c0_96], %168 {strides = array<i32>} : memref<12x12x10xf32, #tpu.memory_space<vmem>>, vector<4x1x10xf32>,
    %c0_97 = arith.constant 0 : index
    %c16 = arith.constant 16 : index
    %c0_98 = arith.constant 0 : index
    %c0_99 = arith.constant 0 : index
    %170 = vector.load %arg1[%c0_97, %c16, %c0_98, %c0_99] : memref<1x24x24x25xf32, #tpu.memory_space<vmem>>, vector<1x8x24x25xf32>
    %171 = vector.shape_cast %170 : vector<1x8x24x25xf32> to vector<8x24x25xf32>
    %172 = vector.shape_cast %171 : vector<8x24x25xf32> to vector<192x25xf32>
    %cst_100 = arith.constant dense<0.000000e+00> : vector<192x10xf32>
    %173 = tpu.matmul %172, %0, %cst_100 {dimension_numbers = #tpu.dot_dimension_numbers<[1], [0], [0], [1], [0, 0, 1, 1], [], []>} : vector<192x25xf32>, vector<25x10xf32>, vector<192x10xf32> -> vector<192x10xf32>
    %174 = vector.broadcast %1 : vector<1x10xf32> to vector<192x10xf32>
    %175 = arith.addf %173, %174 : vector<192x10xf32>
    %176 = vector.shape_cast %175 : vector<192x10xf32> to vector<4x2x24x10xf32>
    %177 = vector.extract_strided_slice %176 {offsets = [0, 0, 0, 0], sizes = [4, 1, 24, 10], strides = [1, 1, 1, 1]} : vector<4x2x24x10xf32> to vector<4x1x24x10xf32>
    %178 = vector.shape_cast %177 : vector<4x1x24x10xf32> to vector<4x24x10xf32>
    %179 = vector.extract_strided_slice %176 {offsets = [0, 1, 0, 0], sizes = [4, 1, 24, 10], strides = [1, 1, 1, 1]} : vector<4x2x24x10xf32> to vector<4x1x24x10xf32>
    %180 = vector.shape_cast %179 : vector<4x1x24x10xf32> to vector<4x24x10xf32>
    %181 = arith.maximumf %178, %180 : vector<4x24x10xf32>
    %182 = vector.extract_strided_slice %181 {offsets = [0, 0, 0], sizes = [4, 1, 10], strides = [1, 1, 1]} : vector<4x24x10xf32> to vector<4x1x10xf32>
    %183 = vector.extract_strided_slice %181 {offsets = [0, 1, 0], sizes = [4, 1, 10], strides = [1, 1, 1]} : vector<4x24x10xf32> to vector<4x1x10xf32>
    %184 = arith.maximumf %182, %183 : vector<4x1x10xf32>
    %cst_101 = arith.constant 0.000000e+00 : f32
    %185 = vector.broadcast %cst_101 : f32 to vector<4x1x10xf32>
    %186 = arith.maximumf %184, %185 : vector<4x1x10xf32>
    %c8_102 = arith.constant 8 : index
    %c0_103 = arith.constant 0 : index
    %c0_104 = arith.constant 0 : index
    %187 = vector.load %arg7[%c8_102, %c0_103, %c0_104] : memref<12x12x10xf32, #tpu.memory_space<vmem>>, vector<4x1x10xf32>
    tpu.vector_store %arg7[%c8_102, %c0_103, %c0_104], %186 {strides = array<i32>} : memref<12x12x10xf32, #tpu.memory_space<vmem>>, vector<4x1x10xf32>,
    %188 = vector.extract_strided_slice %181 {offsets = [0, 2, 0], sizes = [4, 1, 10], strides = [1, 1, 1]} : vector<4x24x10xf32> to vector<4x1x10xf32>
    %189 = vector.extract_strided_slice %181 {offsets = [0, 3, 0], sizes = [4, 1, 10], strides = [1, 1, 1]} : vector<4x24x10xf32> to vector<4x1x10xf32>
    %190 = arith.maximumf %188, %189 : vector<4x1x10xf32>
    %cst_105 = arith.constant 0.000000e+00 : f32
    %191 = vector.broadcast %cst_105 : f32 to vector<4x1x10xf32>
    %192 = arith.maximumf %190, %191 : vector<4x1x10xf32>
    %c8_106 = arith.constant 8 : index
    %c1_107 = arith.constant 1 : index
    %c0_108 = arith.constant 0 : index
    %193 = vector.load %arg7[%c8_106, %c1_107, %c0_108] : memref<12x12x10xf32, #tpu.memory_space<vmem>>, vector<4x1x10xf32>
    tpu.vector_store %arg7[%c8_106, %c1_107, %c0_108], %192 {strides = array<i32>} : memref<12x12x10xf32, #tpu.memory_space<vmem>>, vector<4x1x10xf32>,
    %194 = vector.extract_strided_slice %181 {offsets = [0, 4, 0], sizes = [4, 1, 10], strides = [1, 1, 1]} : vector<4x24x10xf32> to vector<4x1x10xf32>
    %195 = vector.extract_strided_slice %181 {offsets = [0, 5, 0], sizes = [4, 1, 10], strides = [1, 1, 1]} : vector<4x24x10xf32> to vector<4x1x10xf32>
    %196 = arith.maximumf %194, %195 : vector<4x1x10xf32>
    %cst_109 = arith.constant 0.000000e+00 : f32
    %197 = vector.broadcast %cst_109 : f32 to vector<4x1x10xf32>
    %198 = arith.maximumf %196, %197 : vector<4x1x10xf32>
    %c8_110 = arith.constant 8 : index
    %c2_111 = arith.constant 2 : index
    %c0_112 = arith.constant 0 : index
    %199 = vector.load %arg7[%c8_110, %c2_111, %c0_112] : memref<12x12x10xf32, #tpu.memory_space<vmem>>, vector<4x1x10xf32>
    tpu.vector_store %arg7[%c8_110, %c2_111, %c0_112], %198 {strides = array<i32>} : memref<12x12x10xf32, #tpu.memory_space<vmem>>, vector<4x1x10xf32>,
    %200 = vector.extract_strided_slice %181 {offsets = [0, 6, 0], sizes = [4, 1, 10], strides = [1, 1, 1]} : vector<4x24x10xf32> to vector<4x1x10xf32>
    %201 = vector.extract_strided_slice %181 {offsets = [0, 7, 0], sizes = [4, 1, 10], strides = [1, 1, 1]} : vector<4x24x10xf32> to vector<4x1x10xf32>
    %202 = arith.maximumf %200, %201 : vector<4x1x10xf32>
    %cst_113 = arith.constant 0.000000e+00 : f32
    %203 = vector.broadcast %cst_113 : f32 to vector<4x1x10xf32>
    %204 = arith.maximumf %202, %203 : vector<4x1x10xf32>
    %c8_114 = arith.constant 8 : index
    %c3_115 = arith.constant 3 : index
    %c0_116 = arith.constant 0 : index
    %205 = vector.load %arg7[%c8_114, %c3_115, %c0_116] : memref<12x12x10xf32, #tpu.memory_space<vmem>>, vector<4x1x10xf32>
    tpu.vector_store %arg7[%c8_114, %c3_115, %c0_116], %204 {strides = array<i32>} : memref<12x12x10xf32, #tpu.memory_space<vmem>>, vector<4x1x10xf32>,
    %206 = vector.extract_strided_slice %181 {offsets = [0, 8, 0], sizes = [4, 1, 10], strides = [1, 1, 1]} : vector<4x24x10xf32> to vector<4x1x10xf32>
    %207 = vector.extract_strided_slice %181 {offsets = [0, 9, 0], sizes = [4, 1, 10], strides = [1, 1, 1]} : vector<4x24x10xf32> to vector<4x1x10xf32>
    %208 = arith.maximumf %206, %207 : vector<4x1x10xf32>
    %cst_117 = arith.constant 0.000000e+00 : f32
    %209 = vector.broadcast %cst_117 : f32 to vector<4x1x10xf32>
    %210 = arith.maximumf %208, %209 : vector<4x1x10xf32>
    %c8_118 = arith.constant 8 : index
    %c4_119 = arith.constant 4 : index
    %c0_120 = arith.constant 0 : index
    %211 = vector.load %arg7[%c8_118, %c4_119, %c0_120] : memref<12x12x10xf32, #tpu.memory_space<vmem>>, vector<4x1x10xf32>
    tpu.vector_store %arg7[%c8_118, %c4_119, %c0_120], %210 {strides = array<i32>} : memref<12x12x10xf32, #tpu.memory_space<vmem>>, vector<4x1x10xf32>,
    %212 = vector.extract_strided_slice %181 {offsets = [0, 10, 0], sizes = [4, 1, 10], strides = [1, 1, 1]} : vector<4x24x10xf32> to vector<4x1x10xf32>
    %213 = vector.extract_strided_slice %181 {offsets = [0, 11, 0], sizes = [4, 1, 10], strides = [1, 1, 1]} : vector<4x24x10xf32> to vector<4x1x10xf32>
    %214 = arith.maximumf %212, %213 : vector<4x1x10xf32>
    %cst_121 = arith.constant 0.000000e+00 : f32
    %215 = vector.broadcast %cst_121 : f32 to vector<4x1x10xf32>
    %216 = arith.maximumf %214, %215 : vector<4x1x10xf32>
    %c8_122 = arith.constant 8 : index
    %c5_123 = arith.constant 5 : index
    %c0_124 = arith.constant 0 : index
    %217 = vector.load %arg7[%c8_122, %c5_123, %c0_124] : memref<12x12x10xf32, #tpu.memory_space<vmem>>, vector<4x1x10xf32>
    tpu.vector_store %arg7[%c8_122, %c5_123, %c0_124], %216 {strides = array<i32>} : memref<12x12x10xf32, #tpu.memory_space<vmem>>, vector<4x1x10xf32>,
    %218 = vector.extract_strided_slice %181 {offsets = [0, 12, 0], sizes = [4, 1, 10], strides = [1, 1, 1]} : vector<4x24x10xf32> to vector<4x1x10xf32>
    %219 = vector.extract_strided_slice %181 {offsets = [0, 13, 0], sizes = [4, 1, 10], strides = [1, 1, 1]} : vector<4x24x10xf32> to vector<4x1x10xf32>
    %220 = arith.maximumf %218, %219 : vector<4x1x10xf32>
    %cst_125 = arith.constant 0.000000e+00 : f32
    %221 = vector.broadcast %cst_125 : f32 to vector<4x1x10xf32>
    %222 = arith.maximumf %220, %221 : vector<4x1x10xf32>
    %c8_126 = arith.constant 8 : index
    %c6_127 = arith.constant 6 : index
    %c0_128 = arith.constant 0 : index
    %223 = vector.load %arg7[%c8_126, %c6_127, %c0_128] : memref<12x12x10xf32, #tpu.memory_space<vmem>>, vector<4x1x10xf32>
    tpu.vector_store %arg7[%c8_126, %c6_127, %c0_128], %222 {strides = array<i32>} : memref<12x12x10xf32, #tpu.memory_space<vmem>>, vector<4x1x10xf32>,
    %224 = vector.extract_strided_slice %181 {offsets = [0, 14, 0], sizes = [4, 1, 10], strides = [1, 1, 1]} : vector<4x24x10xf32> to vector<4x1x10xf32>
    %225 = vector.extract_strided_slice %181 {offsets = [0, 15, 0], sizes = [4, 1, 10], strides = [1, 1, 1]} : vector<4x24x10xf32> to vector<4x1x10xf32>
    %226 = arith.maximumf %224, %225 : vector<4x1x10xf32>
    %cst_129 = arith.constant 0.000000e+00 : f32
    %227 = vector.broadcast %cst_129 : f32 to vector<4x1x10xf32>
    %228 = arith.maximumf %226, %227 : vector<4x1x10xf32>
    %c8_130 = arith.constant 8 : index
    %c7_131 = arith.constant 7 : index
    %c0_132 = arith.constant 0 : index
    %229 = vector.load %arg7[%c8_130, %c7_131, %c0_132] : memref<12x12x10xf32, #tpu.memory_space<vmem>>, vector<4x1x10xf32>
    tpu.vector_store %arg7[%c8_130, %c7_131, %c0_132], %228 {strides = array<i32>} : memref<12x12x10xf32, #tpu.memory_space<vmem>>, vector<4x1x10xf32>,
    %230 = vector.extract_strided_slice %181 {offsets = [0, 16, 0], sizes = [4, 1, 10], strides = [1, 1, 1]} : vector<4x24x10xf32> to vector<4x1x10xf32>
    %231 = vector.extract_strided_slice %181 {offsets = [0, 17, 0], sizes = [4, 1, 10], strides = [1, 1, 1]} : vector<4x24x10xf32> to vector<4x1x10xf32>
    %232 = arith.maximumf %230, %231 : vector<4x1x10xf32>
    %cst_133 = arith.constant 0.000000e+00 : f32
    %233 = vector.broadcast %cst_133 : f32 to vector<4x1x10xf32>
    %234 = arith.maximumf %232, %233 : vector<4x1x10xf32>
    %c8_134 = arith.constant 8 : index
    %c8_135 = arith.constant 8 : index
    %c0_136 = arith.constant 0 : index
    %235 = vector.load %arg7[%c8_134, %c8_135, %c0_136] : memref<12x12x10xf32, #tpu.memory_space<vmem>>, vector<4x1x10xf32>
    tpu.vector_store %arg7[%c8_134, %c8_135, %c0_136], %234 {strides = array<i32>} : memref<12x12x10xf32, #tpu.memory_space<vmem>>, vector<4x1x10xf32>,
    %236 = vector.extract_strided_slice %181 {offsets = [0, 18, 0], sizes = [4, 1, 10], strides = [1, 1, 1]} : vector<4x24x10xf32> to vector<4x1x10xf32>
    %237 = vector.extract_strided_slice %181 {offsets = [0, 19, 0], sizes = [4, 1, 10], strides = [1, 1, 1]} : vector<4x24x10xf32> to vector<4x1x10xf32>
    %238 = arith.maximumf %236, %237 : vector<4x1x10xf32>
    %cst_137 = arith.constant 0.000000e+00 : f32
    %239 = vector.broadcast %cst_137 : f32 to vector<4x1x10xf32>
    %240 = arith.maximumf %238, %239 : vector<4x1x10xf32>
    %c8_138 = arith.constant 8 : index
    %c9_139 = arith.constant 9 : index
    %c0_140 = arith.constant 0 : index
    %241 = vector.load %arg7[%c8_138, %c9_139, %c0_140] : memref<12x12x10xf32, #tpu.memory_space<vmem>>, vector<4x1x10xf32>
    tpu.vector_store %arg7[%c8_138, %c9_139, %c0_140], %240 {strides = array<i32>} : memref<12x12x10xf32, #tpu.memory_space<vmem>>, vector<4x1x10xf32>,
    %242 = vector.extract_strided_slice %181 {offsets = [0, 20, 0], sizes = [4, 1, 10], strides = [1, 1, 1]} : vector<4x24x10xf32> to vector<4x1x10xf32>
    %243 = vector.extract_strided_slice %181 {offsets = [0, 21, 0], sizes = [4, 1, 10], strides = [1, 1, 1]} : vector<4x24x10xf32> to vector<4x1x10xf32>
    %244 = arith.maximumf %242, %243 : vector<4x1x10xf32>
    %cst_141 = arith.constant 0.000000e+00 : f32
    %245 = vector.broadcast %cst_141 : f32 to vector<4x1x10xf32>
    %246 = arith.maximumf %244, %245 : vector<4x1x10xf32>
    %c8_142 = arith.constant 8 : index
    %c10_143 = arith.constant 10 : index
    %c0_144 = arith.constant 0 : index
    %247 = vector.load %arg7[%c8_142, %c10_143, %c0_144] : memref<12x12x10xf32, #tpu.memory_space<vmem>>, vector<4x1x10xf32>
    tpu.vector_store %arg7[%c8_142, %c10_143, %c0_144], %246 {strides = array<i32>} : memref<12x12x10xf32, #tpu.memory_space<vmem>>, vector<4x1x10xf32>,
    %248 = vector.extract_strided_slice %181 {offsets = [0, 22, 0], sizes = [4, 1, 10], strides = [1, 1, 1]} : vector<4x24x10xf32> to vector<4x1x10xf32>
    %249 = vector.extract_strided_slice %181 {offsets = [0, 23, 0], sizes = [4, 1, 10], strides = [1, 1, 1]} : vector<4x24x10xf32> to vector<4x1x10xf32>
    %250 = arith.maximumf %248, %249 : vector<4x1x10xf32>
    %cst_145 = arith.constant 0.000000e+00 : f32
    %251 = vector.broadcast %cst_145 : f32 to vector<4x1x10xf32>
    %252 = arith.maximumf %250, %251 : vector<4x1x10xf32>
    %c8_146 = arith.constant 8 : index
    %c11_147 = arith.constant 11 : index
    %c0_148 = arith.constant 0 : index
    %253 = vector.load %arg7[%c8_146, %c11_147, %c0_148] : memref<12x12x10xf32, #tpu.memory_space<vmem>>, vector<4x1x10xf32>
    tpu.vector_store %arg7[%c8_146, %c11_147, %c0_148], %252 {strides = array<i32>} : memref<12x12x10xf32, #tpu.memory_space<vmem>>, vector<4x1x10xf32>,
    %c0_149 = arith.constant 0 : index
    %c0_150 = arith.constant 0 : index
    %254 = vector.load %arg5[%c0_149, %c0_150] : memref<1x20xf32, #tpu.memory_space<vmem>>, vector<1x20xf32>
    %255 = vector.shape_cast %254 : vector<1x20xf32> to vector<1x20xf32>
    %256 = vector.broadcast %255 : vector<1x20xf32> to vector<64x20xf32>
    %c0_151 = arith.constant 0 : index
    %c0_152 = arith.constant 0 : index
    %c0_153 = arith.constant 0 : index
    %257 = vector.load %arg7[%c0_151, %c0_152, %c0_153] : memref<12x12x10xf32, #tpu.memory_space<vmem>>, vector<8x8x10xf32>
    %258 = vector.shape_cast %257 : vector<8x8x10xf32> to vector<64x10xf32>
    %c0_154 = arith.constant 0 : index
    %c0_155 = arith.constant 0 : index
    %c0_156 = arith.constant 0 : index
    %259 = vector.load %arg4[%c0_154, %c0_155, %c0_156] : memref<25x10x20xf32, #tpu.memory_space<vmem>>, vector<1x10x20xf32>
    %260 = vector.shape_cast %259 : vector<1x10x20xf32> to vector<10x20xf32>
    %cst_157 = arith.constant dense<0.000000e+00> : vector<64x20xf32>
    %261 = tpu.matmul %258, %260, %cst_157 {dimension_numbers = #tpu.dot_dimension_numbers<[1], [0], [0], [1], [0, 0, 1, 1], [], []>} : vector<64x10xf32>, vector<10x20xf32>, vector<64x20xf32> -> vector<64x20xf32>
    %262 = arith.addf %256, %261 : vector<64x20xf32>
    %c0_158 = arith.constant 0 : index
    %c1_159 = arith.constant 1 : index
    %c0_160 = arith.constant 0 : index
    %263 = vector.load %arg7[%c0_158, %c1_159, %c0_160] : memref<12x12x10xf32, #tpu.memory_space<vmem>>, vector<8x8x10xf32>
    %264 = vector.shape_cast %263 : vector<8x8x10xf32> to vector<64x10xf32>
    %c1_161 = arith.constant 1 : index
    %c0_162 = arith.constant 0 : index
    %c0_163 = arith.constant 0 : index
    %265 = vector.load %arg4[%c1_161, %c0_162, %c0_163] : memref<25x10x20xf32, #tpu.memory_space<vmem>>, vector<1x10x20xf32>
    %266 = vector.shape_cast %265 : vector<1x10x20xf32> to vector<10x20xf32>
    %cst_164 = arith.constant dense<0.000000e+00> : vector<64x20xf32>
    %267 = tpu.matmul %264, %266, %cst_164 {dimension_numbers = #tpu.dot_dimension_numbers<[1], [0], [0], [1], [0, 0, 1, 1], [], []>} : vector<64x10xf32>, vector<10x20xf32>, vector<64x20xf32> -> vector<64x20xf32>
    %268 = arith.addf %262, %267 : vector<64x20xf32>
    %c0_165 = arith.constant 0 : index
    %c2_166 = arith.constant 2 : index
    %c0_167 = arith.constant 0 : index
    %269 = vector.load %arg7[%c0_165, %c2_166, %c0_167] : memref<12x12x10xf32, #tpu.memory_space<vmem>>, vector<8x8x10xf32>
    %270 = vector.shape_cast %269 : vector<8x8x10xf32> to vector<64x10xf32>
    %c2_168 = arith.constant 2 : index
    %c0_169 = arith.constant 0 : index
    %c0_170 = arith.constant 0 : index
    %271 = vector.load %arg4[%c2_168, %c0_169, %c0_170] : memref<25x10x20xf32, #tpu.memory_space<vmem>>, vector<1x10x20xf32>
    %272 = vector.shape_cast %271 : vector<1x10x20xf32> to vector<10x20xf32>
    %cst_171 = arith.constant dense<0.000000e+00> : vector<64x20xf32>
    %273 = tpu.matmul %270, %272, %cst_171 {dimension_numbers = #tpu.dot_dimension_numbers<[1], [0], [0], [1], [0, 0, 1, 1], [], []>} : vector<64x10xf32>, vector<10x20xf32>, vector<64x20xf32> -> vector<64x20xf32>
    %274 = arith.addf %268, %273 : vector<64x20xf32>
    %c0_172 = arith.constant 0 : index
    %c3_173 = arith.constant 3 : index
    %c0_174 = arith.constant 0 : index
    %275 = vector.load %arg7[%c0_172, %c3_173, %c0_174] : memref<12x12x10xf32, #tpu.memory_space<vmem>>, vector<8x8x10xf32>
    %276 = vector.shape_cast %275 : vector<8x8x10xf32> to vector<64x10xf32>
    %c3_175 = arith.constant 3 : index
    %c0_176 = arith.constant 0 : index
    %c0_177 = arith.constant 0 : index
    %277 = vector.load %arg4[%c3_175, %c0_176, %c0_177] : memref<25x10x20xf32, #tpu.memory_space<vmem>>, vector<1x10x20xf32>
    %278 = vector.shape_cast %277 : vector<1x10x20xf32> to vector<10x20xf32>
    %cst_178 = arith.constant dense<0.000000e+00> : vector<64x20xf32>
    %279 = tpu.matmul %276, %278, %cst_178 {dimension_numbers = #tpu.dot_dimension_numbers<[1], [0], [0], [1], [0, 0, 1, 1], [], []>} : vector<64x10xf32>, vector<10x20xf32>, vector<64x20xf32> -> vector<64x20xf32>
    %280 = arith.addf %274, %279 : vector<64x20xf32>
    %c0_179 = arith.constant 0 : index
    %c4_180 = arith.constant 4 : index
    %c0_181 = arith.constant 0 : index
    %281 = vector.load %arg7[%c0_179, %c4_180, %c0_181] : memref<12x12x10xf32, #tpu.memory_space<vmem>>, vector<8x8x10xf32>
    %282 = vector.shape_cast %281 : vector<8x8x10xf32> to vector<64x10xf32>
    %c4_182 = arith.constant 4 : index
    %c0_183 = arith.constant 0 : index
    %c0_184 = arith.constant 0 : index
    %283 = vector.load %arg4[%c4_182, %c0_183, %c0_184] : memref<25x10x20xf32, #tpu.memory_space<vmem>>, vector<1x10x20xf32>
    %284 = vector.shape_cast %283 : vector<1x10x20xf32> to vector<10x20xf32>
    %cst_185 = arith.constant dense<0.000000e+00> : vector<64x20xf32>
    %285 = tpu.matmul %282, %284, %cst_185 {dimension_numbers = #tpu.dot_dimension_numbers<[1], [0], [0], [1], [0, 0, 1, 1], [], []>} : vector<64x10xf32>, vector<10x20xf32>, vector<64x20xf32> -> vector<64x20xf32>
    %286 = arith.addf %280, %285 : vector<64x20xf32>
    %c1_186 = arith.constant 1 : index
    %c0_187 = arith.constant 0 : index
    %c0_188 = arith.constant 0 : index
    %287 = vector.load %arg7[%c1_186, %c0_187, %c0_188] : memref<12x12x10xf32, #tpu.memory_space<vmem>>, vector<8x8x10xf32>
    %288 = vector.shape_cast %287 : vector<8x8x10xf32> to vector<64x10xf32>
    %c5_189 = arith.constant 5 : index
    %c0_190 = arith.constant 0 : index
    %c0_191 = arith.constant 0 : index
    %289 = vector.load %arg4[%c5_189, %c0_190, %c0_191] : memref<25x10x20xf32, #tpu.memory_space<vmem>>, vector<1x10x20xf32>
    %290 = vector.shape_cast %289 : vector<1x10x20xf32> to vector<10x20xf32>
    %cst_192 = arith.constant dense<0.000000e+00> : vector<64x20xf32>
    %291 = tpu.matmul %288, %290, %cst_192 {dimension_numbers = #tpu.dot_dimension_numbers<[1], [0], [0], [1], [0, 0, 1, 1], [], []>} : vector<64x10xf32>, vector<10x20xf32>, vector<64x20xf32> -> vector<64x20xf32>
    %292 = arith.addf %286, %291 : vector<64x20xf32>
    %c1_193 = arith.constant 1 : index
    %c1_194 = arith.constant 1 : index
    %c0_195 = arith.constant 0 : index
    %293 = vector.load %arg7[%c1_193, %c1_194, %c0_195] : memref<12x12x10xf32, #tpu.memory_space<vmem>>, vector<8x8x10xf32>
    %294 = vector.shape_cast %293 : vector<8x8x10xf32> to vector<64x10xf32>
    %c6_196 = arith.constant 6 : index
    %c0_197 = arith.constant 0 : index
    %c0_198 = arith.constant 0 : index
    %295 = vector.load %arg4[%c6_196, %c0_197, %c0_198] : memref<25x10x20xf32, #tpu.memory_space<vmem>>, vector<1x10x20xf32>
    %296 = vector.shape_cast %295 : vector<1x10x20xf32> to vector<10x20xf32>
    %cst_199 = arith.constant dense<0.000000e+00> : vector<64x20xf32>
    %297 = tpu.matmul %294, %296, %cst_199 {dimension_numbers = #tpu.dot_dimension_numbers<[1], [0], [0], [1], [0, 0, 1, 1], [], []>} : vector<64x10xf32>, vector<10x20xf32>, vector<64x20xf32> -> vector<64x20xf32>
    %298 = arith.addf %292, %297 : vector<64x20xf32>
    %c1_200 = arith.constant 1 : index
    %c2_201 = arith.constant 2 : index
    %c0_202 = arith.constant 0 : index
    %299 = vector.load %arg7[%c1_200, %c2_201, %c0_202] : memref<12x12x10xf32, #tpu.memory_space<vmem>>, vector<8x8x10xf32>
    %300 = vector.shape_cast %299 : vector<8x8x10xf32> to vector<64x10xf32>
    %c7_203 = arith.constant 7 : index
    %c0_204 = arith.constant 0 : index
    %c0_205 = arith.constant 0 : index
    %301 = vector.load %arg4[%c7_203, %c0_204, %c0_205] : memref<25x10x20xf32, #tpu.memory_space<vmem>>, vector<1x10x20xf32>
    %302 = vector.shape_cast %301 : vector<1x10x20xf32> to vector<10x20xf32>
    %cst_206 = arith.constant dense<0.000000e+00> : vector<64x20xf32>
    %303 = tpu.matmul %300, %302, %cst_206 {dimension_numbers = #tpu.dot_dimension_numbers<[1], [0], [0], [1], [0, 0, 1, 1], [], []>} : vector<64x10xf32>, vector<10x20xf32>, vector<64x20xf32> -> vector<64x20xf32>
    %304 = arith.addf %298, %303 : vector<64x20xf32>
    %c1_207 = arith.constant 1 : index
    %c3_208 = arith.constant 3 : index
    %c0_209 = arith.constant 0 : index
    %305 = vector.load %arg7[%c1_207, %c3_208, %c0_209] : memref<12x12x10xf32, #tpu.memory_space<vmem>>, vector<8x8x10xf32>
    %306 = vector.shape_cast %305 : vector<8x8x10xf32> to vector<64x10xf32>
    %c8_210 = arith.constant 8 : index
    %c0_211 = arith.constant 0 : index
    %c0_212 = arith.constant 0 : index
    %307 = vector.load %arg4[%c8_210, %c0_211, %c0_212] : memref<25x10x20xf32, #tpu.memory_space<vmem>>, vector<1x10x20xf32>
    %308 = vector.shape_cast %307 : vector<1x10x20xf32> to vector<10x20xf32>
    %cst_213 = arith.constant dense<0.000000e+00> : vector<64x20xf32>
    %309 = tpu.matmul %306, %308, %cst_213 {dimension_numbers = #tpu.dot_dimension_numbers<[1], [0], [0], [1], [0, 0, 1, 1], [], []>} : vector<64x10xf32>, vector<10x20xf32>, vector<64x20xf32> -> vector<64x20xf32>
    %310 = arith.addf %304, %309 : vector<64x20xf32>
    %c1_214 = arith.constant 1 : index
    %c4_215 = arith.constant 4 : index
    %c0_216 = arith.constant 0 : index
    %311 = vector.load %arg7[%c1_214, %c4_215, %c0_216] : memref<12x12x10xf32, #tpu.memory_space<vmem>>, vector<8x8x10xf32>
    %312 = vector.shape_cast %311 : vector<8x8x10xf32> to vector<64x10xf32>
    %c9_217 = arith.constant 9 : index
    %c0_218 = arith.constant 0 : index
    %c0_219 = arith.constant 0 : index
    %313 = vector.load %arg4[%c9_217, %c0_218, %c0_219] : memref<25x10x20xf32, #tpu.memory_space<vmem>>, vector<1x10x20xf32>
    %314 = vector.shape_cast %313 : vector<1x10x20xf32> to vector<10x20xf32>
    %cst_220 = arith.constant dense<0.000000e+00> : vector<64x20xf32>
    %315 = tpu.matmul %312, %314, %cst_220 {dimension_numbers = #tpu.dot_dimension_numbers<[1], [0], [0], [1], [0, 0, 1, 1], [], []>} : vector<64x10xf32>, vector<10x20xf32>, vector<64x20xf32> -> vector<64x20xf32>
    %316 = arith.addf %310, %315 : vector<64x20xf32>
    %c2_221 = arith.constant 2 : index
    %c0_222 = arith.constant 0 : index
    %c0_223 = arith.constant 0 : index
    %317 = vector.load %arg7[%c2_221, %c0_222, %c0_223] : memref<12x12x10xf32, #tpu.memory_space<vmem>>, vector<8x8x10xf32>
    %318 = vector.shape_cast %317 : vector<8x8x10xf32> to vector<64x10xf32>
    %c10_224 = arith.constant 10 : index
    %c0_225 = arith.constant 0 : index
    %c0_226 = arith.constant 0 : index
    %319 = vector.load %arg4[%c10_224, %c0_225, %c0_226] : memref<25x10x20xf32, #tpu.memory_space<vmem>>, vector<1x10x20xf32>
    %320 = vector.shape_cast %319 : vector<1x10x20xf32> to vector<10x20xf32>
    %cst_227 = arith.constant dense<0.000000e+00> : vector<64x20xf32>
    %321 = tpu.matmul %318, %320, %cst_227 {dimension_numbers = #tpu.dot_dimension_numbers<[1], [0], [0], [1], [0, 0, 1, 1], [], []>} : vector<64x10xf32>, vector<10x20xf32>, vector<64x20xf32> -> vector<64x20xf32>
    %322 = arith.addf %316, %321 : vector<64x20xf32>
    %c2_228 = arith.constant 2 : index
    %c1_229 = arith.constant 1 : index
    %c0_230 = arith.constant 0 : index
    %323 = vector.load %arg7[%c2_228, %c1_229, %c0_230] : memref<12x12x10xf32, #tpu.memory_space<vmem>>, vector<8x8x10xf32>
    %324 = vector.shape_cast %323 : vector<8x8x10xf32> to vector<64x10xf32>
    %c11_231 = arith.constant 11 : index
    %c0_232 = arith.constant 0 : index
    %c0_233 = arith.constant 0 : index
    %325 = vector.load %arg4[%c11_231, %c0_232, %c0_233] : memref<25x10x20xf32, #tpu.memory_space<vmem>>, vector<1x10x20xf32>
    %326 = vector.shape_cast %325 : vector<1x10x20xf32> to vector<10x20xf32>
    %cst_234 = arith.constant dense<0.000000e+00> : vector<64x20xf32>
    %327 = tpu.matmul %324, %326, %cst_234 {dimension_numbers = #tpu.dot_dimension_numbers<[1], [0], [0], [1], [0, 0, 1, 1], [], []>} : vector<64x10xf32>, vector<10x20xf32>, vector<64x20xf32> -> vector<64x20xf32>
    %328 = arith.addf %322, %327 : vector<64x20xf32>
    %c2_235 = arith.constant 2 : index
    %c2_236 = arith.constant 2 : index
    %c0_237 = arith.constant 0 : index
    %329 = vector.load %arg7[%c2_235, %c2_236, %c0_237] : memref<12x12x10xf32, #tpu.memory_space<vmem>>, vector<8x8x10xf32>
    %330 = vector.shape_cast %329 : vector<8x8x10xf32> to vector<64x10xf32>
    %c12 = arith.constant 12 : index
    %c0_238 = arith.constant 0 : index
    %c0_239 = arith.constant 0 : index
    %331 = vector.load %arg4[%c12, %c0_238, %c0_239] : memref<25x10x20xf32, #tpu.memory_space<vmem>>, vector<1x10x20xf32>
    %332 = vector.shape_cast %331 : vector<1x10x20xf32> to vector<10x20xf32>
    %cst_240 = arith.constant dense<0.000000e+00> : vector<64x20xf32>
    %333 = tpu.matmul %330, %332, %cst_240 {dimension_numbers = #tpu.dot_dimension_numbers<[1], [0], [0], [1], [0, 0, 1, 1], [], []>} : vector<64x10xf32>, vector<10x20xf32>, vector<64x20xf32> -> vector<64x20xf32>
    %334 = arith.addf %328, %333 : vector<64x20xf32>
    %c2_241 = arith.constant 2 : index
    %c3_242 = arith.constant 3 : index
    %c0_243 = arith.constant 0 : index
    %335 = vector.load %arg7[%c2_241, %c3_242, %c0_243] : memref<12x12x10xf32, #tpu.memory_space<vmem>>, vector<8x8x10xf32>
    %336 = vector.shape_cast %335 : vector<8x8x10xf32> to vector<64x10xf32>
    %c13 = arith.constant 13 : index
    %c0_244 = arith.constant 0 : index
    %c0_245 = arith.constant 0 : index
    %337 = vector.load %arg4[%c13, %c0_244, %c0_245] : memref<25x10x20xf32, #tpu.memory_space<vmem>>, vector<1x10x20xf32>
    %338 = vector.shape_cast %337 : vector<1x10x20xf32> to vector<10x20xf32>
    %cst_246 = arith.constant dense<0.000000e+00> : vector<64x20xf32>
    %339 = tpu.matmul %336, %338, %cst_246 {dimension_numbers = #tpu.dot_dimension_numbers<[1], [0], [0], [1], [0, 0, 1, 1], [], []>} : vector<64x10xf32>, vector<10x20xf32>, vector<64x20xf32> -> vector<64x20xf32>
    %340 = arith.addf %334, %339 : vector<64x20xf32>
    %c2_247 = arith.constant 2 : index
    %c4_248 = arith.constant 4 : index
    %c0_249 = arith.constant 0 : index
    %341 = vector.load %arg7[%c2_247, %c4_248, %c0_249] : memref<12x12x10xf32, #tpu.memory_space<vmem>>, vector<8x8x10xf32>
    %342 = vector.shape_cast %341 : vector<8x8x10xf32> to vector<64x10xf32>
    %c14 = arith.constant 14 : index
    %c0_250 = arith.constant 0 : index
    %c0_251 = arith.constant 0 : index
    %343 = vector.load %arg4[%c14, %c0_250, %c0_251] : memref<25x10x20xf32, #tpu.memory_space<vmem>>, vector<1x10x20xf32>
    %344 = vector.shape_cast %343 : vector<1x10x20xf32> to vector<10x20xf32>
    %cst_252 = arith.constant dense<0.000000e+00> : vector<64x20xf32>
    %345 = tpu.matmul %342, %344, %cst_252 {dimension_numbers = #tpu.dot_dimension_numbers<[1], [0], [0], [1], [0, 0, 1, 1], [], []>} : vector<64x10xf32>, vector<10x20xf32>, vector<64x20xf32> -> vector<64x20xf32>
    %346 = arith.addf %340, %345 : vector<64x20xf32>
    %c3_253 = arith.constant 3 : index
    %c0_254 = arith.constant 0 : index
    %c0_255 = arith.constant 0 : index
    %347 = vector.load %arg7[%c3_253, %c0_254, %c0_255] : memref<12x12x10xf32, #tpu.memory_space<vmem>>, vector<8x8x10xf32>
    %348 = vector.shape_cast %347 : vector<8x8x10xf32> to vector<64x10xf32>
    %c15 = arith.constant 15 : index
    %c0_256 = arith.constant 0 : index
    %c0_257 = arith.constant 0 : index
    %349 = vector.load %arg4[%c15, %c0_256, %c0_257] : memref<25x10x20xf32, #tpu.memory_space<vmem>>, vector<1x10x20xf32>
    %350 = vector.shape_cast %349 : vector<1x10x20xf32> to vector<10x20xf32>
    %cst_258 = arith.constant dense<0.000000e+00> : vector<64x20xf32>
    %351 = tpu.matmul %348, %350, %cst_258 {dimension_numbers = #tpu.dot_dimension_numbers<[1], [0], [0], [1], [0, 0, 1, 1], [], []>} : vector<64x10xf32>, vector<10x20xf32>, vector<64x20xf32> -> vector<64x20xf32>
    %352 = arith.addf %346, %351 : vector<64x20xf32>
    %c3_259 = arith.constant 3 : index
    %c1_260 = arith.constant 1 : index
    %c0_261 = arith.constant 0 : index
    %353 = vector.load %arg7[%c3_259, %c1_260, %c0_261] : memref<12x12x10xf32, #tpu.memory_space<vmem>>, vector<8x8x10xf32>
    %354 = vector.shape_cast %353 : vector<8x8x10xf32> to vector<64x10xf32>
    %c16_262 = arith.constant 16 : index
    %c0_263 = arith.constant 0 : index
    %c0_264 = arith.constant 0 : index
    %355 = vector.load %arg4[%c16_262, %c0_263, %c0_264] : memref<25x10x20xf32, #tpu.memory_space<vmem>>, vector<1x10x20xf32>
    %356 = vector.shape_cast %355 : vector<1x10x20xf32> to vector<10x20xf32>
    %cst_265 = arith.constant dense<0.000000e+00> : vector<64x20xf32>
    %357 = tpu.matmul %354, %356, %cst_265 {dimension_numbers = #tpu.dot_dimension_numbers<[1], [0], [0], [1], [0, 0, 1, 1], [], []>} : vector<64x10xf32>, vector<10x20xf32>, vector<64x20xf32> -> vector<64x20xf32>
    %358 = arith.addf %352, %357 : vector<64x20xf32>
    %c3_266 = arith.constant 3 : index
    %c2_267 = arith.constant 2 : index
    %c0_268 = arith.constant 0 : index
    %359 = vector.load %arg7[%c3_266, %c2_267, %c0_268] : memref<12x12x10xf32, #tpu.memory_space<vmem>>, vector<8x8x10xf32>
    %360 = vector.shape_cast %359 : vector<8x8x10xf32> to vector<64x10xf32>
    %c17 = arith.constant 17 : index
    %c0_269 = arith.constant 0 : index
    %c0_270 = arith.constant 0 : index
    %361 = vector.load %arg4[%c17, %c0_269, %c0_270] : memref<25x10x20xf32, #tpu.memory_space<vmem>>, vector<1x10x20xf32>
    %362 = vector.shape_cast %361 : vector<1x10x20xf32> to vector<10x20xf32>
    %cst_271 = arith.constant dense<0.000000e+00> : vector<64x20xf32>
    %363 = tpu.matmul %360, %362, %cst_271 {dimension_numbers = #tpu.dot_dimension_numbers<[1], [0], [0], [1], [0, 0, 1, 1], [], []>} : vector<64x10xf32>, vector<10x20xf32>, vector<64x20xf32> -> vector<64x20xf32>
    %364 = arith.addf %358, %363 : vector<64x20xf32>
    %c3_272 = arith.constant 3 : index
    %c3_273 = arith.constant 3 : index
    %c0_274 = arith.constant 0 : index
    %365 = vector.load %arg7[%c3_272, %c3_273, %c0_274] : memref<12x12x10xf32, #tpu.memory_space<vmem>>, vector<8x8x10xf32>
    %366 = vector.shape_cast %365 : vector<8x8x10xf32> to vector<64x10xf32>
    %c18 = arith.constant 18 : index
    %c0_275 = arith.constant 0 : index
    %c0_276 = arith.constant 0 : index
    %367 = vector.load %arg4[%c18, %c0_275, %c0_276] : memref<25x10x20xf32, #tpu.memory_space<vmem>>, vector<1x10x20xf32>
    %368 = vector.shape_cast %367 : vector<1x10x20xf32> to vector<10x20xf32>
    %cst_277 = arith.constant dense<0.000000e+00> : vector<64x20xf32>
    %369 = tpu.matmul %366, %368, %cst_277 {dimension_numbers = #tpu.dot_dimension_numbers<[1], [0], [0], [1], [0, 0, 1, 1], [], []>} : vector<64x10xf32>, vector<10x20xf32>, vector<64x20xf32> -> vector<64x20xf32>
    %370 = arith.addf %364, %369 : vector<64x20xf32>
    %c3_278 = arith.constant 3 : index
    %c4_279 = arith.constant 4 : index
    %c0_280 = arith.constant 0 : index
    %371 = vector.load %arg7[%c3_278, %c4_279, %c0_280] : memref<12x12x10xf32, #tpu.memory_space<vmem>>, vector<8x8x10xf32>
    %372 = vector.shape_cast %371 : vector<8x8x10xf32> to vector<64x10xf32>
    %c19 = arith.constant 19 : index
    %c0_281 = arith.constant 0 : index
    %c0_282 = arith.constant 0 : index
    %373 = vector.load %arg4[%c19, %c0_281, %c0_282] : memref<25x10x20xf32, #tpu.memory_space<vmem>>, vector<1x10x20xf32>
    %374 = vector.shape_cast %373 : vector<1x10x20xf32> to vector<10x20xf32>
    %cst_283 = arith.constant dense<0.000000e+00> : vector<64x20xf32>
    %375 = tpu.matmul %372, %374, %cst_283 {dimension_numbers = #tpu.dot_dimension_numbers<[1], [0], [0], [1], [0, 0, 1, 1], [], []>} : vector<64x10xf32>, vector<10x20xf32>, vector<64x20xf32> -> vector<64x20xf32>
    %376 = arith.addf %370, %375 : vector<64x20xf32>
    %c4_284 = arith.constant 4 : index
    %c0_285 = arith.constant 0 : index
    %c0_286 = arith.constant 0 : index
    %377 = vector.load %arg7[%c4_284, %c0_285, %c0_286] : memref<12x12x10xf32, #tpu.memory_space<vmem>>, vector<8x8x10xf32>
    %378 = vector.shape_cast %377 : vector<8x8x10xf32> to vector<64x10xf32>
    %c20 = arith.constant 20 : index
    %c0_287 = arith.constant 0 : index
    %c0_288 = arith.constant 0 : index
    %379 = vector.load %arg4[%c20, %c0_287, %c0_288] : memref<25x10x20xf32, #tpu.memory_space<vmem>>, vector<1x10x20xf32>
    %380 = vector.shape_cast %379 : vector<1x10x20xf32> to vector<10x20xf32>
    %cst_289 = arith.constant dense<0.000000e+00> : vector<64x20xf32>
    %381 = tpu.matmul %378, %380, %cst_289 {dimension_numbers = #tpu.dot_dimension_numbers<[1], [0], [0], [1], [0, 0, 1, 1], [], []>} : vector<64x10xf32>, vector<10x20xf32>, vector<64x20xf32> -> vector<64x20xf32>
    %382 = arith.addf %376, %381 : vector<64x20xf32>
    %c4_290 = arith.constant 4 : index
    %c1_291 = arith.constant 1 : index
    %c0_292 = arith.constant 0 : index
    %383 = vector.load %arg7[%c4_290, %c1_291, %c0_292] : memref<12x12x10xf32, #tpu.memory_space<vmem>>, vector<8x8x10xf32>
    %384 = vector.shape_cast %383 : vector<8x8x10xf32> to vector<64x10xf32>
    %c21 = arith.constant 21 : index
    %c0_293 = arith.constant 0 : index
    %c0_294 = arith.constant 0 : index
    %385 = vector.load %arg4[%c21, %c0_293, %c0_294] : memref<25x10x20xf32, #tpu.memory_space<vmem>>, vector<1x10x20xf32>
    %386 = vector.shape_cast %385 : vector<1x10x20xf32> to vector<10x20xf32>
    %cst_295 = arith.constant dense<0.000000e+00> : vector<64x20xf32>
    %387 = tpu.matmul %384, %386, %cst_295 {dimension_numbers = #tpu.dot_dimension_numbers<[1], [0], [0], [1], [0, 0, 1, 1], [], []>} : vector<64x10xf32>, vector<10x20xf32>, vector<64x20xf32> -> vector<64x20xf32>
    %388 = arith.addf %382, %387 : vector<64x20xf32>
    %c4_296 = arith.constant 4 : index
    %c2_297 = arith.constant 2 : index
    %c0_298 = arith.constant 0 : index
    %389 = vector.load %arg7[%c4_296, %c2_297, %c0_298] : memref<12x12x10xf32, #tpu.memory_space<vmem>>, vector<8x8x10xf32>
    %390 = vector.shape_cast %389 : vector<8x8x10xf32> to vector<64x10xf32>
    %c22 = arith.constant 22 : index
    %c0_299 = arith.constant 0 : index
    %c0_300 = arith.constant 0 : index
    %391 = vector.load %arg4[%c22, %c0_299, %c0_300] : memref<25x10x20xf32, #tpu.memory_space<vmem>>, vector<1x10x20xf32>
    %392 = vector.shape_cast %391 : vector<1x10x20xf32> to vector<10x20xf32>
    %cst_301 = arith.constant dense<0.000000e+00> : vector<64x20xf32>
    %393 = tpu.matmul %390, %392, %cst_301 {dimension_numbers = #tpu.dot_dimension_numbers<[1], [0], [0], [1], [0, 0, 1, 1], [], []>} : vector<64x10xf32>, vector<10x20xf32>, vector<64x20xf32> -> vector<64x20xf32>
    %394 = arith.addf %388, %393 : vector<64x20xf32>
    %c4_302 = arith.constant 4 : index
    %c3_303 = arith.constant 3 : index
    %c0_304 = arith.constant 0 : index
    %395 = vector.load %arg7[%c4_302, %c3_303, %c0_304] : memref<12x12x10xf32, #tpu.memory_space<vmem>>, vector<8x8x10xf32>
    %396 = vector.shape_cast %395 : vector<8x8x10xf32> to vector<64x10xf32>
    %c23 = arith.constant 23 : index
    %c0_305 = arith.constant 0 : index
    %c0_306 = arith.constant 0 : index
    %397 = vector.load %arg4[%c23, %c0_305, %c0_306] : memref<25x10x20xf32, #tpu.memory_space<vmem>>, vector<1x10x20xf32>
    %398 = vector.shape_cast %397 : vector<1x10x20xf32> to vector<10x20xf32>
    %cst_307 = arith.constant dense<0.000000e+00> : vector<64x20xf32>
    %399 = tpu.matmul %396, %398, %cst_307 {dimension_numbers = #tpu.dot_dimension_numbers<[1], [0], [0], [1], [0, 0, 1, 1], [], []>} : vector<64x10xf32>, vector<10x20xf32>, vector<64x20xf32> -> vector<64x20xf32>
    %400 = arith.addf %394, %399 : vector<64x20xf32>
    %c4_308 = arith.constant 4 : index
    %c4_309 = arith.constant 4 : index
    %c0_310 = arith.constant 0 : index
    %401 = vector.load %arg7[%c4_308, %c4_309, %c0_310] : memref<12x12x10xf32, #tpu.memory_space<vmem>>, vector<8x8x10xf32>
    %402 = vector.shape_cast %401 : vector<8x8x10xf32> to vector<64x10xf32>
    %c24 = arith.constant 24 : index
    %c0_311 = arith.constant 0 : index
    %c0_312 = arith.constant 0 : index
    %403 = vector.load %arg4[%c24, %c0_311, %c0_312] : memref<25x10x20xf32, #tpu.memory_space<vmem>>, vector<1x10x20xf32>
    %404 = vector.shape_cast %403 : vector<1x10x20xf32> to vector<10x20xf32>
    %cst_313 = arith.constant dense<0.000000e+00> : vector<64x20xf32>
    %405 = tpu.matmul %402, %404, %cst_313 {dimension_numbers = #tpu.dot_dimension_numbers<[1], [0], [0], [1], [0, 0, 1, 1], [], []>} : vector<64x10xf32>, vector<10x20xf32>, vector<64x20xf32> -> vector<64x20xf32>
    %406 = arith.addf %400, %405 : vector<64x20xf32>
    %407 = vector.shape_cast %406 : vector<64x20xf32> to vector<4x2x8x20xf32>
    %408 = vector.extract_strided_slice %407 {offsets = [0, 0, 0, 0], sizes = [4, 1, 8, 20], strides = [1, 1, 1, 1]} : vector<4x2x8x20xf32> to vector<4x1x8x20xf32>
    %409 = vector.shape_cast %408 : vector<4x1x8x20xf32> to vector<4x8x20xf32>
    %410 = vector.extract_strided_slice %407 {offsets = [0, 1, 0, 0], sizes = [4, 1, 8, 20], strides = [1, 1, 1, 1]} : vector<4x2x8x20xf32> to vector<4x1x8x20xf32>
    %411 = vector.shape_cast %410 : vector<4x1x8x20xf32> to vector<4x8x20xf32>
    %412 = arith.maximumf %409, %411 : vector<4x8x20xf32>
    %413 = vector.extract_strided_slice %412 {offsets = [0, 0, 0], sizes = [4, 1, 20], strides = [1, 1, 1]} : vector<4x8x20xf32> to vector<4x1x20xf32>
    %414 = vector.extract_strided_slice %412 {offsets = [0, 1, 0], sizes = [4, 1, 20], strides = [1, 1, 1]} : vector<4x8x20xf32> to vector<4x1x20xf32>
    %415 = arith.maximumf %413, %414 : vector<4x1x20xf32>
    %cst_314 = arith.constant 0.000000e+00 : f32
    %416 = vector.broadcast %cst_314 : f32 to vector<4x1x20xf32>
    %417 = arith.maximumf %415, %416 : vector<4x1x20xf32>
    %cst_315 = arith.constant dense<0xFF800000> : vector<4x1xf32>
    %418 = vector.multi_reduction <maximumf>, %417, %cst_315 [2] : vector<4x1x20xf32> to vector<4x1xf32>
    %419 = vector.shape_cast %418 : vector<4x1xf32> to vector<4x1x1xf32>
    %420 = vector.broadcast %419 : vector<4x1x1xf32> to vector<4x1x20xf32>
    %421 = arith.subf %417, %420 : vector<4x1x20xf32>
    %422 = math.exp %421 : vector<4x1x20xf32>
    %cst_316 = arith.constant dense<0.000000e+00> : vector<4x1xf32>
    %423 = vector.multi_reduction <add>, %422, %cst_316 [2] : vector<4x1x20xf32> to vector<4x1xf32>
    %424 = vector.shape_cast %423 : vector<4x1xf32> to vector<4x1x1xf32>
    %425 = math.log %424 : vector<4x1x1xf32>
    %426 = vector.broadcast %419 : vector<4x1x1xf32> to vector<4x1x20xf32>
    %427 = arith.subf %417, %426 : vector<4x1x20xf32>
    %428 = vector.broadcast %425 : vector<4x1x1xf32> to vector<4x1x20xf32>
    %429 = arith.subf %427, %428 : vector<4x1x20xf32>
    %c0_317 = arith.constant 0 : index
    %c0_318 = arith.constant 0 : index
    %c0_319 = arith.constant 0 : index
    %c0_320 = arith.constant 0 : index
    %430 = vector.load %arg6[%c0_317, %c0_318, %c0_319, %c0_320] : memref<1x4x4x20xf32, #tpu.memory_space<vmem>>, vector<1x4x1x20xf32>
    %431 = vector.shape_cast %430 : vector<1x4x1x20xf32> to vector<4x1x20xf32>
    %432 = vector.shape_cast %429 : vector<4x1x20xf32> to vector<1x4x1x20xf32>
    tpu.vector_store %arg6[%c0_317, %c0_318, %c0_319, %c0_320], %432 {strides = array<i32>} : memref<1x4x4x20xf32, #tpu.memory_space<vmem>>, vector<1x4x1x20xf32>,
    %433 = vector.extract_strided_slice %412 {offsets = [0, 2, 0], sizes = [4, 1, 20], strides = [1, 1, 1]} : vector<4x8x20xf32> to vector<4x1x20xf32>
    %434 = vector.extract_strided_slice %412 {offsets = [0, 3, 0], sizes = [4, 1, 20], strides = [1, 1, 1]} : vector<4x8x20xf32> to vector<4x1x20xf32>
    %435 = arith.maximumf %433, %434 : vector<4x1x20xf32>
    %cst_321 = arith.constant 0.000000e+00 : f32
    %436 = vector.broadcast %cst_321 : f32 to vector<4x1x20xf32>
    %437 = arith.maximumf %435, %436 : vector<4x1x20xf32>
    %cst_322 = arith.constant dense<0xFF800000> : vector<4x1xf32>
    %438 = vector.multi_reduction <maximumf>, %437, %cst_322 [2] : vector<4x1x20xf32> to vector<4x1xf32>
    %439 = vector.shape_cast %438 : vector<4x1xf32> to vector<4x1x1xf32>
    %440 = vector.broadcast %439 : vector<4x1x1xf32> to vector<4x1x20xf32>
    %441 = arith.subf %437, %440 : vector<4x1x20xf32>
    %442 = math.exp %441 : vector<4x1x20xf32>
    %cst_323 = arith.constant dense<0.000000e+00> : vector<4x1xf32>
    %443 = vector.multi_reduction <add>, %442, %cst_323 [2] : vector<4x1x20xf32> to vector<4x1xf32>
    %444 = vector.shape_cast %443 : vector<4x1xf32> to vector<4x1x1xf32>
    %445 = math.log %444 : vector<4x1x1xf32>
    %446 = vector.broadcast %439 : vector<4x1x1xf32> to vector<4x1x20xf32>
    %447 = arith.subf %437, %446 : vector<4x1x20xf32>
    %448 = vector.broadcast %445 : vector<4x1x1xf32> to vector<4x1x20xf32>
    %449 = arith.subf %447, %448 : vector<4x1x20xf32>
    %c0_324 = arith.constant 0 : index
    %c0_325 = arith.constant 0 : index
    %c1_326 = arith.constant 1 : index
    %c0_327 = arith.constant 0 : index
    %450 = vector.load %arg6[%c0_324, %c0_325, %c1_326, %c0_327] : memref<1x4x4x20xf32, #tpu.memory_space<vmem>>, vector<1x4x1x20xf32>
    %451 = vector.shape_cast %450 : vector<1x4x1x20xf32> to vector<4x1x20xf32>
    %452 = vector.shape_cast %449 : vector<4x1x20xf32> to vector<1x4x1x20xf32>
    tpu.vector_store %arg6[%c0_324, %c0_325, %c1_326, %c0_327], %452 {strides = array<i32>} : memref<1x4x4x20xf32, #tpu.memory_space<vmem>>, vector<1x4x1x20xf32>,
    %453 = vector.extract_strided_slice %412 {offsets = [0, 4, 0], sizes = [4, 1, 20], strides = [1, 1, 1]} : vector<4x8x20xf32> to vector<4x1x20xf32>
    %454 = vector.extract_strided_slice %412 {offsets = [0, 5, 0], sizes = [4, 1, 20], strides = [1, 1, 1]} : vector<4x8x20xf32> to vector<4x1x20xf32>
    %455 = arith.maximumf %453, %454 : vector<4x1x20xf32>
    %cst_328 = arith.constant 0.000000e+00 : f32
    %456 = vector.broadcast %cst_328 : f32 to vector<4x1x20xf32>
    %457 = arith.maximumf %455, %456 : vector<4x1x20xf32>
    %cst_329 = arith.constant dense<0xFF800000> : vector<4x1xf32>
    %458 = vector.multi_reduction <maximumf>, %457, %cst_329 [2] : vector<4x1x20xf32> to vector<4x1xf32>
    %459 = vector.shape_cast %458 : vector<4x1xf32> to vector<4x1x1xf32>
    %460 = vector.broadcast %459 : vector<4x1x1xf32> to vector<4x1x20xf32>
    %461 = arith.subf %457, %460 : vector<4x1x20xf32>
    %462 = math.exp %461 : vector<4x1x20xf32>
    %cst_330 = arith.constant dense<0.000000e+00> : vector<4x1xf32>
    %463 = vector.multi_reduction <add>, %462, %cst_330 [2] : vector<4x1x20xf32> to vector<4x1xf32>
    %464 = vector.shape_cast %463 : vector<4x1xf32> to vector<4x1x1xf32>
    %465 = math.log %464 : vector<4x1x1xf32>
    %466 = vector.broadcast %459 : vector<4x1x1xf32> to vector<4x1x20xf32>
    %467 = arith.subf %457, %466 : vector<4x1x20xf32>
    %468 = vector.broadcast %465 : vector<4x1x1xf32> to vector<4x1x20xf32>
    %469 = arith.subf %467, %468 : vector<4x1x20xf32>
    %c0_331 = arith.constant 0 : index
    %c0_332 = arith.constant 0 : index
    %c2_333 = arith.constant 2 : index
    %c0_334 = arith.constant 0 : index
    %470 = vector.load %arg6[%c0_331, %c0_332, %c2_333, %c0_334] : memref<1x4x4x20xf32, #tpu.memory_space<vmem>>, vector<1x4x1x20xf32>
    %471 = vector.shape_cast %470 : vector<1x4x1x20xf32> to vector<4x1x20xf32>
    %472 = vector.shape_cast %469 : vector<4x1x20xf32> to vector<1x4x1x20xf32>
    tpu.vector_store %arg6[%c0_331, %c0_332, %c2_333, %c0_334], %472 {strides = array<i32>} : memref<1x4x4x20xf32, #tpu.memory_space<vmem>>, vector<1x4x1x20xf32>,
    %473 = vector.extract_strided_slice %412 {offsets = [0, 6, 0], sizes = [4, 1, 20], strides = [1, 1, 1]} : vector<4x8x20xf32> to vector<4x1x20xf32>
    %474 = vector.extract_strided_slice %412 {offsets = [0, 7, 0], sizes = [4, 1, 20], strides = [1, 1, 1]} : vector<4x8x20xf32> to vector<4x1x20xf32>
    %475 = arith.maximumf %473, %474 : vector<4x1x20xf32>
    %cst_335 = arith.constant 0.000000e+00 : f32
    %476 = vector.broadcast %cst_335 : f32 to vector<4x1x20xf32>
    %477 = arith.maximumf %475, %476 : vector<4x1x20xf32>
    %cst_336 = arith.constant dense<0xFF800000> : vector<4x1xf32>
    %478 = vector.multi_reduction <maximumf>, %477, %cst_336 [2] : vector<4x1x20xf32> to vector<4x1xf32>
    %479 = vector.shape_cast %478 : vector<4x1xf32> to vector<4x1x1xf32>
    %480 = vector.broadcast %479 : vector<4x1x1xf32> to vector<4x1x20xf32>
    %481 = arith.subf %477, %480 : vector<4x1x20xf32>
    %482 = math.exp %481 : vector<4x1x20xf32>
    %cst_337 = arith.constant dense<0.000000e+00> : vector<4x1xf32>
    %483 = vector.multi_reduction <add>, %482, %cst_337 [2] : vector<4x1x20xf32> to vector<4x1xf32>
    %484 = vector.shape_cast %483 : vector<4x1xf32> to vector<4x1x1xf32>
    %485 = math.log %484 : vector<4x1x1xf32>
    %486 = vector.broadcast %479 : vector<4x1x1xf32> to vector<4x1x20xf32>
    %487 = arith.subf %477, %486 : vector<4x1x20xf32>
    %488 = vector.broadcast %485 : vector<4x1x1xf32> to vector<4x1x20xf32>
    %489 = arith.subf %487, %488 : vector<4x1x20xf32>
    %c0_338 = arith.constant 0 : index
    %c0_339 = arith.constant 0 : index
    %c3_340 = arith.constant 3 : index
    %c0_341 = arith.constant 0 : index
    %490 = vector.load %arg6[%c0_338, %c0_339, %c3_340, %c0_341] : memref<1x4x4x20xf32, #tpu.memory_space<vmem>>, vector<1x4x1x20xf32>
    %491 = vector.shape_cast %490 : vector<1x4x1x20xf32> to vector<4x1x20xf32>
    %492 = vector.shape_cast %489 : vector<4x1x20xf32> to vector<1x4x1x20xf32>
    tpu.vector_store %arg6[%c0_338, %c0_339, %c3_340, %c0_341], %492 {strides = array<i32>} : memref<1x4x4x20xf32, #tpu.memory_space<vmem>>, vector<1x4x1x20xf32>,
    return
  }
  func.func @transform_0(%arg0: i32) -> (i32, i32, i32, i32) {
    %c0_i32 = arith.constant 0 : i32
    %c0_i32_0 = arith.constant 0 : i32
    %c0_i32_1 = arith.constant 0 : i32
    %c0_i32_2 = arith.constant 0 : i32
    return %arg0, %c0_i32, %c0_i32_0, %c0_i32_1 : i32, i32, i32, i32
  }
  func.func @transform_1(%arg0: i32) -> (i32, i32) {
    %c0_i32 = arith.constant 0 : i32
    %c0_i32_0 = arith.constant 0 : i32
    %c0_i32_1 = arith.constant 0 : i32
    return %c0_i32, %c0_i32_0 : i32, i32
  }
  func.func @transform_2(%arg0: i32) -> (i32, i32) {
    %c0_i32 = arith.constant 0 : i32
    %c0_i32_0 = arith.constant 0 : i32
    %c0_i32_1 = arith.constant 0 : i32
    return %c0_i32, %c0_i32_0 : i32, i32
  }
  func.func @transform_3(%arg0: i32) -> (i32, i32, i32) {
    %c0_i32 = arith.constant 0 : i32
    %c0_i32_0 = arith.constant 0 : i32
    %c0_i32_1 = arith.constant 0 : i32
    %c0_i32_2 = arith.constant 0 : i32
    return %c0_i32, %c0_i32_0, %c0_i32_1 : i32, i32, i32
  }
  func.func @transform_4(%arg0: i32) -> (i32, i32) {
    %c0_i32 = arith.constant 0 : i32
    %c0_i32_0 = arith.constant 0 : i32
    %c0_i32_1 = arith.constant 0 : i32
    return %c0_i32, %c0_i32_0 : i32, i32
  }
  func.func @transform_5(%arg0: i32) -> (i32, i32, i32, i32) {
    %c0_i32 = arith.constant 0 : i32
    %c0_i32_0 = arith.constant 0 : i32
    %c0_i32_1 = arith.constant 0 : i32
    %c0_i32_2 = arith.constant 0 : i32
    return %arg0, %c0_i32, %c0_i32_0, %c0_i32_1 : i32, i32, i32, i32
  }
}

</mosaic_0001>

<llo_original>
// kernel: net_forward.1
$region0: #{net_forward.1}
  #allocation0 [shape = 'u32[]', space=smem, size = 0x4, offset = 0x4, fixed_abs, tag = 'smem constant byte address 0x4 - core index']
  #allocation1 [shape = 'u32[144,128]{1,0:T(1,128)}', space=vmem, size = 0x12000, scoped, tag = 'internal scratch']
  #allocation2 [shape = 'f32[12,12,10]{2,1,0:T(8,128)}', space=vmem, size = 0x18000, scoped, tag = 'scratch operand']
  %s0 = inlined_call_operand.vmem [shape: f32[2,24,24,25], index: 0, kind: input, shape index: {}]
  %s1 = inlined_call_operand.vmem [shape: f32[25,10], index: 1, kind: input, shape index: {}]
  %s2 = inlined_call_operand.vmem [shape: f32[1,10], index: 2, kind: input, shape index: {}]
  %s3 = inlined_call_operand.vmem [shape: f32[25,10,20], index: 3, kind: input, shape index: {}]
  %s4 = inlined_call_operand.vmem [shape: f32[1,20], index: 4, kind: input, shape index: {}]
  %s5 = inlined_call_operand.hbm [shape: f32[2,4,4,20], index: 5, kind: output, shape index: {}]
  %s6 = sld [smem:[#allocation0]]
  $region53: #{net_forward.1} parent=0
    _
  %s8 = ssub.s32 1, %s6
  %s9 = scalar_select 0, %s8, %s6
  $region1: #{net_forward.1} parent=0
    #allocation3 [shape = 'u8[16384]{0}', space=vmem, size = 0x4000, scoped, tag = 'output window, operand 0']
    #allocation4 [shape = 's32[2]{0}', space=sflag, size = 0x8, scoped, tag = 'scoped memory for net_forward.1']
    %10 = vsyncpa [#allocation4], 0
    %s11 = scalar_lea.sflag [#allocation4], 1
    %12 = vsyncpa %s11, 0
    loop: start=0, step=1, limit=4
    $region2: #{net_forward.1} parent=1 // loop_pre_header
      _
    $region3: #{net_forward.1} parent=1 // loop_header
      %s14 = sphi 0, %s18
      %p15 = scmp.ge.s32.totalorder %s14, 4
      %s24 = sphi 0, %s26
      %s27 = sphi 0, %s24
      %s28 = sphi 0, %s27
      %s44 = sphi 0, %s28
      %s48 = sphi 0, %s48
      %s50 = sphi 0, %s48
      %s51 = sphi 0, %s50
      %s65 = sphi 0, %s51
      %s69 = sphi 0, %s69
      %s71 = sphi 0, %s69
      %s72 = sphi 0, %s71
      %s86 = sphi 0, %s72
      %s90 = sphi 0, %s90
      %s92 = sphi 0, %s90
      %s93 = sphi 0, %s92
      %s107 = sphi 0, %s93
      %s111 = sphi 0, %s111
      %s113 = sphi 0, %s111
      %s114 = sphi 0, %s113
      %s128 = sphi 0, %s114
      %s134 = sphi 0, %s136
      %s137 = sphi 0, %s134
      %s138 = sphi 0, %s137
      %s154 = sphi 0, %s138
    $region4: #{net_forward.1} parent=1 // loop_header_branch
      %17 = sbr.rel (%p15) target = $region8
    $region5: #{net_forward.1} parent=1 // loop_body
      %s19 = ssub.s32 %s14, 1
      %s20 = ssub.s32 %s14, 2
      %s21 = sadd.s32 %s14, 1
      %s22 = ssub.s32 %s14, %s21
      %p23 = scmp.eq.s32.totalorder %s22, 0
      %s25 = sadd.s32 %s24, 1
      %s26 = scalar_select %p23, %s24, %s25
      %p29 = pneg %p23
      %p30 = scmp.eq.s32.totalorder %s14, 1
      %p31 = por %p29, %p30
      %p32 = scmp.ne.s32.totalorder %s24, %s27
      %p33 = scmp.eq.s32.totalorder %s14, 0
      %p34 = por %p32, %p33
      %p35 = scmp.ne.s32.totalorder %s24, %s27
      %p36 = scmp.eq.s32.totalorder %s19, 1
      %p37 = por %p35, %p36
      %p38 = scmp.ne.s32.totalorder %s27, %s28
      %p39 = scmp.eq.s32.totalorder %s19, 0
      %p40 = por %p38, %p39
      %p41 = scmp.ne.s32.totalorder %s27, %s28
      %p42 = scmp.eq.s32.totalorder %s20, 1
      %p43 = por %p41, %p42
      %p45 = scmp.ne.s32.totalorder %s28, %s44
      %p46 = scmp.eq.s32.totalorder %s20, 0
      %p47 = por %p45, %p46
      %s49 = sadd.s32 %s48, 1
      %p52 = scmp.eq.s32.totalorder %s14, 1
      %p53 = scmp.ne.s32.totalorder %s48, %s50
      %p54 = scmp.eq.s32.totalorder %s14, 0
      %p55 = por %p53, %p54
      %p56 = scmp.ne.s32.totalorder %s48, %s50
      %p57 = scmp.eq.s32.totalorder %s19, 1
      %p58 = por %p56, %p57
      %p59 = scmp.ne.s32.totalorder %s50, %s51
      %p60 = scmp.eq.s32.totalorder %s19, 0
      %p61 = por %p59, %p60
      %p62 = scmp.ne.s32.totalorder %s50, %s51
      %p63 = scmp.eq.s32.totalorder %s20, 1
      %p64 = por %p62, %p63
      %p66 = scmp.ne.s32.totalorder %s51, %s65
      %p67 = scmp.eq.s32.totalorder %s20, 0
      %p68 = por %p66, %p67
      %s70 = sadd.s32 %s69, 1
      %p73 = scmp.eq.s32.totalorder %s14, 1
      %p74 = scmp.ne.s32.totalorder %s69, %s71
      %p75 = scmp.eq.s32.totalorder %s14, 0
      %p76 = por %p74, %p75
      %p77 = scmp.ne.s32.totalorder %s69, %s71
      %p78 = scmp.eq.s32.totalorder %s19, 1
      %p79 = por %p77, %p78
      %p80 = scmp.ne.s32.totalorder %s71, %s72
      %p81 = scmp.eq.s32.totalorder %s19, 0
      %p82 = por %p80, %p81
      %p83 = scmp.ne.s32.totalorder %s71, %s72
      %p84 = scmp.eq.s32.totalorder %s20, 1
      %p85 = por %p83, %p84
      %p87 = scmp.ne.s32.totalorder %s72, %s86
      %p88 = scmp.eq.s32.totalorder %s20, 0
      %p89 = por %p87, %p88
      %s91 = sadd.s32 %s90, 1
      %p94 = scmp.eq.s32.totalorder %s14, 1
      %p95 = scmp.ne.s32.totalorder %s90, %s92
      %p96 = scmp.eq.s32.totalorder %s14, 0
      %p97 = por %p95, %p96
      %p98 = scmp.ne.s32.totalorder %s90, %s92
      %p99 = scmp.eq.s32.totalorder %s19, 1
      %p100 = por %p98, %p99
      %p101 = scmp.ne.s32.totalorder %s92, %s93
      %p102 = scmp.eq.s32.totalorder %s19, 0
      %p103 = por %p101, %p102
      %p104 = scmp.ne.s32.totalorder %s92, %s93
      %p105 = scmp.eq.s32.totalorder %s20, 1
      %p106 = por %p104, %p105
      %p108 = scmp.ne.s32.totalorder %s93, %s107
      %p109 = scmp.eq.s32.totalorder %s20, 0
      %p110 = por %p108, %p109
      %s112 = sadd.s32 %s111, 1
      %p115 = scmp.eq.s32.totalorder %s14, 1
      %p116 = scmp.ne.s32.totalorder %s111, %s113
      %p117 = scmp.eq.s32.totalorder %s14, 0
      %p118 = por %p116, %p117
      %p119 = scmp.ne.s32.totalorder %s111, %s113
      %p120 = scmp.eq.s32.totalorder %s19, 1
      %p121 = por %p119, %p120
      %p122 = scmp.ne.s32.totalorder %s113, %s114
      %p123 = scmp.eq.s32.totalorder %s19, 0
      %p124 = por %p122, %p123
      %p125 = scmp.ne.s32.totalorder %s113, %s114
      %p126 = scmp.eq.s32.totalorder %s20, 1
      %p127 = por %p125, %p126
      %p129 = scmp.ne.s32.totalorder %s114, %s128
      %p130 = scmp.eq.s32.totalorder %s20, 0
      %p131 = por %p129, %p130
      %s132 = ssub.s32 %s14, %s21
      %p133 = scmp.eq.s32.totalorder %s132, 0
      %s135 = sadd.s32 %s134, 1
      %s136 = scalar_select %p133, %s134, %s135
      %p139 = pneg %p133
      %p140 = scmp.eq.s32.totalorder %s14, 1
      %p141 = por %p139, %p140
      %p142 = scmp.ne.s32.totalorder %s134, %s137
      %p143 = scmp.eq.s32.totalorder %s14, 0
      %p144 = por %p142, %p143
      %p145 = scmp.ne.s32.totalorder %s134, %s137
      %p146 = scmp.eq.s32.totalorder %s19, 1
      %p147 = por %p145, %p146
      %p148 = scmp.ne.s32.totalorder %s137, %s138
      %p149 = scmp.eq.s32.totalorder %s19, 0
      %p150 = por %p148, %p149
      %p151 = scmp.ne.s32.totalorder %s137, %s138
      %p152 = scmp.eq.s32.totalorder %s20, 1
      %p153 = por %p151, %p152
      %p155 = scmp.ne.s32.totalorder %s138, %s154
      %p156 = scmp.eq.s32.totalorder %s20, 0
      %p157 = por %p155, %p156
      %p158 = scmp.le.s32.totalorder 1, %s14
      %p159 = scmp.lt.s32.totalorder %s14, 3
      %p160 = pnand %p158, %p159
      %p161 = pneg %p160
      // Predicated region
      $region9: #{net_forward.1} parent=5 // pred_check
        _
      $region10: #{net_forward.1} parent=5 // pred_check_branch
        %163 = sbr.rel (%p160) target = $region12
      $region11: #{net_forward.1} parent=5 // pred_region
        %s164 = ssub.s32 %s14, 1
        // Predicated region
        $region13: #{net_forward.1} parent=11 // pred_check
          %p165 = pneg %p61
        $region14: #{net_forward.1} parent=11 // pred_check_branch
          %167 = sbr.rel (%p165) target = $region16
        $region15: #{net_forward.1} parent=11 // pred_region
          _
        $region16: #{net_forward.1} parent=11 // pred_fallthru
          _
        // Predicated region
        $region17: #{net_forward.1} parent=11 // pred_check
          %p168 = pneg %p82
        $region18: #{net_forward.1} parent=11 // pred_check_branch
          %170 = sbr.rel (%p168) target = $region20
        $region19: #{net_forward.1} parent=11 // pred_region
          _
        $region20: #{net_forward.1} parent=11 // pred_fallthru
          _
        // Predicated region
        $region21: #{net_forward.1} parent=11 // pred_check
          %p171 = pneg %p103
        $region22: #{net_forward.1} parent=11 // pred_check_branch
          %173 = sbr.rel (%p171) target = $region24
        $region23: #{net_forward.1} parent=11 // pred_region
          _
        $region24: #{net_forward.1} parent=11 // pred_fallthru
          _
        // Predicated region
        $region25: #{net_forward.1} parent=11 // pred_check
          %p174 = pneg %p124
        $region26: #{net_forward.1} parent=11 // pred_check_branch
          %176 = sbr.rel (%p174) target = $region28
        $region27: #{net_forward.1} parent=11 // pred_region
          _
        $region28: #{net_forward.1} parent=11 // pred_fallthru
          _
      $region12: #{net_forward.1} parent=5 // pred_fallthru
        _
      %p177 = scmp.lt.s32.totalorder %s14, 2
      // Predicated region
      $region29: #{net_forward.1} parent=5 // pred_check
        %p178 = pneg %p177
      $region30: #{net_forward.1} parent=5 // pred_check_branch
        %180 = sbr.rel (%p178) target = $region32
      $region31: #{net_forward.1} parent=5 // pred_region
        // Predicated region
        $region33: #{net_forward.1} parent=31 // pred_check
          %p181 = pneg %p34
        $region34: #{net_forward.1} parent=31 // pred_check_branch
          %183 = sbr.rel (%p181) target = $region36
        $region35: #{net_forward.1} parent=31 // pred_region
          %p184 = scmp.lt.s32.totalorder %s14, 1
          %s185 = scalar_select %p184, %s14, 1
          %s186 = smul.addr %s185, 72
          %s187 = smul.addr %s186, 8
          %s188 = scalar_lea.vmem %s0, %s187
        $region36: #{net_forward.1} parent=31 // pred_fallthru
          _
      $region32: #{net_forward.1} parent=5 // pred_fallthru
        _
      %p189 = scmp.le.s32.totalorder 1, %s14
      %p190 = scmp.lt.s32.totalorder %s14, 3
      %p191 = pnand %p189, %p190
      %p192 = pneg %p191
      // Predicated region
      $region37: #{net_forward.1} parent=5 // pred_check
        _
      $region38: #{net_forward.1} parent=5 // pred_check_branch
        %194 = sbr.rel (%p191) target = $region40
      $region39: #{net_forward.1} parent=5 // pred_region
        %s195 = ssub.s32 %s14, 1
        %p196 = scmp.lt.s32.totalorder %s19, 1
        %s197 = scalar_select %p196, %s19, 1
        %s198 = smul.addr %s197, 72
        %s199 = smul.addr %s198, 8
        %s200 = scalar_lea.vmem %s0, %s199
        %p201 = pneg %p40
        %p202 = pneg %p37
        %p203 = pneg %p61
        %p204 = pneg %p58
        %p205 = pneg %p82
        %p206 = pneg %p79
        %p207 = pneg %p103
        %p208 = pneg %p100
        %p209 = pneg %p124
        %p210 = pneg %p121
        %p211 = pneg %p150
        %p212 = pneg %p147
        %s213 = sand.u32 %s137, 1
        %s214 = scalar_lea.sflag [#allocation4], %s213
        %s215 = sand.u32 %s137, 1
        %s216 = smul.addr %s215, 16
        %s217 = scalar_lea.vmem [#allocation3], %s216
        %p218 = scmp.lt.s32.totalorder %s19, 1
        %s219 = scalar_select %p218, %s19, 1
        %s220 = smul.addr %s219, 72
        %s221 = smul.addr %s220, 8
        %s222 = scalar_lea.vmem %s0, %s221
        %v223 = vld [vmem:[%s1] sm:$0xff]
        %v224 = vld [vmem:[%s1 + $0x8] sm:$0xff]
        %v225 = vld [vmem:[%s1 + $0x10] sm:$0xff]
        %v226 = vld [vmem:[%s1 + $0x18] sm:$0x1]
        %v227 = vld [vmem:[%s2] sm:$0x1]
        %v228 = vld [vmem:[%s222] sm:$0xff]
        %v229 = vld [vmem:[%s222 + $0x8] sm:$0xff]
        %v230 = vld [vmem:[%s222 + $0x10] sm:$0xff]
        %v231 = vld [vmem:[%s222 + $0x18] sm:$0xff]
        %v232 = vld [vmem:[%s222 + $0x20] sm:$0xff]
        %v233 = vld [vmem:[%s222 + $0x28] sm:$0xff]
        %v234 = vld [vmem:[%s222 + $0x30] sm:$0xff]
        %v235 = vld [vmem:[%s222 + $0x38] sm:$0xff]
        %v236 = vld [vmem:[%s222 + $0x40] sm:$0xff]
        %v237 = vld [vmem:[%s222 + $0x48] sm:$0xff]
        %v238 = vld [vmem:[%s222 + $0x50] sm:$0xff]
        %v239 = vld [vmem:[%s222 + $0x58] sm:$0xff]
        %v240 = vld [vmem:[%s222 + $0x60] sm:$0xff]
        %v241 = vld [vmem:[%s222 + $0x68] sm:$0xff]
        %v242 = vld [vmem:[%s222 + $0x70] sm:$0xff]
        %v243 = vld [vmem:[%s222 + $0x78] sm:$0xff]
        %v244 = vld [vmem:[%s222 + $0x80] sm:$0xff]
        %v245 = vld [vmem:[%s222 + $0x88] sm:$0xff]
        %v246 = vld [vmem:[%s222 + $0x90] sm:$0xff]
        %v247 = vld [vmem:[%s222 + $0x98] sm:$0xff]
        %v248 = vld [vmem:[%s222 + $0xa0] sm:$0xff]
        %v249 = vld [vmem:[%s222 + $0xa8] sm:$0xff]
        %v250 = vld [vmem:[%s222 + $0xb0] sm:$0xff]
        %v251 = vld [vmem:[%s222 + $0xb8] sm:$0xff]
        %v253 = vlaneseq
        %v254 = vshrl.u32 %v253, 7
        %v255 = vsub.s32 0, %v254
        %v256 = vrot.slane %v227, %v255
        %vm258 = vcmask 203776
        %v260 = vsel %vm258, %v228, 0
        %v263 = vsel %vm258, %v229, 0
        %v266 = vsel %vm258, %v230, 0
        %v269 = vsel %vm258, %v231, 0
        %v272 = vsel %vm258, %v232, 0
        %v275 = vsel %vm258, %v233, 0
        %v278 = vsel %vm258, %v234, 0
        %v281 = vsel %vm258, %v235, 0
        %v284 = vsel %vm258, %v236, 0
        %v287 = vsel %vm258, %v237, 0
        %v290 = vsel %vm258, %v238, 0
        %v293 = vsel %vm258, %v239, 0
        %v296 = vsel %vm258, %v240, 0
        %v299 = vsel %vm258, %v241, 0
        %v302 = vsel %vm258, %v242, 0
        %v305 = vsel %vm258, %v243, 0
        %v308 = vsel %vm258, %v244, 0
        %v311 = vsel %vm258, %v245, 0
        %v314 = vsel %vm258, %v246, 0
        %v317 = vsel %vm258, %v247, 0
        %v320 = vsel %vm258, %v248, 0
        %v323 = vsel %vm258, %v249, 0
        %v326 = vsel %vm258, %v250, 0
        %v329 = vsel %vm258, %v251, 0
        %vm331 = vcmask 1040384
        %v333 = vsel %vm331, %v226, 0
        %335 = vmatprep.subr.mxu0 0.0
        %336 = vmatpush1.msra.mxu0 0.0
        %337 = vmatprep.subr.mxu0 0.0
        %338 = vmatpush1.msra.mxu0 0.0
        %339 = vmatprep.subr.mxu0 0.0
        %340 = vmatpush1.msra.mxu0 0.0
        %341 = vmatprep.subr.mxu0 0.0
        %342 = vmatpush1.msra.mxu0 0.0
        %343 = vmatprep.subr.mxu0 0.0
        %344 = vmatpush1.msra.mxu0 0.0
        %345 = vmatprep.subr.mxu0 0.0
        %346 = vmatpush1.msra.mxu0 0.0
        %347 = vmatprep.subr.mxu0 0.0
        %348 = vmatpush1.msra.mxu0 0.0
        %349 = vmatprep.subr.mxu0 0.0
        %350 = vmatpush1.msra.mxu0 0.0
        %351 = vmatprep.subr.mxu0 0.0
        %352 = vmatpush1.msra.mxu0 0.0
        %353 = vmatprep.subr.mxu0 0.0
        %354 = vmatpush1.msra.mxu0 0.0
        %355 = vmatprep.subr.mxu0 0.0
        %356 = vmatpush1.msra.mxu0 0.0
        %357 = vmatprep.subr.mxu0 0.0
        %358 = vmatpush1.msra.mxu0 0.0
        %359 = vmatprep.subr.mxu0 0.0
        %360 = vmatpush1.msra.mxu0 %v333
        %361 = vmatprep.subr.mxu0 0.0
        %362 = vmatpush1.msra.mxu0 %v225
        %363 = vmatprep.subr.mxu0 0.0
        %364 = vmatpush1.msra.mxu0 %v224
        %365 = vmatprep.subr.mxu0 0.0
        %366 = vmatpush1.msra.mxu0 %v223
        %367 = vmatprep.subr.mxu0 0.0
        %368 = vmatpush2.msra.mxu0 0.0
        %369 = vmatprep.subr.mxu0 0.0
        %370 = vmatpush2.msra.mxu0 0.0
        %371 = vmatprep.subr.mxu0 0.0
        %372 = vmatpush2.msra.mxu0 0.0
        %373 = vmatprep.subr.mxu0 0.0
        %374 = vmatpush2.msra.mxu0 0.0
        %375 = vmatprep.subr.mxu0 0.0
        %376 = vmatpush2.msra.mxu0 0.0
        %377 = vmatprep.subr.mxu0 0.0
        %378 = vmatpush2.msra.mxu0 0.0
        %379 = vmatprep.subr.mxu0 0.0
        %380 = vmatpush2.msra.mxu0 0.0
        %381 = vmatprep.subr.mxu0 0.0
        %382 = vmatpush2.msra.mxu0 0.0
        %383 = vmatprep.subr.mxu0 0.0
        %384 = vmatpush2.msra.mxu0 0.0
        %385 = vmatprep.subr.mxu0 0.0
        %386 = vmatpush2.msra.mxu0 0.0
        %387 = vmatprep.subr.mxu0 0.0
        %388 = vmatpush2.msra.mxu0 0.0
        %389 = vmatprep.subr.mxu0 0.0
        %390 = vmatpush2.msra.mxu0 0.0
        %391 = vmatprep.subr.mxu0 0.0
        %392 = vmatpush2.msra.mxu0 0.0
        %393 = vmatprep.subr.mxu0 0.0
        %394 = vmatpush2.msra.mxu0 0.0
        %395 = vmatprep.subr.mxu0 0.0
        %396 = vmatpush2.msra.mxu0 0.0
        %397 = vmatprep.subr.mxu0 0.0
        %398 = vmatpush2.msra.mxu0 0.0
        %399 = vmatprep.mubr.f32.mxu0 0.0
        %400 = vmatmul.mubr.f32.gmra.mxu0 %v260
        %v401 = vpop.f32.mrf.mxu0
        %v402 = vadd.f32 %v256, %v401
        %v403 = vpop.f32.mrf.mxu0
        %404 = vmatprep.mubr.f32.mxu0 0.0
        %405 = vmatmul.mubr.f32.gmra.mxu0 %v263
        %v406 = vpop.f32.mrf.mxu0
        %v407 = vadd.f32 %v256, %v406
        %v408 = vpop.f32.mrf.mxu0
        %409 = vmatprep.mubr.f32.mxu0 0.0
        %410 = vmatmul.mubr.f32.gmra.mxu0 %v266
        %v411 = vpop.f32.mrf.mxu0
        %v412 = vadd.f32 %v256, %v411
        %v413 = vpop.f32.mrf.mxu0
        %414 = vmatprep.mubr.f32.mxu0 0.0
        %415 = vmatmul.mubr.f32.gmra.mxu0 %v269
        %v416 = vpop.f32.mrf.mxu0
        %v417 = vadd.f32 %v256, %v416
        %v418 = vpop.f32.mrf.mxu0
        %419 = vmatprep.mubr.f32.mxu0 0.0
        %420 = vmatmul.mubr.f32.gmra.mxu0 %v272
        %v421 = vpop.f32.mrf.mxu0
        %v422 = vadd.f32 %v256, %v421
        %v423 = vpop.f32.mrf.mxu0
        %424 = vmatprep.mubr.f32.mxu0 0.0
        %425 = vmatmul.mubr.f32.gmra.mxu0 %v275
        %v426 = vpop.f32.mrf.mxu0
        %v427 = vadd.f32 %v256, %v426
        %v428 = vpop.f32.mrf.mxu0
        %429 = vmatprep.mubr.f32.mxu0 0.0
        %430 = vmatmul.mubr.f32.gmra.mxu0 %v278
        %v431 = vpop.f32.mrf.mxu0
        %v432 = vadd.f32 %v256, %v431
        %v433 = vpop.f32.mrf.mxu0
        %434 = vmatprep.mubr.f32.mxu0 0.0
        %435 = vmatmul.mubr.f32.gmra.mxu0 %v281
        %v436 = vpop.f32.mrf.mxu0
        %v437 = vadd.f32 %v256, %v436
        %v438 = vpop.f32.mrf.mxu0
        %439 = vmatprep.mubr.f32.mxu0 0.0
        %440 = vmatmul.mubr.f32.gmra.mxu0 %v284
        %v441 = vpop.f32.mrf.mxu0
        %v442 = vadd.f32 %v256, %v441
        %v443 = vpop.f32.mrf.mxu0
        %444 = vmatprep.mubr.f32.mxu0 0.0
        %445 = vmatmul.mubr.f32.gmra.mxu0 %v287
        %v446 = vpop.f32.mrf.mxu0
        %v447 = vadd.f32 %v256, %v446
        %v448 = vpop.f32.mrf.mxu0
        %449 = vmatprep.mubr.f32.mxu0 0.0
        %450 = vmatmul.mubr.f32.gmra.mxu0 %v290
        %v451 = vpop.f32.mrf.mxu0
        %v452 = vadd.f32 %v256, %v451
        %v453 = vpop.f32.mrf.mxu0
        %454 = vmatprep.mubr.f32.mxu0 0.0
        %455 = vmatmul.mubr.f32.gmra.mxu0 %v293
        %v456 = vpop.f32.mrf.mxu0
        %v457 = vadd.f32 %v256, %v456
        %v458 = vpop.f32.mrf.mxu0
        %459 = vmatprep.mubr.f32.mxu0 0.0
        %460 = vmatmul.mubr.f32.gmra.mxu0 %v296
        %v461 = vpop.f32.mrf.mxu0
        %v462 = vadd.f32 %v256, %v461
        %v463 = vpop.f32.mrf.mxu0
        %464 = vmatprep.mubr.f32.mxu0 0.0
        %465 = vmatmul.mubr.f32.gmra.mxu0 %v299
        %v466 = vpop.f32.mrf.mxu0
        %v467 = vadd.f32 %v256, %v466
        %v468 = vpop.f32.mrf.mxu0
        %469 = vmatprep.mubr.f32.mxu0 0.0
        %470 = vmatmul.mubr.f32.gmra.mxu0 %v302
        %v471 = vpop.f32.mrf.mxu0
        %v472 = vadd.f32 %v256, %v471
        %v473 = vpop.f32.mrf.mxu0
        %474 = vmatprep.mubr.f32.mxu0 0.0
        %475 = vmatmul.mubr.f32.gmra.mxu0 %v305
        %v476 = vpop.f32.mrf.mxu0
        %v477 = vadd.f32 %v256, %v476
        %v478 = vpop.f32.mrf.mxu0
        %479 = vmatprep.mubr.f32.mxu0 0.0
        %480 = vmatmul.mubr.f32.gmra.mxu0 %v308
        %v481 = vpop.f32.mrf.mxu0
        %v482 = vadd.f32 %v256, %v481
        %v483 = vpop.f32.mrf.mxu0
        %484 = vmatprep.mubr.f32.mxu0 0.0
        %485 = vmatmul.mubr.f32.gmra.mxu0 %v311
        %v486 = vpop.f32.mrf.mxu0
        %v487 = vadd.f32 %v256, %v486
        %v488 = vpop.f32.mrf.mxu0
        %489 = vmatprep.mubr.f32.mxu0 0.0
        %490 = vmatmul.mubr.f32.gmra.mxu0 %v314
        %v491 = vpop.f32.mrf.mxu0
        %v492 = vadd.f32 %v256, %v491
        %v493 = vpop.f32.mrf.mxu0
        %494 = vmatprep.mubr.f32.mxu0 0.0
        %495 = vmatmul.mubr.f32.gmra.mxu0 %v317
        %v496 = vpop.f32.mrf.mxu0
        %v497 = vadd.f32 %v256, %v496
        %v498 = vpop.f32.mrf.mxu0
        %499 = vmatprep.mubr.f32.mxu0 0.0
        %500 = vmatmul.mubr.f32.gmra.mxu0 %v320
        %v501 = vpop.f32.mrf.mxu0
        %v502 = vadd.f32 %v256, %v501
        %v503 = vpop.f32.mrf.mxu0
        %504 = vmatprep.mubr.f32.mxu0 0.0
        %505 = vmatmul.mubr.f32.gmra.mxu0 %v323
        %v506 = vpop.f32.mrf.mxu0
        %v507 = vadd.f32 %v256, %v506
        %v508 = vpop.f32.mrf.mxu0
        %509 = vmatprep.mubr.f32.mxu0 0.0
        %510 = vmatmul.mubr.f32.gmra.mxu0 %v326
        %v511 = vpop.f32.mrf.mxu0
        %v512 = vadd.f32 %v256, %v511
        %v513 = vpop.f32.mrf.mxu0
        %514 = vmatprep.mubr.f32.mxu0 0.0
        %515 = vmatmul.mubr.f32.gmra.mxu0 %v329
        %v516 = vpop.f32.mrf.mxu0
        %v517 = vadd.f32 %v256, %v516
        %v518 = vpop.f32.mrf.mxu0
        %519 = vdwg.mxu0
        %v520 = vmax.f32 %v402, %v417
        %v521 = vmax.f32 %v407, %v422
        %v522 = vmax.f32 %v412, %v427
        %v523 = vmax.f32 %v432, %v447
        %v524 = vmax.f32 %v437, %v452
        %v525 = vmax.f32 %v442, %v457
        %v526 = vmax.f32 %v462, %v477
        %v527 = vmax.f32 %v467, %v482
        %v528 = vmax.f32 %v472, %v487
        %v529 = vmax.f32 %v492, %v507
        %v530 = vmax.f32 %v497, %v512
        %v531 = vmax.f32 %v502, %v517
        %v536 = vrot.slane %v520, 1
        %v537 = vrot.slane %v523, 1
        %v538 = vrot.slane %v526, 1
        %v539 = vrot.slane %v529, 1
        %v544 = vmax.f32 %v520, %v536
        %v545 = vmax.f32 %v523, %v537
        %v546 = vmax.f32 %v526, %v538
        %v547 = vmax.f32 %v529, %v539
        %v548 = vmax.f32 %v544, 0.0
        %v549 = vmax.f32 %v545, 0.0
        %v550 = vmax.f32 %v546, 0.0
        %v551 = vmax.f32 %v547, 0.0
        %vm552 = vcmask 73728
        %553 = vst.msk [vmem:[#allocation2] sm:$0x1] %vm552, %v548
        %554 = vst.msk [vmem:[#allocation2 + $0x10] sm:$0x1] %vm552, %v549
        %555 = vst.msk [vmem:[#allocation2 + $0x20] sm:$0x1] %vm552, %v550
        %556 = vst.msk [vmem:[#allocation2 + $0x30] sm:$0x1] %vm552, %v551
        %vm557 = vcmask 75778
        %558 = vst.msk [vmem:[#allocation2 - $0x1] sm:$0x4] %vm557, %v548
        %559 = vst.msk [vmem:[#allocation2 + $0xf] sm:$0x4] %vm557, %v549
        %560 = vst.msk [vmem:[#allocation2 + $0x1f] sm:$0x4] %vm557, %v550
        %561 = vst.msk [vmem:[#allocation2 + $0x2f] sm:$0x4] %vm557, %v551
        %vm562 = vcmask 77828
        %563 = vst.msk [vmem:[#allocation2 - $0x2] sm:$0x10] %vm562, %v548
        %564 = vst.msk [vmem:[#allocation2 + $0xe] sm:$0x10] %vm562, %v549
        %565 = vst.msk [vmem:[#allocation2 + $0x1e] sm:$0x10] %vm562, %v550
        %566 = vst.msk [vmem:[#allocation2 + $0x2e] sm:$0x10] %vm562, %v551
        %vm567 = vcmask 79878
        %568 = vst.msk [vmem:[#allocation2 - $0x3] sm:$0x40] %vm567, %v548
        %569 = vst.msk [vmem:[#allocation2 + $0xd] sm:$0x40] %vm567, %v549
        %570 = vst.msk [vmem:[#allocation2 + $0x1d] sm:$0x40] %vm567, %v550
        %571 = vst.msk [vmem:[#allocation2 + $0x2d] sm:$0x40] %vm567, %v551
        %v576 = vrot.slane %v521, 1
        %v577 = vrot.slane %v524, 1
        %v578 = vrot.slane %v527, 1
        %v579 = vrot.slane %v530, 1
        %v584 = vmax.f32 %v521, %v576
        %v585 = vmax.f32 %v524, %v577
        %v586 = vmax.f32 %v527, %v578
        %v587 = vmax.f32 %v530, %v579
        %v588 = vmax.f32 %v584, 0.0
        %v589 = vmax.f32 %v585, 0.0
        %v590 = vmax.f32 %v586, 0.0
        %v591 = vmax.f32 %v587, 0.0
        %592 = vst.msk [vmem:[#allocation2 + $0x4] sm:$0x1] %vm552, %v588
        %593 = vst.msk [vmem:[#allocation2 + $0x14] sm:$0x1] %vm552, %v589
        %594 = vst.msk [vmem:[#allocation2 + $0x24] sm:$0x1] %vm552, %v590
        %595 = vst.msk [vmem:[#allocation2 + $0x34] sm:$0x1] %vm552, %v591
        %596 = vst.msk [vmem:[#allocation2 + $0x3] sm:$0x4] %vm557, %v588
        %597 = vst.msk [vmem:[#allocation2 + $0x13] sm:$0x4] %vm557, %v589
        %598 = vst.msk [vmem:[#allocation2 + $0x23] sm:$0x4] %vm557, %v590
        %599 = vst.msk [vmem:[#allocation2 + $0x33] sm:$0x4] %vm557, %v591
        %600 = vst.msk [vmem:[#allocation2 + $0x2] sm:$0x10] %vm562, %v588
        %601 = vst.msk [vmem:[#allocation2 + $0x12] sm:$0x10] %vm562, %v589
        %602 = vst.msk [vmem:[#allocation2 + $0x22] sm:$0x10] %vm562, %v590
        %603 = vst.msk [vmem:[#allocation2 + $0x32] sm:$0x10] %vm562, %v591
        %604 = vst.msk [vmem:[#allocation2 + $0x1] sm:$0x40] %vm567, %v588
        %605 = vst.msk [vmem:[#allocation2 + $0x11] sm:$0x40] %vm567, %v589
        %606 = vst.msk [vmem:[#allocation2 + $0x21] sm:$0x40] %vm567, %v590
        %607 = vst.msk [vmem:[#allocation2 + $0x31] sm:$0x40] %vm567, %v591
        %v612 = vrot.slane %v522, 1
        %v613 = vrot.slane %v525, 1
        %v614 = vrot.slane %v528, 1
        %v615 = vrot.slane %v531, 1
        %v620 = vmax.f32 %v522, %v612
        %v621 = vmax.f32 %v525, %v613
        %v622 = vmax.f32 %v528, %v614
        %v623 = vmax.f32 %v531, %v615
        %v624 = vmax.f32 %v620, 0.0
        %v625 = vmax.f32 %v621, 0.0
        %v626 = vmax.f32 %v622, 0.0
        %v627 = vmax.f32 %v623, 0.0
        %628 = vst.msk [vmem:[#allocation2 + $0x8] sm:$0x1] %vm552, %v624
        %629 = vst.msk [vmem:[#allocation2 + $0x18] sm:$0x1] %vm552, %v625
        %630 = vst.msk [vmem:[#allocation2 + $0x28] sm:$0x1] %vm552, %v626
        %631 = vst.msk [vmem:[#allocation2 + $0x38] sm:$0x1] %vm552, %v627
        %632 = vst.msk [vmem:[#allocation2 + $0x7] sm:$0x4] %vm557, %v624
        %633 = vst.msk [vmem:[#allocation2 + $0x17] sm:$0x4] %vm557, %v625
        %634 = vst.msk [vmem:[#allocation2 + $0x27] sm:$0x4] %vm557, %v626
        %635 = vst.msk [vmem:[#allocation2 + $0x37] sm:$0x4] %vm557, %v627
        %636 = vst.msk [vmem:[#allocation2 + $0x6] sm:$0x10] %vm562, %v624
        %637 = vst.msk [vmem:[#allocation2 + $0x16] sm:$0x10] %vm562, %v625
        %638 = vst.msk [vmem:[#allocation2 + $0x26] sm:$0x10] %vm562, %v626
        %639 = vst.msk [vmem:[#allocation2 + $0x36] sm:$0x10] %vm562, %v627
        %640 = vst.msk [vmem:[#allocation2 + $0x5] sm:$0x40] %vm567, %v624
        %641 = vst.msk [vmem:[#allocation2 + $0x15] sm:$0x40] %vm567, %v625
        %642 = vst.msk [vmem:[#allocation2 + $0x25] sm:$0x40] %vm567, %v626
        %643 = vst.msk [vmem:[#allocation2 + $0x35] sm:$0x40] %vm567, %v627
        %s644 = scalar_lea.vmem %s222, 192
        %v645 = vld [vmem:[%s644] sm:$0xff]
        %v646 = vld [vmem:[%s644 + $0x8] sm:$0xff]
        %v647 = vld [vmem:[%s644 + $0x10] sm:$0xff]
        %v648 = vld [vmem:[%s644 + $0x18] sm:$0xff]
        %v649 = vld [vmem:[%s644 + $0x20] sm:$0xff]
        %v650 = vld [vmem:[%s644 + $0x28] sm:$0xff]
        %v651 = vld [vmem:[%s644 + $0x30] sm:$0xff]
        %v652 = vld [vmem:[%s644 + $0x38] sm:$0xff]
        %v653 = vld [vmem:[%s644 + $0x40] sm:$0xff]
        %v654 = vld [vmem:[%s644 + $0x48] sm:$0xff]
        %v655 = vld [vmem:[%s644 + $0x50] sm:$0xff]
        %v656 = vld [vmem:[%s644 + $0x58] sm:$0xff]
        %v657 = vld [vmem:[%s644 + $0x60] sm:$0xff]
        %v658 = vld [vmem:[%s644 + $0x68] sm:$0xff]
        %v659 = vld [vmem:[%s644 + $0x70] sm:$0xff]
        %v660 = vld [vmem:[%s644 + $0x78] sm:$0xff]
        %v661 = vld [vmem:[%s644 + $0x80] sm:$0xff]
        %v662 = vld [vmem:[%s644 + $0x88] sm:$0xff]
        %v663 = vld [vmem:[%s644 + $0x90] sm:$0xff]
        %v664 = vld [vmem:[%s644 + $0x98] sm:$0xff]
        %v665 = vld [vmem:[%s644 + $0xa0] sm:$0xff]
        %v666 = vld [vmem:[%s644 + $0xa8] sm:$0xff]
        %v667 = vld [vmem:[%s644 + $0xb0] sm:$0xff]
        %v668 = vld [vmem:[%s644 + $0xb8] sm:$0xff]
        %v670 = vsel %vm258, %v645, 0
        %v673 = vsel %vm258, %v646, 0
        %v676 = vsel %vm258, %v647, 0
        %v679 = vsel %vm258, %v648, 0
        %v682 = vsel %vm258, %v649, 0
        %v685 = vsel %vm258, %v650, 0
        %v688 = vsel %vm258, %v651, 0
        %v691 = vsel %vm258, %v652, 0
        %v694 = vsel %vm258, %v653, 0
        %v697 = vsel %vm258, %v654, 0
        %v700 = vsel %vm258, %v655, 0
        %v703 = vsel %vm258, %v656, 0
        %v706 = vsel %vm258, %v657, 0
        %v709 = vsel %vm258, %v658, 0
        %v712 = vsel %vm258, %v659, 0
        %v715 = vsel %vm258, %v660, 0
        %v718 = vsel %vm258, %v661, 0
        %v721 = vsel %vm258, %v662, 0
        %v724 = vsel %vm258, %v663, 0
        %v727 = vsel %vm258, %v664, 0
        %v730 = vsel %vm258, %v665, 0
        %v733 = vsel %vm258, %v666, 0
        %v736 = vsel %vm258, %v667, 0
        %v739 = vsel %vm258, %v668, 0
        %741 = vmatprep.subr.mxu0 0.0
        %742 = vmatpush1.msra.mxu0 0.0
        %743 = vmatprep.subr.mxu0 0.0
        %744 = vmatpush1.msra.mxu0 0.0
        %745 = vmatprep.subr.mxu0 0.0
        %746 = vmatpush1.msra.mxu0 0.0
        %747 = vmatprep.subr.mxu0 0.0
        %748 = vmatpush1.msra.mxu0 0.0
        %749 = vmatprep.subr.mxu0 0.0
        %750 = vmatpush1.msra.mxu0 0.0
        %751 = vmatprep.subr.mxu0 0.0
        %752 = vmatpush1.msra.mxu0 0.0
        %753 = vmatprep.subr.mxu0 0.0
        %754 = vmatpush1.msra.mxu0 0.0
        %755 = vmatprep.subr.mxu0 0.0
        %756 = vmatpush1.msra.mxu0 0.0
        %757 = vmatprep.subr.mxu0 0.0
        %758 = vmatpush1.msra.mxu0 0.0
        %759 = vmatprep.subr.mxu0 0.0
        %760 = vmatpush1.msra.mxu0 0.0
        %761 = vmatprep.subr.mxu0 0.0
        %762 = vmatpush1.msra.mxu0 0.0
        %763 = vmatprep.subr.mxu0 0.0
        %764 = vmatpush1.msra.mxu0 0.0
        %765 = vmatprep.subr.mxu0 0.0
        %766 = vmatpush1.msra.mxu0 %v333
        %767 = vmatprep.subr.mxu0 0.0
        %768 = vmatpush1.msra.mxu0 %v225
        %769 = vmatprep.subr.mxu0 0.0
        %770 = vmatpush1.msra.mxu0 %v224
        %771 = vmatprep.subr.mxu0 0.0
        %772 = vmatpush1.msra.mxu0 %v223
        %773 = vmatprep.subr.mxu0 0.0
        %774 = vmatpush2.msra.mxu0 0.0
        %775 = vmatprep.subr.mxu0 0.0
        %776 = vmatpush2.msra.mxu0 0.0
        %777 = vmatprep.subr.mxu0 0.0
        %778 = vmatpush2.msra.mxu0 0.0
        %779 = vmatprep.subr.mxu0 0.0
        %780 = vmatpush2.msra.mxu0 0.0
        %781 = vmatprep.subr.mxu0 0.0
        %782 = vmatpush2.msra.mxu0 0.0
        %783 = vmatprep.subr.mxu0 0.0
        %784 = vmatpush2.msra.mxu0 0.0
        %785 = vmatprep.subr.mxu0 0.0
        %786 = vmatpush2.msra.mxu0 0.0
        %787 = vmatprep.subr.mxu0 0.0
        %788 = vmatpush2.msra.mxu0 0.0
        %789 = vmatprep.subr.mxu0 0.0
        %790 = vmatpush2.msra.mxu0 0.0
        %791 = vmatprep.subr.mxu0 0.0
        %792 = vmatpush2.msra.mxu0 0.0
        %793 = vmatprep.subr.mxu0 0.0
        %794 = vmatpush2.msra.mxu0 0.0
        %795 = vmatprep.subr.mxu0 0.0
        %796 = vmatpush2.msra.mxu0 0.0
        %797 = vmatprep.subr.mxu0 0.0
        %798 = vmatpush2.msra.mxu0 0.0
        %799 = vmatprep.subr.mxu0 0.0
        %800 = vmatpush2.msra.mxu0 0.0
        %801 = vmatprep.subr.mxu0 0.0
        %802 = vmatpush2.msra.mxu0 0.0
        %803 = vmatprep.subr.mxu0 0.0
        %804 = vmatpush2.msra.mxu0 0.0
        %805 = vmatprep.mubr.f32.mxu0 0.0
        %806 = vmatmul.mubr.f32.gmra.mxu0 %v670
        %v807 = vpop.f32.mrf.mxu0
        %v808 = vadd.f32 %v256, %v807
        %v809 = vpop.f32.mrf.mxu0
        %810 = vmatprep.mubr.f32.mxu0 0.0
        %811 = vmatmul.mubr.f32.gmra.mxu0 %v673
        %v812 = vpop.f32.mrf.mxu0
        %v813 = vadd.f32 %v256, %v812
        %v814 = vpop.f32.mrf.mxu0
        %815 = vmatprep.mubr.f32.mxu0 0.0
        %816 = vmatmul.mubr.f32.gmra.mxu0 %v676
        %v817 = vpop.f32.mrf.mxu0
        %v818 = vadd.f32 %v256, %v817
        %v819 = vpop.f32.mrf.mxu0
        %820 = vmatprep.mubr.f32.mxu0 0.0
        %821 = vmatmul.mubr.f32.gmra.mxu0 %v679
        %v822 = vpop.f32.mrf.mxu0
        %v823 = vadd.f32 %v256, %v822
        %v824 = vpop.f32.mrf.mxu0
        %825 = vmatprep.mubr.f32.mxu0 0.0
        %826 = vmatmul.mubr.f32.gmra.mxu0 %v682
        %v827 = vpop.f32.mrf.mxu0
        %v828 = vadd.f32 %v256, %v827
        %v829 = vpop.f32.mrf.mxu0
        %830 = vmatprep.mubr.f32.mxu0 0.0
        %831 = vmatmul.mubr.f32.gmra.mxu0 %v685
        %v832 = vpop.f32.mrf.mxu0
        %v833 = vadd.f32 %v256, %v832
        %v834 = vpop.f32.mrf.mxu0
        %835 = vmatprep.mubr.f32.mxu0 0.0
        %836 = vmatmul.mubr.f32.gmra.mxu0 %v688
        %v837 = vpop.f32.mrf.mxu0
        %v838 = vadd.f32 %v256, %v837
        %v839 = vpop.f32.mrf.mxu0
        %840 = vmatprep.mubr.f32.mxu0 0.0
        %841 = vmatmul.mubr.f32.gmra.mxu0 %v691
        %v842 = vpop.f32.mrf.mxu0
        %v843 = vadd.f32 %v256, %v842
        %v844 = vpop.f32.mrf.mxu0
        %845 = vmatprep.mubr.f32.mxu0 0.0
        %846 = vmatmul.mubr.f32.gmra.mxu0 %v694
        %v847 = vpop.f32.mrf.mxu0
        %v848 = vadd.f32 %v256, %v847
        %v849 = vpop.f32.mrf.mxu0
        %850 = vmatprep.mubr.f32.mxu0 0.0
        %851 = vmatmul.mubr.f32.gmra.mxu0 %v697
        %v852 = vpop.f32.mrf.mxu0
        %v853 = vadd.f32 %v256, %v852
        %v854 = vpop.f32.mrf.mxu0
        %855 = vmatprep.mubr.f32.mxu0 0.0
        %856 = vmatmul.mubr.f32.gmra.mxu0 %v700
        %v857 = vpop.f32.mrf.mxu0
        %v858 = vadd.f32 %v256, %v857
        %v859 = vpop.f32.mrf.mxu0
        %860 = vmatprep.mubr.f32.mxu0 0.0
        %861 = vmatmul.mubr.f32.gmra.mxu0 %v703
        %v862 = vpop.f32.mrf.mxu0
        %v863 = vadd.f32 %v256, %v862
        %v864 = vpop.f32.mrf.mxu0
        %865 = vmatprep.mubr.f32.mxu0 0.0
        %866 = vmatmul.mubr.f32.gmra.mxu0 %v706
        %v867 = vpop.f32.mrf.mxu0
        %v868 = vadd.f32 %v256, %v867
        %v869 = vpop.f32.mrf.mxu0
        %870 = vmatprep.mubr.f32.mxu0 0.0
        %871 = vmatmul.mubr.f32.gmra.mxu0 %v709
        %v872 = vpop.f32.mrf.mxu0
        %v873 = vadd.f32 %v256, %v872
        %v874 = vpop.f32.mrf.mxu0
        %875 = vmatprep.mubr.f32.mxu0 0.0
        %876 = vmatmul.mubr.f32.gmra.mxu0 %v712
        %v877 = vpop.f32.mrf.mxu0
        %v878 = vadd.f32 %v256, %v877
        %v879 = vpop.f32.mrf.mxu0
        %880 = vmatprep.mubr.f32.mxu0 0.0
        %881 = vmatmul.mubr.f32.gmra.mxu0 %v715
        %v882 = vpop.f32.mrf.mxu0
        %v883 = vadd.f32 %v256, %v882
        %v884 = vpop.f32.mrf.mxu0
        %885 = vmatprep.mubr.f32.mxu0 0.0
        %886 = vmatmul.mubr.f32.gmra.mxu0 %v718
        %v887 = vpop.f32.mrf.mxu0
        %v888 = vadd.f32 %v256, %v887
        %v889 = vpop.f32.mrf.mxu0
        %890 = vmatprep.mubr.f32.mxu0 0.0
        %891 = vmatmul.mubr.f32.gmra.mxu0 %v721
        %v892 = vpop.f32.mrf.mxu0
        %v893 = vadd.f32 %v256, %v892
        %v894 = vpop.f32.mrf.mxu0
        %895 = vmatprep.mubr.f32.mxu0 0.0
        %896 = vmatmul.mubr.f32.gmra.mxu0 %v724
        %v897 = vpop.f32.mrf.mxu0
        %v898 = vadd.f32 %v256, %v897
        %v899 = vpop.f32.mrf.mxu0
        %900 = vmatprep.mubr.f32.mxu0 0.0
        %901 = vmatmul.mubr.f32.gmra.mxu0 %v727
        %v902 = vpop.f32.mrf.mxu0
        %v903 = vadd.f32 %v256, %v902
        %v904 = vpop.f32.mrf.mxu0
        %905 = vmatprep.mubr.f32.mxu0 0.0
        %906 = vmatmul.mubr.f32.gmra.mxu0 %v730
        %v907 = vpop.f32.mrf.mxu0
        %v908 = vadd.f32 %v256, %v907
        %v909 = vpop.f32.mrf.mxu0
        %910 = vmatprep.mubr.f32.mxu0 0.0
        %911 = vmatmul.mubr.f32.gmra.mxu0 %v733
        %v912 = vpop.f32.mrf.mxu0
        %v913 = vadd.f32 %v256, %v912
        %v914 = vpop.f32.mrf.mxu0
        %915 = vmatprep.mubr.f32.mxu0 0.0
        %916 = vmatmul.mubr.f32.gmra.mxu0 %v736
        %v917 = vpop.f32.mrf.mxu0
        %v918 = vadd.f32 %v256, %v917
        %v919 = vpop.f32.mrf.mxu0
        %920 = vmatprep.mubr.f32.mxu0 0.0
        %921 = vmatmul.mubr.f32.gmra.mxu0 %v739
        %v922 = vpop.f32.mrf.mxu0
        %v923 = vadd.f32 %v256, %v922
        %v924 = vpop.f32.mrf.mxu0
        %925 = vdwg.mxu0
        %v926 = vmax.f32 %v808, %v823
        %v927 = vmax.f32 %v813, %v828
        %v928 = vmax.f32 %v818, %v833
        %v929 = vmax.f32 %v838, %v853
        %v930 = vmax.f32 %v843, %v858
        %v931 = vmax.f32 %v848, %v863
        %v932 = vmax.f32 %v868, %v883
        %v933 = vmax.f32 %v873, %v888
        %v934 = vmax.f32 %v878, %v893
        %v935 = vmax.f32 %v898, %v913
        %v936 = vmax.f32 %v903, %v918
        %v937 = vmax.f32 %v908, %v923
        %v942 = vrot.slane %v926, 1
        %v943 = vrot.slane %v929, 1
        %v944 = vrot.slane %v932, 1
        %v945 = vrot.slane %v935, 1
        %v950 = vmax.f32 %v926, %v942
        %v951 = vmax.f32 %v929, %v943
        %v952 = vmax.f32 %v932, %v944
        %v953 = vmax.f32 %v935, %v945
        %v954 = vmax.f32 %v950, 0.0
        %v955 = vmax.f32 %v951, 0.0
        %v956 = vmax.f32 %v952, 0.0
        %v957 = vmax.f32 %v953, 0.0
        %s958 = scalar_lea.vmem [#allocation2], 64
        %959 = vst.msk [vmem:[%s958] sm:$0x1] %vm552, %v954
        %960 = vst.msk [vmem:[%s958 + $0x10] sm:$0x1] %vm552, %v955
        %961 = vst.msk [vmem:[%s958 + $0x20] sm:$0x1] %vm552, %v956
        %962 = vst.msk [vmem:[%s958 + $0x30] sm:$0x1] %vm552, %v957
        %963 = vst.msk [vmem:[%s958 - $0x1] sm:$0x4] %vm557, %v954
        %964 = vst.msk [vmem:[%s958 + $0xf] sm:$0x4] %vm557, %v955
        %965 = vst.msk [vmem:[%s958 + $0x1f] sm:$0x4] %vm557, %v956
        %966 = vst.msk [vmem:[%s958 + $0x2f] sm:$0x4] %vm557, %v957
        %967 = vst.msk [vmem:[%s958 - $0x2] sm:$0x10] %vm562, %v954
        %968 = vst.msk [vmem:[%s958 + $0xe] sm:$0x10] %vm562, %v955
        %969 = vst.msk [vmem:[%s958 + $0x1e] sm:$0x10] %vm562, %v956
        %970 = vst.msk [vmem:[%s958 + $0x2e] sm:$0x10] %vm562, %v957
        %971 = vst.msk [vmem:[%s958 - $0x3] sm:$0x40] %vm567, %v954
        %972 = vst.msk [vmem:[%s958 + $0xd] sm:$0x40] %vm567, %v955
        %973 = vst.msk [vmem:[%s958 + $0x1d] sm:$0x40] %vm567, %v956
        %974 = vst.msk [vmem:[%s958 + $0x2d] sm:$0x40] %vm567, %v957
        %v979 = vrot.slane %v927, 1
        %v980 = vrot.slane %v930, 1
        %v981 = vrot.slane %v933, 1
        %v982 = vrot.slane %v936, 1
        %v987 = vmax.f32 %v927, %v979
        %v988 = vmax.f32 %v930, %v980
        %v989 = vmax.f32 %v933, %v981
        %v990 = vmax.f32 %v936, %v982
        %v991 = vmax.f32 %v987, 0.0
        %v992 = vmax.f32 %v988, 0.0
        %v993 = vmax.f32 %v989, 0.0
        %v994 = vmax.f32 %v990, 0.0
        %995 = vst.msk [vmem:[%s958 + $0x4] sm:$0x1] %vm552, %v991
        %996 = vst.msk [vmem:[%s958 + $0x14] sm:$0x1] %vm552, %v992
        %997 = vst.msk [vmem:[%s958 + $0x24] sm:$0x1] %vm552, %v993
        %998 = vst.msk [vmem:[%s958 + $0x34] sm:$0x1] %vm552, %v994
        %999 = vst.msk [vmem:[%s958 + $0x3] sm:$0x4] %vm557, %v991
        %1000 = vst.msk [vmem:[%s958 + $0x13] sm:$0x4] %vm557, %v992
        %1001 = vst.msk [vmem:[%s958 + $0x23] sm:$0x4] %vm557, %v993
        %1002 = vst.msk [vmem:[%s958 + $0x33] sm:$0x4] %vm557, %v994
        %1003 = vst.msk [vmem:[%s958 + $0x2] sm:$0x10] %vm562, %v991
        %1004 = vst.msk [vmem:[%s958 + $0x12] sm:$0x10] %vm562, %v992
        %1005 = vst.msk [vmem:[%s958 + $0x22] sm:$0x10] %vm562, %v993
        %1006 = vst.msk [vmem:[%s958 + $0x32] sm:$0x10] %vm562, %v994
        %1007 = vst.msk [vmem:[%s958 + $0x1] sm:$0x40] %vm567, %v991
        %1008 = vst.msk [vmem:[%s958 + $0x11] sm:$0x40] %vm567, %v992
        %1009 = vst.msk [vmem:[%s958 + $0x21] sm:$0x40] %vm567, %v993
        %1010 = vst.msk [vmem:[%s958 + $0x31] sm:$0x40] %vm567, %v994
        %v1015 = vrot.slane %v928, 1
        %v1016 = vrot.slane %v931, 1
        %v1017 = vrot.slane %v934, 1
        %v1018 = vrot.slane %v937, 1
        %v1023 = vmax.f32 %v928, %v1015
        %v1024 = vmax.f32 %v931, %v1016
        %v1025 = vmax.f32 %v934, %v1017
        %v1026 = vmax.f32 %v937, %v1018
        %v1027 = vmax.f32 %v1023, 0.0
        %v1028 = vmax.f32 %v1024, 0.0
        %v1029 = vmax.f32 %v1025, 0.0
        %v1030 = vmax.f32 %v1026, 0.0
        %1031 = vst.msk [vmem:[%s958 + $0x8] sm:$0x1] %vm552, %v1027
        %1032 = vst.msk [vmem:[%s958 + $0x18] sm:$0x1] %vm552, %v1028
        %1033 = vst.msk [vmem:[%s958 + $0x28] sm:$0x1] %vm552, %v1029
        %1034 = vst.msk [vmem:[%s958 + $0x38] sm:$0x1] %vm552, %v1030
        %1035 = vst.msk [vmem:[%s958 + $0x7] sm:$0x4] %vm557, %v1027
        %1036 = vst.msk [vmem:[%s958 + $0x17] sm:$0x4] %vm557, %v1028
        %1037 = vst.msk [vmem:[%s958 + $0x27] sm:$0x4] %vm557, %v1029
        %1038 = vst.msk [vmem:[%s958 + $0x37] sm:$0x4] %vm557, %v1030
        %1039 = vst.msk [vmem:[%s958 + $0x6] sm:$0x10] %vm562, %v1027
        %1040 = vst.msk [vmem:[%s958 + $0x16] sm:$0x10] %vm562, %v1028
        %1041 = vst.msk [vmem:[%s958 + $0x26] sm:$0x10] %vm562, %v1029
        %1042 = vst.msk [vmem:[%s958 + $0x36] sm:$0x10] %vm562, %v1030
        %1043 = vst.msk [vmem:[%s958 + $0x5] sm:$0x40] %vm567, %v1027
        %1044 = vst.msk [vmem:[%s958 + $0x15] sm:$0x40] %vm567, %v1028
        %1045 = vst.msk [vmem:[%s958 + $0x25] sm:$0x40] %vm567, %v1029
        %1046 = vst.msk [vmem:[%s958 + $0x35] sm:$0x40] %vm567, %v1030
        %s1047 = scalar_lea.vmem %s222, 384
        %v1048 = vld [vmem:[%s1047] sm:$0xff]
        %v1049 = vld [vmem:[%s1047 + $0x8] sm:$0xff]
        %v1050 = vld [vmem:[%s1047 + $0x10] sm:$0xff]
        %v1051 = vld [vmem:[%s1047 + $0x18] sm:$0xff]
        %v1052 = vld [vmem:[%s1047 + $0x20] sm:$0xff]
        %v1053 = vld [vmem:[%s1047 + $0x28] sm:$0xff]
        %v1054 = vld [vmem:[%s1047 + $0x30] sm:$0xff]
        %v1055 = vld [vmem:[%s1047 + $0x38] sm:$0xff]
        %v1056 = vld [vmem:[%s1047 + $0x40] sm:$0xff]
        %v1057 = vld [vmem:[%s1047 + $0x48] sm:$0xff]
        %v1058 = vld [vmem:[%s1047 + $0x50] sm:$0xff]
        %v1059 = vld [vmem:[%s1047 + $0x58] sm:$0xff]
        %v1060 = vld [vmem:[%s1047 + $0x60] sm:$0xff]
        %v1061 = vld [vmem:[%s1047 + $0x68] sm:$0xff]
        %v1062 = vld [vmem:[%s1047 + $0x70] sm:$0xff]
        %v1063 = vld [vmem:[%s1047 + $0x78] sm:$0xff]
        %v1064 = vld [vmem:[%s1047 + $0x80] sm:$0xff]
        %v1065 = vld [vmem:[%s1047 + $0x88] sm:$0xff]
        %v1066 = vld [vmem:[%s1047 + $0x90] sm:$0xff]
        %v1067 = vld [vmem:[%s1047 + $0x98] sm:$0xff]
        %v1068 = vld [vmem:[%s1047 + $0xa0] sm:$0xff]
        %v1069 = vld [vmem:[%s1047 + $0xa8] sm:$0xff]
        %v1070 = vld [vmem:[%s1047 + $0xb0] sm:$0xff]
        %v1071 = vld [vmem:[%s1047 + $0xb8] sm:$0xff]
        %v1073 = vsel %vm258, %v1048, 0
        %v1076 = vsel %vm258, %v1049, 0
        %v1079 = vsel %vm258, %v1050, 0
        %v1082 = vsel %vm258, %v1051, 0
        %v1085 = vsel %vm258, %v1052, 0
        %v1088 = vsel %vm258, %v1053, 0
        %v1091 = vsel %vm258, %v1054, 0
        %v1094 = vsel %vm258, %v1055, 0
        %v1097 = vsel %vm258, %v1056, 0
        %v1100 = vsel %vm258, %v1057, 0
        %v1103 = vsel %vm258, %v1058, 0
        %v1106 = vsel %vm258, %v1059, 0
        %v1109 = vsel %vm258, %v1060, 0
        %v1112 = vsel %vm258, %v1061, 0
        %v1115 = vsel %vm258, %v1062, 0
        %v1118 = vsel %vm258, %v1063, 0
        %v1121 = vsel %vm258, %v1064, 0
        %v1124 = vsel %vm258, %v1065, 0
        %v1127 = vsel %vm258, %v1066, 0
        %v1130 = vsel %vm258, %v1067, 0
        %v1133 = vsel %vm258, %v1068, 0
        %v1136 = vsel %vm258, %v1069, 0
        %v1139 = vsel %vm258, %v1070, 0
        %v1142 = vsel %vm258, %v1071, 0
        %1144 = vmatprep.subr.mxu0 0.0
        %1145 = vmatpush1.msra.mxu0 0.0
        %1146 = vmatprep.subr.mxu0 0.0
        %1147 = vmatpush1.msra.mxu0 0.0
        %1148 = vmatprep.subr.mxu0 0.0
        %1149 = vmatpush1.msra.mxu0 0.0
        %1150 = vmatprep.subr.mxu0 0.0
        %1151 = vmatpush1.msra.mxu0 0.0
        %1152 = vmatprep.subr.mxu0 0.0
        %1153 = vmatpush1.msra.mxu0 0.0
        %1154 = vmatprep.subr.mxu0 0.0
        %1155 = vmatpush1.msra.mxu0 0.0
        %1156 = vmatprep.subr.mxu0 0.0
        %1157 = vmatpush1.msra.mxu0 0.0
        %1158 = vmatprep.subr.mxu0 0.0
        %1159 = vmatpush1.msra.mxu0 0.0
        %1160 = vmatprep.subr.mxu0 0.0
        %1161 = vmatpush1.msra.mxu0 0.0
        %1162 = vmatprep.subr.mxu0 0.0
        %1163 = vmatpush1.msra.mxu0 0.0
        %1164 = vmatprep.subr.mxu0 0.0
        %1165 = vmatpush1.msra.mxu0 0.0
        %1166 = vmatprep.subr.mxu0 0.0
        %1167 = vmatpush1.msra.mxu0 0.0
        %1168 = vmatprep.subr.mxu0 0.0
        %1169 = vmatpush1.msra.mxu0 %v333
        %1170 = vmatprep.subr.mxu0 0.0
        %1171 = vmatpush1.msra.mxu0 %v225
        %1172 = vmatprep.subr.mxu0 0.0
        %1173 = vmatpush1.msra.mxu0 %v224
        %1174 = vmatprep.subr.mxu0 0.0
        %1175 = vmatpush1.msra.mxu0 %v223
        %1176 = vmatprep.subr.mxu0 0.0
        %1177 = vmatpush2.msra.mxu0 0.0
        %1178 = vmatprep.subr.mxu0 0.0
        %1179 = vmatpush2.msra.mxu0 0.0
        %1180 = vmatprep.subr.mxu0 0.0
        %1181 = vmatpush2.msra.mxu0 0.0
        %1182 = vmatprep.subr.mxu0 0.0
        %1183 = vmatpush2.msra.mxu0 0.0
        %1184 = vmatprep.subr.mxu0 0.0
        %1185 = vmatpush2.msra.mxu0 0.0
        %1186 = vmatprep.subr.mxu0 0.0
        %1187 = vmatpush2.msra.mxu0 0.0
        %1188 = vmatprep.subr.mxu0 0.0
        %1189 = vmatpush2.msra.mxu0 0.0
        %1190 = vmatprep.subr.mxu0 0.0
        %1191 = vmatpush2.msra.mxu0 0.0
        %1192 = vmatprep.subr.mxu0 0.0
        %1193 = vmatpush2.msra.mxu0 0.0
        %1194 = vmatprep.subr.mxu0 0.0
        %1195 = vmatpush2.msra.mxu0 0.0
        %1196 = vmatprep.subr.mxu0 0.0
        %1197 = vmatpush2.msra.mxu0 0.0
        %1198 = vmatprep.subr.mxu0 0.0
        %1199 = vmatpush2.msra.mxu0 0.0
        %1200 = vmatprep.subr.mxu0 0.0
        %1201 = vmatpush2.msra.mxu0 0.0
        %1202 = vmatprep.subr.mxu0 0.0
        %1203 = vmatpush2.msra.mxu0 0.0
        %1204 = vmatprep.subr.mxu0 0.0
        %1205 = vmatpush2.msra.mxu0 0.0
        %1206 = vmatprep.subr.mxu0 0.0
        %1207 = vmatpush2.msra.mxu0 0.0
        %1208 = vmatprep.mubr.f32.mxu0 0.0
        %1209 = vmatmul.mubr.f32.gmra.mxu0 %v1073
        %v1210 = vpop.f32.mrf.mxu0
        %v1211 = vadd.f32 %v256, %v1210
        %v1212 = vpop.f32.mrf.mxu0
        %1213 = vmatprep.mubr.f32.mxu0 0.0
        %1214 = vmatmul.mubr.f32.gmra.mxu0 %v1076
        %v1215 = vpop.f32.mrf.mxu0
        %v1216 = vadd.f32 %v256, %v1215
        %v1217 = vpop.f32.mrf.mxu0
        %1218 = vmatprep.mubr.f32.mxu0 0.0
        %1219 = vmatmul.mubr.f32.gmra.mxu0 %v1079
        %v1220 = vpop.f32.mrf.mxu0
        %v1221 = vadd.f32 %v256, %v1220
        %v1222 = vpop.f32.mrf.mxu0
        %1223 = vmatprep.mubr.f32.mxu0 0.0
        %1224 = vmatmul.mubr.f32.gmra.mxu0 %v1082
        %v1225 = vpop.f32.mrf.mxu0
        %v1226 = vadd.f32 %v256, %v1225
        %v1227 = vpop.f32.mrf.mxu0
        %1228 = vmatprep.mubr.f32.mxu0 0.0
        %1229 = vmatmul.mubr.f32.gmra.mxu0 %v1085
        %v1230 = vpop.f32.mrf.mxu0
        %v1231 = vadd.f32 %v256, %v1230
        %v1232 = vpop.f32.mrf.mxu0
        %1233 = vmatprep.mubr.f32.mxu0 0.0
        %1234 = vmatmul.mubr.f32.gmra.mxu0 %v1088
        %v1235 = vpop.f32.mrf.mxu0
        %v1236 = vadd.f32 %v256, %v1235
        %v1237 = vpop.f32.mrf.mxu0
        %1238 = vmatprep.mubr.f32.mxu0 0.0
        %1239 = vmatmul.mubr.f32.gmra.mxu0 %v1091
        %v1240 = vpop.f32.mrf.mxu0
        %v1241 = vadd.f32 %v256, %v1240
        %v1242 = vpop.f32.mrf.mxu0
        %1243 = vmatprep.mubr.f32.mxu0 0.0
        %1244 = vmatmul.mubr.f32.gmra.mxu0 %v1094
        %v1245 = vpop.f32.mrf.mxu0
        %v1246 = vadd.f32 %v256, %v1245
        %v1247 = vpop.f32.mrf.mxu0
        %1248 = vmatprep.mubr.f32.mxu0 0.0
        %1249 = vmatmul.mubr.f32.gmra.mxu0 %v1097
        %v1250 = vpop.f32.mrf.mxu0
        %v1251 = vadd.f32 %v256, %v1250
        %v1252 = vpop.f32.mrf.mxu0
        %1253 = vmatprep.mubr.f32.mxu0 0.0
        %1254 = vmatmul.mubr.f32.gmra.mxu0 %v1100
        %v1255 = vpop.f32.mrf.mxu0
        %v1256 = vadd.f32 %v256, %v1255
        %v1257 = vpop.f32.mrf.mxu0
        %1258 = vmatprep.mubr.f32.mxu0 0.0
        %1259 = vmatmul.mubr.f32.gmra.mxu0 %v1103
        %v1260 = vpop.f32.mrf.mxu0
        %v1261 = vadd.f32 %v256, %v1260
        %v1262 = vpop.f32.mrf.mxu0
        %1263 = vmatprep.mubr.f32.mxu0 0.0
        %1264 = vmatmul.mubr.f32.gmra.mxu0 %v1106
        %v1265 = vpop.f32.mrf.mxu0
        %v1266 = vadd.f32 %v256, %v1265
        %v1267 = vpop.f32.mrf.mxu0
        %1268 = vmatprep.mubr.f32.mxu0 0.0
        %1269 = vmatmul.mubr.f32.gmra.mxu0 %v1109
        %v1270 = vpop.f32.mrf.mxu0
        %v1271 = vadd.f32 %v256, %v1270
        %v1272 = vpop.f32.mrf.mxu0
        %1273 = vmatprep.mubr.f32.mxu0 0.0
        %1274 = vmatmul.mubr.f32.gmra.mxu0 %v1112
        %v1275 = vpop.f32.mrf.mxu0
        %v1276 = vadd.f32 %v256, %v1275
        %v1277 = vpop.f32.mrf.mxu0
        %1278 = vmatprep.mubr.f32.mxu0 0.0
        %1279 = vmatmul.mubr.f32.gmra.mxu0 %v1115
        %v1280 = vpop.f32.mrf.mxu0
        %v1281 = vadd.f32 %v256, %v1280
        %v1282 = vpop.f32.mrf.mxu0
        %1283 = vmatprep.mubr.f32.mxu0 0.0
        %1284 = vmatmul.mubr.f32.gmra.mxu0 %v1118
        %v1285 = vpop.f32.mrf.mxu0
        %v1286 = vadd.f32 %v256, %v1285
        %v1287 = vpop.f32.mrf.mxu0
        %1288 = vmatprep.mubr.f32.mxu0 0.0
        %1289 = vmatmul.mubr.f32.gmra.mxu0 %v1121
        %v1290 = vpop.f32.mrf.mxu0
        %v1291 = vadd.f32 %v256, %v1290
        %v1292 = vpop.f32.mrf.mxu0
        %1293 = vmatprep.mubr.f32.mxu0 0.0
        %1294 = vmatmul.mubr.f32.gmra.mxu0 %v1124
        %v1295 = vpop.f32.mrf.mxu0
        %v1296 = vadd.f32 %v256, %v1295
        %v1297 = vpop.f32.mrf.mxu0
        %1298 = vmatprep.mubr.f32.mxu0 0.0
        %1299 = vmatmul.mubr.f32.gmra.mxu0 %v1127
        %v1300 = vpop.f32.mrf.mxu0
        %v1301 = vadd.f32 %v256, %v1300
        %v1302 = vpop.f32.mrf.mxu0
        %1303 = vmatprep.mubr.f32.mxu0 0.0
        %1304 = vmatmul.mubr.f32.gmra.mxu0 %v1130
        %v1305 = vpop.f32.mrf.mxu0
        %v1306 = vadd.f32 %v256, %v1305
        %v1307 = vpop.f32.mrf.mxu0
        %1308 = vmatprep.mubr.f32.mxu0 0.0
        %1309 = vmatmul.mubr.f32.gmra.mxu0 %v1133
        %v1310 = vpop.f32.mrf.mxu0
        %v1311 = vadd.f32 %v256, %v1310
        %v1312 = vpop.f32.mrf.mxu0
        %1313 = vmatprep.mubr.f32.mxu0 0.0
        %1314 = vmatmul.mubr.f32.gmra.mxu0 %v1136
        %v1315 = vpop.f32.mrf.mxu0
        %v1316 = vadd.f32 %v256, %v1315
        %v1317 = vpop.f32.mrf.mxu0
        %1318 = vmatprep.mubr.f32.mxu0 0.0
        %1319 = vmatmul.mubr.f32.gmra.mxu0 %v1139
        %v1320 = vpop.f32.mrf.mxu0
        %v1321 = vadd.f32 %v256, %v1320
        %v1322 = vpop.f32.mrf.mxu0
        %1323 = vmatprep.mubr.f32.mxu0 0.0
        %1324 = vmatmul.mubr.f32.gmra.mxu0 %v1142
        %v1325 = vpop.f32.mrf.mxu0
        %v1326 = vadd.f32 %v256, %v1325
        %v1327 = vpop.f32.mrf.mxu0
        %1328 = vdwg.mxu0
        %v1329 = vmax.f32 %v1211, %v1226
        %v1330 = vmax.f32 %v1216, %v1231
        %v1331 = vmax.f32 %v1221, %v1236
        %v1332 = vmax.f32 %v1241, %v1256
        %v1333 = vmax.f32 %v1246, %v1261
        %v1334 = vmax.f32 %v1251, %v1266
        %v1335 = vmax.f32 %v1271, %v1286
        %v1336 = vmax.f32 %v1276, %v1291
        %v1337 = vmax.f32 %v1281, %v1296
        %v1338 = vmax.f32 %v1301, %v1316
        %v1339 = vmax.f32 %v1306, %v1321
        %v1340 = vmax.f32 %v1311, %v1326
        %v1345 = vrot.slane %v1329, 1
        %v1346 = vrot.slane %v1332, 1
        %v1347 = vrot.slane %v1335, 1
        %v1348 = vrot.slane %v1338, 1
        %v1353 = vmax.f32 %v1329, %v1345
        %v1354 = vmax.f32 %v1332, %v1346
        %v1355 = vmax.f32 %v1335, %v1347
        %v1356 = vmax.f32 %v1338, %v1348
        %v1357 = vmax.f32 %v1353, 0.0
        %v1358 = vmax.f32 %v1354, 0.0
        %v1359 = vmax.f32 %v1355, 0.0
        %v1360 = vmax.f32 %v1356, 0.0
        %s1361 = scalar_lea.vmem [#allocation2], 128
        %1362 = vst.msk [vmem:[%s1361] sm:$0x1] %vm552, %v1357
        %1363 = vst.msk [vmem:[%s1361 + $0x10] sm:$0x1] %vm552, %v1358
        %1364 = vst.msk [vmem:[%s1361 + $0x20] sm:$0x1] %vm552, %v1359
        %1365 = vst.msk [vmem:[%s1361 + $0x30] sm:$0x1] %vm552, %v1360
        %1366 = vst.msk [vmem:[%s1361 - $0x1] sm:$0x4] %vm557, %v1357
        %1367 = vst.msk [vmem:[%s1361 + $0xf] sm:$0x4] %vm557, %v1358
        %1368 = vst.msk [vmem:[%s1361 + $0x1f] sm:$0x4] %vm557, %v1359
        %1369 = vst.msk [vmem:[%s1361 + $0x2f] sm:$0x4] %vm557, %v1360
        %1370 = vst.msk [vmem:[%s1361 - $0x2] sm:$0x10] %vm562, %v1357
        %1371 = vst.msk [vmem:[%s1361 + $0xe] sm:$0x10] %vm562, %v1358
        %1372 = vst.msk [vmem:[%s1361 + $0x1e] sm:$0x10] %vm562, %v1359
        %1373 = vst.msk [vmem:[%s1361 + $0x2e] sm:$0x10] %vm562, %v1360
        %1374 = vst.msk [vmem:[%s1361 - $0x3] sm:$0x40] %vm567, %v1357
        %1375 = vst.msk [vmem:[%s1361 + $0xd] sm:$0x40] %vm567, %v1358
        %1376 = vst.msk [vmem:[%s1361 + $0x1d] sm:$0x40] %vm567, %v1359
        %1377 = vst.msk [vmem:[%s1361 + $0x2d] sm:$0x40] %vm567, %v1360
        %v1382 = vrot.slane %v1330, 1
        %v1383 = vrot.slane %v1333, 1
        %v1384 = vrot.slane %v1336, 1
        %v1385 = vrot.slane %v1339, 1
        %v1390 = vmax.f32 %v1330, %v1382
        %v1391 = vmax.f32 %v1333, %v1383
        %v1392 = vmax.f32 %v1336, %v1384
        %v1393 = vmax.f32 %v1339, %v1385
        %v1394 = vmax.f32 %v1390, 0.0
        %v1395 = vmax.f32 %v1391, 0.0
        %v1396 = vmax.f32 %v1392, 0.0
        %v1397 = vmax.f32 %v1393, 0.0
        %1398 = vst.msk [vmem:[%s1361 + $0x4] sm:$0x1] %vm552, %v1394
        %1399 = vst.msk [vmem:[%s1361 + $0x14] sm:$0x1] %vm552, %v1395
        %1400 = vst.msk [vmem:[%s1361 + $0x24] sm:$0x1] %vm552, %v1396
        %1401 = vst.msk [vmem:[%s1361 + $0x34] sm:$0x1] %vm552, %v1397
        %1402 = vst.msk [vmem:[%s1361 + $0x3] sm:$0x4] %vm557, %v1394
        %1403 = vst.msk [vmem:[%s1361 + $0x13] sm:$0x4] %vm557, %v1395
        %1404 = vst.msk [vmem:[%s1361 + $0x23] sm:$0x4] %vm557, %v1396
        %1405 = vst.msk [vmem:[%s1361 + $0x33] sm:$0x4] %vm557, %v1397
        %1406 = vst.msk [vmem:[%s1361 + $0x2] sm:$0x10] %vm562, %v1394
        %1407 = vst.msk [vmem:[%s1361 + $0x12] sm:$0x10] %vm562, %v1395
        %1408 = vst.msk [vmem:[%s1361 + $0x22] sm:$0x10] %vm562, %v1396
        %1409 = vst.msk [vmem:[%s1361 + $0x32] sm:$0x10] %vm562, %v1397
        %1410 = vst.msk [vmem:[%s1361 + $0x1] sm:$0x40] %vm567, %v1394
        %1411 = vst.msk [vmem:[%s1361 + $0x11] sm:$0x40] %vm567, %v1395
        %1412 = vst.msk [vmem:[%s1361 + $0x21] sm:$0x40] %vm567, %v1396
        %1413 = vst.msk [vmem:[%s1361 + $0x31] sm:$0x40] %vm567, %v1397
        %v1418 = vrot.slane %v1331, 1
        %v1419 = vrot.slane %v1334, 1
        %v1420 = vrot.slane %v1337, 1
        %v1421 = vrot.slane %v1340, 1
        %v1426 = vmax.f32 %v1331, %v1418
        %v1427 = vmax.f32 %v1334, %v1419
        %v1428 = vmax.f32 %v1337, %v1420
        %v1429 = vmax.f32 %v1340, %v1421
        %v1430 = vmax.f32 %v1426, 0.0
        %v1431 = vmax.f32 %v1427, 0.0
        %v1432 = vmax.f32 %v1428, 0.0
        %v1433 = vmax.f32 %v1429, 0.0
        %1434 = vst.msk [vmem:[%s1361 + $0x8] sm:$0x1] %vm552, %v1430
        %1435 = vst.msk [vmem:[%s1361 + $0x18] sm:$0x1] %vm552, %v1431
        %1436 = vst.msk [vmem:[%s1361 + $0x28] sm:$0x1] %vm552, %v1432
        %1437 = vst.msk [vmem:[%s1361 + $0x38] sm:$0x1] %vm552, %v1433
        %1438 = vst.msk [vmem:[%s1361 + $0x7] sm:$0x4] %vm557, %v1430
        %1439 = vst.msk [vmem:[%s1361 + $0x17] sm:$0x4] %vm557, %v1431
        %1440 = vst.msk [vmem:[%s1361 + $0x27] sm:$0x4] %vm557, %v1432
        %1441 = vst.msk [vmem:[%s1361 + $0x37] sm:$0x4] %vm557, %v1433
        %1442 = vst.msk [vmem:[%s1361 + $0x6] sm:$0x10] %vm562, %v1430
        %1443 = vst.msk [vmem:[%s1361 + $0x16] sm:$0x10] %vm562, %v1431
        %1444 = vst.msk [vmem:[%s1361 + $0x26] sm:$0x10] %vm562, %v1432
        %1445 = vst.msk [vmem:[%s1361 + $0x36] sm:$0x10] %vm562, %v1433
        %1446 = vst.msk [vmem:[%s1361 + $0x5] sm:$0x40] %vm567, %v1430
        %1447 = vst.msk [vmem:[%s1361 + $0x15] sm:$0x40] %vm567, %v1431
        %1448 = vst.msk [vmem:[%s1361 + $0x25] sm:$0x40] %vm567, %v1432
        %1449 = vst.msk [vmem:[%s1361 + $0x35] sm:$0x40] %vm567, %v1433
        %v1450 = vld [vmem:[%s4] sm:$0x1]
        %v1452 = vlaneseq
        %v1453 = vshrl.u32 %v1452, 7
        %v1454 = vsub.s32 0, %v1453
        %v1455 = vrot.slane %v1450, %v1454
        %v1457 = vld [vmem:[#allocation2] sm:$0xff]
        %v1458 = vld [vmem:[#allocation2 + $0x10] sm:$0xff]
        %v1459 = vld [vmem:[#allocation2 + $0x20] sm:$0xff]
        %v1460 = vld [vmem:[#allocation2 + $0x30] sm:$0xff]
        %v1461 = vld [vmem:[#allocation2 + $0x40] sm:$0xff]
        %v1462 = vld [vmem:[#allocation2 + $0x50] sm:$0xff]
        %v1463 = vld [vmem:[#allocation2 + $0x60] sm:$0xff]
        %v1464 = vld [vmem:[#allocation2 + $0x70] sm:$0xff]
        %v1465 = vld [vmem:[%s3] sm:$0xff]
        %v1466 = vld [vmem:[%s3 + $0x8] sm:$0x3]
        %vm1467 = vcmask 80896
        %v1469 = vsel %vm1467, %v1457, 0
        %v1472 = vsel %vm1467, %v1458, 0
        %v1475 = vsel %vm1467, %v1459, 0
        %v1478 = vsel %vm1467, %v1460, 0
        %v1481 = vsel %vm1467, %v1461, 0
        %v1484 = vsel %vm1467, %v1462, 0
        %v1487 = vsel %vm1467, %v1463, 0
        %v1490 = vsel %vm1467, %v1464, 0
        %vm1492 = vcmask 1041408
        %v1494 = vsel %vm1492, %v1466, 0
        %1496 = vmatprep.subr.mxu0 0.0
        %1497 = vmatpush1.msra.mxu0 0.0
        %1498 = vmatprep.subr.mxu0 0.0
        %1499 = vmatpush1.msra.mxu0 0.0
        %1500 = vmatprep.subr.mxu0 0.0
        %1501 = vmatpush1.msra.mxu0 0.0
        %1502 = vmatprep.subr.mxu0 0.0
        %1503 = vmatpush1.msra.mxu0 0.0
        %1504 = vmatprep.subr.mxu0 0.0
        %1505 = vmatpush1.msra.mxu0 0.0
        %1506 = vmatprep.subr.mxu0 0.0
        %1507 = vmatpush1.msra.mxu0 0.0
        %1508 = vmatprep.subr.mxu0 0.0
        %1509 = vmatpush1.msra.mxu0 0.0
        %1510 = vmatprep.subr.mxu0 0.0
        %1511 = vmatpush1.msra.mxu0 0.0
        %1512 = vmatprep.subr.mxu0 0.0
        %1513 = vmatpush1.msra.mxu0 0.0
        %1514 = vmatprep.subr.mxu0 0.0
        %1515 = vmatpush1.msra.mxu0 0.0
        %1516 = vmatprep.subr.mxu0 0.0
        %1517 = vmatpush1.msra.mxu0 0.0
        %1518 = vmatprep.subr.mxu0 0.0
        %1519 = vmatpush1.msra.mxu0 0.0
        %1520 = vmatprep.subr.mxu0 0.0
        %1521 = vmatpush1.msra.mxu0 0.0
        %1522 = vmatprep.subr.mxu0 0.0
        %1523 = vmatpush1.msra.mxu0 0.0
        %1524 = vmatprep.subr.mxu0 0.0
        %1525 = vmatpush1.msra.mxu0 %v1494
        %1526 = vmatprep.subr.mxu0 0.0
        %1527 = vmatpush1.msra.mxu0 %v1465
        %1528 = vmatprep.subr.mxu0 0.0
        %1529 = vmatpush2.msra.mxu0 0.0
        %1530 = vmatprep.subr.mxu0 0.0
        %1531 = vmatpush2.msra.mxu0 0.0
        %1532 = vmatprep.subr.mxu0 0.0
        %1533 = vmatpush2.msra.mxu0 0.0
        %1534 = vmatprep.subr.mxu0 0.0
        %1535 = vmatpush2.msra.mxu0 0.0
        %1536 = vmatprep.subr.mxu0 0.0
        %1537 = vmatpush2.msra.mxu0 0.0
        %1538 = vmatprep.subr.mxu0 0.0
        %1539 = vmatpush2.msra.mxu0 0.0
        %1540 = vmatprep.subr.mxu0 0.0
        %1541 = vmatpush2.msra.mxu0 0.0
        %1542 = vmatprep.subr.mxu0 0.0
        %1543 = vmatpush2.msra.mxu0 0.0
        %1544 = vmatprep.subr.mxu0 0.0
        %1545 = vmatpush2.msra.mxu0 0.0
        %1546 = vmatprep.subr.mxu0 0.0
        %1547 = vmatpush2.msra.mxu0 0.0
        %1548 = vmatprep.subr.mxu0 0.0
        %1549 = vmatpush2.msra.mxu0 0.0
        %1550 = vmatprep.subr.mxu0 0.0
        %1551 = vmatpush2.msra.mxu0 0.0
        %1552 = vmatprep.subr.mxu0 0.0
        %1553 = vmatpush2.msra.mxu0 0.0
        %1554 = vmatprep.subr.mxu0 0.0
        %1555 = vmatpush2.msra.mxu0 0.0
        %1556 = vmatprep.subr.mxu0 0.0
        %1557 = vmatpush2.msra.mxu0 0.0
        %1558 = vmatprep.subr.mxu0 0.0
        %1559 = vmatpush2.msra.mxu0 0.0
        %1560 = vmatprep.mubr.f32.mxu0 0.0
        %1561 = vmatmul.mubr.f32.gmra.mxu0 %v1469
        %v1562 = vpop.f32.mrf.mxu0
        %v1563 = vadd.f32 0.0, %v1562
        %v1564 = vpop.f32.mrf.mxu0
        %1565 = vmatprep.mubr.f32.mxu0 0.0
        %1566 = vmatmul.mubr.f32.gmra.mxu0 %v1472
        %v1567 = vpop.f32.mrf.mxu0
        %v1568 = vadd.f32 0.0, %v1567
        %v1569 = vpop.f32.mrf.mxu0
        %1570 = vmatprep.mubr.f32.mxu0 0.0
        %1571 = vmatmul.mubr.f32.gmra.mxu0 %v1475
        %v1572 = vpop.f32.mrf.mxu0
        %v1573 = vadd.f32 0.0, %v1572
        %v1574 = vpop.f32.mrf.mxu0
        %1575 = vmatprep.mubr.f32.mxu0 0.0
        %1576 = vmatmul.mubr.f32.gmra.mxu0 %v1478
        %v1577 = vpop.f32.mrf.mxu0
        %v1578 = vadd.f32 0.0, %v1577
        %v1579 = vpop.f32.mrf.mxu0
        %1580 = vmatprep.mubr.f32.mxu0 0.0
        %1581 = vmatmul.mubr.f32.gmra.mxu0 %v1481
        %v1582 = vpop.f32.mrf.mxu0
        %v1583 = vadd.f32 0.0, %v1582
        %v1584 = vpop.f32.mrf.mxu0
        %1585 = vmatprep.mubr.f32.mxu0 0.0
        %1586 = vmatmul.mubr.f32.gmra.mxu0 %v1484
        %v1587 = vpop.f32.mrf.mxu0
        %v1588 = vadd.f32 0.0, %v1587
        %v1589 = vpop.f32.mrf.mxu0
        %1590 = vmatprep.mubr.f32.mxu0 0.0
        %1591 = vmatmul.mubr.f32.gmra.mxu0 %v1487
        %v1592 = vpop.f32.mrf.mxu0
        %v1593 = vadd.f32 0.0, %v1592
        %v1594 = vpop.f32.mrf.mxu0
        %1595 = vmatprep.mubr.f32.mxu0 0.0
        %1596 = vmatmul.mubr.f32.gmra.mxu0 %v1490
        %v1597 = vpop.f32.mrf.mxu0
        %v1598 = vadd.f32 0.0, %v1597
        %v1599 = vpop.f32.mrf.mxu0
        %1600 = vdwg.mxu0
        %v1601 = vadd.f32 %v1455, %v1563
        %v1602 = vadd.f32 %v1455, %v1568
        %v1603 = vadd.f32 %v1455, %v1573
        %v1604 = vadd.f32 %v1455, %v1578
        %v1605 = vadd.f32 %v1455, %v1583
        %v1606 = vadd.f32 %v1455, %v1588
        %v1607 = vadd.f32 %v1455, %v1593
        %v1608 = vadd.f32 %v1455, %v1598
        %v1609 = vld [vmem:[#allocation2 + $0x1] sm:$0xff]
        %v1610 = vld [vmem:[#allocation2 + $0x11] sm:$0xff]
        %v1611 = vld [vmem:[#allocation2 + $0x21] sm:$0xff]
        %v1612 = vld [vmem:[#allocation2 + $0x31] sm:$0xff]
        %v1613 = vld [vmem:[#allocation2 + $0x41] sm:$0xff]
        %v1614 = vld [vmem:[#allocation2 + $0x51] sm:$0xff]
        %v1615 = vld [vmem:[#allocation2 + $0x61] sm:$0xff]
        %v1616 = vld [vmem:[#allocation2 + $0x71] sm:$0xff]
        %s1617 = scalar_lea.vmem %s3, 16
        %v1618 = vld [vmem:[%s1617] sm:$0xff]
        %v1619 = vld [vmem:[%s1617 + $0x8] sm:$0x3]
        %v1621 = vsel %vm1467, %v1609, 0
        %v1624 = vsel %vm1467, %v1610, 0
        %v1627 = vsel %vm1467, %v1611, 0
        %v1630 = vsel %vm1467, %v1612, 0
        %v1633 = vsel %vm1467, %v1613, 0
        %v1636 = vsel %vm1467, %v1614, 0
        %v1639 = vsel %vm1467, %v1615, 0
        %v1642 = vsel %vm1467, %v1616, 0
        %v1645 = vsel %vm1492, %v1619, 0
        %1647 = vmatprep.subr.mxu0 0.0
        %1648 = vmatpush1.msra.mxu0 0.0
        %1649 = vmatprep.subr.mxu0 0.0
        %1650 = vmatpush1.msra.mxu0 0.0
        %1651 = vmatprep.subr.mxu0 0.0
        %1652 = vmatpush1.msra.mxu0 0.0
        %1653 = vmatprep.subr.mxu0 0.0
        %1654 = vmatpush1.msra.mxu0 0.0
        %1655 = vmatprep.subr.mxu0 0.0
        %1656 = vmatpush1.msra.mxu0 0.0
        %1657 = vmatprep.subr.mxu0 0.0
        %1658 = vmatpush1.msra.mxu0 0.0
        %1659 = vmatprep.subr.mxu0 0.0
        %1660 = vmatpush1.msra.mxu0 0.0
        %1661 = vmatprep.subr.mxu0 0.0
        %1662 = vmatpush1.msra.mxu0 0.0
        %1663 = vmatprep.subr.mxu0 0.0
        %1664 = vmatpush1.msra.mxu0 0.0
        %1665 = vmatprep.subr.mxu0 0.0
        %1666 = vmatpush1.msra.mxu0 0.0
        %1667 = vmatprep.subr.mxu0 0.0
        %1668 = vmatpush1.msra.mxu0 0.0
        %1669 = vmatprep.subr.mxu0 0.0
        %1670 = vmatpush1.msra.mxu0 0.0
        %1671 = vmatprep.subr.mxu0 0.0
        %1672 = vmatpush1.msra.mxu0 0.0
        %1673 = vmatprep.subr.mxu0 0.0
        %1674 = vmatpush1.msra.mxu0 0.0
        %1675 = vmatprep.subr.mxu0 0.0
        %1676 = vmatpush1.msra.mxu0 %v1645
        %1677 = vmatprep.subr.mxu0 0.0
        %1678 = vmatpush1.msra.mxu0 %v1618
        %1679 = vmatprep.subr.mxu0 0.0
        %1680 = vmatpush2.msra.mxu0 0.0
        %1681 = vmatprep.subr.mxu0 0.0
        %1682 = vmatpush2.msra.mxu0 0.0
        %1683 = vmatprep.subr.mxu0 0.0
        %1684 = vmatpush2.msra.mxu0 0.0
        %1685 = vmatprep.subr.mxu0 0.0
        %1686 = vmatpush2.msra.mxu0 0.0
        %1687 = vmatprep.subr.mxu0 0.0
        %1688 = vmatpush2.msra.mxu0 0.0
        %1689 = vmatprep.subr.mxu0 0.0
        %1690 = vmatpush2.msra.mxu0 0.0
        %1691 = vmatprep.subr.mxu0 0.0
        %1692 = vmatpush2.msra.mxu0 0.0
        %1693 = vmatprep.subr.mxu0 0.0
        %1694 = vmatpush2.msra.mxu0 0.0
        %1695 = vmatprep.subr.mxu0 0.0
        %1696 = vmatpush2.msra.mxu0 0.0
        %1697 = vmatprep.subr.mxu0 0.0
        %1698 = vmatpush2.msra.mxu0 0.0
        %1699 = vmatprep.subr.mxu0 0.0
        %1700 = vmatpush2.msra.mxu0 0.0
        %1701 = vmatprep.subr.mxu0 0.0
        %1702 = vmatpush2.msra.mxu0 0.0
        %1703 = vmatprep.subr.mxu0 0.0
        %1704 = vmatpush2.msra.mxu0 0.0
        %1705 = vmatprep.subr.mxu0 0.0
        %1706 = vmatpush2.msra.mxu0 0.0
        %1707 = vmatprep.subr.mxu0 0.0
        %1708 = vmatpush2.msra.mxu0 0.0
        %1709 = vmatprep.subr.mxu0 0.0
        %1710 = vmatpush2.msra.mxu0 0.0
        %1711 = vmatprep.mubr.f32.mxu0 0.0
        %1712 = vmatmul.mubr.f32.gmra.mxu0 %v1621
        %v1713 = vpop.f32.mrf.mxu0
        %v1714 = vadd.f32 0.0, %v1713
        %v1715 = vpop.f32.mrf.mxu0
        %1716 = vmatprep.mubr.f32.mxu0 0.0
        %1717 = vmatmul.mubr.f32.gmra.mxu0 %v1624
        %v1718 = vpop.f32.mrf.mxu0
        %v1719 = vadd.f32 0.0, %v1718
        %v1720 = vpop.f32.mrf.mxu0
        %1721 = vmatprep.mubr.f32.mxu0 0.0
        %1722 = vmatmul.mubr.f32.gmra.mxu0 %v1627
        %v1723 = vpop.f32.mrf.mxu0
        %v1724 = vadd.f32 0.0, %v1723
        %v1725 = vpop.f32.mrf.mxu0
        %1726 = vmatprep.mubr.f32.mxu0 0.0
        %1727 = vmatmul.mubr.f32.gmra.mxu0 %v1630
        %v1728 = vpop.f32.mrf.mxu0
        %v1729 = vadd.f32 0.0, %v1728
        %v1730 = vpop.f32.mrf.mxu0
        %1731 = vmatprep.mubr.f32.mxu0 0.0
        %1732 = vmatmul.mubr.f32.gmra.mxu0 %v1633
        %v1733 = vpop.f32.mrf.mxu0
        %v1734 = vadd.f32 0.0, %v1733
        %v1735 = vpop.f32.mrf.mxu0
        %1736 = vmatprep.mubr.f32.mxu0 0.0
        %1737 = vmatmul.mubr.f32.gmra.mxu0 %v1636
        %v1738 = vpop.f32.mrf.mxu0
        %v1739 = vadd.f32 0.0, %v1738
        %v1740 = vpop.f32.mrf.mxu0
        %1741 = vmatprep.mubr.f32.mxu0 0.0
        %1742 = vmatmul.mubr.f32.gmra.mxu0 %v1639
        %v1743 = vpop.f32.mrf.mxu0
        %v1744 = vadd.f32 0.0, %v1743
        %v1745 = vpop.f32.mrf.mxu0
        %1746 = vmatprep.mubr.f32.mxu0 0.0
        %1747 = vmatmul.mubr.f32.gmra.mxu0 %v1642
        %v1748 = vpop.f32.mrf.mxu0
        %v1749 = vadd.f32 0.0, %v1748
        %v1750 = vpop.f32.mrf.mxu0
        %1751 = vdwg.mxu0
        %v1752 = vadd.f32 %v1601, %v1714
        %v1753 = vadd.f32 %v1602, %v1719
        %v1754 = vadd.f32 %v1603, %v1724
        %v1755 = vadd.f32 %v1604, %v1729
        %v1756 = vadd.f32 %v1605, %v1734
        %v1757 = vadd.f32 %v1606, %v1739
        %v1758 = vadd.f32 %v1607, %v1744
        %v1759 = vadd.f32 %v1608, %v1749
        %v1760 = vld [vmem:[#allocation2 + $0x2] sm:$0xff]
        %v1761 = vld [vmem:[#allocation2 + $0x12] sm:$0xff]
        %v1762 = vld [vmem:[#allocation2 + $0x22] sm:$0xff]
        %v1763 = vld [vmem:[#allocation2 + $0x32] sm:$0xff]
        %v1764 = vld [vmem:[#allocation2 + $0x42] sm:$0xff]
        %v1765 = vld [vmem:[#allocation2 + $0x52] sm:$0xff]
        %v1766 = vld [vmem:[#allocation2 + $0x62] sm:$0xff]
        %v1767 = vld [vmem:[#allocation2 + $0x72] sm:$0xff]
        %s1768 = scalar_lea.vmem %s3, 32
        %v1769 = vld [vmem:[%s1768] sm:$0xff]
        %v1770 = vld [vmem:[%s1768 + $0x8] sm:$0x3]
        %v1772 = vsel %vm1467, %v1760, 0
        %v1775 = vsel %vm1467, %v1761, 0
        %v1778 = vsel %vm1467, %v1762, 0
        %v1781 = vsel %vm1467, %v1763, 0
        %v1784 = vsel %vm1467, %v1764, 0
        %v1787 = vsel %vm1467, %v1765, 0
        %v1790 = vsel %vm1467, %v1766, 0
        %v1793 = vsel %vm1467, %v1767, 0
        %v1796 = vsel %vm1492, %v1770, 0
        %1798 = vmatprep.subr.mxu0 0.0
        %1799 = vmatpush1.msra.mxu0 0.0
        %1800 = vmatprep.subr.mxu0 0.0
        %1801 = vmatpush1.msra.mxu0 0.0
        %1802 = vmatprep.subr.mxu0 0.0
        %1803 = vmatpush1.msra.mxu0 0.0
        %1804 = vmatprep.subr.mxu0 0.0
        %1805 = vmatpush1.msra.mxu0 0.0
        %1806 = vmatprep.subr.mxu0 0.0
        %1807 = vmatpush1.msra.mxu0 0.0
        %1808 = vmatprep.subr.mxu0 0.0
        %1809 = vmatpush1.msra.mxu0 0.0
        %1810 = vmatprep.subr.mxu0 0.0
        %1811 = vmatpush1.msra.mxu0 0.0
        %1812 = vmatprep.subr.mxu0 0.0
        %1813 = vmatpush1.msra.mxu0 0.0
        %1814 = vmatprep.subr.mxu0 0.0
        %1815 = vmatpush1.msra.mxu0 0.0
        %1816 = vmatprep.subr.mxu0 0.0
        %1817 = vmatpush1.msra.mxu0 0.0
        %1818 = vmatprep.subr.mxu0 0.0
        %1819 = vmatpush1.msra.mxu0 0.0
        %1820 = vmatprep.subr.mxu0 0.0
        %1821 = vmatpush1.msra.mxu0 0.0
        %1822 = vmatprep.subr.mxu0 0.0
        %1823 = vmatpush1.msra.mxu0 0.0
        %1824 = vmatprep.subr.mxu0 0.0
        %1825 = vmatpush1.msra.mxu0 0.0
        %1826 = vmatprep.subr.mxu0 0.0
        %1827 = vmatpush1.msra.mxu0 %v1796
        %1828 = vmatprep.subr.mxu0 0.0
        %1829 = vmatpush1.msra.mxu0 %v1769
        %1830 = vmatprep.subr.mxu0 0.0
        %1831 = vmatpush2.msra.mxu0 0.0
        %1832 = vmatprep.subr.mxu0 0.0
        %1833 = vmatpush2.msra.mxu0 0.0
        %1834 = vmatprep.subr.mxu0 0.0
        %1835 = vmatpush2.msra.mxu0 0.0
        %1836 = vmatprep.subr.mxu0 0.0
        %1837 = vmatpush2.msra.mxu0 0.0
        %1838 = vmatprep.subr.mxu0 0.0
        %1839 = vmatpush2.msra.mxu0 0.0
        %1840 = vmatprep.subr.mxu0 0.0
        %1841 = vmatpush2.msra.mxu0 0.0
        %1842 = vmatprep.subr.mxu0 0.0
        %1843 = vmatpush2.msra.mxu0 0.0
        %1844 = vmatprep.subr.mxu0 0.0
        %1845 = vmatpush2.msra.mxu0 0.0
        %1846 = vmatprep.subr.mxu0 0.0
        %1847 = vmatpush2.msra.mxu0 0.0
        %1848 = vmatprep.subr.mxu0 0.0
        %1849 = vmatpush2.msra.mxu0 0.0
        %1850 = vmatprep.subr.mxu0 0.0
        %1851 = vmatpush2.msra.mxu0 0.0
        %1852 = vmatprep.subr.mxu0 0.0
        %1853 = vmatpush2.msra.mxu0 0.0
        %1854 = vmatprep.subr.mxu0 0.0
        %1855 = vmatpush2.msra.mxu0 0.0
        %1856 = vmatprep.subr.mxu0 0.0
        %1857 = vmatpush2.msra.mxu0 0.0
        %1858 = vmatprep.subr.mxu0 0.0
        %1859 = vmatpush2.msra.mxu0 0.0
        %1860 = vmatprep.subr.mxu0 0.0
        %1861 = vmatpush2.msra.mxu0 0.0
        %1862 = vmatprep.mubr.f32.mxu0 0.0
        %1863 = vmatmul.mubr.f32.gmra.mxu0 %v1772
        %v1864 = vpop.f32.mrf.mxu0
        %v1865 = vadd.f32 0.0, %v1864
        %v1866 = vpop.f32.mrf.mxu0
        %1867 = vmatprep.mubr.f32.mxu0 0.0
        %1868 = vmatmul.mubr.f32.gmra.mxu0 %v1775
        %v1869 = vpop.f32.mrf.mxu0
        %v1870 = vadd.f32 0.0, %v1869
        %v1871 = vpop.f32.mrf.mxu0
        %1872 = vmatprep.mubr.f32.mxu0 0.0
        %1873 = vmatmul.mubr.f32.gmra.mxu0 %v1778
        %v1874 = vpop.f32.mrf.mxu0
        %v1875 = vadd.f32 0.0, %v1874
        %v1876 = vpop.f32.mrf.mxu0
        %1877 = vmatprep.mubr.f32.mxu0 0.0
        %1878 = vmatmul.mubr.f32.gmra.mxu0 %v1781
        %v1879 = vpop.f32.mrf.mxu0
        %v1880 = vadd.f32 0.0, %v1879
        %v1881 = vpop.f32.mrf.mxu0
        %1882 = vmatprep.mubr.f32.mxu0 0.0
        %1883 = vmatmul.mubr.f32.gmra.mxu0 %v1784
        %v1884 = vpop.f32.mrf.mxu0
        %v1885 = vadd.f32 0.0, %v1884
        %v1886 = vpop.f32.mrf.mxu0
        %1887 = vmatprep.mubr.f32.mxu0 0.0
        %1888 = vmatmul.mubr.f32.gmra.mxu0 %v1787
        %v1889 = vpop.f32.mrf.mxu0
        %v1890 = vadd.f32 0.0, %v1889
        %v1891 = vpop.f32.mrf.mxu0
        %1892 = vmatprep.mubr.f32.mxu0 0.0
        %1893 = vmatmul.mubr.f32.gmra.mxu0 %v1790
        %v1894 = vpop.f32.mrf.mxu0
        %v1895 = vadd.f32 0.0, %v1894
        %v1896 = vpop.f32.mrf.mxu0
        %1897 = vmatprep.mubr.f32.mxu0 0.0
        %1898 = vmatmul.mubr.f32.gmra.mxu0 %v1793
        %v1899 = vpop.f32.mrf.mxu0
        %v1900 = vadd.f32 0.0, %v1899
        %v1901 = vpop.f32.mrf.mxu0
        %1902 = vdwg.mxu0
        %v1903 = vadd.f32 %v1752, %v1865
        %v1904 = vadd.f32 %v1753, %v1870
        %v1905 = vadd.f32 %v1754, %v1875
        %v1906 = vadd.f32 %v1755, %v1880
        %v1907 = vadd.f32 %v1756, %v1885
        %v1908 = vadd.f32 %v1757, %v1890
        %v1909 = vadd.f32 %v1758, %v1895
        %v1910 = vadd.f32 %v1759, %v1900
        %v1911 = vld [vmem:[#allocation2 + $0x3] sm:$0xff]
        %v1912 = vld [vmem:[#allocation2 + $0x13] sm:$0xff]
        %v1913 = vld [vmem:[#allocation2 + $0x23] sm:$0xff]
        %v1914 = vld [vmem:[#allocation2 + $0x33] sm:$0xff]
        %v1915 = vld [vmem:[#allocation2 + $0x43] sm:$0xff]
        %v1916 = vld [vmem:[#allocation2 + $0x53] sm:$0xff]
        %v1917 = vld [vmem:[#allocation2 + $0x63] sm:$0xff]
        %v1918 = vld [vmem:[#allocation2 + $0x73] sm:$0xff]
        %s1919 = scalar_lea.vmem %s3, 48
        %v1920 = vld [vmem:[%s1919] sm:$0xff]
        %v1921 = vld [vmem:[%s1919 + $0x8] sm:$0x3]
        %v1923 = vsel %vm1467, %v1911, 0
        %v1926 = vsel %vm1467, %v1912, 0
        %v1929 = vsel %vm1467, %v1913, 0
        %v1932 = vsel %vm1467, %v1914, 0
        %v1935 = vsel %vm1467, %v1915, 0
        %v1938 = vsel %vm1467, %v1916, 0
        %v1941 = vsel %vm1467, %v1917, 0
        %v1944 = vsel %vm1467, %v1918, 0
        %v1947 = vsel %vm1492, %v1921, 0
        %1949 = vmatprep.subr.mxu0 0.0
        %1950 = vmatpush1.msra.mxu0 0.0
        %1951 = vmatprep.subr.mxu0 0.0
        %1952 = vmatpush1.msra.mxu0 0.0
        %1953 = vmatprep.subr.mxu0 0.0
        %1954 = vmatpush1.msra.mxu0 0.0
        %1955 = vmatprep.subr.mxu0 0.0
        %1956 = vmatpush1.msra.mxu0 0.0
        %1957 = vmatprep.subr.mxu0 0.0
        %1958 = vmatpush1.msra.mxu0 0.0
        %1959 = vmatprep.subr.mxu0 0.0
        %1960 = vmatpush1.msra.mxu0 0.0
        %1961 = vmatprep.subr.mxu0 0.0
        %1962 = vmatpush1.msra.mxu0 0.0
        %1963 = vmatprep.subr.mxu0 0.0
        %1964 = vmatpush1.msra.mxu0 0.0
        %1965 = vmatprep.subr.mxu0 0.0
        %1966 = vmatpush1.msra.mxu0 0.0
        %1967 = vmatprep.subr.mxu0 0.0
        %1968 = vmatpush1.msra.mxu0 0.0
        %1969 = vmatprep.subr.mxu0 0.0
        %1970 = vmatpush1.msra.mxu0 0.0
        %1971 = vmatprep.subr.mxu0 0.0
        %1972 = vmatpush1.msra.mxu0 0.0
        %1973 = vmatprep.subr.mxu0 0.0
        %1974 = vmatpush1.msra.mxu0 0.0
        %1975 = vmatprep.subr.mxu0 0.0
        %1976 = vmatpush1.msra.mxu0 0.0
        %1977 = vmatprep.subr.mxu0 0.0
        %1978 = vmatpush1.msra.mxu0 %v1947
        %1979 = vmatprep.subr.mxu0 0.0
        %1980 = vmatpush1.msra.mxu0 %v1920
        %1981 = vmatprep.subr.mxu0 0.0
        %1982 = vmatpush2.msra.mxu0 0.0
        %1983 = vmatprep.subr.mxu0 0.0
        %1984 = vmatpush2.msra.mxu0 0.0
        %1985 = vmatprep.subr.mxu0 0.0
        %1986 = vmatpush2.msra.mxu0 0.0
        %1987 = vmatprep.subr.mxu0 0.0
        %1988 = vmatpush2.msra.mxu0 0.0
        %1989 = vmatprep.subr.mxu0 0.0
        %1990 = vmatpush2.msra.mxu0 0.0
        %1991 = vmatprep.subr.mxu0 0.0
        %1992 = vmatpush2.msra.mxu0 0.0
        %1993 = vmatprep.subr.mxu0 0.0
        %1994 = vmatpush2.msra.mxu0 0.0
        %1995 = vmatprep.subr.mxu0 0.0
        %1996 = vmatpush2.msra.mxu0 0.0
        %1997 = vmatprep.subr.mxu0 0.0
        %1998 = vmatpush2.msra.mxu0 0.0
        %1999 = vmatprep.subr.mxu0 0.0
        %2000 = vmatpush2.msra.mxu0 0.0
        %2001 = vmatprep.subr.mxu0 0.0
        %2002 = vmatpush2.msra.mxu0 0.0
        %2003 = vmatprep.subr.mxu0 0.0
        %2004 = vmatpush2.msra.mxu0 0.0
        %2005 = vmatprep.subr.mxu0 0.0
        %2006 = vmatpush2.msra.mxu0 0.0
        %2007 = vmatprep.subr.mxu0 0.0
        %2008 = vmatpush2.msra.mxu0 0.0
        %2009 = vmatprep.subr.mxu0 0.0
        %2010 = vmatpush2.msra.mxu0 0.0
        %2011 = vmatprep.subr.mxu0 0.0
        %2012 = vmatpush2.msra.mxu0 0.0
        %2013 = vmatprep.mubr.f32.mxu0 0.0
        %2014 = vmatmul.mubr.f32.gmra.mxu0 %v1923
        %v2015 = vpop.f32.mrf.mxu0
        %v2016 = vadd.f32 0.0, %v2015
        %v2017 = vpop.f32.mrf.mxu0
        %2018 = vmatprep.mubr.f32.mxu0 0.0
        %2019 = vmatmul.mubr.f32.gmra.mxu0 %v1926
        %v2020 = vpop.f32.mrf.mxu0
        %v2021 = vadd.f32 0.0, %v2020
        %v2022 = vpop.f32.mrf.mxu0
        %2023 = vmatprep.mubr.f32.mxu0 0.0
        %2024 = vmatmul.mubr.f32.gmra.mxu0 %v1929
        %v2025 = vpop.f32.mrf.mxu0
        %v2026 = vadd.f32 0.0, %v2025
        %v2027 = vpop.f32.mrf.mxu0
        %2028 = vmatprep.mubr.f32.mxu0 0.0
        %2029 = vmatmul.mubr.f32.gmra.mxu0 %v1932
        %v2030 = vpop.f32.mrf.mxu0
        %v2031 = vadd.f32 0.0, %v2030
        %v2032 = vpop.f32.mrf.mxu0
        %2033 = vmatprep.mubr.f32.mxu0 0.0
        %2034 = vmatmul.mubr.f32.gmra.mxu0 %v1935
        %v2035 = vpop.f32.mrf.mxu0
        %v2036 = vadd.f32 0.0, %v2035
        %v2037 = vpop.f32.mrf.mxu0
        %2038 = vmatprep.mubr.f32.mxu0 0.0
        %2039 = vmatmul.mubr.f32.gmra.mxu0 %v1938
        %v2040 = vpop.f32.mrf.mxu0
        %v2041 = vadd.f32 0.0, %v2040
        %v2042 = vpop.f32.mrf.mxu0
        %2043 = vmatprep.mubr.f32.mxu0 0.0
        %2044 = vmatmul.mubr.f32.gmra.mxu0 %v1941
        %v2045 = vpop.f32.mrf.mxu0
        %v2046 = vadd.f32 0.0, %v2045
        %v2047 = vpop.f32.mrf.mxu0
        %2048 = vmatprep.mubr.f32.mxu0 0.0
        %2049 = vmatmul.mubr.f32.gmra.mxu0 %v1944
        %v2050 = vpop.f32.mrf.mxu0
        %v2051 = vadd.f32 0.0, %v2050
        %v2052 = vpop.f32.mrf.mxu0
        %2053 = vdwg.mxu0
        %v2054 = vadd.f32 %v1903, %v2016
        %v2055 = vadd.f32 %v1904, %v2021
        %v2056 = vadd.f32 %v1905, %v2026
        %v2057 = vadd.f32 %v1906, %v2031
        %v2058 = vadd.f32 %v1907, %v2036
        %v2059 = vadd.f32 %v1908, %v2041
        %v2060 = vadd.f32 %v1909, %v2046
        %v2061 = vadd.f32 %v1910, %v2051
        %v2062 = vld [vmem:[#allocation2 + $0x4] sm:$0xff]
        %v2063 = vld [vmem:[#allocation2 + $0x14] sm:$0xff]
        %v2064 = vld [vmem:[#allocation2 + $0x24] sm:$0xff]
        %v2065 = vld [vmem:[#allocation2 + $0x34] sm:$0xff]
        %v2066 = vld [vmem:[#allocation2 + $0x44] sm:$0xff]
        %v2067 = vld [vmem:[#allocation2 + $0x54] sm:$0xff]
        %v2068 = vld [vmem:[#allocation2 + $0x64] sm:$0xff]
        %v2069 = vld [vmem:[#allocation2 + $0x74] sm:$0xff]
        %s2070 = scalar_lea.vmem %s3, 64
        %v2071 = vld [vmem:[%s2070] sm:$0xff]
        %v2072 = vld [vmem:[%s2070 + $0x8] sm:$0x3]
        %v2074 = vsel %vm1467, %v2062, 0
        %v2077 = vsel %vm1467, %v2063, 0
        %v2080 = vsel %vm1467, %v2064, 0
        %v2083 = vsel %vm1467, %v2065, 0
        %v2086 = vsel %vm1467, %v2066, 0
        %v2089 = vsel %vm1467, %v2067, 0
        %v2092 = vsel %vm1467, %v2068, 0
        %v2095 = vsel %vm1467, %v2069, 0
        %v2098 = vsel %vm1492, %v2072, 0
        %2100 = vmatprep.subr.mxu0 0.0
        %2101 = vmatpush1.msra.mxu0 0.0
        %2102 = vmatprep.subr.mxu0 0.0
        %2103 = vmatpush1.msra.mxu0 0.0
        %2104 = vmatprep.subr.mxu0 0.0
        %2105 = vmatpush1.msra.mxu0 0.0
        %2106 = vmatprep.subr.mxu0 0.0
        %2107 = vmatpush1.msra.mxu0 0.0
        %2108 = vmatprep.subr.mxu0 0.0
        %2109 = vmatpush1.msra.mxu0 0.0
        %2110 = vmatprep.subr.mxu0 0.0
        %2111 = vmatpush1.msra.mxu0 0.0
        %2112 = vmatprep.subr.mxu0 0.0
        %2113 = vmatpush1.msra.mxu0 0.0
        %2114 = vmatprep.subr.mxu0 0.0
        %2115 = vmatpush1.msra.mxu0 0.0
        %2116 = vmatprep.subr.mxu0 0.0
        %2117 = vmatpush1.msra.mxu0 0.0
        %2118 = vmatprep.subr.mxu0 0.0
        %2119 = vmatpush1.msra.mxu0 0.0
        %2120 = vmatprep.subr.mxu0 0.0
        %2121 = vmatpush1.msra.mxu0 0.0
        %2122 = vmatprep.subr.mxu0 0.0
        %2123 = vmatpush1.msra.mxu0 0.0
        %2124 = vmatprep.subr.mxu0 0.0
        %2125 = vmatpush1.msra.mxu0 0.0
        %2126 = vmatprep.subr.mxu0 0.0
        %2127 = vmatpush1.msra.mxu0 0.0
        %2128 = vmatprep.subr.mxu0 0.0
        %2129 = vmatpush1.msra.mxu0 %v2098
        %2130 = vmatprep.subr.mxu0 0.0
        %2131 = vmatpush1.msra.mxu0 %v2071
        %2132 = vmatprep.subr.mxu0 0.0
        %2133 = vmatpush2.msra.mxu0 0.0
        %2134 = vmatprep.subr.mxu0 0.0
        %2135 = vmatpush2.msra.mxu0 0.0
        %2136 = vmatprep.subr.mxu0 0.0
        %2137 = vmatpush2.msra.mxu0 0.0
        %2138 = vmatprep.subr.mxu0 0.0
        %2139 = vmatpush2.msra.mxu0 0.0
        %2140 = vmatprep.subr.mxu0 0.0
        %2141 = vmatpush2.msra.mxu0 0.0
        %2142 = vmatprep.subr.mxu0 0.0
        %2143 = vmatpush2.msra.mxu0 0.0
        %2144 = vmatprep.subr.mxu0 0.0
        %2145 = vmatpush2.msra.mxu0 0.0
        %2146 = vmatprep.subr.mxu0 0.0
        %2147 = vmatpush2.msra.mxu0 0.0
        %2148 = vmatprep.subr.mxu0 0.0
        %2149 = vmatpush2.msra.mxu0 0.0
        %2150 = vmatprep.subr.mxu0 0.0
        %2151 = vmatpush2.msra.mxu0 0.0
        %2152 = vmatprep.subr.mxu0 0.0
        %2153 = vmatpush2.msra.mxu0 0.0
        %2154 = vmatprep.subr.mxu0 0.0
        %2155 = vmatpush2.msra.mxu0 0.0
        %2156 = vmatprep.subr.mxu0 0.0
        %2157 = vmatpush2.msra.mxu0 0.0
        %2158 = vmatprep.subr.mxu0 0.0
        %2159 = vmatpush2.msra.mxu0 0.0
        %2160 = vmatprep.subr.mxu0 0.0
        %2161 = vmatpush2.msra.mxu0 0.0
        %2162 = vmatprep.subr.mxu0 0.0
        %2163 = vmatpush2.msra.mxu0 0.0
        %2164 = vmatprep.mubr.f32.mxu0 0.0
        %2165 = vmatmul.mubr.f32.gmra.mxu0 %v2074
        %v2166 = vpop.f32.mrf.mxu0
        %v2167 = vadd.f32 0.0, %v2166
        %v2168 = vpop.f32.mrf.mxu0
        %2169 = vmatprep.mubr.f32.mxu0 0.0
        %2170 = vmatmul.mubr.f32.gmra.mxu0 %v2077
        %v2171 = vpop.f32.mrf.mxu0
        %v2172 = vadd.f32 0.0, %v2171
        %v2173 = vpop.f32.mrf.mxu0
        %2174 = vmatprep.mubr.f32.mxu0 0.0
        %2175 = vmatmul.mubr.f32.gmra.mxu0 %v2080
        %v2176 = vpop.f32.mrf.mxu0
        %v2177 = vadd.f32 0.0, %v2176
        %v2178 = vpop.f32.mrf.mxu0
        %2179 = vmatprep.mubr.f32.mxu0 0.0
        %2180 = vmatmul.mubr.f32.gmra.mxu0 %v2083
        %v2181 = vpop.f32.mrf.mxu0
        %v2182 = vadd.f32 0.0, %v2181
        %v2183 = vpop.f32.mrf.mxu0
        %2184 = vmatprep.mubr.f32.mxu0 0.0
        %2185 = vmatmul.mubr.f32.gmra.mxu0 %v2086
        %v2186 = vpop.f32.mrf.mxu0
        %v2187 = vadd.f32 0.0, %v2186
        %v2188 = vpop.f32.mrf.mxu0
        %2189 = vmatprep.mubr.f32.mxu0 0.0
        %2190 = vmatmul.mubr.f32.gmra.mxu0 %v2089
        %v2191 = vpop.f32.mrf.mxu0
        %v2192 = vadd.f32 0.0, %v2191
        %v2193 = vpop.f32.mrf.mxu0
        %2194 = vmatprep.mubr.f32.mxu0 0.0
        %2195 = vmatmul.mubr.f32.gmra.mxu0 %v2092
        %v2196 = vpop.f32.mrf.mxu0
        %v2197 = vadd.f32 0.0, %v2196
        %v2198 = vpop.f32.mrf.mxu0
        %2199 = vmatprep.mubr.f32.mxu0 0.0
        %2200 = vmatmul.mubr.f32.gmra.mxu0 %v2095
        %v2201 = vpop.f32.mrf.mxu0
        %v2202 = vadd.f32 0.0, %v2201
        %v2203 = vpop.f32.mrf.mxu0
        %2204 = vdwg.mxu0
        %v2205 = vadd.f32 %v2054, %v2167
        %v2206 = vadd.f32 %v2055, %v2172
        %v2207 = vadd.f32 %v2056, %v2177
        %v2208 = vadd.f32 %v2057, %v2182
        %v2209 = vadd.f32 %v2058, %v2187
        %v2210 = vadd.f32 %v2059, %v2192
        %v2211 = vadd.f32 %v2060, %v2197
        %v2212 = vadd.f32 %v2061, %v2202
        %s2213 = scalar_lea.vmem [#allocation2], 16
        %v2214 = vld [vmem:[%s2213] sm:$0xff]
        %v2215 = vld [vmem:[%s2213 + $0x10] sm:$0xff]
        %v2216 = vld [vmem:[%s2213 + $0x20] sm:$0xff]
        %v2217 = vld [vmem:[%s2213 + $0x30] sm:$0xff]
        %v2218 = vld [vmem:[%s2213 + $0x40] sm:$0xff]
        %v2219 = vld [vmem:[%s2213 + $0x50] sm:$0xff]
        %v2220 = vld [vmem:[%s2213 + $0x60] sm:$0xff]
        %v2221 = vld [vmem:[%s2213 + $0x70] sm:$0xff]
        %s2222 = scalar_lea.vmem %s3, 80
        %v2223 = vld [vmem:[%s2222] sm:$0xff]
        %v2224 = vld [vmem:[%s2222 + $0x8] sm:$0x3]
        %v2226 = vsel %vm1467, %v2214, 0
        %v2229 = vsel %vm1467, %v2215, 0
        %v2232 = vsel %vm1467, %v2216, 0
        %v2235 = vsel %vm1467, %v2217, 0
        %v2238 = vsel %vm1467, %v2218, 0
        %v2241 = vsel %vm1467, %v2219, 0
        %v2244 = vsel %vm1467, %v2220, 0
        %v2247 = vsel %vm1467, %v2221, 0
        %v2250 = vsel %vm1492, %v2224, 0
        %2252 = vmatprep.subr.mxu0 0.0
        %2253 = vmatpush1.msra.mxu0 0.0
        %2254 = vmatprep.subr.mxu0 0.0
        %2255 = vmatpush1.msra.mxu0 0.0
        %2256 = vmatprep.subr.mxu0 0.0
        %2257 = vmatpush1.msra.mxu0 0.0
        %2258 = vmatprep.subr.mxu0 0.0
        %2259 = vmatpush1.msra.mxu0 0.0
        %2260 = vmatprep.subr.mxu0 0.0
        %2261 = vmatpush1.msra.mxu0 0.0
        %2262 = vmatprep.subr.mxu0 0.0
        %2263 = vmatpush1.msra.mxu0 0.0
        %2264 = vmatprep.subr.mxu0 0.0
        %2265 = vmatpush1.msra.mxu0 0.0
        %2266 = vmatprep.subr.mxu0 0.0
        %2267 = vmatpush1.msra.mxu0 0.0
        %2268 = vmatprep.subr.mxu0 0.0
        %2269 = vmatpush1.msra.mxu0 0.0
        %2270 = vmatprep.subr.mxu0 0.0
        %2271 = vmatpush1.msra.mxu0 0.0
        %2272 = vmatprep.subr.mxu0 0.0
        %2273 = vmatpush1.msra.mxu0 0.0
        %2274 = vmatprep.subr.mxu0 0.0
        %2275 = vmatpush1.msra.mxu0 0.0
        %2276 = vmatprep.subr.mxu0 0.0
        %2277 = vmatpush1.msra.mxu0 0.0
        %2278 = vmatprep.subr.mxu0 0.0
        %2279 = vmatpush1.msra.mxu0 0.0
        %2280 = vmatprep.subr.mxu0 0.0
        %2281 = vmatpush1.msra.mxu0 %v2250
        %2282 = vmatprep.subr.mxu0 0.0
        %2283 = vmatpush1.msra.mxu0 %v2223
        %2284 = vmatprep.subr.mxu0 0.0
        %2285 = vmatpush2.msra.mxu0 0.0
        %2286 = vmatprep.subr.mxu0 0.0
        %2287 = vmatpush2.msra.mxu0 0.0
        %2288 = vmatprep.subr.mxu0 0.0
        %2289 = vmatpush2.msra.mxu0 0.0
        %2290 = vmatprep.subr.mxu0 0.0
        %2291 = vmatpush2.msra.mxu0 0.0
        %2292 = vmatprep.subr.mxu0 0.0
        %2293 = vmatpush2.msra.mxu0 0.0
        %2294 = vmatprep.subr.mxu0 0.0
        %2295 = vmatpush2.msra.mxu0 0.0
        %2296 = vmatprep.subr.mxu0 0.0
        %2297 = vmatpush2.msra.mxu0 0.0
        %2298 = vmatprep.subr.mxu0 0.0
        %2299 = vmatpush2.msra.mxu0 0.0
        %2300 = vmatprep.subr.mxu0 0.0
        %2301 = vmatpush2.msra.mxu0 0.0
        %2302 = vmatprep.subr.mxu0 0.0
        %2303 = vmatpush2.msra.mxu0 0.0
        %2304 = vmatprep.subr.mxu0 0.0
        %2305 = vmatpush2.msra.mxu0 0.0
        %2306 = vmatprep.subr.mxu0 0.0
        %2307 = vmatpush2.msra.mxu0 0.0
        %2308 = vmatprep.subr.mxu0 0.0
        %2309 = vmatpush2.msra.mxu0 0.0
        %2310 = vmatprep.subr.mxu0 0.0
        %2311 = vmatpush2.msra.mxu0 0.0
        %2312 = vmatprep.subr.mxu0 0.0
        %2313 = vmatpush2.msra.mxu0 0.0
        %2314 = vmatprep.subr.mxu0 0.0
        %2315 = vmatpush2.msra.mxu0 0.0
        %2316 = vmatprep.mubr.f32.mxu0 0.0
        %2317 = vmatmul.mubr.f32.gmra.mxu0 %v2226
        %v2318 = vpop.f32.mrf.mxu0
        %v2319 = vadd.f32 0.0, %v2318
        %v2320 = vpop.f32.mrf.mxu0
        %2321 = vmatprep.mubr.f32.mxu0 0.0
        %2322 = vmatmul.mubr.f32.gmra.mxu0 %v2229
        %v2323 = vpop.f32.mrf.mxu0
        %v2324 = vadd.f32 0.0, %v2323
        %v2325 = vpop.f32.mrf.mxu0
        %2326 = vmatprep.mubr.f32.mxu0 0.0
        %2327 = vmatmul.mubr.f32.gmra.mxu0 %v2232
        %v2328 = vpop.f32.mrf.mxu0
        %v2329 = vadd.f32 0.0, %v2328
        %v2330 = vpop.f32.mrf.mxu0
        %2331 = vmatprep.mubr.f32.mxu0 0.0
        %2332 = vmatmul.mubr.f32.gmra.mxu0 %v2235
        %v2333 = vpop.f32.mrf.mxu0
        %v2334 = vadd.f32 0.0, %v2333
        %v2335 = vpop.f32.mrf.mxu0
        %2336 = vmatprep.mubr.f32.mxu0 0.0
        %2337 = vmatmul.mubr.f32.gmra.mxu0 %v2238
        %v2338 = vpop.f32.mrf.mxu0
        %v2339 = vadd.f32 0.0, %v2338
        %v2340 = vpop.f32.mrf.mxu0
        %2341 = vmatprep.mubr.f32.mxu0 0.0
        %2342 = vmatmul.mubr.f32.gmra.mxu0 %v2241
        %v2343 = vpop.f32.mrf.mxu0
        %v2344 = vadd.f32 0.0, %v2343
        %v2345 = vpop.f32.mrf.mxu0
        %2346 = vmatprep.mubr.f32.mxu0 0.0
        %2347 = vmatmul.mubr.f32.gmra.mxu0 %v2244
        %v2348 = vpop.f32.mrf.mxu0
        %v2349 = vadd.f32 0.0, %v2348
        %v2350 = vpop.f32.mrf.mxu0
        %2351 = vmatprep.mubr.f32.mxu0 0.0
        %2352 = vmatmul.mubr.f32.gmra.mxu0 %v2247
        %v2353 = vpop.f32.mrf.mxu0
        %v2354 = vadd.f32 0.0, %v2353
        %v2355 = vpop.f32.mrf.mxu0
        %2356 = vdwg.mxu0
        %v2357 = vadd.f32 %v2205, %v2319
        %v2358 = vadd.f32 %v2206, %v2324
        %v2359 = vadd.f32 %v2207, %v2329
        %v2360 = vadd.f32 %v2208, %v2334
        %v2361 = vadd.f32 %v2209, %v2339
        %v2362 = vadd.f32 %v2210, %v2344
        %v2363 = vadd.f32 %v2211, %v2349
        %v2364 = vadd.f32 %v2212, %v2354
        %v2365 = vld [vmem:[%s2213 + $0x1] sm:$0xff]
        %v2366 = vld [vmem:[%s2213 + $0x11] sm:$0xff]
        %v2367 = vld [vmem:[%s2213 + $0x21] sm:$0xff]
        %v2368 = vld [vmem:[%s2213 + $0x31] sm:$0xff]
        %v2369 = vld [vmem:[%s2213 + $0x41] sm:$0xff]
        %v2370 = vld [vmem:[%s2213 + $0x51] sm:$0xff]
        %v2371 = vld [vmem:[%s2213 + $0x61] sm:$0xff]
        %v2372 = vld [vmem:[%s2213 + $0x71] sm:$0xff]
        %s2373 = scalar_lea.vmem %s3, 96
        %v2374 = vld [vmem:[%s2373] sm:$0xff]
        %v2375 = vld [vmem:[%s2373 + $0x8] sm:$0x3]
        %v2377 = vsel %vm1467, %v2365, 0
        %v2380 = vsel %vm1467, %v2366, 0
        %v2383 = vsel %vm1467, %v2367, 0
        %v2386 = vsel %vm1467, %v2368, 0
        %v2389 = vsel %vm1467, %v2369, 0
        %v2392 = vsel %vm1467, %v2370, 0
        %v2395 = vsel %vm1467, %v2371, 0
        %v2398 = vsel %vm1467, %v2372, 0
        %v2401 = vsel %vm1492, %v2375, 0
        %2403 = vmatprep.subr.mxu0 0.0
        %2404 = vmatpush1.msra.mxu0 0.0
        %2405 = vmatprep.subr.mxu0 0.0
        %2406 = vmatpush1.msra.mxu0 0.0
        %2407 = vmatprep.subr.mxu0 0.0
        %2408 = vmatpush1.msra.mxu0 0.0
        %2409 = vmatprep.subr.mxu0 0.0
        %2410 = vmatpush1.msra.mxu0 0.0
        %2411 = vmatprep.subr.mxu0 0.0
        %2412 = vmatpush1.msra.mxu0 0.0
        %2413 = vmatprep.subr.mxu0 0.0
        %2414 = vmatpush1.msra.mxu0 0.0
        %2415 = vmatprep.subr.mxu0 0.0
        %2416 = vmatpush1.msra.mxu0 0.0
        %2417 = vmatprep.subr.mxu0 0.0
        %2418 = vmatpush1.msra.mxu0 0.0
        %2419 = vmatprep.subr.mxu0 0.0
        %2420 = vmatpush1.msra.mxu0 0.0
        %2421 = vmatprep.subr.mxu0 0.0
        %2422 = vmatpush1.msra.mxu0 0.0
        %2423 = vmatprep.subr.mxu0 0.0
        %2424 = vmatpush1.msra.mxu0 0.0
        %2425 = vmatprep.subr.mxu0 0.0
        %2426 = vmatpush1.msra.mxu0 0.0
        %2427 = vmatprep.subr.mxu0 0.0
        %2428 = vmatpush1.msra.mxu0 0.0
        %2429 = vmatprep.subr.mxu0 0.0
        %2430 = vmatpush1.msra.mxu0 0.0
        %2431 = vmatprep.subr.mxu0 0.0
        %2432 = vmatpush1.msra.mxu0 %v2401
        %2433 = vmatprep.subr.mxu0 0.0
        %2434 = vmatpush1.msra.mxu0 %v2374
        %2435 = vmatprep.subr.mxu0 0.0
        %2436 = vmatpush2.msra.mxu0 0.0
        %2437 = vmatprep.subr.mxu0 0.0
        %2438 = vmatpush2.msra.mxu0 0.0
        %2439 = vmatprep.subr.mxu0 0.0
        %2440 = vmatpush2.msra.mxu0 0.0
        %2441 = vmatprep.subr.mxu0 0.0
        %2442 = vmatpush2.msra.mxu0 0.0
        %2443 = vmatprep.subr.mxu0 0.0
        %2444 = vmatpush2.msra.mxu0 0.0
        %2445 = vmatprep.subr.mxu0 0.0
        %2446 = vmatpush2.msra.mxu0 0.0
        %2447 = vmatprep.subr.mxu0 0.0
        %2448 = vmatpush2.msra.mxu0 0.0
        %2449 = vmatprep.subr.mxu0 0.0
        %2450 = vmatpush2.msra.mxu0 0.0
        %2451 = vmatprep.subr.mxu0 0.0
        %2452 = vmatpush2.msra.mxu0 0.0
        %2453 = vmatprep.subr.mxu0 0.0
        %2454 = vmatpush2.msra.mxu0 0.0
        %2455 = vmatprep.subr.mxu0 0.0
        %2456 = vmatpush2.msra.mxu0 0.0
        %2457 = vmatprep.subr.mxu0 0.0
        %2458 = vmatpush2.msra.mxu0 0.0
        %2459 = vmatprep.subr.mxu0 0.0
        %2460 = vmatpush2.msra.mxu0 0.0
        %2461 = vmatprep.subr.mxu0 0.0
        %2462 = vmatpush2.msra.mxu0 0.0
        %2463 = vmatprep.subr.mxu0 0.0
        %2464 = vmatpush2.msra.mxu0 0.0
        %2465 = vmatprep.subr.mxu0 0.0
        %2466 = vmatpush2.msra.mxu0 0.0
        %2467 = vmatprep.mubr.f32.mxu0 0.0
        %2468 = vmatmul.mubr.f32.gmra.mxu0 %v2377
        %v2469 = vpop.f32.mrf.mxu0
        %v2470 = vadd.f32 0.0, %v2469
        %v2471 = vpop.f32.mrf.mxu0
        %2472 = vmatprep.mubr.f32.mxu0 0.0
        %2473 = vmatmul.mubr.f32.gmra.mxu0 %v2380
        %v2474 = vpop.f32.mrf.mxu0
        %v2475 = vadd.f32 0.0, %v2474
        %v2476 = vpop.f32.mrf.mxu0
        %2477 = vmatprep.mubr.f32.mxu0 0.0
        %2478 = vmatmul.mubr.f32.gmra.mxu0 %v2383
        %v2479 = vpop.f32.mrf.mxu0
        %v2480 = vadd.f32 0.0, %v2479
        %v2481 = vpop.f32.mrf.mxu0
        %2482 = vmatprep.mubr.f32.mxu0 0.0
        %2483 = vmatmul.mubr.f32.gmra.mxu0 %v2386
        %v2484 = vpop.f32.mrf.mxu0
        %v2485 = vadd.f32 0.0, %v2484
        %v2486 = vpop.f32.mrf.mxu0
        %2487 = vmatprep.mubr.f32.mxu0 0.0
        %2488 = vmatmul.mubr.f32.gmra.mxu0 %v2389
        %v2489 = vpop.f32.mrf.mxu0
        %v2490 = vadd.f32 0.0, %v2489
        %v2491 = vpop.f32.mrf.mxu0
        %2492 = vmatprep.mubr.f32.mxu0 0.0
        %2493 = vmatmul.mubr.f32.gmra.mxu0 %v2392
        %v2494 = vpop.f32.mrf.mxu0
        %v2495 = vadd.f32 0.0, %v2494
        %v2496 = vpop.f32.mrf.mxu0
        %2497 = vmatprep.mubr.f32.mxu0 0.0
        %2498 = vmatmul.mubr.f32.gmra.mxu0 %v2395
        %v2499 = vpop.f32.mrf.mxu0
        %v2500 = vadd.f32 0.0, %v2499
        %v2501 = vpop.f32.mrf.mxu0
        %2502 = vmatprep.mubr.f32.mxu0 0.0
        %2503 = vmatmul.mubr.f32.gmra.mxu0 %v2398
        %v2504 = vpop.f32.mrf.mxu0
        %v2505 = vadd.f32 0.0, %v2504
        %v2506 = vpop.f32.mrf.mxu0
        %2507 = vdwg.mxu0
        %v2508 = vadd.f32 %v2357, %v2470
        %v2509 = vadd.f32 %v2358, %v2475
        %v2510 = vadd.f32 %v2359, %v2480
        %v2511 = vadd.f32 %v2360, %v2485
        %v2512 = vadd.f32 %v2361, %v2490
        %v2513 = vadd.f32 %v2362, %v2495
        %v2514 = vadd.f32 %v2363, %v2500
        %v2515 = vadd.f32 %v2364, %v2505
        %v2516 = vld [vmem:[%s2213 + $0x2] sm:$0xff]
        %v2517 = vld [vmem:[%s2213 + $0x12] sm:$0xff]
        %v2518 = vld [vmem:[%s2213 + $0x22] sm:$0xff]
        %v2519 = vld [vmem:[%s2213 + $0x32] sm:$0xff]
        %v2520 = vld [vmem:[%s2213 + $0x42] sm:$0xff]
        %v2521 = vld [vmem:[%s2213 + $0x52] sm:$0xff]
        %v2522 = vld [vmem:[%s2213 + $0x62] sm:$0xff]
        %v2523 = vld [vmem:[%s2213 + $0x72] sm:$0xff]
        %s2524 = scalar_lea.vmem %s3, 112
        %v2525 = vld [vmem:[%s2524] sm:$0xff]
        %v2526 = vld [vmem:[%s2524 + $0x8] sm:$0x3]
        %v2528 = vsel %vm1467, %v2516, 0
        %v2531 = vsel %vm1467, %v2517, 0
        %v2534 = vsel %vm1467, %v2518, 0
        %v2537 = vsel %vm1467, %v2519, 0
        %v2540 = vsel %vm1467, %v2520, 0
        %v2543 = vsel %vm1467, %v2521, 0
        %v2546 = vsel %vm1467, %v2522, 0
        %v2549 = vsel %vm1467, %v2523, 0
        %v2552 = vsel %vm1492, %v2526, 0
        %2554 = vmatprep.subr.mxu0 0.0
        %2555 = vmatpush1.msra.mxu0 0.0
        %2556 = vmatprep.subr.mxu0 0.0
        %2557 = vmatpush1.msra.mxu0 0.0
        %2558 = vmatprep.subr.mxu0 0.0
        %2559 = vmatpush1.msra.mxu0 0.0
        %2560 = vmatprep.subr.mxu0 0.0
        %2561 = vmatpush1.msra.mxu0 0.0
        %2562 = vmatprep.subr.mxu0 0.0
        %2563 = vmatpush1.msra.mxu0 0.0
        %2564 = vmatprep.subr.mxu0 0.0
        %2565 = vmatpush1.msra.mxu0 0.0
        %2566 = vmatprep.subr.mxu0 0.0
        %2567 = vmatpush1.msra.mxu0 0.0
        %2568 = vmatprep.subr.mxu0 0.0
        %2569 = vmatpush1.msra.mxu0 0.0
        %2570 = vmatprep.subr.mxu0 0.0
        %2571 = vmatpush1.msra.mxu0 0.0
        %2572 = vmatprep.subr.mxu0 0.0
        %2573 = vmatpush1.msra.mxu0 0.0
        %2574 = vmatprep.subr.mxu0 0.0
        %2575 = vmatpush1.msra.mxu0 0.0
        %2576 = vmatprep.subr.mxu0 0.0
        %2577 = vmatpush1.msra.mxu0 0.0
        %2578 = vmatprep.subr.mxu0 0.0
        %2579 = vmatpush1.msra.mxu0 0.0
        %2580 = vmatprep.subr.mxu0 0.0
        %2581 = vmatpush1.msra.mxu0 0.0
        %2582 = vmatprep.subr.mxu0 0.0
        %2583 = vmatpush1.msra.mxu0 %v2552
        %2584 = vmatprep.subr.mxu0 0.0
        %2585 = vmatpush1.msra.mxu0 %v2525
        %2586 = vmatprep.subr.mxu0 0.0
        %2587 = vmatpush2.msra.mxu0 0.0
        %2588 = vmatprep.subr.mxu0 0.0
        %2589 = vmatpush2.msra.mxu0 0.0
        %2590 = vmatprep.subr.mxu0 0.0
        %2591 = vmatpush2.msra.mxu0 0.0
        %2592 = vmatprep.subr.mxu0 0.0
        %2593 = vmatpush2.msra.mxu0 0.0
        %2594 = vmatprep.subr.mxu0 0.0
        %2595 = vmatpush2.msra.mxu0 0.0
        %2596 = vmatprep.subr.mxu0 0.0
        %2597 = vmatpush2.msra.mxu0 0.0
        %2598 = vmatprep.subr.mxu0 0.0
        %2599 = vmatpush2.msra.mxu0 0.0
        %2600 = vmatprep.subr.mxu0 0.0
        %2601 = vmatpush2.msra.mxu0 0.0
        %2602 = vmatprep.subr.mxu0 0.0
        %2603 = vmatpush2.msra.mxu0 0.0
        %2604 = vmatprep.subr.mxu0 0.0
        %2605 = vmatpush2.msra.mxu0 0.0
        %2606 = vmatprep.subr.mxu0 0.0
        %2607 = vmatpush2.msra.mxu0 0.0
        %2608 = vmatprep.subr.mxu0 0.0
        %2609 = vmatpush2.msra.mxu0 0.0
        %2610 = vmatprep.subr.mxu0 0.0
        %2611 = vmatpush2.msra.mxu0 0.0
        %2612 = vmatprep.subr.mxu0 0.0
        %2613 = vmatpush2.msra.mxu0 0.0
        %2614 = vmatprep.subr.mxu0 0.0
        %2615 = vmatpush2.msra.mxu0 0.0
        %2616 = vmatprep.subr.mxu0 0.0
        %2617 = vmatpush2.msra.mxu0 0.0
        %2618 = vmatprep.mubr.f32.mxu0 0.0
        %2619 = vmatmul.mubr.f32.gmra.mxu0 %v2528
        %v2620 = vpop.f32.mrf.mxu0
        %v2621 = vadd.f32 0.0, %v2620
        %v2622 = vpop.f32.mrf.mxu0
        %2623 = vmatprep.mubr.f32.mxu0 0.0
        %2624 = vmatmul.mubr.f32.gmra.mxu0 %v2531
        %v2625 = vpop.f32.mrf.mxu0
        %v2626 = vadd.f32 0.0, %v2625
        %v2627 = vpop.f32.mrf.mxu0
        %2628 = vmatprep.mubr.f32.mxu0 0.0
        %2629 = vmatmul.mubr.f32.gmra.mxu0 %v2534
        %v2630 = vpop.f32.mrf.mxu0
        %v2631 = vadd.f32 0.0, %v2630
        %v2632 = vpop.f32.mrf.mxu0
        %2633 = vmatprep.mubr.f32.mxu0 0.0
        %2634 = vmatmul.mubr.f32.gmra.mxu0 %v2537
        %v2635 = vpop.f32.mrf.mxu0
        %v2636 = vadd.f32 0.0, %v2635
        %v2637 = vpop.f32.mrf.mxu0
        %2638 = vmatprep.mubr.f32.mxu0 0.0
        %2639 = vmatmul.mubr.f32.gmra.mxu0 %v2540
        %v2640 = vpop.f32.mrf.mxu0
        %v2641 = vadd.f32 0.0, %v2640
        %v2642 = vpop.f32.mrf.mxu0
        %2643 = vmatprep.mubr.f32.mxu0 0.0
        %2644 = vmatmul.mubr.f32.gmra.mxu0 %v2543
        %v2645 = vpop.f32.mrf.mxu0
        %v2646 = vadd.f32 0.0, %v2645
        %v2647 = vpop.f32.mrf.mxu0
        %2648 = vmatprep.mubr.f32.mxu0 0.0
        %2649 = vmatmul.mubr.f32.gmra.mxu0 %v2546
        %v2650 = vpop.f32.mrf.mxu0
        %v2651 = vadd.f32 0.0, %v2650
        %v2652 = vpop.f32.mrf.mxu0
        %2653 = vmatprep.mubr.f32.mxu0 0.0
        %2654 = vmatmul.mubr.f32.gmra.mxu0 %v2549
        %v2655 = vpop.f32.mrf.mxu0
        %v2656 = vadd.f32 0.0, %v2655
        %v2657 = vpop.f32.mrf.mxu0
        %2658 = vdwg.mxu0
        %v2659 = vadd.f32 %v2508, %v2621
        %v2660 = vadd.f32 %v2509, %v2626
        %v2661 = vadd.f32 %v2510, %v2631
        %v2662 = vadd.f32 %v2511, %v2636
        %v2663 = vadd.f32 %v2512, %v2641
        %v2664 = vadd.f32 %v2513, %v2646
        %v2665 = vadd.f32 %v2514, %v2651
        %v2666 = vadd.f32 %v2515, %v2656
        %v2667 = vld [vmem:[%s2213 + $0x3] sm:$0xff]
        %v2668 = vld [vmem:[%s2213 + $0x13] sm:$0xff]
        %v2669 = vld [vmem:[%s2213 + $0x23] sm:$0xff]
        %v2670 = vld [vmem:[%s2213 + $0x33] sm:$0xff]
        %v2671 = vld [vmem:[%s2213 + $0x43] sm:$0xff]
        %v2672 = vld [vmem:[%s2213 + $0x53] sm:$0xff]
        %v2673 = vld [vmem:[%s2213 + $0x63] sm:$0xff]
        %v2674 = vld [vmem:[%s2213 + $0x73] sm:$0xff]
        %s2675 = scalar_lea.vmem %s3, 128
        %v2676 = vld [vmem:[%s2675] sm:$0xff]
        %v2677 = vld [vmem:[%s2675 + $0x8] sm:$0x3]
        %v2679 = vsel %vm1467, %v2667, 0
        %v2682 = vsel %vm1467, %v2668, 0
        %v2685 = vsel %vm1467, %v2669, 0
        %v2688 = vsel %vm1467, %v2670, 0
        %v2691 = vsel %vm1467, %v2671, 0
        %v2694 = vsel %vm1467, %v2672, 0
        %v2697 = vsel %vm1467, %v2673, 0
        %v2700 = vsel %vm1467, %v2674, 0
        %v2703 = vsel %vm1492, %v2677, 0
        %2705 = vmatprep.subr.mxu0 0.0
        %2706 = vmatpush1.msra.mxu0 0.0
        %2707 = vmatprep.subr.mxu0 0.0
        %2708 = vmatpush1.msra.mxu0 0.0
        %2709 = vmatprep.subr.mxu0 0.0
        %2710 = vmatpush1.msra.mxu0 0.0
        %2711 = vmatprep.subr.mxu0 0.0
        %2712 = vmatpush1.msra.mxu0 0.0
        %2713 = vmatprep.subr.mxu0 0.0
        %2714 = vmatpush1.msra.mxu0 0.0
        %2715 = vmatprep.subr.mxu0 0.0
        %2716 = vmatpush1.msra.mxu0 0.0
        %2717 = vmatprep.subr.mxu0 0.0
        %2718 = vmatpush1.msra.mxu0 0.0
        %2719 = vmatprep.subr.mxu0 0.0
        %2720 = vmatpush1.msra.mxu0 0.0
        %2721 = vmatprep.subr.mxu0 0.0
        %2722 = vmatpush1.msra.mxu0 0.0
        %2723 = vmatprep.subr.mxu0 0.0
        %2724 = vmatpush1.msra.mxu0 0.0
        %2725 = vmatprep.subr.mxu0 0.0
        %2726 = vmatpush1.msra.mxu0 0.0
        %2727 = vmatprep.subr.mxu0 0.0
        %2728 = vmatpush1.msra.mxu0 0.0
        %2729 = vmatprep.subr.mxu0 0.0
        %2730 = vmatpush1.msra.mxu0 0.0
        %2731 = vmatprep.subr.mxu0 0.0
        %2732 = vmatpush1.msra.mxu0 0.0
        %2733 = vmatprep.subr.mxu0 0.0
        %2734 = vmatpush1.msra.mxu0 %v2703
        %2735 = vmatprep.subr.mxu0 0.0
        %2736 = vmatpush1.msra.mxu0 %v2676
        %2737 = vmatprep.subr.mxu0 0.0
        %2738 = vmatpush2.msra.mxu0 0.0
        %2739 = vmatprep.subr.mxu0 0.0
        %2740 = vmatpush2.msra.mxu0 0.0
        %2741 = vmatprep.subr.mxu0 0.0
        %2742 = vmatpush2.msra.mxu0 0.0
        %2743 = vmatprep.subr.mxu0 0.0
        %2744 = vmatpush2.msra.mxu0 0.0
        %2745 = vmatprep.subr.mxu0 0.0
        %2746 = vmatpush2.msra.mxu0 0.0
        %2747 = vmatprep.subr.mxu0 0.0
        %2748 = vmatpush2.msra.mxu0 0.0
        %2749 = vmatprep.subr.mxu0 0.0
        %2750 = vmatpush2.msra.mxu0 0.0
        %2751 = vmatprep.subr.mxu0 0.0
        %2752 = vmatpush2.msra.mxu0 0.0
        %2753 = vmatprep.subr.mxu0 0.0
        %2754 = vmatpush2.msra.mxu0 0.0
        %2755 = vmatprep.subr.mxu0 0.0
        %2756 = vmatpush2.msra.mxu0 0.0
        %2757 = vmatprep.subr.mxu0 0.0
        %2758 = vmatpush2.msra.mxu0 0.0
        %2759 = vmatprep.subr.mxu0 0.0
        %2760 = vmatpush2.msra.mxu0 0.0
        %2761 = vmatprep.subr.mxu0 0.0
        %2762 = vmatpush2.msra.mxu0 0.0
        %2763 = vmatprep.subr.mxu0 0.0
        %2764 = vmatpush2.msra.mxu0 0.0
        %2765 = vmatprep.subr.mxu0 0.0
        %2766 = vmatpush2.msra.mxu0 0.0
        %2767 = vmatprep.subr.mxu0 0.0
        %2768 = vmatpush2.msra.mxu0 0.0
        %2769 = vmatprep.mubr.f32.mxu0 0.0
        %2770 = vmatmul.mubr.f32.gmra.mxu0 %v2679
        %v2771 = vpop.f32.mrf.mxu0
        %v2772 = vadd.f32 0.0, %v2771
        %v2773 = vpop.f32.mrf.mxu0
        %2774 = vmatprep.mubr.f32.mxu0 0.0
        %2775 = vmatmul.mubr.f32.gmra.mxu0 %v2682
        %v2776 = vpop.f32.mrf.mxu0
        %v2777 = vadd.f32 0.0, %v2776
        %v2778 = vpop.f32.mrf.mxu0
        %2779 = vmatprep.mubr.f32.mxu0 0.0
        %2780 = vmatmul.mubr.f32.gmra.mxu0 %v2685
        %v2781 = vpop.f32.mrf.mxu0
        %v2782 = vadd.f32 0.0, %v2781
        %v2783 = vpop.f32.mrf.mxu0
        %2784 = vmatprep.mubr.f32.mxu0 0.0
        %2785 = vmatmul.mubr.f32.gmra.mxu0 %v2688
        %v2786 = vpop.f32.mrf.mxu0
        %v2787 = vadd.f32 0.0, %v2786
        %v2788 = vpop.f32.mrf.mxu0
        %2789 = vmatprep.mubr.f32.mxu0 0.0
        %2790 = vmatmul.mubr.f32.gmra.mxu0 %v2691
        %v2791 = vpop.f32.mrf.mxu0
        %v2792 = vadd.f32 0.0, %v2791
        %v2793 = vpop.f32.mrf.mxu0
        %2794 = vmatprep.mubr.f32.mxu0 0.0
        %2795 = vmatmul.mubr.f32.gmra.mxu0 %v2694
        %v2796 = vpop.f32.mrf.mxu0
        %v2797 = vadd.f32 0.0, %v2796
        %v2798 = vpop.f32.mrf.mxu0
        %2799 = vmatprep.mubr.f32.mxu0 0.0
        %2800 = vmatmul.mubr.f32.gmra.mxu0 %v2697
        %v2801 = vpop.f32.mrf.mxu0
        %v2802 = vadd.f32 0.0, %v2801
        %v2803 = vpop.f32.mrf.mxu0
        %2804 = vmatprep.mubr.f32.mxu0 0.0
        %2805 = vmatmul.mubr.f32.gmra.mxu0 %v2700
        %v2806 = vpop.f32.mrf.mxu0
        %v2807 = vadd.f32 0.0, %v2806
        %v2808 = vpop.f32.mrf.mxu0
        %2809 = vdwg.mxu0
        %v2810 = vadd.f32 %v2659, %v2772
        %v2811 = vadd.f32 %v2660, %v2777
        %v2812 = vadd.f32 %v2661, %v2782
        %v2813 = vadd.f32 %v2662, %v2787
        %v2814 = vadd.f32 %v2663, %v2792
        %v2815 = vadd.f32 %v2664, %v2797
        %v2816 = vadd.f32 %v2665, %v2802
        %v2817 = vadd.f32 %v2666, %v2807
        %v2818 = vld [vmem:[%s2213 + $0x4] sm:$0xff]
        %v2819 = vld [vmem:[%s2213 + $0x14] sm:$0xff]
        %v2820 = vld [vmem:[%s2213 + $0x24] sm:$0xff]
        %v2821 = vld [vmem:[%s2213 + $0x34] sm:$0xff]
        %v2822 = vld [vmem:[%s2213 + $0x44] sm:$0xff]
        %v2823 = vld [vmem:[%s2213 + $0x54] sm:$0xff]
        %v2824 = vld [vmem:[%s2213 + $0x64] sm:$0xff]
        %v2825 = vld [vmem:[%s2213 + $0x74] sm:$0xff]
        %s2826 = scalar_lea.vmem %s3, 144
        %v2827 = vld [vmem:[%s2826] sm:$0xff]
        %v2828 = vld [vmem:[%s2826 + $0x8] sm:$0x3]
        %v2830 = vsel %vm1467, %v2818, 0
        %v2833 = vsel %vm1467, %v2819, 0
        %v2836 = vsel %vm1467, %v2820, 0
        %v2839 = vsel %vm1467, %v2821, 0
        %v2842 = vsel %vm1467, %v2822, 0
        %v2845 = vsel %vm1467, %v2823, 0
        %v2848 = vsel %vm1467, %v2824, 0
        %v2851 = vsel %vm1467, %v2825, 0
        %v2854 = vsel %vm1492, %v2828, 0
        %2856 = vmatprep.subr.mxu0 0.0
        %2857 = vmatpush1.msra.mxu0 0.0
        %2858 = vmatprep.subr.mxu0 0.0
        %2859 = vmatpush1.msra.mxu0 0.0
        %2860 = vmatprep.subr.mxu0 0.0
        %2861 = vmatpush1.msra.mxu0 0.0
        %2862 = vmatprep.subr.mxu0 0.0
        %2863 = vmatpush1.msra.mxu0 0.0
        %2864 = vmatprep.subr.mxu0 0.0
        %2865 = vmatpush1.msra.mxu0 0.0
        %2866 = vmatprep.subr.mxu0 0.0
        %2867 = vmatpush1.msra.mxu0 0.0
        %2868 = vmatprep.subr.mxu0 0.0
        %2869 = vmatpush1.msra.mxu0 0.0
        %2870 = vmatprep.subr.mxu0 0.0
        %2871 = vmatpush1.msra.mxu0 0.0
        %2872 = vmatprep.subr.mxu0 0.0
        %2873 = vmatpush1.msra.mxu0 0.0
        %2874 = vmatprep.subr.mxu0 0.0
        %2875 = vmatpush1.msra.mxu0 0.0
        %2876 = vmatprep.subr.mxu0 0.0
        %2877 = vmatpush1.msra.mxu0 0.0
        %2878 = vmatprep.subr.mxu0 0.0
        %2879 = vmatpush1.msra.mxu0 0.0
        %2880 = vmatprep.subr.mxu0 0.0
        %2881 = vmatpush1.msra.mxu0 0.0
        %2882 = vmatprep.subr.mxu0 0.0
        %2883 = vmatpush1.msra.mxu0 0.0
        %2884 = vmatprep.subr.mxu0 0.0
        %2885 = vmatpush1.msra.mxu0 %v2854
        %2886 = vmatprep.subr.mxu0 0.0
        %2887 = vmatpush1.msra.mxu0 %v2827
        %2888 = vmatprep.subr.mxu0 0.0
        %2889 = vmatpush2.msra.mxu0 0.0
        %2890 = vmatprep.subr.mxu0 0.0
        %2891 = vmatpush2.msra.mxu0 0.0
        %2892 = vmatprep.subr.mxu0 0.0
        %2893 = vmatpush2.msra.mxu0 0.0
        %2894 = vmatprep.subr.mxu0 0.0
        %2895 = vmatpush2.msra.mxu0 0.0
        %2896 = vmatprep.subr.mxu0 0.0
        %2897 = vmatpush2.msra.mxu0 0.0
        %2898 = vmatprep.subr.mxu0 0.0
        %2899 = vmatpush2.msra.mxu0 0.0
        %2900 = vmatprep.subr.mxu0 0.0
        %2901 = vmatpush2.msra.mxu0 0.0
        %2902 = vmatprep.subr.mxu0 0.0
        %2903 = vmatpush2.msra.mxu0 0.0
        %2904 = vmatprep.subr.mxu0 0.0
        %2905 = vmatpush2.msra.mxu0 0.0
        %2906 = vmatprep.subr.mxu0 0.0
        %2907 = vmatpush2.msra.mxu0 0.0
        %2908 = vmatprep.subr.mxu0 0.0
        %2909 = vmatpush2.msra.mxu0 0.0
        %2910 = vmatprep.subr.mxu0 0.0
        %2911 = vmatpush2.msra.mxu0 0.0
        %2912 = vmatprep.subr.mxu0 0.0
        %2913 = vmatpush2.msra.mxu0 0.0
        %2914 = vmatprep.subr.mxu0 0.0
        %2915 = vmatpush2.msra.mxu0 0.0
        %2916 = vmatprep.subr.mxu0 0.0
        %2917 = vmatpush2.msra.mxu0 0.0
        %2918 = vmatprep.subr.mxu0 0.0
        %2919 = vmatpush2.msra.mxu0 0.0
        %2920 = vmatprep.mubr.f32.mxu0 0.0
        %2921 = vmatmul.mubr.f32.gmra.mxu0 %v2830
        %v2922 = vpop.f32.mrf.mxu0
        %v2923 = vadd.f32 0.0, %v2922
        %v2924 = vpop.f32.mrf.mxu0
        %2925 = vmatprep.mubr.f32.mxu0 0.0
        %2926 = vmatmul.mubr.f32.gmra.mxu0 %v2833
        %v2927 = vpop.f32.mrf.mxu0
        %v2928 = vadd.f32 0.0, %v2927
        %v2929 = vpop.f32.mrf.mxu0
        %2930 = vmatprep.mubr.f32.mxu0 0.0
        %2931 = vmatmul.mubr.f32.gmra.mxu0 %v2836
        %v2932 = vpop.f32.mrf.mxu0
        %v2933 = vadd.f32 0.0, %v2932
        %v2934 = vpop.f32.mrf.mxu0
        %2935 = vmatprep.mubr.f32.mxu0 0.0
        %2936 = vmatmul.mubr.f32.gmra.mxu0 %v2839
        %v2937 = vpop.f32.mrf.mxu0
        %v2938 = vadd.f32 0.0, %v2937
        %v2939 = vpop.f32.mrf.mxu0
        %2940 = vmatprep.mubr.f32.mxu0 0.0
        %2941 = vmatmul.mubr.f32.gmra.mxu0 %v2842
        %v2942 = vpop.f32.mrf.mxu0
        %v2943 = vadd.f32 0.0, %v2942
        %v2944 = vpop.f32.mrf.mxu0
        %2945 = vmatprep.mubr.f32.mxu0 0.0
        %2946 = vmatmul.mubr.f32.gmra.mxu0 %v2845
        %v2947 = vpop.f32.mrf.mxu0
        %v2948 = vadd.f32 0.0, %v2947
        %v2949 = vpop.f32.mrf.mxu0
        %2950 = vmatprep.mubr.f32.mxu0 0.0
        %2951 = vmatmul.mubr.f32.gmra.mxu0 %v2848
        %v2952 = vpop.f32.mrf.mxu0
        %v2953 = vadd.f32 0.0, %v2952
        %v2954 = vpop.f32.mrf.mxu0
        %2955 = vmatprep.mubr.f32.mxu0 0.0
        %2956 = vmatmul.mubr.f32.gmra.mxu0 %v2851
        %v2957 = vpop.f32.mrf.mxu0
        %v2958 = vadd.f32 0.0, %v2957
        %v2959 = vpop.f32.mrf.mxu0
        %2960 = vdwg.mxu0
        %v2961 = vadd.f32 %v2810, %v2923
        %v2962 = vadd.f32 %v2811, %v2928
        %v2963 = vadd.f32 %v2812, %v2933
        %v2964 = vadd.f32 %v2813, %v2938
        %v2965 = vadd.f32 %v2814, %v2943
        %v2966 = vadd.f32 %v2815, %v2948
        %v2967 = vadd.f32 %v2816, %v2953
        %v2968 = vadd.f32 %v2817, %v2958
        %s2969 = scalar_lea.vmem [#allocation2], 32
        %v2970 = vld [vmem:[%s2969] sm:$0xff]
        %v2971 = vld [vmem:[%s2969 + $0x10] sm:$0xff]
        %v2972 = vld [vmem:[%s2969 + $0x20] sm:$0xff]
        %v2973 = vld [vmem:[%s2969 + $0x30] sm:$0xff]
        %v2974 = vld [vmem:[%s2969 + $0x40] sm:$0xff]
        %v2975 = vld [vmem:[%s2969 + $0x50] sm:$0xff]
        %v2976 = vld [vmem:[%s2969 + $0x60] sm:$0xff]
        %v2977 = vld [vmem:[%s2969 + $0x70] sm:$0xff]
        %s2978 = scalar_lea.vmem %s3, 160
        %v2979 = vld [vmem:[%s2978] sm:$0xff]
        %v2980 = vld [vmem:[%s2978 + $0x8] sm:$0x3]
        %v2982 = vsel %vm1467, %v2970, 0
        %v2985 = vsel %vm1467, %v2971, 0
        %v2988 = vsel %vm1467, %v2972, 0
        %v2991 = vsel %vm1467, %v2973, 0
        %v2994 = vsel %vm1467, %v2974, 0
        %v2997 = vsel %vm1467, %v2975, 0
        %v3000 = vsel %vm1467, %v2976, 0
        %v3003 = vsel %vm1467, %v2977, 0
        %v3006 = vsel %vm1492, %v2980, 0
        %3008 = vmatprep.subr.mxu0 0.0
        %3009 = vmatpush1.msra.mxu0 0.0
        %3010 = vmatprep.subr.mxu0 0.0
        %3011 = vmatpush1.msra.mxu0 0.0
        %3012 = vmatprep.subr.mxu0 0.0
        %3013 = vmatpush1.msra.mxu0 0.0
        %3014 = vmatprep.subr.mxu0 0.0
        %3015 = vmatpush1.msra.mxu0 0.0
        %3016 = vmatprep.subr.mxu0 0.0
        %3017 = vmatpush1.msra.mxu0 0.0
        %3018 = vmatprep.subr.mxu0 0.0
        %3019 = vmatpush1.msra.mxu0 0.0
        %3020 = vmatprep.subr.mxu0 0.0
        %3021 = vmatpush1.msra.mxu0 0.0
        %3022 = vmatprep.subr.mxu0 0.0
        %3023 = vmatpush1.msra.mxu0 0.0
        %3024 = vmatprep.subr.mxu0 0.0
        %3025 = vmatpush1.msra.mxu0 0.0
        %3026 = vmatprep.subr.mxu0 0.0
        %3027 = vmatpush1.msra.mxu0 0.0
        %3028 = vmatprep.subr.mxu0 0.0
        %3029 = vmatpush1.msra.mxu0 0.0
        %3030 = vmatprep.subr.mxu0 0.0
        %3031 = vmatpush1.msra.mxu0 0.0
        %3032 = vmatprep.subr.mxu0 0.0
        %3033 = vmatpush1.msra.mxu0 0.0
        %3034 = vmatprep.subr.mxu0 0.0
        %3035 = vmatpush1.msra.mxu0 0.0
        %3036 = vmatprep.subr.mxu0 0.0
        %3037 = vmatpush1.msra.mxu0 %v3006
        %3038 = vmatprep.subr.mxu0 0.0
        %3039 = vmatpush1.msra.mxu0 %v2979
        %3040 = vmatprep.subr.mxu0 0.0
        %3041 = vmatpush2.msra.mxu0 0.0
        %3042 = vmatprep.subr.mxu0 0.0
        %3043 = vmatpush2.msra.mxu0 0.0
        %3044 = vmatprep.subr.mxu0 0.0
        %3045 = vmatpush2.msra.mxu0 0.0
        %3046 = vmatprep.subr.mxu0 0.0
        %3047 = vmatpush2.msra.mxu0 0.0
        %3048 = vmatprep.subr.mxu0 0.0
        %3049 = vmatpush2.msra.mxu0 0.0
        %3050 = vmatprep.subr.mxu0 0.0
        %3051 = vmatpush2.msra.mxu0 0.0
        %3052 = vmatprep.subr.mxu0 0.0
        %3053 = vmatpush2.msra.mxu0 0.0
        %3054 = vmatprep.subr.mxu0 0.0
        %3055 = vmatpush2.msra.mxu0 0.0
        %3056 = vmatprep.subr.mxu0 0.0
        %3057 = vmatpush2.msra.mxu0 0.0
        %3058 = vmatprep.subr.mxu0 0.0
        %3059 = vmatpush2.msra.mxu0 0.0
        %3060 = vmatprep.subr.mxu0 0.0
        %3061 = vmatpush2.msra.mxu0 0.0
        %3062 = vmatprep.subr.mxu0 0.0
        %3063 = vmatpush2.msra.mxu0 0.0
        %3064 = vmatprep.subr.mxu0 0.0
        %3065 = vmatpush2.msra.mxu0 0.0
        %3066 = vmatprep.subr.mxu0 0.0
        %3067 = vmatpush2.msra.mxu0 0.0
        %3068 = vmatprep.subr.mxu0 0.0
        %3069 = vmatpush2.msra.mxu0 0.0
        %3070 = vmatprep.subr.mxu0 0.0
        %3071 = vmatpush2.msra.mxu0 0.0
        %3072 = vmatprep.mubr.f32.mxu0 0.0
        %3073 = vmatmul.mubr.f32.gmra.mxu0 %v2982
        %v3074 = vpop.f32.mrf.mxu0
        %v3075 = vadd.f32 0.0, %v3074
        %v3076 = vpop.f32.mrf.mxu0
        %3077 = vmatprep.mubr.f32.mxu0 0.0
        %3078 = vmatmul.mubr.f32.gmra.mxu0 %v2985
        %v3079 = vpop.f32.mrf.mxu0
        %v3080 = vadd.f32 0.0, %v3079
        %v3081 = vpop.f32.mrf.mxu0
        %3082 = vmatprep.mubr.f32.mxu0 0.0
        %3083 = vmatmul.mubr.f32.gmra.mxu0 %v2988
        %v3084 = vpop.f32.mrf.mxu0
        %v3085 = vadd.f32 0.0, %v3084
        %v3086 = vpop.f32.mrf.mxu0
        %3087 = vmatprep.mubr.f32.mxu0 0.0
        %3088 = vmatmul.mubr.f32.gmra.mxu0 %v2991
        %v3089 = vpop.f32.mrf.mxu0
        %v3090 = vadd.f32 0.0, %v3089
        %v3091 = vpop.f32.mrf.mxu0
        %3092 = vmatprep.mubr.f32.mxu0 0.0
        %3093 = vmatmul.mubr.f32.gmra.mxu0 %v2994
        %v3094 = vpop.f32.mrf.mxu0
        %v3095 = vadd.f32 0.0, %v3094
        %v3096 = vpop.f32.mrf.mxu0
        %3097 = vmatprep.mubr.f32.mxu0 0.0
        %3098 = vmatmul.mubr.f32.gmra.mxu0 %v2997
        %v3099 = vpop.f32.mrf.mxu0
        %v3100 = vadd.f32 0.0, %v3099
        %v3101 = vpop.f32.mrf.mxu0
        %3102 = vmatprep.mubr.f32.mxu0 0.0
        %3103 = vmatmul.mubr.f32.gmra.mxu0 %v3000
        %v3104 = vpop.f32.mrf.mxu0
        %v3105 = vadd.f32 0.0, %v3104
        %v3106 = vpop.f32.mrf.mxu0
        %3107 = vmatprep.mubr.f32.mxu0 0.0
        %3108 = vmatmul.mubr.f32.gmra.mxu0 %v3003
        %v3109 = vpop.f32.mrf.mxu0
        %v3110 = vadd.f32 0.0, %v3109
        %v3111 = vpop.f32.mrf.mxu0
        %3112 = vdwg.mxu0
        %v3113 = vadd.f32 %v2961, %v3075
        %v3114 = vadd.f32 %v2962, %v3080
        %v3115 = vadd.f32 %v2963, %v3085
        %v3116 = vadd.f32 %v2964, %v3090
        %v3117 = vadd.f32 %v2965, %v3095
        %v3118 = vadd.f32 %v2966, %v3100
        %v3119 = vadd.f32 %v2967, %v3105
        %v3120 = vadd.f32 %v2968, %v3110
        %v3121 = vld [vmem:[%s2969 + $0x1] sm:$0xff]
        %v3122 = vld [vmem:[%s2969 + $0x11] sm:$0xff]
        %v3123 = vld [vmem:[%s2969 + $0x21] sm:$0xff]
        %v3124 = vld [vmem:[%s2969 + $0x31] sm:$0xff]
        %v3125 = vld [vmem:[%s2969 + $0x41] sm:$0xff]
        %v3126 = vld [vmem:[%s2969 + $0x51] sm:$0xff]
        %v3127 = vld [vmem:[%s2969 + $0x61] sm:$0xff]
        %v3128 = vld [vmem:[%s2969 + $0x71] sm:$0xff]
        %s3129 = scalar_lea.vmem %s3, 176
        %v3130 = vld [vmem:[%s3129] sm:$0xff]
        %v3131 = vld [vmem:[%s3129 + $0x8] sm:$0x3]
        %v3133 = vsel %vm1467, %v3121, 0
        %v3136 = vsel %vm1467, %v3122, 0
        %v3139 = vsel %vm1467, %v3123, 0
        %v3142 = vsel %vm1467, %v3124, 0
        %v3145 = vsel %vm1467, %v3125, 0
        %v3148 = vsel %vm1467, %v3126, 0
        %v3151 = vsel %vm1467, %v3127, 0
        %v3154 = vsel %vm1467, %v3128, 0
        %v3157 = vsel %vm1492, %v3131, 0
        %3159 = vmatprep.subr.mxu0 0.0
        %3160 = vmatpush1.msra.mxu0 0.0
        %3161 = vmatprep.subr.mxu0 0.0
        %3162 = vmatpush1.msra.mxu0 0.0
        %3163 = vmatprep.subr.mxu0 0.0
        %3164 = vmatpush1.msra.mxu0 0.0
        %3165 = vmatprep.subr.mxu0 0.0
        %3166 = vmatpush1.msra.mxu0 0.0
        %3167 = vmatprep.subr.mxu0 0.0
        %3168 = vmatpush1.msra.mxu0 0.0
        %3169 = vmatprep.subr.mxu0 0.0
        %3170 = vmatpush1.msra.mxu0 0.0
        %3171 = vmatprep.subr.mxu0 0.0
        %3172 = vmatpush1.msra.mxu0 0.0
        %3173 = vmatprep.subr.mxu0 0.0
        %3174 = vmatpush1.msra.mxu0 0.0
        %3175 = vmatprep.subr.mxu0 0.0
        %3176 = vmatpush1.msra.mxu0 0.0
        %3177 = vmatprep.subr.mxu0 0.0
        %3178 = vmatpush1.msra.mxu0 0.0
        %3179 = vmatprep.subr.mxu0 0.0
        %3180 = vmatpush1.msra.mxu0 0.0
        %3181 = vmatprep.subr.mxu0 0.0
        %3182 = vmatpush1.msra.mxu0 0.0
        %3183 = vmatprep.subr.mxu0 0.0
        %3184 = vmatpush1.msra.mxu0 0.0
        %3185 = vmatprep.subr.mxu0 0.0
        %3186 = vmatpush1.msra.mxu0 0.0
        %3187 = vmatprep.subr.mxu0 0.0
        %3188 = vmatpush1.msra.mxu0 %v3157
        %3189 = vmatprep.subr.mxu0 0.0
        %3190 = vmatpush1.msra.mxu0 %v3130
        %3191 = vmatprep.subr.mxu0 0.0
        %3192 = vmatpush2.msra.mxu0 0.0
        %3193 = vmatprep.subr.mxu0 0.0
        %3194 = vmatpush2.msra.mxu0 0.0
        %3195 = vmatprep.subr.mxu0 0.0
        %3196 = vmatpush2.msra.mxu0 0.0
        %3197 = vmatprep.subr.mxu0 0.0
        %3198 = vmatpush2.msra.mxu0 0.0
        %3199 = vmatprep.subr.mxu0 0.0
        %3200 = vmatpush2.msra.mxu0 0.0
        %3201 = vmatprep.subr.mxu0 0.0
        %3202 = vmatpush2.msra.mxu0 0.0
        %3203 = vmatprep.subr.mxu0 0.0
        %3204 = vmatpush2.msra.mxu0 0.0
        %3205 = vmatprep.subr.mxu0 0.0
        %3206 = vmatpush2.msra.mxu0 0.0
        %3207 = vmatprep.subr.mxu0 0.0
        %3208 = vmatpush2.msra.mxu0 0.0
        %3209 = vmatprep.subr.mxu0 0.0
        %3210 = vmatpush2.msra.mxu0 0.0
        %3211 = vmatprep.subr.mxu0 0.0
        %3212 = vmatpush2.msra.mxu0 0.0
        %3213 = vmatprep.subr.mxu0 0.0
        %3214 = vmatpush2.msra.mxu0 0.0
        %3215 = vmatprep.subr.mxu0 0.0
        %3216 = vmatpush2.msra.mxu0 0.0
        %3217 = vmatprep.subr.mxu0 0.0
        %3218 = vmatpush2.msra.mxu0 0.0
        %3219 = vmatprep.subr.mxu0 0.0
        %3220 = vmatpush2.msra.mxu0 0.0
        %3221 = vmatprep.subr.mxu0 0.0
        %3222 = vmatpush2.msra.mxu0 0.0
        %3223 = vmatprep.mubr.f32.mxu0 0.0
        %3224 = vmatmul.mubr.f32.gmra.mxu0 %v3133
        %v3225 = vpop.f32.mrf.mxu0
        %v3226 = vadd.f32 0.0, %v3225
        %v3227 = vpop.f32.mrf.mxu0
        %3228 = vmatprep.mubr.f32.mxu0 0.0
        %3229 = vmatmul.mubr.f32.gmra.mxu0 %v3136
        %v3230 = vpop.f32.mrf.mxu0
        %v3231 = vadd.f32 0.0, %v3230
        %v3232 = vpop.f32.mrf.mxu0
        %3233 = vmatprep.mubr.f32.mxu0 0.0
        %3234 = vmatmul.mubr.f32.gmra.mxu0 %v3139
        %v3235 = vpop.f32.mrf.mxu0
        %v3236 = vadd.f32 0.0, %v3235
        %v3237 = vpop.f32.mrf.mxu0
        %3238 = vmatprep.mubr.f32.mxu0 0.0
        %3239 = vmatmul.mubr.f32.gmra.mxu0 %v3142
        %v3240 = vpop.f32.mrf.mxu0
        %v3241 = vadd.f32 0.0, %v3240
        %v3242 = vpop.f32.mrf.mxu0
        %3243 = vmatprep.mubr.f32.mxu0 0.0
        %3244 = vmatmul.mubr.f32.gmra.mxu0 %v3145
        %v3245 = vpop.f32.mrf.mxu0
        %v3246 = vadd.f32 0.0, %v3245
        %v3247 = vpop.f32.mrf.mxu0
        %3248 = vmatprep.mubr.f32.mxu0 0.0
        %3249 = vmatmul.mubr.f32.gmra.mxu0 %v3148
        %v3250 = vpop.f32.mrf.mxu0
        %v3251 = vadd.f32 0.0, %v3250
        %v3252 = vpop.f32.mrf.mxu0
        %3253 = vmatprep.mubr.f32.mxu0 0.0
        %3254 = vmatmul.mubr.f32.gmra.mxu0 %v3151
        %v3255 = vpop.f32.mrf.mxu0
        %v3256 = vadd.f32 0.0, %v3255
        %v3257 = vpop.f32.mrf.mxu0
        %3258 = vmatprep.mubr.f32.mxu0 0.0
        %3259 = vmatmul.mubr.f32.gmra.mxu0 %v3154
        %v3260 = vpop.f32.mrf.mxu0
        %v3261 = vadd.f32 0.0, %v3260
        %v3262 = vpop.f32.mrf.mxu0
        %3263 = vdwg.mxu0
        %v3264 = vadd.f32 %v3113, %v3226
        %v3265 = vadd.f32 %v3114, %v3231
        %v3266 = vadd.f32 %v3115, %v3236
        %v3267 = vadd.f32 %v3116, %v3241
        %v3268 = vadd.f32 %v3117, %v3246
        %v3269 = vadd.f32 %v3118, %v3251
        %v3270 = vadd.f32 %v3119, %v3256
        %v3271 = vadd.f32 %v3120, %v3261
        %v3272 = vld [vmem:[%s2969 + $0x2] sm:$0xff]
        %v3273 = vld [vmem:[%s2969 + $0x12] sm:$0xff]
        %v3274 = vld [vmem:[%s2969 + $0x22] sm:$0xff]
        %v3275 = vld [vmem:[%s2969 + $0x32] sm:$0xff]
        %v3276 = vld [vmem:[%s2969 + $0x42] sm:$0xff]
        %v3277 = vld [vmem:[%s2969 + $0x52] sm:$0xff]
        %v3278 = vld [vmem:[%s2969 + $0x62] sm:$0xff]
        %v3279 = vld [vmem:[%s2969 + $0x72] sm:$0xff]
        %s3280 = scalar_lea.vmem %s3, 192
        %v3281 = vld [vmem:[%s3280] sm:$0xff]
        %v3282 = vld [vmem:[%s3280 + $0x8] sm:$0x3]
        %v3284 = vsel %vm1467, %v3272, 0
        %v3287 = vsel %vm1467, %v3273, 0
        %v3290 = vsel %vm1467, %v3274, 0
        %v3293 = vsel %vm1467, %v3275, 0
        %v3296 = vsel %vm1467, %v3276, 0
        %v3299 = vsel %vm1467, %v3277, 0
        %v3302 = vsel %vm1467, %v3278, 0
        %v3305 = vsel %vm1467, %v3279, 0
        %v3308 = vsel %vm1492, %v3282, 0
        %3310 = vmatprep.subr.mxu0 0.0
        %3311 = vmatpush1.msra.mxu0 0.0
        %3312 = vmatprep.subr.mxu0 0.0
        %3313 = vmatpush1.msra.mxu0 0.0
        %3314 = vmatprep.subr.mxu0 0.0
        %3315 = vmatpush1.msra.mxu0 0.0
        %3316 = vmatprep.subr.mxu0 0.0
        %3317 = vmatpush1.msra.mxu0 0.0
        %3318 = vmatprep.subr.mxu0 0.0
        %3319 = vmatpush1.msra.mxu0 0.0
        %3320 = vmatprep.subr.mxu0 0.0
        %3321 = vmatpush1.msra.mxu0 0.0
        %3322 = vmatprep.subr.mxu0 0.0
        %3323 = vmatpush1.msra.mxu0 0.0
        %3324 = vmatprep.subr.mxu0 0.0
        %3325 = vmatpush1.msra.mxu0 0.0
        %3326 = vmatprep.subr.mxu0 0.0
        %3327 = vmatpush1.msra.mxu0 0.0
        %3328 = vmatprep.subr.mxu0 0.0
        %3329 = vmatpush1.msra.mxu0 0.0
        %3330 = vmatprep.subr.mxu0 0.0
        %3331 = vmatpush1.msra.mxu0 0.0
        %3332 = vmatprep.subr.mxu0 0.0
        %3333 = vmatpush1.msra.mxu0 0.0
        %3334 = vmatprep.subr.mxu0 0.0
        %3335 = vmatpush1.msra.mxu0 0.0
        %3336 = vmatprep.subr.mxu0 0.0
        %3337 = vmatpush1.msra.mxu0 0.0
        %3338 = vmatprep.subr.mxu0 0.0
        %3339 = vmatpush1.msra.mxu0 %v3308
        %3340 = vmatprep.subr.mxu0 0.0
        %3341 = vmatpush1.msra.mxu0 %v3281
        %3342 = vmatprep.subr.mxu0 0.0
        %3343 = vmatpush2.msra.mxu0 0.0
        %3344 = vmatprep.subr.mxu0 0.0
        %3345 = vmatpush2.msra.mxu0 0.0
        %3346 = vmatprep.subr.mxu0 0.0
        %3347 = vmatpush2.msra.mxu0 0.0
        %3348 = vmatprep.subr.mxu0 0.0
        %3349 = vmatpush2.msra.mxu0 0.0
        %3350 = vmatprep.subr.mxu0 0.0
        %3351 = vmatpush2.msra.mxu0 0.0
        %3352 = vmatprep.subr.mxu0 0.0
        %3353 = vmatpush2.msra.mxu0 0.0
        %3354 = vmatprep.subr.mxu0 0.0
        %3355 = vmatpush2.msra.mxu0 0.0
        %3356 = vmatprep.subr.mxu0 0.0
        %3357 = vmatpush2.msra.mxu0 0.0
        %3358 = vmatprep.subr.mxu0 0.0
        %3359 = vmatpush2.msra.mxu0 0.0
        %3360 = vmatprep.subr.mxu0 0.0
        %3361 = vmatpush2.msra.mxu0 0.0
        %3362 = vmatprep.subr.mxu0 0.0
        %3363 = vmatpush2.msra.mxu0 0.0
        %3364 = vmatprep.subr.mxu0 0.0
        %3365 = vmatpush2.msra.mxu0 0.0
        %3366 = vmatprep.subr.mxu0 0.0
        %3367 = vmatpush2.msra.mxu0 0.0
        %3368 = vmatprep.subr.mxu0 0.0
        %3369 = vmatpush2.msra.mxu0 0.0
        %3370 = vmatprep.subr.mxu0 0.0
        %3371 = vmatpush2.msra.mxu0 0.0
        %3372 = vmatprep.subr.mxu0 0.0
        %3373 = vmatpush2.msra.mxu0 0.0
        %3374 = vmatprep.mubr.f32.mxu0 0.0
        %3375 = vmatmul.mubr.f32.gmra.mxu0 %v3284
        %v3376 = vpop.f32.mrf.mxu0
        %v3377 = vadd.f32 0.0, %v3376
        %v3378 = vpop.f32.mrf.mxu0
        %3379 = vmatprep.mubr.f32.mxu0 0.0
        %3380 = vmatmul.mubr.f32.gmra.mxu0 %v3287
        %v3381 = vpop.f32.mrf.mxu0
        %v3382 = vadd.f32 0.0, %v3381
        %v3383 = vpop.f32.mrf.mxu0
        %3384 = vmatprep.mubr.f32.mxu0 0.0
        %3385 = vmatmul.mubr.f32.gmra.mxu0 %v3290
        %v3386 = vpop.f32.mrf.mxu0
        %v3387 = vadd.f32 0.0, %v3386
        %v3388 = vpop.f32.mrf.mxu0
        %3389 = vmatprep.mubr.f32.mxu0 0.0
        %3390 = vmatmul.mubr.f32.gmra.mxu0 %v3293
        %v3391 = vpop.f32.mrf.mxu0
        %v3392 = vadd.f32 0.0, %v3391
        %v3393 = vpop.f32.mrf.mxu0
        %3394 = vmatprep.mubr.f32.mxu0 0.0
        %3395 = vmatmul.mubr.f32.gmra.mxu0 %v3296
        %v3396 = vpop.f32.mrf.mxu0
        %v3397 = vadd.f32 0.0, %v3396
        %v3398 = vpop.f32.mrf.mxu0
        %3399 = vmatprep.mubr.f32.mxu0 0.0
        %3400 = vmatmul.mubr.f32.gmra.mxu0 %v3299
        %v3401 = vpop.f32.mrf.mxu0
        %v3402 = vadd.f32 0.0, %v3401
        %v3403 = vpop.f32.mrf.mxu0
        %3404 = vmatprep.mubr.f32.mxu0 0.0
        %3405 = vmatmul.mubr.f32.gmra.mxu0 %v3302
        %v3406 = vpop.f32.mrf.mxu0
        %v3407 = vadd.f32 0.0, %v3406
        %v3408 = vpop.f32.mrf.mxu0
        %3409 = vmatprep.mubr.f32.mxu0 0.0
        %3410 = vmatmul.mubr.f32.gmra.mxu0 %v3305
        %v3411 = vpop.f32.mrf.mxu0
        %v3412 = vadd.f32 0.0, %v3411
        %v3413 = vpop.f32.mrf.mxu0
        %3414 = vdwg.mxu0
        %v3415 = vadd.f32 %v3264, %v3377
        %v3416 = vadd.f32 %v3265, %v3382
        %v3417 = vadd.f32 %v3266, %v3387
        %v3418 = vadd.f32 %v3267, %v3392
        %v3419 = vadd.f32 %v3268, %v3397
        %v3420 = vadd.f32 %v3269, %v3402
        %v3421 = vadd.f32 %v3270, %v3407
        %v3422 = vadd.f32 %v3271, %v3412
        %v3423 = vld [vmem:[%s2969 + $0x3] sm:$0xff]
        %v3424 = vld [vmem:[%s2969 + $0x13] sm:$0xff]
        %v3425 = vld [vmem:[%s2969 + $0x23] sm:$0xff]
        %v3426 = vld [vmem:[%s2969 + $0x33] sm:$0xff]
        %v3427 = vld [vmem:[%s2969 + $0x43] sm:$0xff]
        %v3428 = vld [vmem:[%s2969 + $0x53] sm:$0xff]
        %v3429 = vld [vmem:[%s2969 + $0x63] sm:$0xff]
        %v3430 = vld [vmem:[%s2969 + $0x73] sm:$0xff]
        %s3431 = scalar_lea.vmem %s3, 208
        %v3432 = vld [vmem:[%s3431] sm:$0xff]
        %v3433 = vld [vmem:[%s3431 + $0x8] sm:$0x3]
        %v3435 = vsel %vm1467, %v3423, 0
        %v3438 = vsel %vm1467, %v3424, 0
        %v3441 = vsel %vm1467, %v3425, 0
        %v3444 = vsel %vm1467, %v3426, 0
        %v3447 = vsel %vm1467, %v3427, 0
        %v3450 = vsel %vm1467, %v3428, 0
        %v3453 = vsel %vm1467, %v3429, 0
        %v3456 = vsel %vm1467, %v3430, 0
        %v3459 = vsel %vm1492, %v3433, 0
        %3461 = vmatprep.subr.mxu0 0.0
        %3462 = vmatpush1.msra.mxu0 0.0
        %3463 = vmatprep.subr.mxu0 0.0
        %3464 = vmatpush1.msra.mxu0 0.0
        %3465 = vmatprep.subr.mxu0 0.0
        %3466 = vmatpush1.msra.mxu0 0.0
        %3467 = vmatprep.subr.mxu0 0.0
        %3468 = vmatpush1.msra.mxu0 0.0
        %3469 = vmatprep.subr.mxu0 0.0
        %3470 = vmatpush1.msra.mxu0 0.0
        %3471 = vmatprep.subr.mxu0 0.0
        %3472 = vmatpush1.msra.mxu0 0.0
        %3473 = vmatprep.subr.mxu0 0.0
        %3474 = vmatpush1.msra.mxu0 0.0
        %3475 = vmatprep.subr.mxu0 0.0
        %3476 = vmatpush1.msra.mxu0 0.0
        %3477 = vmatprep.subr.mxu0 0.0
        %3478 = vmatpush1.msra.mxu0 0.0
        %3479 = vmatprep.subr.mxu0 0.0
        %3480 = vmatpush1.msra.mxu0 0.0
        %3481 = vmatprep.subr.mxu0 0.0
        %3482 = vmatpush1.msra.mxu0 0.0
        %3483 = vmatprep.subr.mxu0 0.0
        %3484 = vmatpush1.msra.mxu0 0.0
        %3485 = vmatprep.subr.mxu0 0.0
        %3486 = vmatpush1.msra.mxu0 0.0
        %3487 = vmatprep.subr.mxu0 0.0
        %3488 = vmatpush1.msra.mxu0 0.0
        %3489 = vmatprep.subr.mxu0 0.0
        %3490 = vmatpush1.msra.mxu0 %v3459
        %3491 = vmatprep.subr.mxu0 0.0
        %3492 = vmatpush1.msra.mxu0 %v3432
        %3493 = vmatprep.subr.mxu0 0.0
        %3494 = vmatpush2.msra.mxu0 0.0
        %3495 = vmatprep.subr.mxu0 0.0
        %3496 = vmatpush2.msra.mxu0 0.0
        %3497 = vmatprep.subr.mxu0 0.0
        %3498 = vmatpush2.msra.mxu0 0.0
        %3499 = vmatprep.subr.mxu0 0.0
        %3500 = vmatpush2.msra.mxu0 0.0
        %3501 = vmatprep.subr.mxu0 0.0
        %3502 = vmatpush2.msra.mxu0 0.0
        %3503 = vmatprep.subr.mxu0 0.0
        %3504 = vmatpush2.msra.mxu0 0.0
        %3505 = vmatprep.subr.mxu0 0.0
        %3506 = vmatpush2.msra.mxu0 0.0
        %3507 = vmatprep.subr.mxu0 0.0
        %3508 = vmatpush2.msra.mxu0 0.0
        %3509 = vmatprep.subr.mxu0 0.0
        %3510 = vmatpush2.msra.mxu0 0.0
        %3511 = vmatprep.subr.mxu0 0.0
        %3512 = vmatpush2.msra.mxu0 0.0
        %3513 = vmatprep.subr.mxu0 0.0
        %3514 = vmatpush2.msra.mxu0 0.0
        %3515 = vmatprep.subr.mxu0 0.0
        %3516 = vmatpush2.msra.mxu0 0.0
        %3517 = vmatprep.subr.mxu0 0.0
        %3518 = vmatpush2.msra.mxu0 0.0
        %3519 = vmatprep.subr.mxu0 0.0
        %3520 = vmatpush2.msra.mxu0 0.0
        %3521 = vmatprep.subr.mxu0 0.0
        %3522 = vmatpush2.msra.mxu0 0.0
        %3523 = vmatprep.subr.mxu0 0.0
        %3524 = vmatpush2.msra.mxu0 0.0
        %3525 = vmatprep.mubr.f32.mxu0 0.0
        %3526 = vmatmul.mubr.f32.gmra.mxu0 %v3435
        %v3527 = vpop.f32.mrf.mxu0
        %v3528 = vadd.f32 0.0, %v3527
        %v3529 = vpop.f32.mrf.mxu0
        %3530 = vmatprep.mubr.f32.mxu0 0.0
        %3531 = vmatmul.mubr.f32.gmra.mxu0 %v3438
        %v3532 = vpop.f32.mrf.mxu0
        %v3533 = vadd.f32 0.0, %v3532
        %v3534 = vpop.f32.mrf.mxu0
        %3535 = vmatprep.mubr.f32.mxu0 0.0
        %3536 = vmatmul.mubr.f32.gmra.mxu0 %v3441
        %v3537 = vpop.f32.mrf.mxu0
        %v3538 = vadd.f32 0.0, %v3537
        %v3539 = vpop.f32.mrf.mxu0
        %3540 = vmatprep.mubr.f32.mxu0 0.0
        %3541 = vmatmul.mubr.f32.gmra.mxu0 %v3444
        %v3542 = vpop.f32.mrf.mxu0
        %v3543 = vadd.f32 0.0, %v3542
        %v3544 = vpop.f32.mrf.mxu0
        %3545 = vmatprep.mubr.f32.mxu0 0.0
        %3546 = vmatmul.mubr.f32.gmra.mxu0 %v3447
        %v3547 = vpop.f32.mrf.mxu0
        %v3548 = vadd.f32 0.0, %v3547
        %v3549 = vpop.f32.mrf.mxu0
        %3550 = vmatprep.mubr.f32.mxu0 0.0
        %3551 = vmatmul.mubr.f32.gmra.mxu0 %v3450
        %v3552 = vpop.f32.mrf.mxu0
        %v3553 = vadd.f32 0.0, %v3552
        %v3554 = vpop.f32.mrf.mxu0
        %3555 = vmatprep.mubr.f32.mxu0 0.0
        %3556 = vmatmul.mubr.f32.gmra.mxu0 %v3453
        %v3557 = vpop.f32.mrf.mxu0
        %v3558 = vadd.f32 0.0, %v3557
        %v3559 = vpop.f32.mrf.mxu0
        %3560 = vmatprep.mubr.f32.mxu0 0.0
        %3561 = vmatmul.mubr.f32.gmra.mxu0 %v3456
        %v3562 = vpop.f32.mrf.mxu0
        %v3563 = vadd.f32 0.0, %v3562
        %v3564 = vpop.f32.mrf.mxu0
        %3565 = vdwg.mxu0
        %v3566 = vadd.f32 %v3415, %v3528
        %v3567 = vadd.f32 %v3416, %v3533
        %v3568 = vadd.f32 %v3417, %v3538
        %v3569 = vadd.f32 %v3418, %v3543
        %v3570 = vadd.f32 %v3419, %v3548
        %v3571 = vadd.f32 %v3420, %v3553
        %v3572 = vadd.f32 %v3421, %v3558
        %v3573 = vadd.f32 %v3422, %v3563
        %v3574 = vld [vmem:[%s2969 + $0x4] sm:$0xff]
        %v3575 = vld [vmem:[%s2969 + $0x14] sm:$0xff]
        %v3576 = vld [vmem:[%s2969 + $0x24] sm:$0xff]
        %v3577 = vld [vmem:[%s2969 + $0x34] sm:$0xff]
        %v3578 = vld [vmem:[%s2969 + $0x44] sm:$0xff]
        %v3579 = vld [vmem:[%s2969 + $0x54] sm:$0xff]
        %v3580 = vld [vmem:[%s2969 + $0x64] sm:$0xff]
        %v3581 = vld [vmem:[%s2969 + $0x74] sm:$0xff]
        %s3582 = scalar_lea.vmem %s3, 224
        %v3583 = vld [vmem:[%s3582] sm:$0xff]
        %v3584 = vld [vmem:[%s3582 + $0x8] sm:$0x3]
        %v3586 = vsel %vm1467, %v3574, 0
        %v3589 = vsel %vm1467, %v3575, 0
        %v3592 = vsel %vm1467, %v3576, 0
        %v3595 = vsel %vm1467, %v3577, 0
        %v3598 = vsel %vm1467, %v3578, 0
        %v3601 = vsel %vm1467, %v3579, 0
        %v3604 = vsel %vm1467, %v3580, 0
        %v3607 = vsel %vm1467, %v3581, 0
        %v3610 = vsel %vm1492, %v3584, 0
        %3612 = vmatprep.subr.mxu0 0.0
        %3613 = vmatpush1.msra.mxu0 0.0
        %3614 = vmatprep.subr.mxu0 0.0
        %3615 = vmatpush1.msra.mxu0 0.0
        %3616 = vmatprep.subr.mxu0 0.0
        %3617 = vmatpush1.msra.mxu0 0.0
        %3618 = vmatprep.subr.mxu0 0.0
        %3619 = vmatpush1.msra.mxu0 0.0
        %3620 = vmatprep.subr.mxu0 0.0
        %3621 = vmatpush1.msra.mxu0 0.0
        %3622 = vmatprep.subr.mxu0 0.0
        %3623 = vmatpush1.msra.mxu0 0.0
        %3624 = vmatprep.subr.mxu0 0.0
        %3625 = vmatpush1.msra.mxu0 0.0
        %3626 = vmatprep.subr.mxu0 0.0
        %3627 = vmatpush1.msra.mxu0 0.0
        %3628 = vmatprep.subr.mxu0 0.0
        %3629 = vmatpush1.msra.mxu0 0.0
        %3630 = vmatprep.subr.mxu0 0.0
        %3631 = vmatpush1.msra.mxu0 0.0
        %3632 = vmatprep.subr.mxu0 0.0
        %3633 = vmatpush1.msra.mxu0 0.0
        %3634 = vmatprep.subr.mxu0 0.0
        %3635 = vmatpush1.msra.mxu0 0.0
        %3636 = vmatprep.subr.mxu0 0.0
        %3637 = vmatpush1.msra.mxu0 0.0
        %3638 = vmatprep.subr.mxu0 0.0
        %3639 = vmatpush1.msra.mxu0 0.0
        %3640 = vmatprep.subr.mxu0 0.0
        %3641 = vmatpush1.msra.mxu0 %v3610
        %3642 = vmatprep.subr.mxu0 0.0
        %3643 = vmatpush1.msra.mxu0 %v3583
        %3644 = vmatprep.subr.mxu0 0.0
        %3645 = vmatpush2.msra.mxu0 0.0
        %3646 = vmatprep.subr.mxu0 0.0
        %3647 = vmatpush2.msra.mxu0 0.0
        %3648 = vmatprep.subr.mxu0 0.0
        %3649 = vmatpush2.msra.mxu0 0.0
        %3650 = vmatprep.subr.mxu0 0.0
        %3651 = vmatpush2.msra.mxu0 0.0
        %3652 = vmatprep.subr.mxu0 0.0
        %3653 = vmatpush2.msra.mxu0 0.0
        %3654 = vmatprep.subr.mxu0 0.0
        %3655 = vmatpush2.msra.mxu0 0.0
        %3656 = vmatprep.subr.mxu0 0.0
        %3657 = vmatpush2.msra.mxu0 0.0
        %3658 = vmatprep.subr.mxu0 0.0
        %3659 = vmatpush2.msra.mxu0 0.0
        %3660 = vmatprep.subr.mxu0 0.0
        %3661 = vmatpush2.msra.mxu0 0.0
        %3662 = vmatprep.subr.mxu0 0.0
        %3663 = vmatpush2.msra.mxu0 0.0
        %3664 = vmatprep.subr.mxu0 0.0
        %3665 = vmatpush2.msra.mxu0 0.0
        %3666 = vmatprep.subr.mxu0 0.0
        %3667 = vmatpush2.msra.mxu0 0.0
        %3668 = vmatprep.subr.mxu0 0.0
        %3669 = vmatpush2.msra.mxu0 0.0
        %3670 = vmatprep.subr.mxu0 0.0
        %3671 = vmatpush2.msra.mxu0 0.0
        %3672 = vmatprep.subr.mxu0 0.0
        %3673 = vmatpush2.msra.mxu0 0.0
        %3674 = vmatprep.subr.mxu0 0.0
        %3675 = vmatpush2.msra.mxu0 0.0
        %3676 = vmatprep.mubr.f32.mxu0 0.0
        %3677 = vmatmul.mubr.f32.gmra.mxu0 %v3586
        %v3678 = vpop.f32.mrf.mxu0
        %v3679 = vadd.f32 0.0, %v3678
        %v3680 = vpop.f32.mrf.mxu0
        %3681 = vmatprep.mubr.f32.mxu0 0.0
        %3682 = vmatmul.mubr.f32.gmra.mxu0 %v3589
        %v3683 = vpop.f32.mrf.mxu0
        %v3684 = vadd.f32 0.0, %v3683
        %v3685 = vpop.f32.mrf.mxu0
        %3686 = vmatprep.mubr.f32.mxu0 0.0
        %3687 = vmatmul.mubr.f32.gmra.mxu0 %v3592
        %v3688 = vpop.f32.mrf.mxu0
        %v3689 = vadd.f32 0.0, %v3688
        %v3690 = vpop.f32.mrf.mxu0
        %3691 = vmatprep.mubr.f32.mxu0 0.0
        %3692 = vmatmul.mubr.f32.gmra.mxu0 %v3595
        %v3693 = vpop.f32.mrf.mxu0
        %v3694 = vadd.f32 0.0, %v3693
        %v3695 = vpop.f32.mrf.mxu0
        %3696 = vmatprep.mubr.f32.mxu0 0.0
        %3697 = vmatmul.mubr.f32.gmra.mxu0 %v3598
        %v3698 = vpop.f32.mrf.mxu0
        %v3699 = vadd.f32 0.0, %v3698
        %v3700 = vpop.f32.mrf.mxu0
        %3701 = vmatprep.mubr.f32.mxu0 0.0
        %3702 = vmatmul.mubr.f32.gmra.mxu0 %v3601
        %v3703 = vpop.f32.mrf.mxu0
        %v3704 = vadd.f32 0.0, %v3703
        %v3705 = vpop.f32.mrf.mxu0
        %3706 = vmatprep.mubr.f32.mxu0 0.0
        %3707 = vmatmul.mubr.f32.gmra.mxu0 %v3604
        %v3708 = vpop.f32.mrf.mxu0
        %v3709 = vadd.f32 0.0, %v3708
        %v3710 = vpop.f32.mrf.mxu0
        %3711 = vmatprep.mubr.f32.mxu0 0.0
        %3712 = vmatmul.mubr.f32.gmra.mxu0 %v3607
        %v3713 = vpop.f32.mrf.mxu0
        %v3714 = vadd.f32 0.0, %v3713
        %v3715 = vpop.f32.mrf.mxu0
        %3716 = vdwg.mxu0
        %v3717 = vadd.f32 %v3566, %v3679
        %v3718 = vadd.f32 %v3567, %v3684
        %v3719 = vadd.f32 %v3568, %v3689
        %v3720 = vadd.f32 %v3569, %v3694
        %v3721 = vadd.f32 %v3570, %v3699
        %v3722 = vadd.f32 %v3571, %v3704
        %v3723 = vadd.f32 %v3572, %v3709
        %v3724 = vadd.f32 %v3573, %v3714
        %s3725 = scalar_lea.vmem [#allocation2], 48
        %v3726 = vld [vmem:[%s3725] sm:$0xff]
        %v3727 = vld [vmem:[%s3725 + $0x10] sm:$0xff]
        %v3728 = vld [vmem:[%s3725 + $0x20] sm:$0xff]
        %v3729 = vld [vmem:[%s3725 + $0x30] sm:$0xff]
        %v3730 = vld [vmem:[%s3725 + $0x40] sm:$0xff]
        %v3731 = vld [vmem:[%s3725 + $0x50] sm:$0xff]
        %v3732 = vld [vmem:[%s3725 + $0x60] sm:$0xff]
        %v3733 = vld [vmem:[%s3725 + $0x70] sm:$0xff]
        %s3734 = scalar_lea.vmem %s3, 240
        %v3735 = vld [vmem:[%s3734] sm:$0xff]
        %v3736 = vld [vmem:[%s3734 + $0x8] sm:$0x3]
        %v3738 = vsel %vm1467, %v3726, 0
        %v3741 = vsel %vm1467, %v3727, 0
        %v3744 = vsel %vm1467, %v3728, 0
        %v3747 = vsel %vm1467, %v3729, 0
        %v3750 = vsel %vm1467, %v3730, 0
        %v3753 = vsel %vm1467, %v3731, 0
        %v3756 = vsel %vm1467, %v3732, 0
        %v3759 = vsel %vm1467, %v3733, 0
        %v3762 = vsel %vm1492, %v3736, 0
        %3764 = vmatprep.subr.mxu0 0.0
        %3765 = vmatpush1.msra.mxu0 0.0
        %3766 = vmatprep.subr.mxu0 0.0
        %3767 = vmatpush1.msra.mxu0 0.0
        %3768 = vmatprep.subr.mxu0 0.0
        %3769 = vmatpush1.msra.mxu0 0.0
        %3770 = vmatprep.subr.mxu0 0.0
        %3771 = vmatpush1.msra.mxu0 0.0
        %3772 = vmatprep.subr.mxu0 0.0
        %3773 = vmatpush1.msra.mxu0 0.0
        %3774 = vmatprep.subr.mxu0 0.0
        %3775 = vmatpush1.msra.mxu0 0.0
        %3776 = vmatprep.subr.mxu0 0.0
        %3777 = vmatpush1.msra.mxu0 0.0
        %3778 = vmatprep.subr.mxu0 0.0
        %3779 = vmatpush1.msra.mxu0 0.0
        %3780 = vmatprep.subr.mxu0 0.0
        %3781 = vmatpush1.msra.mxu0 0.0
        %3782 = vmatprep.subr.mxu0 0.0
        %3783 = vmatpush1.msra.mxu0 0.0
        %3784 = vmatprep.subr.mxu0 0.0
        %3785 = vmatpush1.msra.mxu0 0.0
        %3786 = vmatprep.subr.mxu0 0.0
        %3787 = vmatpush1.msra.mxu0 0.0
        %3788 = vmatprep.subr.mxu0 0.0
        %3789 = vmatpush1.msra.mxu0 0.0
        %3790 = vmatprep.subr.mxu0 0.0
        %3791 = vmatpush1.msra.mxu0 0.0
        %3792 = vmatprep.subr.mxu0 0.0
        %3793 = vmatpush1.msra.mxu0 %v3762
        %3794 = vmatprep.subr.mxu0 0.0
        %3795 = vmatpush1.msra.mxu0 %v3735
        %3796 = vmatprep.subr.mxu0 0.0
        %3797 = vmatpush2.msra.mxu0 0.0
        %3798 = vmatprep.subr.mxu0 0.0
        %3799 = vmatpush2.msra.mxu0 0.0
        %3800 = vmatprep.subr.mxu0 0.0
        %3801 = vmatpush2.msra.mxu0 0.0
        %3802 = vmatprep.subr.mxu0 0.0
        %3803 = vmatpush2.msra.mxu0 0.0
        %3804 = vmatprep.subr.mxu0 0.0
        %3805 = vmatpush2.msra.mxu0 0.0
        %3806 = vmatprep.subr.mxu0 0.0
        %3807 = vmatpush2.msra.mxu0 0.0
        %3808 = vmatprep.subr.mxu0 0.0
        %3809 = vmatpush2.msra.mxu0 0.0
        %3810 = vmatprep.subr.mxu0 0.0
        %3811 = vmatpush2.msra.mxu0 0.0
        %3812 = vmatprep.subr.mxu0 0.0
        %3813 = vmatpush2.msra.mxu0 0.0
        %3814 = vmatprep.subr.mxu0 0.0
        %3815 = vmatpush2.msra.mxu0 0.0
        %3816 = vmatprep.subr.mxu0 0.0
        %3817 = vmatpush2.msra.mxu0 0.0
        %3818 = vmatprep.subr.mxu0 0.0
        %3819 = vmatpush2.msra.mxu0 0.0
        %3820 = vmatprep.subr.mxu0 0.0
        %3821 = vmatpush2.msra.mxu0 0.0
        %3822 = vmatprep.subr.mxu0 0.0
        %3823 = vmatpush2.msra.mxu0 0.0
        %3824 = vmatprep.subr.mxu0 0.0
        %3825 = vmatpush2.msra.mxu0 0.0
        %3826 = vmatprep.subr.mxu0 0.0
        %3827 = vmatpush2.msra.mxu0 0.0
        %3828 = vmatprep.mubr.f32.mxu0 0.0
        %3829 = vmatmul.mubr.f32.gmra.mxu0 %v3738
        %v3830 = vpop.f32.mrf.mxu0
        %v3831 = vadd.f32 0.0, %v3830
        %v3832 = vpop.f32.mrf.mxu0
        %3833 = vmatprep.mubr.f32.mxu0 0.0
        %3834 = vmatmul.mubr.f32.gmra.mxu0 %v3741
        %v3835 = vpop.f32.mrf.mxu0
        %v3836 = vadd.f32 0.0, %v3835
        %v3837 = vpop.f32.mrf.mxu0
        %3838 = vmatprep.mubr.f32.mxu0 0.0
        %3839 = vmatmul.mubr.f32.gmra.mxu0 %v3744
        %v3840 = vpop.f32.mrf.mxu0
        %v3841 = vadd.f32 0.0, %v3840
        %v3842 = vpop.f32.mrf.mxu0
        %3843 = vmatprep.mubr.f32.mxu0 0.0
        %3844 = vmatmul.mubr.f32.gmra.mxu0 %v3747
        %v3845 = vpop.f32.mrf.mxu0
        %v3846 = vadd.f32 0.0, %v3845
        %v3847 = vpop.f32.mrf.mxu0
        %3848 = vmatprep.mubr.f32.mxu0 0.0
        %3849 = vmatmul.mubr.f32.gmra.mxu0 %v3750
        %v3850 = vpop.f32.mrf.mxu0
        %v3851 = vadd.f32 0.0, %v3850
        %v3852 = vpop.f32.mrf.mxu0
        %3853 = vmatprep.mubr.f32.mxu0 0.0
        %3854 = vmatmul.mubr.f32.gmra.mxu0 %v3753
        %v3855 = vpop.f32.mrf.mxu0
        %v3856 = vadd.f32 0.0, %v3855
        %v3857 = vpop.f32.mrf.mxu0
        %3858 = vmatprep.mubr.f32.mxu0 0.0
        %3859 = vmatmul.mubr.f32.gmra.mxu0 %v3756
        %v3860 = vpop.f32.mrf.mxu0
        %v3861 = vadd.f32 0.0, %v3860
        %v3862 = vpop.f32.mrf.mxu0
        %3863 = vmatprep.mubr.f32.mxu0 0.0
        %3864 = vmatmul.mubr.f32.gmra.mxu0 %v3759
        %v3865 = vpop.f32.mrf.mxu0
        %v3866 = vadd.f32 0.0, %v3865
        %v3867 = vpop.f32.mrf.mxu0
        %3868 = vdwg.mxu0
        %v3869 = vadd.f32 %v3717, %v3831
        %v3870 = vadd.f32 %v3718, %v3836
        %v3871 = vadd.f32 %v3719, %v3841
        %v3872 = vadd.f32 %v3720, %v3846
        %v3873 = vadd.f32 %v3721, %v3851
        %v3874 = vadd.f32 %v3722, %v3856
        %v3875 = vadd.f32 %v3723, %v3861
        %v3876 = vadd.f32 %v3724, %v3866
        %v3877 = vld [vmem:[%s3725 + $0x1] sm:$0xff]
        %v3878 = vld [vmem:[%s3725 + $0x11] sm:$0xff]
        %v3879 = vld [vmem:[%s3725 + $0x21] sm:$0xff]
        %v3880 = vld [vmem:[%s3725 + $0x31] sm:$0xff]
        %v3881 = vld [vmem:[%s3725 + $0x41] sm:$0xff]
        %v3882 = vld [vmem:[%s3725 + $0x51] sm:$0xff]
        %v3883 = vld [vmem:[%s3725 + $0x61] sm:$0xff]
        %v3884 = vld [vmem:[%s3725 + $0x71] sm:$0xff]
        %s3885 = scalar_lea.vmem %s3, 256
        %v3886 = vld [vmem:[%s3885] sm:$0xff]
        %v3887 = vld [vmem:[%s3885 + $0x8] sm:$0x3]
        %v3889 = vsel %vm1467, %v3877, 0
        %v3892 = vsel %vm1467, %v3878, 0
        %v3895 = vsel %vm1467, %v3879, 0
        %v3898 = vsel %vm1467, %v3880, 0
        %v3901 = vsel %vm1467, %v3881, 0
        %v3904 = vsel %vm1467, %v3882, 0
        %v3907 = vsel %vm1467, %v3883, 0
        %v3910 = vsel %vm1467, %v3884, 0
        %v3913 = vsel %vm1492, %v3887, 0
        %3915 = vmatprep.subr.mxu0 0.0
        %3916 = vmatpush1.msra.mxu0 0.0
        %3917 = vmatprep.subr.mxu0 0.0
        %3918 = vmatpush1.msra.mxu0 0.0
        %3919 = vmatprep.subr.mxu0 0.0
        %3920 = vmatpush1.msra.mxu0 0.0
        %3921 = vmatprep.subr.mxu0 0.0
        %3922 = vmatpush1.msra.mxu0 0.0
        %3923 = vmatprep.subr.mxu0 0.0
        %3924 = vmatpush1.msra.mxu0 0.0
        %3925 = vmatprep.subr.mxu0 0.0
        %3926 = vmatpush1.msra.mxu0 0.0
        %3927 = vmatprep.subr.mxu0 0.0
        %3928 = vmatpush1.msra.mxu0 0.0
        %3929 = vmatprep.subr.mxu0 0.0
        %3930 = vmatpush1.msra.mxu0 0.0
        %3931 = vmatprep.subr.mxu0 0.0
        %3932 = vmatpush1.msra.mxu0 0.0
        %3933 = vmatprep.subr.mxu0 0.0
        %3934 = vmatpush1.msra.mxu0 0.0
        %3935 = vmatprep.subr.mxu0 0.0
        %3936 = vmatpush1.msra.mxu0 0.0
        %3937 = vmatprep.subr.mxu0 0.0
        %3938 = vmatpush1.msra.mxu0 0.0
        %3939 = vmatprep.subr.mxu0 0.0
        %3940 = vmatpush1.msra.mxu0 0.0
        %3941 = vmatprep.subr.mxu0 0.0
        %3942 = vmatpush1.msra.mxu0 0.0
        %3943 = vmatprep.subr.mxu0 0.0
        %3944 = vmatpush1.msra.mxu0 %v3913
        %3945 = vmatprep.subr.mxu0 0.0
        %3946 = vmatpush1.msra.mxu0 %v3886
        %3947 = vmatprep.subr.mxu0 0.0
        %3948 = vmatpush2.msra.mxu0 0.0
        %3949 = vmatprep.subr.mxu0 0.0
        %3950 = vmatpush2.msra.mxu0 0.0
        %3951 = vmatprep.subr.mxu0 0.0
        %3952 = vmatpush2.msra.mxu0 0.0
        %3953 = vmatprep.subr.mxu0 0.0
        %3954 = vmatpush2.msra.mxu0 0.0
        %3955 = vmatprep.subr.mxu0 0.0
        %3956 = vmatpush2.msra.mxu0 0.0
        %3957 = vmatprep.subr.mxu0 0.0
        %3958 = vmatpush2.msra.mxu0 0.0
        %3959 = vmatprep.subr.mxu0 0.0
        %3960 = vmatpush2.msra.mxu0 0.0
        %3961 = vmatprep.subr.mxu0 0.0
        %3962 = vmatpush2.msra.mxu0 0.0
        %3963 = vmatprep.subr.mxu0 0.0
        %3964 = vmatpush2.msra.mxu0 0.0
        %3965 = vmatprep.subr.mxu0 0.0
        %3966 = vmatpush2.msra.mxu0 0.0
        %3967 = vmatprep.subr.mxu0 0.0
        %3968 = vmatpush2.msra.mxu0 0.0
        %3969 = vmatprep.subr.mxu0 0.0
        %3970 = vmatpush2.msra.mxu0 0.0
        %3971 = vmatprep.subr.mxu0 0.0
        %3972 = vmatpush2.msra.mxu0 0.0
        %3973 = vmatprep.subr.mxu0 0.0
        %3974 = vmatpush2.msra.mxu0 0.0
        %3975 = vmatprep.subr.mxu0 0.0
        %3976 = vmatpush2.msra.mxu0 0.0
        %3977 = vmatprep.subr.mxu0 0.0
        %3978 = vmatpush2.msra.mxu0 0.0
        %3979 = vmatprep.mubr.f32.mxu0 0.0
        %3980 = vmatmul.mubr.f32.gmra.mxu0 %v3889
        %v3981 = vpop.f32.mrf.mxu0
        %v3982 = vadd.f32 0.0, %v3981
        %v3983 = vpop.f32.mrf.mxu0
        %3984 = vmatprep.mubr.f32.mxu0 0.0
        %3985 = vmatmul.mubr.f32.gmra.mxu0 %v3892
        %v3986 = vpop.f32.mrf.mxu0
        %v3987 = vadd.f32 0.0, %v3986
        %v3988 = vpop.f32.mrf.mxu0
        %3989 = vmatprep.mubr.f32.mxu0 0.0
        %3990 = vmatmul.mubr.f32.gmra.mxu0 %v3895
        %v3991 = vpop.f32.mrf.mxu0
        %v3992 = vadd.f32 0.0, %v3991
        %v3993 = vpop.f32.mrf.mxu0
        %3994 = vmatprep.mubr.f32.mxu0 0.0
        %3995 = vmatmul.mubr.f32.gmra.mxu0 %v3898
        %v3996 = vpop.f32.mrf.mxu0
        %v3997 = vadd.f32 0.0, %v3996
        %v3998 = vpop.f32.mrf.mxu0
        %3999 = vmatprep.mubr.f32.mxu0 0.0
        %4000 = vmatmul.mubr.f32.gmra.mxu0 %v3901
        %v4001 = vpop.f32.mrf.mxu0
        %v4002 = vadd.f32 0.0, %v4001
        %v4003 = vpop.f32.mrf.mxu0
        %4004 = vmatprep.mubr.f32.mxu0 0.0
        %4005 = vmatmul.mubr.f32.gmra.mxu0 %v3904
        %v4006 = vpop.f32.mrf.mxu0
        %v4007 = vadd.f32 0.0, %v4006
        %v4008 = vpop.f32.mrf.mxu0
        %4009 = vmatprep.mubr.f32.mxu0 0.0
        %4010 = vmatmul.mubr.f32.gmra.mxu0 %v3907
        %v4011 = vpop.f32.mrf.mxu0
        %v4012 = vadd.f32 0.0, %v4011
        %v4013 = vpop.f32.mrf.mxu0
        %4014 = vmatprep.mubr.f32.mxu0 0.0
        %4015 = vmatmul.mubr.f32.gmra.mxu0 %v3910
        %v4016 = vpop.f32.mrf.mxu0
        %v4017 = vadd.f32 0.0, %v4016
        %v4018 = vpop.f32.mrf.mxu0
        %4019 = vdwg.mxu0
        %v4020 = vadd.f32 %v3869, %v3982
        %v4021 = vadd.f32 %v3870, %v3987
        %v4022 = vadd.f32 %v3871, %v3992
        %v4023 = vadd.f32 %v3872, %v3997
        %v4024 = vadd.f32 %v3873, %v4002
        %v4025 = vadd.f32 %v3874, %v4007
        %v4026 = vadd.f32 %v3875, %v4012
        %v4027 = vadd.f32 %v3876, %v4017
        %v4028 = vld [vmem:[%s3725 + $0x2] sm:$0xff]
        %v4029 = vld [vmem:[%s3725 + $0x12] sm:$0xff]
        %v4030 = vld [vmem:[%s3725 + $0x22] sm:$0xff]
        %v4031 = vld [vmem:[%s3725 + $0x32] sm:$0xff]
        %v4032 = vld [vmem:[%s3725 + $0x42] sm:$0xff]
        %v4033 = vld [vmem:[%s3725 + $0x52] sm:$0xff]
        %v4034 = vld [vmem:[%s3725 + $0x62] sm:$0xff]
        %v4035 = vld [vmem:[%s3725 + $0x72] sm:$0xff]
        %s4036 = scalar_lea.vmem %s3, 272
        %v4037 = vld [vmem:[%s4036] sm:$0xff]
        %v4038 = vld [vmem:[%s4036 + $0x8] sm:$0x3]
        %v4040 = vsel %vm1467, %v4028, 0
        %v4043 = vsel %vm1467, %v4029, 0
        %v4046 = vsel %vm1467, %v4030, 0
        %v4049 = vsel %vm1467, %v4031, 0
        %v4052 = vsel %vm1467, %v4032, 0
        %v4055 = vsel %vm1467, %v4033, 0
        %v4058 = vsel %vm1467, %v4034, 0
        %v4061 = vsel %vm1467, %v4035, 0
        %v4064 = vsel %vm1492, %v4038, 0
        %4066 = vmatprep.subr.mxu0 0.0
        %4067 = vmatpush1.msra.mxu0 0.0
        %4068 = vmatprep.subr.mxu0 0.0
        %4069 = vmatpush1.msra.mxu0 0.0
        %4070 = vmatprep.subr.mxu0 0.0
        %4071 = vmatpush1.msra.mxu0 0.0
        %4072 = vmatprep.subr.mxu0 0.0
        %4073 = vmatpush1.msra.mxu0 0.0
        %4074 = vmatprep.subr.mxu0 0.0
        %4075 = vmatpush1.msra.mxu0 0.0
        %4076 = vmatprep.subr.mxu0 0.0
        %4077 = vmatpush1.msra.mxu0 0.0
        %4078 = vmatprep.subr.mxu0 0.0
        %4079 = vmatpush1.msra.mxu0 0.0
        %4080 = vmatprep.subr.mxu0 0.0
        %4081 = vmatpush1.msra.mxu0 0.0
        %4082 = vmatprep.subr.mxu0 0.0
        %4083 = vmatpush1.msra.mxu0 0.0
        %4084 = vmatprep.subr.mxu0 0.0
        %4085 = vmatpush1.msra.mxu0 0.0
        %4086 = vmatprep.subr.mxu0 0.0
        %4087 = vmatpush1.msra.mxu0 0.0
        %4088 = vmatprep.subr.mxu0 0.0
        %4089 = vmatpush1.msra.mxu0 0.0
        %4090 = vmatprep.subr.mxu0 0.0
        %4091 = vmatpush1.msra.mxu0 0.0
        %4092 = vmatprep.subr.mxu0 0.0
        %4093 = vmatpush1.msra.mxu0 0.0
        %4094 = vmatprep.subr.mxu0 0.0
        %4095 = vmatpush1.msra.mxu0 %v4064
        %4096 = vmatprep.subr.mxu0 0.0
        %4097 = vmatpush1.msra.mxu0 %v4037
        %4098 = vmatprep.subr.mxu0 0.0
        %4099 = vmatpush2.msra.mxu0 0.0
        %4100 = vmatprep.subr.mxu0 0.0
        %4101 = vmatpush2.msra.mxu0 0.0
        %4102 = vmatprep.subr.mxu0 0.0
        %4103 = vmatpush2.msra.mxu0 0.0
        %4104 = vmatprep.subr.mxu0 0.0
        %4105 = vmatpush2.msra.mxu0 0.0
        %4106 = vmatprep.subr.mxu0 0.0
        %4107 = vmatpush2.msra.mxu0 0.0
        %4108 = vmatprep.subr.mxu0 0.0
        %4109 = vmatpush2.msra.mxu0 0.0
        %4110 = vmatprep.subr.mxu0 0.0
        %4111 = vmatpush2.msra.mxu0 0.0
        %4112 = vmatprep.subr.mxu0 0.0
        %4113 = vmatpush2.msra.mxu0 0.0
        %4114 = vmatprep.subr.mxu0 0.0
        %4115 = vmatpush2.msra.mxu0 0.0
        %4116 = vmatprep.subr.mxu0 0.0
        %4117 = vmatpush2.msra.mxu0 0.0
        %4118 = vmatprep.subr.mxu0 0.0
        %4119 = vmatpush2.msra.mxu0 0.0
        %4120 = vmatprep.subr.mxu0 0.0
        %4121 = vmatpush2.msra.mxu0 0.0
        %4122 = vmatprep.subr.mxu0 0.0
        %4123 = vmatpush2.msra.mxu0 0.0
        %4124 = vmatprep.subr.mxu0 0.0
        %4125 = vmatpush2.msra.mxu0 0.0
        %4126 = vmatprep.subr.mxu0 0.0
        %4127 = vmatpush2.msra.mxu0 0.0
        %4128 = vmatprep.subr.mxu0 0.0
        %4129 = vmatpush2.msra.mxu0 0.0
        %4130 = vmatprep.mubr.f32.mxu0 0.0
        %4131 = vmatmul.mubr.f32.gmra.mxu0 %v4040
        %v4132 = vpop.f32.mrf.mxu0
        %v4133 = vadd.f32 0.0, %v4132
        %v4134 = vpop.f32.mrf.mxu0
        %4135 = vmatprep.mubr.f32.mxu0 0.0
        %4136 = vmatmul.mubr.f32.gmra.mxu0 %v4043
        %v4137 = vpop.f32.mrf.mxu0
        %v4138 = vadd.f32 0.0, %v4137
        %v4139 = vpop.f32.mrf.mxu0
        %4140 = vmatprep.mubr.f32.mxu0 0.0
        %4141 = vmatmul.mubr.f32.gmra.mxu0 %v4046
        %v4142 = vpop.f32.mrf.mxu0
        %v4143 = vadd.f32 0.0, %v4142
        %v4144 = vpop.f32.mrf.mxu0
        %4145 = vmatprep.mubr.f32.mxu0 0.0
        %4146 = vmatmul.mubr.f32.gmra.mxu0 %v4049
        %v4147 = vpop.f32.mrf.mxu0
        %v4148 = vadd.f32 0.0, %v4147
        %v4149 = vpop.f32.mrf.mxu0
        %4150 = vmatprep.mubr.f32.mxu0 0.0
        %4151 = vmatmul.mubr.f32.gmra.mxu0 %v4052
        %v4152 = vpop.f32.mrf.mxu0
        %v4153 = vadd.f32 0.0, %v4152
        %v4154 = vpop.f32.mrf.mxu0
        %4155 = vmatprep.mubr.f32.mxu0 0.0
        %4156 = vmatmul.mubr.f32.gmra.mxu0 %v4055
        %v4157 = vpop.f32.mrf.mxu0
        %v4158 = vadd.f32 0.0, %v4157
        %v4159 = vpop.f32.mrf.mxu0
        %4160 = vmatprep.mubr.f32.mxu0 0.0
        %4161 = vmatmul.mubr.f32.gmra.mxu0 %v4058
        %v4162 = vpop.f32.mrf.mxu0
        %v4163 = vadd.f32 0.0, %v4162
        %v4164 = vpop.f32.mrf.mxu0
        %4165 = vmatprep.mubr.f32.mxu0 0.0
        %4166 = vmatmul.mubr.f32.gmra.mxu0 %v4061
        %v4167 = vpop.f32.mrf.mxu0
        %v4168 = vadd.f32 0.0, %v4167
        %v4169 = vpop.f32.mrf.mxu0
        %4170 = vdwg.mxu0
        %v4171 = vadd.f32 %v4020, %v4133
        %v4172 = vadd.f32 %v4021, %v4138
        %v4173 = vadd.f32 %v4022, %v4143
        %v4174 = vadd.f32 %v4023, %v4148
        %v4175 = vadd.f32 %v4024, %v4153
        %v4176 = vadd.f32 %v4025, %v4158
        %v4177 = vadd.f32 %v4026, %v4163
        %v4178 = vadd.f32 %v4027, %v4168
        %v4179 = vld [vmem:[%s3725 + $0x3] sm:$0xff]
        %v4180 = vld [vmem:[%s3725 + $0x13] sm:$0xff]
        %v4181 = vld [vmem:[%s3725 + $0x23] sm:$0xff]
        %v4182 = vld [vmem:[%s3725 + $0x33] sm:$0xff]
        %v4183 = vld [vmem:[%s3725 + $0x43] sm:$0xff]
        %v4184 = vld [vmem:[%s3725 + $0x53] sm:$0xff]
        %v4185 = vld [vmem:[%s3725 + $0x63] sm:$0xff]
        %v4186 = vld [vmem:[%s3725 + $0x73] sm:$0xff]
        %s4187 = scalar_lea.vmem %s3, 288
        %v4188 = vld [vmem:[%s4187] sm:$0xff]
        %v4189 = vld [vmem:[%s4187 + $0x8] sm:$0x3]
        %v4191 = vsel %vm1467, %v4179, 0
        %v4194 = vsel %vm1467, %v4180, 0
        %v4197 = vsel %vm1467, %v4181, 0
        %v4200 = vsel %vm1467, %v4182, 0
        %v4203 = vsel %vm1467, %v4183, 0
        %v4206 = vsel %vm1467, %v4184, 0
        %v4209 = vsel %vm1467, %v4185, 0
        %v4212 = vsel %vm1467, %v4186, 0
        %v4215 = vsel %vm1492, %v4189, 0
        %4217 = vmatprep.subr.mxu0 0.0
        %4218 = vmatpush1.msra.mxu0 0.0
        %4219 = vmatprep.subr.mxu0 0.0
        %4220 = vmatpush1.msra.mxu0 0.0
        %4221 = vmatprep.subr.mxu0 0.0
        %4222 = vmatpush1.msra.mxu0 0.0
        %4223 = vmatprep.subr.mxu0 0.0
        %4224 = vmatpush1.msra.mxu0 0.0
        %4225 = vmatprep.subr.mxu0 0.0
        %4226 = vmatpush1.msra.mxu0 0.0
        %4227 = vmatprep.subr.mxu0 0.0
        %4228 = vmatpush1.msra.mxu0 0.0
        %4229 = vmatprep.subr.mxu0 0.0
        %4230 = vmatpush1.msra.mxu0 0.0
        %4231 = vmatprep.subr.mxu0 0.0
        %4232 = vmatpush1.msra.mxu0 0.0
        %4233 = vmatprep.subr.mxu0 0.0
        %4234 = vmatpush1.msra.mxu0 0.0
        %4235 = vmatprep.subr.mxu0 0.0
        %4236 = vmatpush1.msra.mxu0 0.0
        %4237 = vmatprep.subr.mxu0 0.0
        %4238 = vmatpush1.msra.mxu0 0.0
        %4239 = vmatprep.subr.mxu0 0.0
        %4240 = vmatpush1.msra.mxu0 0.0
        %4241 = vmatprep.subr.mxu0 0.0
        %4242 = vmatpush1.msra.mxu0 0.0
        %4243 = vmatprep.subr.mxu0 0.0
        %4244 = vmatpush1.msra.mxu0 0.0
        %4245 = vmatprep.subr.mxu0 0.0
        %4246 = vmatpush1.msra.mxu0 %v4215
        %4247 = vmatprep.subr.mxu0 0.0
        %4248 = vmatpush1.msra.mxu0 %v4188
        %4249 = vmatprep.subr.mxu0 0.0
        %4250 = vmatpush2.msra.mxu0 0.0
        %4251 = vmatprep.subr.mxu0 0.0
        %4252 = vmatpush2.msra.mxu0 0.0
        %4253 = vmatprep.subr.mxu0 0.0
        %4254 = vmatpush2.msra.mxu0 0.0
        %4255 = vmatprep.subr.mxu0 0.0
        %4256 = vmatpush2.msra.mxu0 0.0
        %4257 = vmatprep.subr.mxu0 0.0
        %4258 = vmatpush2.msra.mxu0 0.0
        %4259 = vmatprep.subr.mxu0 0.0
        %4260 = vmatpush2.msra.mxu0 0.0
        %4261 = vmatprep.subr.mxu0 0.0
        %4262 = vmatpush2.msra.mxu0 0.0
        %4263 = vmatprep.subr.mxu0 0.0
        %4264 = vmatpush2.msra.mxu0 0.0
        %4265 = vmatprep.subr.mxu0 0.0
        %4266 = vmatpush2.msra.mxu0 0.0
        %4267 = vmatprep.subr.mxu0 0.0
        %4268 = vmatpush2.msra.mxu0 0.0
        %4269 = vmatprep.subr.mxu0 0.0
        %4270 = vmatpush2.msra.mxu0 0.0
        %4271 = vmatprep.subr.mxu0 0.0
        %4272 = vmatpush2.msra.mxu0 0.0
        %4273 = vmatprep.subr.mxu0 0.0
        %4274 = vmatpush2.msra.mxu0 0.0
        %4275 = vmatprep.subr.mxu0 0.0
        %4276 = vmatpush2.msra.mxu0 0.0
        %4277 = vmatprep.subr.mxu0 0.0
        %4278 = vmatpush2.msra.mxu0 0.0
        %4279 = vmatprep.subr.mxu0 0.0
        %4280 = vmatpush2.msra.mxu0 0.0
        %4281 = vmatprep.mubr.f32.mxu0 0.0
        %4282 = vmatmul.mubr.f32.gmra.mxu0 %v4191
        %v4283 = vpop.f32.mrf.mxu0
        %v4284 = vadd.f32 0.0, %v4283
        %v4285 = vpop.f32.mrf.mxu0
        %4286 = vmatprep.mubr.f32.mxu0 0.0
        %4287 = vmatmul.mubr.f32.gmra.mxu0 %v4194
        %v4288 = vpop.f32.mrf.mxu0
        %v4289 = vadd.f32 0.0, %v4288
        %v4290 = vpop.f32.mrf.mxu0
        %4291 = vmatprep.mubr.f32.mxu0 0.0
        %4292 = vmatmul.mubr.f32.gmra.mxu0 %v4197
        %v4293 = vpop.f32.mrf.mxu0
        %v4294 = vadd.f32 0.0, %v4293
        %v4295 = vpop.f32.mrf.mxu0
        %4296 = vmatprep.mubr.f32.mxu0 0.0
        %4297 = vmatmul.mubr.f32.gmra.mxu0 %v4200
        %v4298 = vpop.f32.mrf.mxu0
        %v4299 = vadd.f32 0.0, %v4298
        %v4300 = vpop.f32.mrf.mxu0
        %4301 = vmatprep.mubr.f32.mxu0 0.0
        %4302 = vmatmul.mubr.f32.gmra.mxu0 %v4203
        %v4303 = vpop.f32.mrf.mxu0
        %v4304 = vadd.f32 0.0, %v4303
        %v4305 = vpop.f32.mrf.mxu0
        %4306 = vmatprep.mubr.f32.mxu0 0.0
        %4307 = vmatmul.mubr.f32.gmra.mxu0 %v4206
        %v4308 = vpop.f32.mrf.mxu0
        %v4309 = vadd.f32 0.0, %v4308
        %v4310 = vpop.f32.mrf.mxu0
        %4311 = vmatprep.mubr.f32.mxu0 0.0
        %4312 = vmatmul.mubr.f32.gmra.mxu0 %v4209
        %v4313 = vpop.f32.mrf.mxu0
        %v4314 = vadd.f32 0.0, %v4313
        %v4315 = vpop.f32.mrf.mxu0
        %4316 = vmatprep.mubr.f32.mxu0 0.0
        %4317 = vmatmul.mubr.f32.gmra.mxu0 %v4212
        %v4318 = vpop.f32.mrf.mxu0
        %v4319 = vadd.f32 0.0, %v4318
        %v4320 = vpop.f32.mrf.mxu0
        %4321 = vdwg.mxu0
        %v4322 = vadd.f32 %v4171, %v4284
        %v4323 = vadd.f32 %v4172, %v4289
        %v4324 = vadd.f32 %v4173, %v4294
        %v4325 = vadd.f32 %v4174, %v4299
        %v4326 = vadd.f32 %v4175, %v4304
        %v4327 = vadd.f32 %v4176, %v4309
        %v4328 = vadd.f32 %v4177, %v4314
        %v4329 = vadd.f32 %v4178, %v4319
        %v4330 = vld [vmem:[%s3725 + $0x4] sm:$0xff]
        %v4331 = vld [vmem:[%s3725 + $0x14] sm:$0xff]
        %v4332 = vld [vmem:[%s3725 + $0x24] sm:$0xff]
        %v4333 = vld [vmem:[%s3725 + $0x34] sm:$0xff]
        %v4334 = vld [vmem:[%s3725 + $0x44] sm:$0xff]
        %v4335 = vld [vmem:[%s3725 + $0x54] sm:$0xff]
        %v4336 = vld [vmem:[%s3725 + $0x64] sm:$0xff]
        %v4337 = vld [vmem:[%s3725 + $0x74] sm:$0xff]
        %s4338 = scalar_lea.vmem %s3, 304
        %v4339 = vld [vmem:[%s4338] sm:$0xff]
        %v4340 = vld [vmem:[%s4338 + $0x8] sm:$0x3]
        %v4342 = vsel %vm1467, %v4330, 0
        %v4345 = vsel %vm1467, %v4331, 0
        %v4348 = vsel %vm1467, %v4332, 0
        %v4351 = vsel %vm1467, %v4333, 0
        %v4354 = vsel %vm1467, %v4334, 0
        %v4357 = vsel %vm1467, %v4335, 0
        %v4360 = vsel %vm1467, %v4336, 0
        %v4363 = vsel %vm1467, %v4337, 0
        %v4366 = vsel %vm1492, %v4340, 0
        %4368 = vmatprep.subr.mxu0 0.0
        %4369 = vmatpush1.msra.mxu0 0.0
        %4370 = vmatprep.subr.mxu0 0.0
        %4371 = vmatpush1.msra.mxu0 0.0
        %4372 = vmatprep.subr.mxu0 0.0
        %4373 = vmatpush1.msra.mxu0 0.0
        %4374 = vmatprep.subr.mxu0 0.0
        %4375 = vmatpush1.msra.mxu0 0.0
        %4376 = vmatprep.subr.mxu0 0.0
        %4377 = vmatpush1.msra.mxu0 0.0
        %4378 = vmatprep.subr.mxu0 0.0
        %4379 = vmatpush1.msra.mxu0 0.0
        %4380 = vmatprep.subr.mxu0 0.0
        %4381 = vmatpush1.msra.mxu0 0.0
        %4382 = vmatprep.subr.mxu0 0.0
        %4383 = vmatpush1.msra.mxu0 0.0
        %4384 = vmatprep.subr.mxu0 0.0
        %4385 = vmatpush1.msra.mxu0 0.0
        %4386 = vmatprep.subr.mxu0 0.0
        %4387 = vmatpush1.msra.mxu0 0.0
        %4388 = vmatprep.subr.mxu0 0.0
        %4389 = vmatpush1.msra.mxu0 0.0
        %4390 = vmatprep.subr.mxu0 0.0
        %4391 = vmatpush1.msra.mxu0 0.0
        %4392 = vmatprep.subr.mxu0 0.0
        %4393 = vmatpush1.msra.mxu0 0.0
        %4394 = vmatprep.subr.mxu0 0.0
        %4395 = vmatpush1.msra.mxu0 0.0
        %4396 = vmatprep.subr.mxu0 0.0
        %4397 = vmatpush1.msra.mxu0 %v4366
        %4398 = vmatprep.subr.mxu0 0.0
        %4399 = vmatpush1.msra.mxu0 %v4339
        %4400 = vmatprep.subr.mxu0 0.0
        %4401 = vmatpush2.msra.mxu0 0.0
        %4402 = vmatprep.subr.mxu0 0.0
        %4403 = vmatpush2.msra.mxu0 0.0
        %4404 = vmatprep.subr.mxu0 0.0
        %4405 = vmatpush2.msra.mxu0 0.0
        %4406 = vmatprep.subr.mxu0 0.0
        %4407 = vmatpush2.msra.mxu0 0.0
        %4408 = vmatprep.subr.mxu0 0.0
        %4409 = vmatpush2.msra.mxu0 0.0
        %4410 = vmatprep.subr.mxu0 0.0
        %4411 = vmatpush2.msra.mxu0 0.0
        %4412 = vmatprep.subr.mxu0 0.0
        %4413 = vmatpush2.msra.mxu0 0.0
        %4414 = vmatprep.subr.mxu0 0.0
        %4415 = vmatpush2.msra.mxu0 0.0
        %4416 = vmatprep.subr.mxu0 0.0
        %4417 = vmatpush2.msra.mxu0 0.0
        %4418 = vmatprep.subr.mxu0 0.0
        %4419 = vmatpush2.msra.mxu0 0.0
        %4420 = vmatprep.subr.mxu0 0.0
        %4421 = vmatpush2.msra.mxu0 0.0
        %4422 = vmatprep.subr.mxu0 0.0
        %4423 = vmatpush2.msra.mxu0 0.0
        %4424 = vmatprep.subr.mxu0 0.0
        %4425 = vmatpush2.msra.mxu0 0.0
        %4426 = vmatprep.subr.mxu0 0.0
        %4427 = vmatpush2.msra.mxu0 0.0
        %4428 = vmatprep.subr.mxu0 0.0
        %4429 = vmatpush2.msra.mxu0 0.0
        %4430 = vmatprep.subr.mxu0 0.0
        %4431 = vmatpush2.msra.mxu0 0.0
        %4432 = vmatprep.mubr.f32.mxu0 0.0
        %4433 = vmatmul.mubr.f32.gmra.mxu0 %v4342
        %v4434 = vpop.f32.mrf.mxu0
        %v4435 = vadd.f32 0.0, %v4434
        %v4436 = vpop.f32.mrf.mxu0
        %4437 = vmatprep.mubr.f32.mxu0 0.0
        %4438 = vmatmul.mubr.f32.gmra.mxu0 %v4345
        %v4439 = vpop.f32.mrf.mxu0
        %v4440 = vadd.f32 0.0, %v4439
        %v4441 = vpop.f32.mrf.mxu0
        %4442 = vmatprep.mubr.f32.mxu0 0.0
        %4443 = vmatmul.mubr.f32.gmra.mxu0 %v4348
        %v4444 = vpop.f32.mrf.mxu0
        %v4445 = vadd.f32 0.0, %v4444
        %v4446 = vpop.f32.mrf.mxu0
        %4447 = vmatprep.mubr.f32.mxu0 0.0
        %4448 = vmatmul.mubr.f32.gmra.mxu0 %v4351
        %v4449 = vpop.f32.mrf.mxu0
        %v4450 = vadd.f32 0.0, %v4449
        %v4451 = vpop.f32.mrf.mxu0
        %4452 = vmatprep.mubr.f32.mxu0 0.0
        %4453 = vmatmul.mubr.f32.gmra.mxu0 %v4354
        %v4454 = vpop.f32.mrf.mxu0
        %v4455 = vadd.f32 0.0, %v4454
        %v4456 = vpop.f32.mrf.mxu0
        %4457 = vmatprep.mubr.f32.mxu0 0.0
        %4458 = vmatmul.mubr.f32.gmra.mxu0 %v4357
        %v4459 = vpop.f32.mrf.mxu0
        %v4460 = vadd.f32 0.0, %v4459
        %v4461 = vpop.f32.mrf.mxu0
        %4462 = vmatprep.mubr.f32.mxu0 0.0
        %4463 = vmatmul.mubr.f32.gmra.mxu0 %v4360
        %v4464 = vpop.f32.mrf.mxu0
        %v4465 = vadd.f32 0.0, %v4464
        %v4466 = vpop.f32.mrf.mxu0
        %4467 = vmatprep.mubr.f32.mxu0 0.0
        %4468 = vmatmul.mubr.f32.gmra.mxu0 %v4363
        %v4469 = vpop.f32.mrf.mxu0
        %v4470 = vadd.f32 0.0, %v4469
        %v4471 = vpop.f32.mrf.mxu0
        %4472 = vdwg.mxu0
        %v4473 = vadd.f32 %v4322, %v4435
        %v4474 = vadd.f32 %v4323, %v4440
        %v4475 = vadd.f32 %v4324, %v4445
        %v4476 = vadd.f32 %v4325, %v4450
        %v4477 = vadd.f32 %v4326, %v4455
        %v4478 = vadd.f32 %v4327, %v4460
        %v4479 = vadd.f32 %v4328, %v4465
        %v4480 = vadd.f32 %v4329, %v4470
        %v4481 = vld [vmem:[%s958] sm:$0xff]
        %v4482 = vld [vmem:[%s958 + $0x10] sm:$0xff]
        %v4483 = vld [vmem:[%s958 + $0x20] sm:$0xff]
        %v4484 = vld [vmem:[%s958 + $0x30] sm:$0xff]
        %v4485 = vld [vmem:[%s958 + $0x40] sm:$0xff]
        %v4486 = vld [vmem:[%s958 + $0x50] sm:$0xff]
        %v4487 = vld [vmem:[%s958 + $0x60] sm:$0xff]
        %v4488 = vld [vmem:[%s958 + $0x70] sm:$0xff]
        %s4489 = scalar_lea.vmem %s3, 320
        %v4490 = vld [vmem:[%s4489] sm:$0xff]
        %v4491 = vld [vmem:[%s4489 + $0x8] sm:$0x3]
        %v4493 = vsel %vm1467, %v4481, 0
        %v4496 = vsel %vm1467, %v4482, 0
        %v4499 = vsel %vm1467, %v4483, 0
        %v4502 = vsel %vm1467, %v4484, 0
        %v4505 = vsel %vm1467, %v4485, 0
        %v4508 = vsel %vm1467, %v4486, 0
        %v4511 = vsel %vm1467, %v4487, 0
        %v4514 = vsel %vm1467, %v4488, 0
        %v4517 = vsel %vm1492, %v4491, 0
        %4519 = vmatprep.subr.mxu0 0.0
        %4520 = vmatpush1.msra.mxu0 0.0
        %4521 = vmatprep.subr.mxu0 0.0
        %4522 = vmatpush1.msra.mxu0 0.0
        %4523 = vmatprep.subr.mxu0 0.0
        %4524 = vmatpush1.msra.mxu0 0.0
        %4525 = vmatprep.subr.mxu0 0.0
        %4526 = vmatpush1.msra.mxu0 0.0
        %4527 = vmatprep.subr.mxu0 0.0
        %4528 = vmatpush1.msra.mxu0 0.0
        %4529 = vmatprep.subr.mxu0 0.0
        %4530 = vmatpush1.msra.mxu0 0.0
        %4531 = vmatprep.subr.mxu0 0.0
        %4532 = vmatpush1.msra.mxu0 0.0
        %4533 = vmatprep.subr.mxu0 0.0
        %4534 = vmatpush1.msra.mxu0 0.0
        %4535 = vmatprep.subr.mxu0 0.0
        %4536 = vmatpush1.msra.mxu0 0.0
        %4537 = vmatprep.subr.mxu0 0.0
        %4538 = vmatpush1.msra.mxu0 0.0
        %4539 = vmatprep.subr.mxu0 0.0
        %4540 = vmatpush1.msra.mxu0 0.0
        %4541 = vmatprep.subr.mxu0 0.0
        %4542 = vmatpush1.msra.mxu0 0.0
        %4543 = vmatprep.subr.mxu0 0.0
        %4544 = vmatpush1.msra.mxu0 0.0
        %4545 = vmatprep.subr.mxu0 0.0
        %4546 = vmatpush1.msra.mxu0 0.0
        %4547 = vmatprep.subr.mxu0 0.0
        %4548 = vmatpush1.msra.mxu0 %v4517
        %4549 = vmatprep.subr.mxu0 0.0
        %4550 = vmatpush1.msra.mxu0 %v4490
        %4551 = vmatprep.subr.mxu0 0.0
        %4552 = vmatpush2.msra.mxu0 0.0
        %4553 = vmatprep.subr.mxu0 0.0
        %4554 = vmatpush2.msra.mxu0 0.0
        %4555 = vmatprep.subr.mxu0 0.0
        %4556 = vmatpush2.msra.mxu0 0.0
        %4557 = vmatprep.subr.mxu0 0.0
        %4558 = vmatpush2.msra.mxu0 0.0
        %4559 = vmatprep.subr.mxu0 0.0
        %4560 = vmatpush2.msra.mxu0 0.0
        %4561 = vmatprep.subr.mxu0 0.0
        %4562 = vmatpush2.msra.mxu0 0.0
        %4563 = vmatprep.subr.mxu0 0.0
        %4564 = vmatpush2.msra.mxu0 0.0
        %4565 = vmatprep.subr.mxu0 0.0
        %4566 = vmatpush2.msra.mxu0 0.0
        %4567 = vmatprep.subr.mxu0 0.0
        %4568 = vmatpush2.msra.mxu0 0.0
        %4569 = vmatprep.subr.mxu0 0.0
        %4570 = vmatpush2.msra.mxu0 0.0
        %4571 = vmatprep.subr.mxu0 0.0
        %4572 = vmatpush2.msra.mxu0 0.0
        %4573 = vmatprep.subr.mxu0 0.0
        %4574 = vmatpush2.msra.mxu0 0.0
        %4575 = vmatprep.subr.mxu0 0.0
        %4576 = vmatpush2.msra.mxu0 0.0
        %4577 = vmatprep.subr.mxu0 0.0
        %4578 = vmatpush2.msra.mxu0 0.0
        %4579 = vmatprep.subr.mxu0 0.0
        %4580 = vmatpush2.msra.mxu0 0.0
        %4581 = vmatprep.subr.mxu0 0.0
        %4582 = vmatpush2.msra.mxu0 0.0
        %4583 = vmatprep.mubr.f32.mxu0 0.0
        %4584 = vmatmul.mubr.f32.gmra.mxu0 %v4493
        %v4585 = vpop.f32.mrf.mxu0
        %v4586 = vadd.f32 0.0, %v4585
        %v4587 = vpop.f32.mrf.mxu0
        %4588 = vmatprep.mubr.f32.mxu0 0.0
        %4589 = vmatmul.mubr.f32.gmra.mxu0 %v4496
        %v4590 = vpop.f32.mrf.mxu0
        %v4591 = vadd.f32 0.0, %v4590
        %v4592 = vpop.f32.mrf.mxu0
        %4593 = vmatprep.mubr.f32.mxu0 0.0
        %4594 = vmatmul.mubr.f32.gmra.mxu0 %v4499
        %v4595 = vpop.f32.mrf.mxu0
        %v4596 = vadd.f32 0.0, %v4595
        %v4597 = vpop.f32.mrf.mxu0
        %4598 = vmatprep.mubr.f32.mxu0 0.0
        %4599 = vmatmul.mubr.f32.gmra.mxu0 %v4502
        %v4600 = vpop.f32.mrf.mxu0
        %v4601 = vadd.f32 0.0, %v4600
        %v4602 = vpop.f32.mrf.mxu0
        %4603 = vmatprep.mubr.f32.mxu0 0.0
        %4604 = vmatmul.mubr.f32.gmra.mxu0 %v4505
        %v4605 = vpop.f32.mrf.mxu0
        %v4606 = vadd.f32 0.0, %v4605
        %v4607 = vpop.f32.mrf.mxu0
        %4608 = vmatprep.mubr.f32.mxu0 0.0
        %4609 = vmatmul.mubr.f32.gmra.mxu0 %v4508
        %v4610 = vpop.f32.mrf.mxu0
        %v4611 = vadd.f32 0.0, %v4610
        %v4612 = vpop.f32.mrf.mxu0
        %4613 = vmatprep.mubr.f32.mxu0 0.0
        %4614 = vmatmul.mubr.f32.gmra.mxu0 %v4511
        %v4615 = vpop.f32.mrf.mxu0
        %v4616 = vadd.f32 0.0, %v4615
        %v4617 = vpop.f32.mrf.mxu0
        %4618 = vmatprep.mubr.f32.mxu0 0.0
        %4619 = vmatmul.mubr.f32.gmra.mxu0 %v4514
        %v4620 = vpop.f32.mrf.mxu0
        %v4621 = vadd.f32 0.0, %v4620
        %v4622 = vpop.f32.mrf.mxu0
        %4623 = vdwg.mxu0
        %v4624 = vadd.f32 %v4473, %v4586
        %v4625 = vadd.f32 %v4474, %v4591
        %v4626 = vadd.f32 %v4475, %v4596
        %v4627 = vadd.f32 %v4476, %v4601
        %v4628 = vadd.f32 %v4477, %v4606
        %v4629 = vadd.f32 %v4478, %v4611
        %v4630 = vadd.f32 %v4479, %v4616
        %v4631 = vadd.f32 %v4480, %v4621
        %v4632 = vld [vmem:[%s958 + $0x1] sm:$0xff]
        %v4633 = vld [vmem:[%s958 + $0x11] sm:$0xff]
        %v4634 = vld [vmem:[%s958 + $0x21] sm:$0xff]
        %v4635 = vld [vmem:[%s958 + $0x31] sm:$0xff]
        %v4636 = vld [vmem:[%s958 + $0x41] sm:$0xff]
        %v4637 = vld [vmem:[%s958 + $0x51] sm:$0xff]
        %v4638 = vld [vmem:[%s958 + $0x61] sm:$0xff]
        %v4639 = vld [vmem:[%s958 + $0x71] sm:$0xff]
        %s4640 = scalar_lea.vmem %s3, 336
        %v4641 = vld [vmem:[%s4640] sm:$0xff]
        %v4642 = vld [vmem:[%s4640 + $0x8] sm:$0x3]
        %v4644 = vsel %vm1467, %v4632, 0
        %v4647 = vsel %vm1467, %v4633, 0
        %v4650 = vsel %vm1467, %v4634, 0
        %v4653 = vsel %vm1467, %v4635, 0
        %v4656 = vsel %vm1467, %v4636, 0
        %v4659 = vsel %vm1467, %v4637, 0
        %v4662 = vsel %vm1467, %v4638, 0
        %v4665 = vsel %vm1467, %v4639, 0
        %v4668 = vsel %vm1492, %v4642, 0
        %4670 = vmatprep.subr.mxu0 0.0
        %4671 = vmatpush1.msra.mxu0 0.0
        %4672 = vmatprep.subr.mxu0 0.0
        %4673 = vmatpush1.msra.mxu0 0.0
        %4674 = vmatprep.subr.mxu0 0.0
        %4675 = vmatpush1.msra.mxu0 0.0
        %4676 = vmatprep.subr.mxu0 0.0
        %4677 = vmatpush1.msra.mxu0 0.0
        %4678 = vmatprep.subr.mxu0 0.0
        %4679 = vmatpush1.msra.mxu0 0.0
        %4680 = vmatprep.subr.mxu0 0.0
        %4681 = vmatpush1.msra.mxu0 0.0
        %4682 = vmatprep.subr.mxu0 0.0
        %4683 = vmatpush1.msra.mxu0 0.0
        %4684 = vmatprep.subr.mxu0 0.0
        %4685 = vmatpush1.msra.mxu0 0.0
        %4686 = vmatprep.subr.mxu0 0.0
        %4687 = vmatpush1.msra.mxu0 0.0
        %4688 = vmatprep.subr.mxu0 0.0
        %4689 = vmatpush1.msra.mxu0 0.0
        %4690 = vmatprep.subr.mxu0 0.0
        %4691 = vmatpush1.msra.mxu0 0.0
        %4692 = vmatprep.subr.mxu0 0.0
        %4693 = vmatpush1.msra.mxu0 0.0
        %4694 = vmatprep.subr.mxu0 0.0
        %4695 = vmatpush1.msra.mxu0 0.0
        %4696 = vmatprep.subr.mxu0 0.0
        %4697 = vmatpush1.msra.mxu0 0.0
        %4698 = vmatprep.subr.mxu0 0.0
        %4699 = vmatpush1.msra.mxu0 %v4668
        %4700 = vmatprep.subr.mxu0 0.0
        %4701 = vmatpush1.msra.mxu0 %v4641
        %4702 = vmatprep.subr.mxu0 0.0
        %4703 = vmatpush2.msra.mxu0 0.0
        %4704 = vmatprep.subr.mxu0 0.0
        %4705 = vmatpush2.msra.mxu0 0.0
        %4706 = vmatprep.subr.mxu0 0.0
        %4707 = vmatpush2.msra.mxu0 0.0
        %4708 = vmatprep.subr.mxu0 0.0
        %4709 = vmatpush2.msra.mxu0 0.0
        %4710 = vmatprep.subr.mxu0 0.0
        %4711 = vmatpush2.msra.mxu0 0.0
        %4712 = vmatprep.subr.mxu0 0.0
        %4713 = vmatpush2.msra.mxu0 0.0
        %4714 = vmatprep.subr.mxu0 0.0
        %4715 = vmatpush2.msra.mxu0 0.0
        %4716 = vmatprep.subr.mxu0 0.0
        %4717 = vmatpush2.msra.mxu0 0.0
        %4718 = vmatprep.subr.mxu0 0.0
        %4719 = vmatpush2.msra.mxu0 0.0
        %4720 = vmatprep.subr.mxu0 0.0
        %4721 = vmatpush2.msra.mxu0 0.0
        %4722 = vmatprep.subr.mxu0 0.0
        %4723 = vmatpush2.msra.mxu0 0.0
        %4724 = vmatprep.subr.mxu0 0.0
        %4725 = vmatpush2.msra.mxu0 0.0
        %4726 = vmatprep.subr.mxu0 0.0
        %4727 = vmatpush2.msra.mxu0 0.0
        %4728 = vmatprep.subr.mxu0 0.0
        %4729 = vmatpush2.msra.mxu0 0.0
        %4730 = vmatprep.subr.mxu0 0.0
        %4731 = vmatpush2.msra.mxu0 0.0
        %4732 = vmatprep.subr.mxu0 0.0
        %4733 = vmatpush2.msra.mxu0 0.0
        %4734 = vmatprep.mubr.f32.mxu0 0.0
        %4735 = vmatmul.mubr.f32.gmra.mxu0 %v4644
        %v4736 = vpop.f32.mrf.mxu0
        %v4737 = vadd.f32 0.0, %v4736
        %v4738 = vpop.f32.mrf.mxu0
        %4739 = vmatprep.mubr.f32.mxu0 0.0
        %4740 = vmatmul.mubr.f32.gmra.mxu0 %v4647
        %v4741 = vpop.f32.mrf.mxu0
        %v4742 = vadd.f32 0.0, %v4741
        %v4743 = vpop.f32.mrf.mxu0
        %4744 = vmatprep.mubr.f32.mxu0 0.0
        %4745 = vmatmul.mubr.f32.gmra.mxu0 %v4650
        %v4746 = vpop.f32.mrf.mxu0
        %v4747 = vadd.f32 0.0, %v4746
        %v4748 = vpop.f32.mrf.mxu0
        %4749 = vmatprep.mubr.f32.mxu0 0.0
        %4750 = vmatmul.mubr.f32.gmra.mxu0 %v4653
        %v4751 = vpop.f32.mrf.mxu0
        %v4752 = vadd.f32 0.0, %v4751
        %v4753 = vpop.f32.mrf.mxu0
        %4754 = vmatprep.mubr.f32.mxu0 0.0
        %4755 = vmatmul.mubr.f32.gmra.mxu0 %v4656
        %v4756 = vpop.f32.mrf.mxu0
        %v4757 = vadd.f32 0.0, %v4756
        %v4758 = vpop.f32.mrf.mxu0
        %4759 = vmatprep.mubr.f32.mxu0 0.0
        %4760 = vmatmul.mubr.f32.gmra.mxu0 %v4659
        %v4761 = vpop.f32.mrf.mxu0
        %v4762 = vadd.f32 0.0, %v4761
        %v4763 = vpop.f32.mrf.mxu0
        %4764 = vmatprep.mubr.f32.mxu0 0.0
        %4765 = vmatmul.mubr.f32.gmra.mxu0 %v4662
        %v4766 = vpop.f32.mrf.mxu0
        %v4767 = vadd.f32 0.0, %v4766
        %v4768 = vpop.f32.mrf.mxu0
        %4769 = vmatprep.mubr.f32.mxu0 0.0
        %4770 = vmatmul.mubr.f32.gmra.mxu0 %v4665
        %v4771 = vpop.f32.mrf.mxu0
        %v4772 = vadd.f32 0.0, %v4771
        %v4773 = vpop.f32.mrf.mxu0
        %4774 = vdwg.mxu0
        %v4775 = vadd.f32 %v4624, %v4737
        %v4776 = vadd.f32 %v4625, %v4742
        %v4777 = vadd.f32 %v4626, %v4747
        %v4778 = vadd.f32 %v4627, %v4752
        %v4779 = vadd.f32 %v4628, %v4757
        %v4780 = vadd.f32 %v4629, %v4762
        %v4781 = vadd.f32 %v4630, %v4767
        %v4782 = vadd.f32 %v4631, %v4772
        %v4783 = vld [vmem:[%s958 + $0x2] sm:$0xff]
        %v4784 = vld [vmem:[%s958 + $0x12] sm:$0xff]
        %v4785 = vld [vmem:[%s958 + $0x22] sm:$0xff]
        %v4786 = vld [vmem:[%s958 + $0x32] sm:$0xff]
        %v4787 = vld [vmem:[%s958 + $0x42] sm:$0xff]
        %v4788 = vld [vmem:[%s958 + $0x52] sm:$0xff]
        %v4789 = vld [vmem:[%s958 + $0x62] sm:$0xff]
        %v4790 = vld [vmem:[%s958 + $0x72] sm:$0xff]
        %s4791 = scalar_lea.vmem %s3, 352
        %v4792 = vld [vmem:[%s4791] sm:$0xff]
        %v4793 = vld [vmem:[%s4791 + $0x8] sm:$0x3]
        %v4795 = vsel %vm1467, %v4783, 0
        %v4798 = vsel %vm1467, %v4784, 0
        %v4801 = vsel %vm1467, %v4785, 0
        %v4804 = vsel %vm1467, %v4786, 0
        %v4807 = vsel %vm1467, %v4787, 0
        %v4810 = vsel %vm1467, %v4788, 0
        %v4813 = vsel %vm1467, %v4789, 0
        %v4816 = vsel %vm1467, %v4790, 0
        %v4819 = vsel %vm1492, %v4793, 0
        %4821 = vmatprep.subr.mxu0 0.0
        %4822 = vmatpush1.msra.mxu0 0.0
        %4823 = vmatprep.subr.mxu0 0.0
        %4824 = vmatpush1.msra.mxu0 0.0
        %4825 = vmatprep.subr.mxu0 0.0
        %4826 = vmatpush1.msra.mxu0 0.0
        %4827 = vmatprep.subr.mxu0 0.0
        %4828 = vmatpush1.msra.mxu0 0.0
        %4829 = vmatprep.subr.mxu0 0.0
        %4830 = vmatpush1.msra.mxu0 0.0
        %4831 = vmatprep.subr.mxu0 0.0
        %4832 = vmatpush1.msra.mxu0 0.0
        %4833 = vmatprep.subr.mxu0 0.0
        %4834 = vmatpush1.msra.mxu0 0.0
        %4835 = vmatprep.subr.mxu0 0.0
        %4836 = vmatpush1.msra.mxu0 0.0
        %4837 = vmatprep.subr.mxu0 0.0
        %4838 = vmatpush1.msra.mxu0 0.0
        %4839 = vmatprep.subr.mxu0 0.0
        %4840 = vmatpush1.msra.mxu0 0.0
        %4841 = vmatprep.subr.mxu0 0.0
        %4842 = vmatpush1.msra.mxu0 0.0
        %4843 = vmatprep.subr.mxu0 0.0
        %4844 = vmatpush1.msra.mxu0 0.0
        %4845 = vmatprep.subr.mxu0 0.0
        %4846 = vmatpush1.msra.mxu0 0.0
        %4847 = vmatprep.subr.mxu0 0.0
        %4848 = vmatpush1.msra.mxu0 0.0
        %4849 = vmatprep.subr.mxu0 0.0
        %4850 = vmatpush1.msra.mxu0 %v4819
        %4851 = vmatprep.subr.mxu0 0.0
        %4852 = vmatpush1.msra.mxu0 %v4792
        %4853 = vmatprep.subr.mxu0 0.0
        %4854 = vmatpush2.msra.mxu0 0.0
        %4855 = vmatprep.subr.mxu0 0.0
        %4856 = vmatpush2.msra.mxu0 0.0
        %4857 = vmatprep.subr.mxu0 0.0
        %4858 = vmatpush2.msra.mxu0 0.0
        %4859 = vmatprep.subr.mxu0 0.0
        %4860 = vmatpush2.msra.mxu0 0.0
        %4861 = vmatprep.subr.mxu0 0.0
        %4862 = vmatpush2.msra.mxu0 0.0
        %4863 = vmatprep.subr.mxu0 0.0
        %4864 = vmatpush2.msra.mxu0 0.0
        %4865 = vmatprep.subr.mxu0 0.0
        %4866 = vmatpush2.msra.mxu0 0.0
        %4867 = vmatprep.subr.mxu0 0.0
        %4868 = vmatpush2.msra.mxu0 0.0
        %4869 = vmatprep.subr.mxu0 0.0
        %4870 = vmatpush2.msra.mxu0 0.0
        %4871 = vmatprep.subr.mxu0 0.0
        %4872 = vmatpush2.msra.mxu0 0.0
        %4873 = vmatprep.subr.mxu0 0.0
        %4874 = vmatpush2.msra.mxu0 0.0
        %4875 = vmatprep.subr.mxu0 0.0
        %4876 = vmatpush2.msra.mxu0 0.0
        %4877 = vmatprep.subr.mxu0 0.0
        %4878 = vmatpush2.msra.mxu0 0.0
        %4879 = vmatprep.subr.mxu0 0.0
        %4880 = vmatpush2.msra.mxu0 0.0
        %4881 = vmatprep.subr.mxu0 0.0
        %4882 = vmatpush2.msra.mxu0 0.0
        %4883 = vmatprep.subr.mxu0 0.0
        %4884 = vmatpush2.msra.mxu0 0.0
        %4885 = vmatprep.mubr.f32.mxu0 0.0
        %4886 = vmatmul.mubr.f32.gmra.mxu0 %v4795
        %v4887 = vpop.f32.mrf.mxu0
        %v4888 = vadd.f32 0.0, %v4887
        %v4889 = vpop.f32.mrf.mxu0
        %4890 = vmatprep.mubr.f32.mxu0 0.0
        %4891 = vmatmul.mubr.f32.gmra.mxu0 %v4798
        %v4892 = vpop.f32.mrf.mxu0
        %v4893 = vadd.f32 0.0, %v4892
        %v4894 = vpop.f32.mrf.mxu0
        %4895 = vmatprep.mubr.f32.mxu0 0.0
        %4896 = vmatmul.mubr.f32.gmra.mxu0 %v4801
        %v4897 = vpop.f32.mrf.mxu0
        %v4898 = vadd.f32 0.0, %v4897
        %v4899 = vpop.f32.mrf.mxu0
        %4900 = vmatprep.mubr.f32.mxu0 0.0
        %4901 = vmatmul.mubr.f32.gmra.mxu0 %v4804
        %v4902 = vpop.f32.mrf.mxu0
        %v4903 = vadd.f32 0.0, %v4902
        %v4904 = vpop.f32.mrf.mxu0
        %4905 = vmatprep.mubr.f32.mxu0 0.0
        %4906 = vmatmul.mubr.f32.gmra.mxu0 %v4807
        %v4907 = vpop.f32.mrf.mxu0
        %v4908 = vadd.f32 0.0, %v4907
        %v4909 = vpop.f32.mrf.mxu0
        %4910 = vmatprep.mubr.f32.mxu0 0.0
        %4911 = vmatmul.mubr.f32.gmra.mxu0 %v4810
        %v4912 = vpop.f32.mrf.mxu0
        %v4913 = vadd.f32 0.0, %v4912
        %v4914 = vpop.f32.mrf.mxu0
        %4915 = vmatprep.mubr.f32.mxu0 0.0
        %4916 = vmatmul.mubr.f32.gmra.mxu0 %v4813
        %v4917 = vpop.f32.mrf.mxu0
        %v4918 = vadd.f32 0.0, %v4917
        %v4919 = vpop.f32.mrf.mxu0
        %4920 = vmatprep.mubr.f32.mxu0 0.0
        %4921 = vmatmul.mubr.f32.gmra.mxu0 %v4816
        %v4922 = vpop.f32.mrf.mxu0
        %v4923 = vadd.f32 0.0, %v4922
        %v4924 = vpop.f32.mrf.mxu0
        %4925 = vdwg.mxu0
        %v4926 = vadd.f32 %v4775, %v4888
        %v4927 = vadd.f32 %v4776, %v4893
        %v4928 = vadd.f32 %v4777, %v4898
        %v4929 = vadd.f32 %v4778, %v4903
        %v4930 = vadd.f32 %v4779, %v4908
        %v4931 = vadd.f32 %v4780, %v4913
        %v4932 = vadd.f32 %v4781, %v4918
        %v4933 = vadd.f32 %v4782, %v4923
        %v4934 = vld [vmem:[%s958 + $0x3] sm:$0xff]
        %v4935 = vld [vmem:[%s958 + $0x13] sm:$0xff]
        %v4936 = vld [vmem:[%s958 + $0x23] sm:$0xff]
        %v4937 = vld [vmem:[%s958 + $0x33] sm:$0xff]
        %v4938 = vld [vmem:[%s958 + $0x43] sm:$0xff]
        %v4939 = vld [vmem:[%s958 + $0x53] sm:$0xff]
        %v4940 = vld [vmem:[%s958 + $0x63] sm:$0xff]
        %v4941 = vld [vmem:[%s958 + $0x73] sm:$0xff]
        %s4942 = scalar_lea.vmem %s3, 368
        %v4943 = vld [vmem:[%s4942] sm:$0xff]
        %v4944 = vld [vmem:[%s4942 + $0x8] sm:$0x3]
        %v4946 = vsel %vm1467, %v4934, 0
        %v4949 = vsel %vm1467, %v4935, 0
        %v4952 = vsel %vm1467, %v4936, 0
        %v4955 = vsel %vm1467, %v4937, 0
        %v4958 = vsel %vm1467, %v4938, 0
        %v4961 = vsel %vm1467, %v4939, 0
        %v4964 = vsel %vm1467, %v4940, 0
        %v4967 = vsel %vm1467, %v4941, 0
        %v4970 = vsel %vm1492, %v4944, 0
        %4972 = vmatprep.subr.mxu0 0.0
        %4973 = vmatpush1.msra.mxu0 0.0
        %4974 = vmatprep.subr.mxu0 0.0
        %4975 = vmatpush1.msra.mxu0 0.0
        %4976 = vmatprep.subr.mxu0 0.0
        %4977 = vmatpush1.msra.mxu0 0.0
        %4978 = vmatprep.subr.mxu0 0.0
        %4979 = vmatpush1.msra.mxu0 0.0
        %4980 = vmatprep.subr.mxu0 0.0
        %4981 = vmatpush1.msra.mxu0 0.0
        %4982 = vmatprep.subr.mxu0 0.0
        %4983 = vmatpush1.msra.mxu0 0.0
        %4984 = vmatprep.subr.mxu0 0.0
        %4985 = vmatpush1.msra.mxu0 0.0
        %4986 = vmatprep.subr.mxu0 0.0
        %4987 = vmatpush1.msra.mxu0 0.0
        %4988 = vmatprep.subr.mxu0 0.0
        %4989 = vmatpush1.msra.mxu0 0.0
        %4990 = vmatprep.subr.mxu0 0.0
        %4991 = vmatpush1.msra.mxu0 0.0
        %4992 = vmatprep.subr.mxu0 0.0
        %4993 = vmatpush1.msra.mxu0 0.0
        %4994 = vmatprep.subr.mxu0 0.0
        %4995 = vmatpush1.msra.mxu0 0.0
        %4996 = vmatprep.subr.mxu0 0.0
        %4997 = vmatpush1.msra.mxu0 0.0
        %4998 = vmatprep.subr.mxu0 0.0
        %4999 = vmatpush1.msra.mxu0 0.0
        %5000 = vmatprep.subr.mxu0 0.0
        %5001 = vmatpush1.msra.mxu0 %v4970
        %5002 = vmatprep.subr.mxu0 0.0
        %5003 = vmatpush1.msra.mxu0 %v4943
        %5004 = vmatprep.subr.mxu0 0.0
        %5005 = vmatpush2.msra.mxu0 0.0
        %5006 = vmatprep.subr.mxu0 0.0
        %5007 = vmatpush2.msra.mxu0 0.0
        %5008 = vmatprep.subr.mxu0 0.0
        %5009 = vmatpush2.msra.mxu0 0.0
        %5010 = vmatprep.subr.mxu0 0.0
        %5011 = vmatpush2.msra.mxu0 0.0
        %5012 = vmatprep.subr.mxu0 0.0
        %5013 = vmatpush2.msra.mxu0 0.0
        %5014 = vmatprep.subr.mxu0 0.0
        %5015 = vmatpush2.msra.mxu0 0.0
        %5016 = vmatprep.subr.mxu0 0.0
        %5017 = vmatpush2.msra.mxu0 0.0
        %5018 = vmatprep.subr.mxu0 0.0
        %5019 = vmatpush2.msra.mxu0 0.0
        %5020 = vmatprep.subr.mxu0 0.0
        %5021 = vmatpush2.msra.mxu0 0.0
        %5022 = vmatprep.subr.mxu0 0.0
        %5023 = vmatpush2.msra.mxu0 0.0
        %5024 = vmatprep.subr.mxu0 0.0
        %5025 = vmatpush2.msra.mxu0 0.0
        %5026 = vmatprep.subr.mxu0 0.0
        %5027 = vmatpush2.msra.mxu0 0.0
        %5028 = vmatprep.subr.mxu0 0.0
        %5029 = vmatpush2.msra.mxu0 0.0
        %5030 = vmatprep.subr.mxu0 0.0
        %5031 = vmatpush2.msra.mxu0 0.0
        %5032 = vmatprep.subr.mxu0 0.0
        %5033 = vmatpush2.msra.mxu0 0.0
        %5034 = vmatprep.subr.mxu0 0.0
        %5035 = vmatpush2.msra.mxu0 0.0
        %5036 = vmatprep.mubr.f32.mxu0 0.0
        %5037 = vmatmul.mubr.f32.gmra.mxu0 %v4946
        %v5038 = vpop.f32.mrf.mxu0
        %v5039 = vadd.f32 0.0, %v5038
        %v5040 = vpop.f32.mrf.mxu0
        %5041 = vmatprep.mubr.f32.mxu0 0.0
        %5042 = vmatmul.mubr.f32.gmra.mxu0 %v4949
        %v5043 = vpop.f32.mrf.mxu0
        %v5044 = vadd.f32 0.0, %v5043
        %v5045 = vpop.f32.mrf.mxu0
        %5046 = vmatprep.mubr.f32.mxu0 0.0
        %5047 = vmatmul.mubr.f32.gmra.mxu0 %v4952
        %v5048 = vpop.f32.mrf.mxu0
        %v5049 = vadd.f32 0.0, %v5048
        %v5050 = vpop.f32.mrf.mxu0
        %5051 = vmatprep.mubr.f32.mxu0 0.0
        %5052 = vmatmul.mubr.f32.gmra.mxu0 %v4955
        %v5053 = vpop.f32.mrf.mxu0
        %v5054 = vadd.f32 0.0, %v5053
        %v5055 = vpop.f32.mrf.mxu0
        %5056 = vmatprep.mubr.f32.mxu0 0.0
        %5057 = vmatmul.mubr.f32.gmra.mxu0 %v4958
        %v5058 = vpop.f32.mrf.mxu0
        %v5059 = vadd.f32 0.0, %v5058
        %v5060 = vpop.f32.mrf.mxu0
        %5061 = vmatprep.mubr.f32.mxu0 0.0
        %5062 = vmatmul.mubr.f32.gmra.mxu0 %v4961
        %v5063 = vpop.f32.mrf.mxu0
        %v5064 = vadd.f32 0.0, %v5063
        %v5065 = vpop.f32.mrf.mxu0
        %5066 = vmatprep.mubr.f32.mxu0 0.0
        %5067 = vmatmul.mubr.f32.gmra.mxu0 %v4964
        %v5068 = vpop.f32.mrf.mxu0
        %v5069 = vadd.f32 0.0, %v5068
        %v5070 = vpop.f32.mrf.mxu0
        %5071 = vmatprep.mubr.f32.mxu0 0.0
        %5072 = vmatmul.mubr.f32.gmra.mxu0 %v4967
        %v5073 = vpop.f32.mrf.mxu0
        %v5074 = vadd.f32 0.0, %v5073
        %v5075 = vpop.f32.mrf.mxu0
        %5076 = vdwg.mxu0
        %v5077 = vadd.f32 %v4926, %v5039
        %v5078 = vadd.f32 %v4927, %v5044
        %v5079 = vadd.f32 %v4928, %v5049
        %v5080 = vadd.f32 %v4929, %v5054
        %v5081 = vadd.f32 %v4930, %v5059
        %v5082 = vadd.f32 %v4931, %v5064
        %v5083 = vadd.f32 %v4932, %v5069
        %v5084 = vadd.f32 %v4933, %v5074
        %v5085 = vld [vmem:[%s958 + $0x4] sm:$0xff]
        %v5086 = vld [vmem:[%s958 + $0x14] sm:$0xff]
        %v5087 = vld [vmem:[%s958 + $0x24] sm:$0xff]
        %v5088 = vld [vmem:[%s958 + $0x34] sm:$0xff]
        %v5089 = vld [vmem:[%s958 + $0x44] sm:$0xff]
        %v5090 = vld [vmem:[%s958 + $0x54] sm:$0xff]
        %v5091 = vld [vmem:[%s958 + $0x64] sm:$0xff]
        %v5092 = vld [vmem:[%s958 + $0x74] sm:$0xff]
        %s5093 = scalar_lea.vmem %s3, 384
        %v5094 = vld [vmem:[%s5093] sm:$0xff]
        %v5095 = vld [vmem:[%s5093 + $0x8] sm:$0x3]
        %v5097 = vsel %vm1467, %v5085, 0
        %v5100 = vsel %vm1467, %v5086, 0
        %v5103 = vsel %vm1467, %v5087, 0
        %v5106 = vsel %vm1467, %v5088, 0
        %v5109 = vsel %vm1467, %v5089, 0
        %v5112 = vsel %vm1467, %v5090, 0
        %v5115 = vsel %vm1467, %v5091, 0
        %v5118 = vsel %vm1467, %v5092, 0
        %v5121 = vsel %vm1492, %v5095, 0
        %5123 = vmatprep.subr.mxu0 0.0
        %5124 = vmatpush1.msra.mxu0 0.0
        %5125 = vmatprep.subr.mxu0 0.0
        %5126 = vmatpush1.msra.mxu0 0.0
        %5127 = vmatprep.subr.mxu0 0.0
        %5128 = vmatpush1.msra.mxu0 0.0
        %5129 = vmatprep.subr.mxu0 0.0
        %5130 = vmatpush1.msra.mxu0 0.0
        %5131 = vmatprep.subr.mxu0 0.0
        %5132 = vmatpush1.msra.mxu0 0.0
        %5133 = vmatprep.subr.mxu0 0.0
        %5134 = vmatpush1.msra.mxu0 0.0
        %5135 = vmatprep.subr.mxu0 0.0
        %5136 = vmatpush1.msra.mxu0 0.0
        %5137 = vmatprep.subr.mxu0 0.0
        %5138 = vmatpush1.msra.mxu0 0.0
        %5139 = vmatprep.subr.mxu0 0.0
        %5140 = vmatpush1.msra.mxu0 0.0
        %5141 = vmatprep.subr.mxu0 0.0
        %5142 = vmatpush1.msra.mxu0 0.0
        %5143 = vmatprep.subr.mxu0 0.0
        %5144 = vmatpush1.msra.mxu0 0.0
        %5145 = vmatprep.subr.mxu0 0.0
        %5146 = vmatpush1.msra.mxu0 0.0
        %5147 = vmatprep.subr.mxu0 0.0
        %5148 = vmatpush1.msra.mxu0 0.0
        %5149 = vmatprep.subr.mxu0 0.0
        %5150 = vmatpush1.msra.mxu0 0.0
        %5151 = vmatprep.subr.mxu0 0.0
        %5152 = vmatpush1.msra.mxu0 %v5121
        %5153 = vmatprep.subr.mxu0 0.0
        %5154 = vmatpush1.msra.mxu0 %v5094
        %5155 = vmatprep.subr.mxu0 0.0
        %5156 = vmatpush2.msra.mxu0 0.0
        %5157 = vmatprep.subr.mxu0 0.0
        %5158 = vmatpush2.msra.mxu0 0.0
        %5159 = vmatprep.subr.mxu0 0.0
        %5160 = vmatpush2.msra.mxu0 0.0
        %5161 = vmatprep.subr.mxu0 0.0
        %5162 = vmatpush2.msra.mxu0 0.0
        %5163 = vmatprep.subr.mxu0 0.0
        %5164 = vmatpush2.msra.mxu0 0.0
        %5165 = vmatprep.subr.mxu0 0.0
        %5166 = vmatpush2.msra.mxu0 0.0
        %5167 = vmatprep.subr.mxu0 0.0
        %5168 = vmatpush2.msra.mxu0 0.0
        %5169 = vmatprep.subr.mxu0 0.0
        %5170 = vmatpush2.msra.mxu0 0.0
        %5171 = vmatprep.subr.mxu0 0.0
        %5172 = vmatpush2.msra.mxu0 0.0
        %5173 = vmatprep.subr.mxu0 0.0
        %5174 = vmatpush2.msra.mxu0 0.0
        %5175 = vmatprep.subr.mxu0 0.0
        %5176 = vmatpush2.msra.mxu0 0.0
        %5177 = vmatprep.subr.mxu0 0.0
        %5178 = vmatpush2.msra.mxu0 0.0
        %5179 = vmatprep.subr.mxu0 0.0
        %5180 = vmatpush2.msra.mxu0 0.0
        %5181 = vmatprep.subr.mxu0 0.0
        %5182 = vmatpush2.msra.mxu0 0.0
        %5183 = vmatprep.subr.mxu0 0.0
        %5184 = vmatpush2.msra.mxu0 0.0
        %5185 = vmatprep.subr.mxu0 0.0
        %5186 = vmatpush2.msra.mxu0 0.0
        %5187 = vmatprep.mubr.f32.mxu0 0.0
        %5188 = vmatmul.mubr.f32.gmra.mxu0 %v5097
        %v5189 = vpop.f32.mrf.mxu0
        %v5190 = vadd.f32 0.0, %v5189
        %v5191 = vpop.f32.mrf.mxu0
        %5192 = vmatprep.mubr.f32.mxu0 0.0
        %5193 = vmatmul.mubr.f32.gmra.mxu0 %v5100
        %v5194 = vpop.f32.mrf.mxu0
        %v5195 = vadd.f32 0.0, %v5194
        %v5196 = vpop.f32.mrf.mxu0
        %5197 = vmatprep.mubr.f32.mxu0 0.0
        %5198 = vmatmul.mubr.f32.gmra.mxu0 %v5103
        %v5199 = vpop.f32.mrf.mxu0
        %v5200 = vadd.f32 0.0, %v5199
        %v5201 = vpop.f32.mrf.mxu0
        %5202 = vmatprep.mubr.f32.mxu0 0.0
        %5203 = vmatmul.mubr.f32.gmra.mxu0 %v5106
        %v5204 = vpop.f32.mrf.mxu0
        %v5205 = vadd.f32 0.0, %v5204
        %v5206 = vpop.f32.mrf.mxu0
        %5207 = vmatprep.mubr.f32.mxu0 0.0
        %5208 = vmatmul.mubr.f32.gmra.mxu0 %v5109
        %v5209 = vpop.f32.mrf.mxu0
        %v5210 = vadd.f32 0.0, %v5209
        %v5211 = vpop.f32.mrf.mxu0
        %5212 = vmatprep.mubr.f32.mxu0 0.0
        %5213 = vmatmul.mubr.f32.gmra.mxu0 %v5112
        %v5214 = vpop.f32.mrf.mxu0
        %v5215 = vadd.f32 0.0, %v5214
        %v5216 = vpop.f32.mrf.mxu0
        %5217 = vmatprep.mubr.f32.mxu0 0.0
        %5218 = vmatmul.mubr.f32.gmra.mxu0 %v5115
        %v5219 = vpop.f32.mrf.mxu0
        %v5220 = vadd.f32 0.0, %v5219
        %v5221 = vpop.f32.mrf.mxu0
        %5222 = vmatprep.mubr.f32.mxu0 0.0
        %5223 = vmatmul.mubr.f32.gmra.mxu0 %v5118
        %v5224 = vpop.f32.mrf.mxu0
        %v5225 = vadd.f32 0.0, %v5224
        %v5226 = vpop.f32.mrf.mxu0
        %5227 = vdwg.mxu0
        %v5228 = vadd.f32 %v5077, %v5190
        %v5229 = vadd.f32 %v5078, %v5195
        %v5230 = vadd.f32 %v5079, %v5200
        %v5231 = vadd.f32 %v5080, %v5205
        %v5232 = vadd.f32 %v5081, %v5210
        %v5233 = vadd.f32 %v5082, %v5215
        %v5234 = vadd.f32 %v5083, %v5220
        %v5235 = vadd.f32 %v5084, %v5225
        %v5236 = vmax.f32 %v5228, %v5229
        %v5237 = vmax.f32 %v5230, %v5231
        %v5238 = vmax.f32 %v5232, %v5233
        %v5239 = vmax.f32 %v5234, %v5235
        %v5244 = vrot.slane %v5236, 1
        %v5245 = vrot.slane %v5237, 1
        %v5246 = vrot.slane %v5238, 1
        %v5247 = vrot.slane %v5239, 1
        %v5252 = vmax.f32 %v5236, %v5244
        %v5253 = vmax.f32 %v5237, %v5245
        %v5254 = vmax.f32 %v5238, %v5246
        %v5255 = vmax.f32 %v5239, %v5247
        %v5256 = vmax.f32 %v5252, 0.0
        %v5257 = vmax.f32 %v5253, 0.0
        %v5258 = vmax.f32 %v5254, 0.0
        %v5259 = vmax.f32 %v5255, 0.0
        %vm5260 = vcmask 155648
        %v5261 = vsel %vm5260, %v5256, -inf
        %5262 = vmax.xlane.f32.xlu0 %v5261
        %v5263 = vpop.xlane.xlu0 %5262
        %v5264 = vsel %vm5260, %v5257, -inf
        %5265 = vmax.xlane.f32.xlu0 %v5264
        %v5266 = vpop.xlane.xlu0 %5265
        %v5267 = vsel %vm5260, %v5258, -inf
        %5268 = vmax.xlane.f32.xlu0 %v5267
        %v5269 = vpop.xlane.xlu0 %5268
        %v5270 = vsel %vm5260, %v5259, -inf
        %5271 = vmax.xlane.f32.xlu0 %v5270
        %v5272 = vpop.xlane.xlu0 %5271
        %v5273 = vsub.f32 %v5256, %v5263
        %v5274 = vsub.f32 %v5257, %v5266
        %v5275 = vsub.f32 %v5258, %v5269
        %v5276 = vsub.f32 %v5259, %v5272
        %v5277 = vmul.f32 %v5273, 1.442695
        %v5278 = vpow.pop %v5277
        %v5279 = vmul.f32 %v5274, 1.442695
        %v5280 = vpow.pop %v5279
        %v5281 = vmul.f32 %v5275, 1.442695
        %v5282 = vpow.pop %v5281
        %v5283 = vmul.f32 %v5276, 1.442695
        %v5284 = vpow.pop %v5283
        %v5285 = vsel %vm5260, %v5278, 0.0
        %5286 = vadd.xlane.f32.xlu0 %v5285
        %v5287 = vpop.xlane.xlu0 %5286
        %v5288 = vsel %vm5260, %v5280, 0.0
        %5289 = vadd.xlane.f32.xlu0 %v5288
        %v5290 = vpop.xlane.xlu0 %5289
        %v5291 = vsel %vm5260, %v5282, 0.0
        %5292 = vadd.xlane.f32.xlu0 %v5291
        %v5293 = vpop.xlane.xlu0 %5292
        %v5294 = vsel %vm5260, %v5284, 0.0
        %5295 = vadd.xlane.f32.xlu0 %v5294
        %v5296 = vpop.xlane.xlu0 %5295
        %v5297 = vlog2.pop %v5287
        %v5298 = vmul.f32 %v5297, 0.6931472
        %v5299 = vlog2.pop %v5290
        %v5300 = vmul.f32 %v5299, 0.6931472
        %v5301 = vlog2.pop %v5293
        %v5302 = vmul.f32 %v5301, 0.6931472
        %v5303 = vlog2.pop %v5296
        %v5304 = vmul.f32 %v5303, 0.6931472
        %v5305 = vsub.f32 %v5273, %v5298
        %v5306 = vsub.f32 %v5274, %v5300
        %v5307 = vsub.f32 %v5275, %v5302
        %v5308 = vsub.f32 %v5276, %v5304
        %5309 = vst.msk [vmem:[%s217] sm:$0x1] %vm5260, %v5305
        %5310 = vst.msk [vmem:[%s217 + $0x4] sm:$0x1] %vm5260, %v5306
        %5311 = vst.msk [vmem:[%s217 + $0x8] sm:$0x1] %vm5260, %v5307
        %5312 = vst.msk [vmem:[%s217 + $0xc] sm:$0x1] %vm5260, %v5308
        %vm5313 = vcmask 157698
        %v5314 = vsel %vm5313, %v5256, -inf
        %5315 = vmax.xlane.f32.xlu0 %v5314
        %v5316 = vpop.xlane.xlu0 %5315
        %v5317 = vsel %vm5313, %v5257, -inf
        %5318 = vmax.xlane.f32.xlu0 %v5317
        %v5319 = vpop.xlane.xlu0 %5318
        %v5320 = vsel %vm5313, %v5258, -inf
        %5321 = vmax.xlane.f32.xlu0 %v5320
        %v5322 = vpop.xlane.xlu0 %5321
        %v5323 = vsel %vm5313, %v5259, -inf
        %5324 = vmax.xlane.f32.xlu0 %v5323
        %v5325 = vpop.xlane.xlu0 %5324
        %v5326 = vsub.f32 %v5256, %v5316
        %v5327 = vsub.f32 %v5257, %v5319
        %v5328 = vsub.f32 %v5258, %v5322
        %v5329 = vsub.f32 %v5259, %v5325
        %v5330 = vmul.f32 %v5326, 1.442695
        %v5331 = vpow.pop %v5330
        %v5332 = vmul.f32 %v5327, 1.442695
        %v5333 = vpow.pop %v5332
        %v5334 = vmul.f32 %v5328, 1.442695
        %v5335 = vpow.pop %v5334
        %v5336 = vmul.f32 %v5329, 1.442695
        %v5337 = vpow.pop %v5336
        %v5338 = vsel %vm5313, %v5331, 0.0
        %5339 = vadd.xlane.f32.xlu0 %v5338
        %v5340 = vpop.xlane.xlu0 %5339
        %v5341 = vsel %vm5313, %v5333, 0.0
        %5342 = vadd.xlane.f32.xlu0 %v5341
        %v5343 = vpop.xlane.xlu0 %5342
        %v5344 = vsel %vm5313, %v5335, 0.0
        %5345 = vadd.xlane.f32.xlu0 %v5344
        %v5346 = vpop.xlane.xlu0 %5345
        %v5347 = vsel %vm5313, %v5337, 0.0
        %5348 = vadd.xlane.f32.xlu0 %v5347
        %v5349 = vpop.xlane.xlu0 %5348
        %v5350 = vlog2.pop %v5340
        %v5351 = vmul.f32 %v5350, 0.6931472
        %v5352 = vlog2.pop %v5343
        %v5353 = vmul.f32 %v5352, 0.6931472
        %v5354 = vlog2.pop %v5346
        %v5355 = vmul.f32 %v5354, 0.6931472
        %v5356 = vlog2.pop %v5349
        %v5357 = vmul.f32 %v5356, 0.6931472
        %v5358 = vsub.f32 %v5326, %v5351
        %v5359 = vsub.f32 %v5327, %v5353
        %v5360 = vsub.f32 %v5328, %v5355
        %v5361 = vsub.f32 %v5329, %v5357
        %5362 = vst.msk [vmem:[%s217 - $0x1] sm:$0x4] %vm5313, %v5358
        %5363 = vst.msk [vmem:[%s217 + $0x3] sm:$0x4] %vm5313, %v5359
        %5364 = vst.msk [vmem:[%s217 + $0x7] sm:$0x4] %vm5313, %v5360
        %5365 = vst.msk [vmem:[%s217 + $0xb] sm:$0x4] %vm5313, %v5361
        %vm5366 = vcmask 159748
        %v5367 = vsel %vm5366, %v5256, -inf
        %5368 = vmax.xlane.f32.xlu0 %v5367
        %v5369 = vpop.xlane.xlu0 %5368
        %v5370 = vsel %vm5366, %v5257, -inf
        %5371 = vmax.xlane.f32.xlu0 %v5370
        %v5372 = vpop.xlane.xlu0 %5371
        %v5373 = vsel %vm5366, %v5258, -inf
        %5374 = vmax.xlane.f32.xlu0 %v5373
        %v5375 = vpop.xlane.xlu0 %5374
        %v5376 = vsel %vm5366, %v5259, -inf
        %5377 = vmax.xlane.f32.xlu0 %v5376
        %v5378 = vpop.xlane.xlu0 %5377
        %v5379 = vsub.f32 %v5256, %v5369
        %v5380 = vsub.f32 %v5257, %v5372
        %v5381 = vsub.f32 %v5258, %v5375
        %v5382 = vsub.f32 %v5259, %v5378
        %v5383 = vmul.f32 %v5379, 1.442695
        %v5384 = vpow.pop %v5383
        %v5385 = vmul.f32 %v5380, 1.442695
        %v5386 = vpow.pop %v5385
        %v5387 = vmul.f32 %v5381, 1.442695
        %v5388 = vpow.pop %v5387
        %v5389 = vmul.f32 %v5382, 1.442695
        %v5390 = vpow.pop %v5389
        %v5391 = vsel %vm5366, %v5384, 0.0
        %5392 = vadd.xlane.f32.xlu0 %v5391
        %v5393 = vpop.xlane.xlu0 %5392
        %v5394 = vsel %vm5366, %v5386, 0.0
        %5395 = vadd.xlane.f32.xlu0 %v5394
        %v5396 = vpop.xlane.xlu0 %5395
        %v5397 = vsel %vm5366, %v5388, 0.0
        %5398 = vadd.xlane.f32.xlu0 %v5397
        %v5399 = vpop.xlane.xlu0 %5398
        %v5400 = vsel %vm5366, %v5390, 0.0
        %5401 = vadd.xlane.f32.xlu0 %v5400
        %v5402 = vpop.xlane.xlu0 %5401
        %v5403 = vlog2.pop %v5393
        %v5404 = vmul.f32 %v5403, 0.6931472
        %v5405 = vlog2.pop %v5396
        %v5406 = vmul.f32 %v5405, 0.6931472
        %v5407 = vlog2.pop %v5399
        %v5408 = vmul.f32 %v5407, 0.6931472
        %v5409 = vlog2.pop %v5402
        %v5410 = vmul.f32 %v5409, 0.6931472
        %v5411 = vsub.f32 %v5379, %v5404
        %v5412 = vsub.f32 %v5380, %v5406
        %v5413 = vsub.f32 %v5381, %v5408
        %v5414 = vsub.f32 %v5382, %v5410
        %5415 = vst.msk [vmem:[%s217 - $0x2] sm:$0x10] %vm5366, %v5411
        %5416 = vst.msk [vmem:[%s217 + $0x2] sm:$0x10] %vm5366, %v5412
        %5417 = vst.msk [vmem:[%s217 + $0x6] sm:$0x10] %vm5366, %v5413
        %5418 = vst.msk [vmem:[%s217 + $0xa] sm:$0x10] %vm5366, %v5414
        %vm5419 = vcmask 161798
        %v5420 = vsel %vm5419, %v5256, -inf
        %5421 = vmax.xlane.f32.xlu0 %v5420
        %v5422 = vpop.xlane.xlu0 %5421
        %v5423 = vsel %vm5419, %v5257, -inf
        %5424 = vmax.xlane.f32.xlu0 %v5423
        %v5425 = vpop.xlane.xlu0 %5424
        %v5426 = vsel %vm5419, %v5258, -inf
        %5427 = vmax.xlane.f32.xlu0 %v5426
        %v5428 = vpop.xlane.xlu0 %5427
        %v5429 = vsel %vm5419, %v5259, -inf
        %5430 = vmax.xlane.f32.xlu0 %v5429
        %v5431 = vpop.xlane.xlu0 %5430
        %v5432 = vsub.f32 %v5256, %v5422
        %v5433 = vsub.f32 %v5257, %v5425
        %v5434 = vsub.f32 %v5258, %v5428
        %v5435 = vsub.f32 %v5259, %v5431
        %v5436 = vmul.f32 %v5432, 1.442695
        %v5437 = vpow.pop %v5436
        %v5438 = vmul.f32 %v5433, 1.442695
        %v5439 = vpow.pop %v5438
        %v5440 = vmul.f32 %v5434, 1.442695
        %v5441 = vpow.pop %v5440
        %v5442 = vmul.f32 %v5435, 1.442695
        %v5443 = vpow.pop %v5442
        %v5444 = vsel %vm5419, %v5437, 0.0
        %5445 = vadd.xlane.f32.xlu0 %v5444
        %v5446 = vpop.xlane.xlu0 %5445
        %v5447 = vsel %vm5419, %v5439, 0.0
        %5448 = vadd.xlane.f32.xlu0 %v5447
        %v5449 = vpop.xlane.xlu0 %5448
        %v5450 = vsel %vm5419, %v5441, 0.0
        %5451 = vadd.xlane.f32.xlu0 %v5450
        %v5452 = vpop.xlane.xlu0 %5451
        %v5453 = vsel %vm5419, %v5443, 0.0
        %5454 = vadd.xlane.f32.xlu0 %v5453
        %v5455 = vpop.xlane.xlu0 %5454
        %v5456 = vlog2.pop %v5446
        %v5457 = vmul.f32 %v5456, 0.6931472
        %v5458 = vlog2.pop %v5449
        %v5459 = vmul.f32 %v5458, 0.6931472
        %v5460 = vlog2.pop %v5452
        %v5461 = vmul.f32 %v5460, 0.6931472
        %v5462 = vlog2.pop %v5455
        %v5463 = vmul.f32 %v5462, 0.6931472
        %v5464 = vsub.f32 %v5432, %v5457
        %v5465 = vsub.f32 %v5433, %v5459
        %v5466 = vsub.f32 %v5434, %v5461
        %v5467 = vsub.f32 %v5435, %v5463
        %5468 = vst.msk [vmem:[%s217 - $0x3] sm:$0x40] %vm5419, %v5464
        %5469 = vst.msk [vmem:[%s217 + $0x1] sm:$0x40] %vm5419, %v5465
        %5470 = vst.msk [vmem:[%s217 + $0x5] sm:$0x40] %vm5419, %v5466
        %5471 = vst.msk [vmem:[%s217 + $0x9] sm:$0x40] %vm5419, %v5467
        %s5472 = sand.u32 %s137, 1
        %s5473 = scalar_lea.sflag [#allocation4], %s5472
        %s5474 = sand.u32 %s137, 1
        %s5475 = smul.addr %s5474, 16
        %s5476 = scalar_lea.vmem [#allocation3], %s5475
        // Predicated region
        $region41: #{net_forward.1} parent=39 // pred_check
          %p5477 = pneg %p147
        $region42: #{net_forward.1} parent=39 // pred_check_branch
          %5479 = sbr.rel (%p5477) target = $region44
        $region43: #{net_forward.1} parent=39 // pred_region
          %s5481 = ssub.s32 256, 256
          %5482 = vsyncadd %s5473, %s5481
          %s5483 = smul.addr %s19, 4
          %s5484 = smul.addr %s5483, 64
          %s5485 = scalar_lea.hbm %s5, %s5484
          %s5486 = sshll.u32 %s5476, 4
          %s5487 = int_to_ptr.vmem [resolvable:$true] %s5486
          %5492 = dma.vmem_to_hbm [thread:$0]  %s5487, 256, %s5485, %s5473, 64, 64, 4
        $region44: #{net_forward.1} parent=39 // pred_fallthru
          _
      $region40: #{net_forward.1} parent=5 // pred_fallthru
        _
      %p5493 = scmp.le.s32.totalorder 2, %s14
      // Predicated region
      $region45: #{net_forward.1} parent=5 // pred_check
        %p5494 = pneg %p5493
      $region46: #{net_forward.1} parent=5 // pred_check_branch
        %5496 = sbr.rel (%p5494) target = $region48
      $region47: #{net_forward.1} parent=5 // pred_region
        %s5497 = ssub.s32 %s14, 2
        // Predicated region
        $region49: #{net_forward.1} parent=47 // pred_check
          %p5498 = pneg %p153
        $region50: #{net_forward.1} parent=47 // pred_check_branch
          %5500 = sbr.rel (%p5498) target = $region52
        $region51: #{net_forward.1} parent=47 // pred_region
          %s5501 = sand.u32 %s138, 1
          %s5502 = scalar_lea.sflag [#allocation4], %s5501
          %s5503 = sand.u32 %s138, 1
          %s5504 = smul.addr %s5503, 16
          %s5505 = scalar_lea.vmem [#allocation3], %s5504
          %5506 = dma.done %s5502, 256
        $region52: #{net_forward.1} parent=47 // pred_fallthru
          _
      $region48: #{net_forward.1} parent=5 // pred_fallthru
        _
    $region6: #{net_forward.1} parent=1 // loop_footer
      %s18 = sadd.s32 1, %s14
    $region7: #{net_forward.1} parent=1 // loop_footer_branch
      %13 = sbr.rel target = $region3
    $region8: #{net_forward.1} parent=1 // loop_exit
      _
    %5507 = vsyncpa [#allocation4], 1
    %s5508 = scalar_lea.sflag [#allocation4], 1
    %5509 = vsyncpa %s5508, 1

</llo_original>
